<compile_context>
chip_gen: v7x
topology: tpu7x:2x2x1
jax: 0.10.0
libtpu: 0.0.40
codegen_flags: <defaults>
</compile_context>

<pallas_src>
import functools

import jax
import jax.numpy as jnp
from jax.experimental import pallas as pl
from jax.experimental.pallas import tpu as pltpu


def _round_up(x, m):
    return (x + m - 1) // m * m


# --------------------------------------------------------------------------
# Fused matmul + bias + activation.  M-tiled ("parallel"), N padded to a
# multiple of 128 for lane-dense stores, bf16 operands feeding the MXU with
# f32 accumulation (cast happens only immediately before the dot).
# --------------------------------------------------------------------------
def _matmul_bias_kernel(x_ref, w_ref, b_ref, o_ref, *, activation):
    y = jnp.dot(x_ref[...].astype(jnp.bfloat16),
                w_ref[...].astype(jnp.bfloat16),
                preferred_element_type=jnp.float32)
    y = y + b_ref[...]
    if activation == "relu":
        y = jnp.maximum(y, 0.0)
    o_ref[...] = y


def pallas_matmul_bias(x, w, b, activation="none", tile_m=256):
    """y = act(x @ w + b). x:[M,K], w:[K,N], b:[N] -> [M,N] float32."""
    M, K = x.shape
    K2, N = w.shape
    assert K == K2
    Np = _round_up(N, 128)                        # lane-dense output stores
    if Np != N:
        w = jnp.pad(w, ((0, 0), (0, Np - N)))
        b = jnp.pad(b, ((0, Np - N),))
    tm = min(tile_m, _round_up(M, 8))
    Mp = _round_up(M, tm)
    if Mp != M:
        x = jnp.pad(x, ((0, Mp - M), (0, 0)))

    kernel = functools.partial(_matmul_bias_kernel, activation=activation)
    out = pl.pallas_call(
        kernel,
        out_shape=jax.ShapeDtypeStruct((Mp, Np), jnp.float32),
        grid=(Mp // tm,),
        in_specs=[
            pl.BlockSpec((tm, K), lambda i: (i, 0)),
            pl.BlockSpec((K, Np), lambda i: (0, 0)),
            pl.BlockSpec((1, Np), lambda i: (0, 0)),
        ],
        out_specs=pl.BlockSpec((tm, Np), lambda i: (i, 0)),
        compiler_params=pltpu.CompilerParams(
            dimension_semantics=("parallel",)),
    )(x.astype(jnp.float32), w.astype(jnp.float32),
      b.reshape(1, Np).astype(jnp.float32))
    return out[:M, :N]


# --------------------------------------------------------------------------
# Fused 3x3 conv + bias + ReLU (im2col-free): accumulate 9 shifted taps of the
# pre-padded NHWC input directly in VMEM.  Avoids materializing [B,H,W,9*Cin].
# --------------------------------------------------------------------------
def _conv3x3_kernel(x_ref, w_ref, b_ref, o_ref, *, cin):
    # x: [B, H+2, W+2, Cin] (zero padded), w: [9*Cin, Cout], b: [1, Cout]
    B, H, W, Cout = o_ref.shape
    x = x_ref[...]
    acc = jnp.zeros((B, H, W, Cout), jnp.float32)
    for dy in range(3):
        for dx in range(3):
            tap = x[:, dy:dy + H, dx:dx + W, :]
            for c in range(cin):
                k = (dy * 3 + dx) * cin + c
                acc = acc + tap[:, :, :, c:c + 1] * w_ref[k, :]
    o_ref[...] = jnp.maximum(acc + b_ref[0, :], 0.0)


def pallas_conv3x3_bias_relu(x_nhwc, w, b):
    B, H, W, Cin = x_nhwc.shape
    Cout = w.shape[1]
    xp = jnp.pad(x_nhwc, ((0, 0), (1, 1), (1, 1), (0, 0)))
    kernel = functools.partial(_conv3x3_kernel, cin=Cin)
    return pl.pallas_call(
        kernel,
        out_shape=jax.ShapeDtypeStruct((B, H, W, Cout), jnp.float32),
        grid=(1,),
        in_specs=[
            pl.BlockSpec((B, H + 2, W + 2, Cin), lambda i: (0, 0, 0, 0)),
            pl.BlockSpec((9 * Cin, Cout), lambda i: (0, 0)),
            pl.BlockSpec((1, Cout), lambda i: (0, 0)),
        ],
        out_specs=pl.BlockSpec((B, H, W, Cout), lambda i: (0, 0, 0, 0)),
    )(xp.astype(jnp.float32), w.astype(jnp.float32),
      b.reshape(1, Cout).astype(jnp.float32))


# --------------------------------------------------------------------------
# Depthwise 3x3 conv (per-channel), taps on a pre-padded input.
# --------------------------------------------------------------------------
def _depthwise3x3_kernel(x_ref, w_ref, o_ref):
    B, H, W, C = o_ref.shape
    x = x_ref[...]
    acc = jnp.zeros((B, H, W, C), jnp.float32)
    for dy in range(3):
        for dx in range(3):
            acc = acc + x[:, dy:dy + H, dx:dx + W, :] * w_ref[dy * 3 + dx, :]
    o_ref[...] = acc


def pallas_depthwise3x3(x_nhwc, w9c):
    B, H, W, C = x_nhwc.shape
    xp = jnp.pad(x_nhwc, ((0, 0), (1, 1), (1, 1), (0, 0)))
    return pl.pallas_call(
        _depthwise3x3_kernel,
        out_shape=jax.ShapeDtypeStruct((B, H, W, C), jnp.float32),
        grid=(1,),
        in_specs=[
            pl.BlockSpec((B, H + 2, W + 2, C), lambda i: (0, 0, 0, 0)),
            pl.BlockSpec((9, C), lambda i: (0, 0)),
        ],
        out_specs=pl.BlockSpec((B, H, W, C), lambda i: (0, 0, 0, 0)),
    )(xp.astype(jnp.float32), w9c.astype(jnp.float32))


# --------------------------------------------------------------------------
# AdaptiveAvgPool2d((output_channel, 1)) applied to permute(0,3,1,2)+squeeze(3)
# == identity on channels, mean over the feature-map height.
# --------------------------------------------------------------------------
def _avgpool_h_kernel(x_ref, o_ref):
    o_ref[...] = jnp.mean(x_ref[...], axis=1)


def pallas_adaptive_avgpool(feat_nhwc):
    B, H, W, C = feat_nhwc.shape
    return pl.pallas_call(
        _avgpool_h_kernel,
        out_shape=jax.ShapeDtypeStruct((B, W, C), jnp.float32),
        grid=(1,),
        in_specs=[pl.BlockSpec((B, H, W, C), lambda i: (0, 0, 0, 0))],
        out_specs=pl.BlockSpec((B, W, C), lambda i: (0, 0, 0)),
    )(feat_nhwc.astype(jnp.float32))


# --------------------------------------------------------------------------
# Bidirectional LSTM recurrence: one pallas_call, time loop inside the kernel.
# xp holds both directions' precomputed input projections on the lane axis
# ([T, B, 8H]; cols [0,4H) forward, [4H,8H) backward).  h/c for both
# directions live in VMEM scratch; outputs are written at t (fwd) / T-1-t (bwd)
# so out_f[t] / out_b[t] match PyTorch's bidirectional output at position t.
# --------------------------------------------------------------------------
def _bilstm_kernel(xp_ref, whf_ref, whb_ref, of_ref, ob_ref,
                   hf_ref, cf_ref, hb_ref, cb_ref):
    T, B, H = of_ref.shape
    hf_ref[...] = jnp.zeros_like(hf_ref)
    cf_ref[...] = jnp.zeros_like(cf_ref)
    hb_ref[...] = jnp.zeros_like(hb_ref)
    cb_ref[...] = jnp.zeros_like(cb_ref)

    # Hoisted (loaded + cast once, reused every step).
    whf = whf_ref[...].astype(jnp.bfloat16)
    whb = whb_ref[...].astype(jnp.bfloat16)

    def gates_to_hc(pre, c_prev):
        # PyTorch gate order: i, f, g, o
        i = jax.nn.sigmoid(pre[:, 0 * H:1 * H])
        f = jax.nn.sigmoid(pre[:, 1 * H:2 * H])
        g = jnp.tanh(pre[:, 2 * H:3 * H])
        o = jax.nn.sigmoid(pre[:, 3 * H:4 * H])
        c = f * c_prev + i * g
        h = o * jnp.tanh(c)
        return h, c

    @pl.loop(0, T, unroll=True)
    def _(t):
        rev = T - 1 - t
        xp_f = xp_ref[t]                       # [B, 8H]
        xp_b = xp_ref[rev]
        gf = xp_f[:, :4 * H] + jnp.dot(hf_ref[...].astype(jnp.bfloat16), whf,
                                       preferred_element_type=jnp.float32)
        gb = xp_b[:, 4 * H:] + jnp.dot(hb_ref[...].astype(jnp.bfloat16), whb,
                                       preferred_element_type=jnp.float32)
        h_f, c_f = gates_to_hc(gf, cf_ref[...])
        h_b, c_b = gates_to_hc(gb, cb_ref[...])
        hf_ref[...] = h_f
        cf_ref[...] = c_f
        hb_ref[...] = h_b
        cb_ref[...] = c_b
        of_ref[t] = h_f
        ob_ref[rev] = h_b


def pallas_bilstm(xp_tb8h, whh_f, whh_b, hidden):
    T, B, G8 = xp_tb8h.shape
    return pl.pallas_call(
        _bilstm_kernel,
        out_shape=(jax.ShapeDtypeStruct((T, B, hidden), jnp.float32),
                   jax.ShapeDtypeStruct((T, B, hidden), jnp.float32)),
        grid=(1,),
        in_specs=[
            pl.BlockSpec((T, B, G8), lambda i: (0, 0, 0)),
            pl.BlockSpec((hidden, 4 * hidden), lambda i: (0, 0)),
            pl.BlockSpec((hidden, 4 * hidden), lambda i: (0, 0)),
        ],
        out_specs=(pl.BlockSpec((T, B, hidden), lambda i: (0, 0, 0)),
                   pl.BlockSpec((T, B, hidden), lambda i: (0, 0, 0))),
        scratch_shapes=[pltpu.VMEM((B, hidden), jnp.float32)] * 4,
        compiler_params=pltpu.CompilerParams(
            dimension_semantics=("arbitrary",)),
    )(xp_tb8h.astype(jnp.float32), whh_f.astype(jnp.float32),
      whh_b.astype(jnp.float32))


# ------------------------------ Glue (plain JAX) ----------------------------

def maxpool2x2(x_nhwc):
    B, H, W, C = x_nhwc.shape
    x = x_nhwc[:, :(H // 2) * 2, :(W // 2) * 2, :]   # floor, like MaxPool2d(2,2)
    return x.reshape(B, H // 2, 2, W // 2, 2, C).max(axis=(2, 4))


def run_sequence_and_prediction(seq_btc, params, hidden, num_class):
    """Two BidirectionalLSTMs + Prediction, with the no-activation Linears
    folded (exactly) into the next input projection / the final GEMM."""
    B, T, C = seq_btc.shape
    x_tb = jnp.transpose(seq_btc, (1, 0, 2)).reshape(T * B, C)   # [T*B, C]

    l1, l2 = params["lstm1"], params["lstm2"]

    # ---- BiLSTM 1: both directions' input projections in one GEMM (N = 8H)
    w_in1 = jnp.concatenate([l1["fwd"]["w_ih_t"], l1["bwd"]["w_ih_t"]], axis=1)
    b_in1 = jnp.concatenate([l1["fwd"]["b_ih"] + l1["fwd"]["b_hh"],
                             l1["bwd"]["b_ih"] + l1["bwd"]["b_hh"]])
    xp1 = pallas_matmul_bias(x_tb, w_in1, b_in1).reshape(T, B, 8 * hidden)
    of1, ob1 = pallas_bilstm(xp1, l1["fwd"]["w_hh_t"], l1["bwd"]["w_hh_t"],
                             hidden)
    rec1 = jnp.concatenate([of1, ob1], axis=-1).reshape(T * B, 2 * hidden)

    # ---- BiLSTM 2: lstm1's output Linear (2H->H, no activation) folded into
    #      lstm2's input projection:  (rec@W_lin+b_lin)@W_ih+b == rec@(W_lin@W_ih)+...
    w_in2 = jnp.concatenate([l1["linear_w_t"] @ l2["fwd"]["w_ih_t"],
                             l1["linear_w_t"] @ l2["bwd"]["w_ih_t"]], axis=1)
    b_in2 = jnp.concatenate(
        [l1["linear_b"] @ l2["fwd"]["w_ih_t"] + l2["fwd"]["b_ih"] + l2["fwd"]["b_hh"],
         l1["linear_b"] @ l2["bwd"]["w_ih_t"] + l2["bwd"]["b_ih"] + l2["bwd"]["b_hh"]])
    xp2 = pallas_matmul_bias(rec1, w_in2, b_in2).reshape(T, B, 8 * hidden)
    of2, ob2 = pallas_bilstm(xp2, l2["fwd"]["w_hh_t"], l2["bwd"]["w_hh_t"],
                             hidden)
    rec2 = jnp.concatenate([of2, ob2], axis=-1).reshape(T * B, 2 * hidden)

    # ---- Prediction: lstm2's output Linear folded into the final Linear.
    w_pred = l2["linear_w_t"] @ params["pred_w"]
    b_pred = l2["linear_b"] @ params["pred_w"] + params["pred_b"]
    pred = pallas_matmul_bias(rec2, w_pred, b_pred)              # [T*B, nc]
    return pred.reshape(T, B, num_class)                         # == permute(1,0,2)


def crnn_forward(params, x_nchw, opt):
    # ---- Feature extraction (simplified depthwise-separable VGG) ----
    # TODO(synk): real VGG/CSPDarknet backbone source is not provided.
    x = jnp.transpose(x_nchw, (0, 2, 3, 1)).astype(jnp.float32)  # NCHW -> NHWC

    y = pallas_conv3x3_bias_relu(x, params["conv1_w"], params["conv1_b"])
    y = maxpool2x2(y)

    y = pallas_depthwise3x3(y, params["dw2_w"])
    B_, H_, W_, C_ = y.shape
    y = pallas_matmul_bias(y.reshape(-1, C_), params["pw2_w"], params["pw2_b"],
                           "relu").reshape(B_, H_, W_, -1)
    y = maxpool2x2(y)

    B_, H_, W_, C_ = y.shape
    y = pallas_matmul_bias(y.reshape(-1, C_), params["pw3_w"], params["pw3_b"],
                           "relu").reshape(B_, H_, W_, -1)

    # ---- AdaptiveAvgPool2d((output_channel, 1)) -> [B, T=Wf, C]
    seq = pallas_adaptive_avgpool(y)

    # ---- Sequence modeling + Prediction (output already [T, B, num_class])
    return run_sequence_and_prediction(seq, params, opt["hidden_size"],
                                       opt["num_class"])


# ------------------------------- Parameters ---------------------------------

def _uniform(key, shape, scale=0.08):
    return jax.random.uniform(key, shape, jnp.float32, -scale, scale)


def init_params(key, opt, c1=16, c2=32):
    ks = iter(jax.random.split(key, 40))
    H = opt["hidden_size"]
    c_in, c_out = opt["input_channel"], opt["output_channel"]

    def lstm_dir(in_dim):
        return dict(
            w_ih_t=_uniform(next(ks), (in_dim, 4 * H)),
            w_hh_t=_uniform(next(ks), (H, 4 * H)),
            b_ih=_uniform(next(ks), (4 * H,)),
            b_hh=_uniform(next(ks), (4 * H,)),
        )

    def bilstm(in_dim):
        return dict(
            fwd=lstm_dir(in_dim),
            bwd=lstm_dir(in_dim),
            linear_w_t=_uniform(next(ks), (2 * H, H)),
            linear_b=_uniform(next(ks), (H,)),
        )

    return dict(
        conv1_w=_uniform(next(ks), (9 * c_in, c1)),
        conv1_b=_uniform(next(ks), (c1,)),
        dw2_w=_uniform(next(ks), (9, c1)),
        pw2_w=_uniform(next(ks), (c1, c2)),
        pw2_b=_uniform(next(ks), (c2,)),
        pw3_w=_uniform(next(ks), (c2, c_out)),
        pw3_b=_uniform(next(ks), (c_out,)),
        lstm1=bilstm(c_out),
        lstm2=bilstm(H),
        pred_w=_uniform(next(ks), (H, opt["num_class"])),
        pred_b=_uniform(next(ks), (opt["num_class"],)),
    )


# ---------------------------------- Main -------------------------------------

if __name__ == "__main__":
    opt = dict(
        FeatureExtraction="VGG",
        input_channel=1,
        output_channel=64,
        hidden_size=32,
        num_class=10,
    )
    key = jax.random.PRNGKey(0)
    kp, kx = jax.random.split(key)
    params = init_params(kp, opt)

    # Small CRNN-style input: [B, C, H, W] = [2, 1, 16, 32]
    x = jax.random.normal(kx, (2, 1, 16, 32), jnp.float32)

    forward = jax.jit(functools.partial(crnn_forward, opt=opt))
    out = jax.block_until_ready(forward(params, x))

    # Feature width 32 -> /2 -> /2 = 8  => sequence length T = 8.
    assert out.shape == (8, 2, opt["num_class"]), out.shape
    assert bool(jnp.all(jnp.isfinite(out)))
    print("KERNEL_OK")
</pallas_src>

<mosaic_0001>
module attributes {stable_mosaic.version = 11 : i64} {
  func.func @_conv3x3_kernel(%arg0: i32, %arg1: memref<2x18x34x1xf32, #tpu.memory_space<vmem>>, %arg2: memref<9x16xf32, #tpu.memory_space<vmem>>, %arg3: memref<1x16xf32, #tpu.memory_space<vmem>>, %arg4: memref<2x16x32x16xf32, #tpu.memory_space<vmem>>) attributes {dimension_semantics = [#tpu.dimension_semantics<arbitrary>], iteration_bounds = array<i64: 1>, scalar_prefetch = 0 : i64, scratch_operands = 0 : i64, tpu.core_type = #tpu.core_type<tc>, window_params = [{pipeline_mode = #tpu.pipeline_mode<synchronous>, transform_indices = @transform_0, window_bounds = array<i64: 2, 18, 34, 1>}, {pipeline_mode = #tpu.pipeline_mode<synchronous>, transform_indices = @transform_1, window_bounds = array<i64: 9, 16>}, {pipeline_mode = #tpu.pipeline_mode<synchronous>, transform_indices = @transform_2, window_bounds = array<i64: 1, 16>}, {pipeline_mode = #tpu.pipeline_mode<synchronous>, transform_indices = @transform_3, window_bounds = array<i64: 2, 16, 32, 16>}]} {
    %c0 = arith.constant 0 : index
    %c0_0 = arith.constant 0 : index
    %c0_1 = arith.constant 0 : index
    %c0_2 = arith.constant 0 : index
    %0 = vector.load %arg1[%c0, %c0_0, %c0_1, %c0_2] : memref<2x18x34x1xf32, #tpu.memory_space<vmem>>, vector<2x18x34x1xf32>
    %cst = arith.constant 0.000000e+00 : f32
    %1 = vector.broadcast %cst : f32 to vector<2x16x32x16xf32>
    %2 = vector.extract_strided_slice %0 {offsets = [0, 0, 0, 0], sizes = [2, 16, 32, 1], strides = [1, 1, 1, 1]} : vector<2x18x34x1xf32> to vector<2x16x32x1xf32>
    %c0_3 = arith.constant 0 : index
    %c0_4 = arith.constant 0 : index
    %3 = vector.load %arg2[%c0_3, %c0_4] : memref<9x16xf32, #tpu.memory_space<vmem>>, vector<1x16xf32>
    %4 = vector.shape_cast %3 : vector<1x16xf32> to vector<16xf32>
    %5 = vector.shape_cast %4 : vector<16xf32> to vector<1x1x1x16xf32>
    %6 = vector.broadcast %2 : vector<2x16x32x1xf32> to vector<2x16x32x16xf32>
    %7 = vector.broadcast %5 : vector<1x1x1x16xf32> to vector<2x16x32x16xf32>
    %8 = arith.mulf %6, %7 : vector<2x16x32x16xf32>
    %9 = arith.addf %1, %8 : vector<2x16x32x16xf32>
    %10 = vector.extract_strided_slice %0 {offsets = [0, 0, 1, 0], sizes = [2, 16, 32, 1], strides = [1, 1, 1, 1]} : vector<2x18x34x1xf32> to vector<2x16x32x1xf32>
    %c1 = arith.constant 1 : index
    %c0_5 = arith.constant 0 : index
    %11 = vector.load %arg2[%c1, %c0_5] : memref<9x16xf32, #tpu.memory_space<vmem>>, vector<1x16xf32>
    %12 = vector.shape_cast %11 : vector<1x16xf32> to vector<16xf32>
    %13 = vector.shape_cast %12 : vector<16xf32> to vector<1x1x1x16xf32>
    %14 = vector.broadcast %10 : vector<2x16x32x1xf32> to vector<2x16x32x16xf32>
    %15 = vector.broadcast %13 : vector<1x1x1x16xf32> to vector<2x16x32x16xf32>
    %16 = arith.mulf %14, %15 : vector<2x16x32x16xf32>
    %17 = arith.addf %9, %16 : vector<2x16x32x16xf32>
    %18 = vector.extract_strided_slice %0 {offsets = [0, 0, 2, 0], sizes = [2, 16, 32, 1], strides = [1, 1, 1, 1]} : vector<2x18x34x1xf32> to vector<2x16x32x1xf32>
    %c2 = arith.constant 2 : index
    %c0_6 = arith.constant 0 : index
    %19 = vector.load %arg2[%c2, %c0_6] : memref<9x16xf32, #tpu.memory_space<vmem>>, vector<1x16xf32>
    %20 = vector.shape_cast %19 : vector<1x16xf32> to vector<16xf32>
    %21 = vector.shape_cast %20 : vector<16xf32> to vector<1x1x1x16xf32>
    %22 = vector.broadcast %18 : vector<2x16x32x1xf32> to vector<2x16x32x16xf32>
    %23 = vector.broadcast %21 : vector<1x1x1x16xf32> to vector<2x16x32x16xf32>
    %24 = arith.mulf %22, %23 : vector<2x16x32x16xf32>
    %25 = arith.addf %17, %24 : vector<2x16x32x16xf32>
    %26 = vector.extract_strided_slice %0 {offsets = [0, 1, 0, 0], sizes = [2, 16, 32, 1], strides = [1, 1, 1, 1]} : vector<2x18x34x1xf32> to vector<2x16x32x1xf32>
    %c3 = arith.constant 3 : index
    %c0_7 = arith.constant 0 : index
    %27 = vector.load %arg2[%c3, %c0_7] : memref<9x16xf32, #tpu.memory_space<vmem>>, vector<1x16xf32>
    %28 = vector.shape_cast %27 : vector<1x16xf32> to vector<16xf32>
    %29 = vector.shape_cast %28 : vector<16xf32> to vector<1x1x1x16xf32>
    %30 = vector.broadcast %26 : vector<2x16x32x1xf32> to vector<2x16x32x16xf32>
    %31 = vector.broadcast %29 : vector<1x1x1x16xf32> to vector<2x16x32x16xf32>
    %32 = arith.mulf %30, %31 : vector<2x16x32x16xf32>
    %33 = arith.addf %25, %32 : vector<2x16x32x16xf32>
    %34 = vector.extract_strided_slice %0 {offsets = [0, 1, 1, 0], sizes = [2, 16, 32, 1], strides = [1, 1, 1, 1]} : vector<2x18x34x1xf32> to vector<2x16x32x1xf32>
    %c4 = arith.constant 4 : index
    %c0_8 = arith.constant 0 : index
    %35 = vector.load %arg2[%c4, %c0_8] : memref<9x16xf32, #tpu.memory_space<vmem>>, vector<1x16xf32>
    %36 = vector.shape_cast %35 : vector<1x16xf32> to vector<16xf32>
    %37 = vector.shape_cast %36 : vector<16xf32> to vector<1x1x1x16xf32>
    %38 = vector.broadcast %34 : vector<2x16x32x1xf32> to vector<2x16x32x16xf32>
    %39 = vector.broadcast %37 : vector<1x1x1x16xf32> to vector<2x16x32x16xf32>
    %40 = arith.mulf %38, %39 : vector<2x16x32x16xf32>
    %41 = arith.addf %33, %40 : vector<2x16x32x16xf32>
    %42 = vector.extract_strided_slice %0 {offsets = [0, 1, 2, 0], sizes = [2, 16, 32, 1], strides = [1, 1, 1, 1]} : vector<2x18x34x1xf32> to vector<2x16x32x1xf32>
    %c5 = arith.constant 5 : index
    %c0_9 = arith.constant 0 : index
    %43 = vector.load %arg2[%c5, %c0_9] : memref<9x16xf32, #tpu.memory_space<vmem>>, vector<1x16xf32>
    %44 = vector.shape_cast %43 : vector<1x16xf32> to vector<16xf32>
    %45 = vector.shape_cast %44 : vector<16xf32> to vector<1x1x1x16xf32>
    %46 = vector.broadcast %42 : vector<2x16x32x1xf32> to vector<2x16x32x16xf32>
    %47 = vector.broadcast %45 : vector<1x1x1x16xf32> to vector<2x16x32x16xf32>
    %48 = arith.mulf %46, %47 : vector<2x16x32x16xf32>
    %49 = arith.addf %41, %48 : vector<2x16x32x16xf32>
    %50 = vector.extract_strided_slice %0 {offsets = [0, 2, 0, 0], sizes = [2, 16, 32, 1], strides = [1, 1, 1, 1]} : vector<2x18x34x1xf32> to vector<2x16x32x1xf32>
    %c6 = arith.constant 6 : index
    %c0_10 = arith.constant 0 : index
    %51 = vector.load %arg2[%c6, %c0_10] : memref<9x16xf32, #tpu.memory_space<vmem>>, vector<1x16xf32>
    %52 = vector.shape_cast %51 : vector<1x16xf32> to vector<16xf32>
    %53 = vector.shape_cast %52 : vector<16xf32> to vector<1x1x1x16xf32>
    %54 = vector.broadcast %50 : vector<2x16x32x1xf32> to vector<2x16x32x16xf32>
    %55 = vector.broadcast %53 : vector<1x1x1x16xf32> to vector<2x16x32x16xf32>
    %56 = arith.mulf %54, %55 : vector<2x16x32x16xf32>
    %57 = arith.addf %49, %56 : vector<2x16x32x16xf32>
    %58 = vector.extract_strided_slice %0 {offsets = [0, 2, 1, 0], sizes = [2, 16, 32, 1], strides = [1, 1, 1, 1]} : vector<2x18x34x1xf32> to vector<2x16x32x1xf32>
    %c7 = arith.constant 7 : index
    %c0_11 = arith.constant 0 : index
    %59 = vector.load %arg2[%c7, %c0_11] : memref<9x16xf32, #tpu.memory_space<vmem>>, vector<1x16xf32>
    %60 = vector.shape_cast %59 : vector<1x16xf32> to vector<16xf32>
    %61 = vector.shape_cast %60 : vector<16xf32> to vector<1x1x1x16xf32>
    %62 = vector.broadcast %58 : vector<2x16x32x1xf32> to vector<2x16x32x16xf32>
    %63 = vector.broadcast %61 : vector<1x1x1x16xf32> to vector<2x16x32x16xf32>
    %64 = arith.mulf %62, %63 : vector<2x16x32x16xf32>
    %65 = arith.addf %57, %64 : vector<2x16x32x16xf32>
    %66 = vector.extract_strided_slice %0 {offsets = [0, 2, 2, 0], sizes = [2, 16, 32, 1], strides = [1, 1, 1, 1]} : vector<2x18x34x1xf32> to vector<2x16x32x1xf32>
    %c8 = arith.constant 8 : index
    %c0_12 = arith.constant 0 : index
    %67 = vector.load %arg2[%c8, %c0_12] : memref<9x16xf32, #tpu.memory_space<vmem>>, vector<1x16xf32>
    %68 = vector.shape_cast %67 : vector<1x16xf32> to vector<16xf32>
    %69 = vector.shape_cast %68 : vector<16xf32> to vector<1x1x1x16xf32>
    %70 = vector.broadcast %66 : vector<2x16x32x1xf32> to vector<2x16x32x16xf32>
    %71 = vector.broadcast %69 : vector<1x1x1x16xf32> to vector<2x16x32x16xf32>
    %72 = arith.mulf %70, %71 : vector<2x16x32x16xf32>
    %73 = arith.addf %65, %72 : vector<2x16x32x16xf32>
    %c0_13 = arith.constant 0 : index
    %c0_14 = arith.constant 0 : index
    %74 = vector.load %arg3[%c0_13, %c0_14] : memref<1x16xf32, #tpu.memory_space<vmem>>, vector<1x16xf32>
    %75 = vector.shape_cast %74 : vector<1x16xf32> to vector<16xf32>
    %76 = vector.shape_cast %75 : vector<16xf32> to vector<1x1x1x16xf32>
    %77 = vector.broadcast %76 : vector<1x1x1x16xf32> to vector<2x16x32x16xf32>
    %78 = arith.addf %73, %77 : vector<2x16x32x16xf32>
    %cst_15 = arith.constant 0.000000e+00 : f32
    %79 = vector.broadcast %cst_15 : f32 to vector<2x16x32x16xf32>
    %80 = arith.maximumf %78, %79 : vector<2x16x32x16xf32>
    %c0_16 = arith.constant 0 : index
    %c0_17 = arith.constant 0 : index
    %c0_18 = arith.constant 0 : index
    %c0_19 = arith.constant 0 : index
    %81 = vector.load %arg4[%c0_16, %c0_17, %c0_18, %c0_19] : memref<2x16x32x16xf32, #tpu.memory_space<vmem>>, vector<2x16x32x16xf32>
    tpu.vector_store %arg4[%c0_16, %c0_17, %c0_18, %c0_19], %80 {strides = array<i32>} : memref<2x16x32x16xf32, #tpu.memory_space<vmem>>, vector<2x16x32x16xf32>,
    return
  }
  func.func @transform_0(%arg0: i32) -> (i32, i32, i32, i32) {
    %c0_i32 = arith.constant 0 : i32
    %c0_i32_0 = arith.constant 0 : i32
    %c0_i32_1 = arith.constant 0 : i32
    %c0_i32_2 = arith.constant 0 : i32
    %c0_i32_3 = arith.constant 0 : i32
    return %c0_i32, %c0_i32_0, %c0_i32_1, %c0_i32_2 : i32, i32, i32, i32
  }
  func.func @transform_1(%arg0: i32) -> (i32, i32) {
    %c0_i32 = arith.constant 0 : i32
    %c0_i32_0 = arith.constant 0 : i32
    %c0_i32_1 = arith.constant 0 : i32
    return %c0_i32, %c0_i32_0 : i32, i32
  }
  func.func @transform_2(%arg0: i32) -> (i32, i32) {
    %c0_i32 = arith.constant 0 : i32
    %c0_i32_0 = arith.constant 0 : i32
    %c0_i32_1 = arith.constant 0 : i32
    return %c0_i32, %c0_i32_0 : i32, i32
  }
  func.func @transform_3(%arg0: i32) -> (i32, i32, i32, i32) {
    %c0_i32 = arith.constant 0 : i32
    %c0_i32_0 = arith.constant 0 : i32
    %c0_i32_1 = arith.constant 0 : i32
    %c0_i32_2 = arith.constant 0 : i32
    %c0_i32_3 = arith.constant 0 : i32
    return %c0_i32, %c0_i32_0, %c0_i32_1, %c0_i32_2 : i32, i32, i32, i32
  }
}

module attributes {stable_mosaic.version = 11 : i64} {
  func.func @_depthwise3x3_kernel(%arg0: i32, %arg1: memref<2x10x18x16xf32, #tpu.memory_space<vmem>>, %arg2: memref<9x16xf32, #tpu.memory_space<vmem>>, %arg3: memref<2x8x16x16xf32, #tpu.memory_space<vmem>>) attributes {dimension_semantics = [#tpu.dimension_semantics<arbitrary>], iteration_bounds = array<i64: 1>, scalar_prefetch = 0 : i64, scratch_operands = 0 : i64, tpu.core_type = #tpu.core_type<tc>, window_params = [{pipeline_mode = #tpu.pipeline_mode<synchronous>, transform_indices = @transform_0, window_bounds = array<i64: 2, 10, 18, 16>}, {pipeline_mode = #tpu.pipeline_mode<synchronous>, transform_indices = @transform_1, window_bounds = array<i64: 9, 16>}, {pipeline_mode = #tpu.pipeline_mode<synchronous>, transform_indices = @transform_2, window_bounds = array<i64: 2, 8, 16, 16>}]} {
    %c0 = arith.constant 0 : index
    %c0_0 = arith.constant 0 : index
    %c0_1 = arith.constant 0 : index
    %c0_2 = arith.constant 0 : index
    %0 = vector.load %arg1[%c0, %c0_0, %c0_1, %c0_2] : memref<2x10x18x16xf32, #tpu.memory_space<vmem>>, vector<2x10x18x16xf32>
    %cst = arith.constant 0.000000e+00 : f32
    %1 = vector.broadcast %cst : f32 to vector<2x8x16x16xf32>
    %2 = vector.extract_strided_slice %0 {offsets = [0, 0, 0, 0], sizes = [2, 8, 16, 16], strides = [1, 1, 1, 1]} : vector<2x10x18x16xf32> to vector<2x8x16x16xf32>
    %c0_3 = arith.constant 0 : index
    %c0_4 = arith.constant 0 : index
    %3 = vector.load %arg2[%c0_3, %c0_4] : memref<9x16xf32, #tpu.memory_space<vmem>>, vector<1x16xf32>
    %4 = vector.shape_cast %3 : vector<1x16xf32> to vector<16xf32>
    %5 = vector.shape_cast %4 : vector<16xf32> to vector<1x1x1x16xf32>
    %6 = vector.broadcast %5 : vector<1x1x1x16xf32> to vector<2x8x16x16xf32>
    %7 = arith.mulf %2, %6 : vector<2x8x16x16xf32>
    %8 = arith.addf %1, %7 : vector<2x8x16x16xf32>
    %9 = vector.extract_strided_slice %0 {offsets = [0, 0, 1, 0], sizes = [2, 8, 16, 16], strides = [1, 1, 1, 1]} : vector<2x10x18x16xf32> to vector<2x8x16x16xf32>
    %c1 = arith.constant 1 : index
    %c0_5 = arith.constant 0 : index
    %10 = vector.load %arg2[%c1, %c0_5] : memref<9x16xf32, #tpu.memory_space<vmem>>, vector<1x16xf32>
    %11 = vector.shape_cast %10 : vector<1x16xf32> to vector<16xf32>
    %12 = vector.shape_cast %11 : vector<16xf32> to vector<1x1x1x16xf32>
    %13 = vector.broadcast %12 : vector<1x1x1x16xf32> to vector<2x8x16x16xf32>
    %14 = arith.mulf %9, %13 : vector<2x8x16x16xf32>
    %15 = arith.addf %8, %14 : vector<2x8x16x16xf32>
    %16 = vector.extract_strided_slice %0 {offsets = [0, 0, 2, 0], sizes = [2, 8, 16, 16], strides = [1, 1, 1, 1]} : vector<2x10x18x16xf32> to vector<2x8x16x16xf32>
    %c2 = arith.constant 2 : index
    %c0_6 = arith.constant 0 : index
    %17 = vector.load %arg2[%c2, %c0_6] : memref<9x16xf32, #tpu.memory_space<vmem>>, vector<1x16xf32>
    %18 = vector.shape_cast %17 : vector<1x16xf32> to vector<16xf32>
    %19 = vector.shape_cast %18 : vector<16xf32> to vector<1x1x1x16xf32>
    %20 = vector.broadcast %19 : vector<1x1x1x16xf32> to vector<2x8x16x16xf32>
    %21 = arith.mulf %16, %20 : vector<2x8x16x16xf32>
    %22 = arith.addf %15, %21 : vector<2x8x16x16xf32>
    %23 = vector.extract_strided_slice %0 {offsets = [0, 1, 0, 0], sizes = [2, 8, 16, 16], strides = [1, 1, 1, 1]} : vector<2x10x18x16xf32> to vector<2x8x16x16xf32>
    %c3 = arith.constant 3 : index
    %c0_7 = arith.constant 0 : index
    %24 = vector.load %arg2[%c3, %c0_7] : memref<9x16xf32, #tpu.memory_space<vmem>>, vector<1x16xf32>
    %25 = vector.shape_cast %24 : vector<1x16xf32> to vector<16xf32>
    %26 = vector.shape_cast %25 : vector<16xf32> to vector<1x1x1x16xf32>
    %27 = vector.broadcast %26 : vector<1x1x1x16xf32> to vector<2x8x16x16xf32>
    %28 = arith.mulf %23, %27 : vector<2x8x16x16xf32>
    %29 = arith.addf %22, %28 : vector<2x8x16x16xf32>
    %30 = vector.extract_strided_slice %0 {offsets = [0, 1, 1, 0], sizes = [2, 8, 16, 16], strides = [1, 1, 1, 1]} : vector<2x10x18x16xf32> to vector<2x8x16x16xf32>
    %c4 = arith.constant 4 : index
    %c0_8 = arith.constant 0 : index
    %31 = vector.load %arg2[%c4, %c0_8] : memref<9x16xf32, #tpu.memory_space<vmem>>, vector<1x16xf32>
    %32 = vector.shape_cast %31 : vector<1x16xf32> to vector<16xf32>
    %33 = vector.shape_cast %32 : vector<16xf32> to vector<1x1x1x16xf32>
    %34 = vector.broadcast %33 : vector<1x1x1x16xf32> to vector<2x8x16x16xf32>
    %35 = arith.mulf %30, %34 : vector<2x8x16x16xf32>
    %36 = arith.addf %29, %35 : vector<2x8x16x16xf32>
    %37 = vector.extract_strided_slice %0 {offsets = [0, 1, 2, 0], sizes = [2, 8, 16, 16], strides = [1, 1, 1, 1]} : vector<2x10x18x16xf32> to vector<2x8x16x16xf32>
    %c5 = arith.constant 5 : index
    %c0_9 = arith.constant 0 : index
    %38 = vector.load %arg2[%c5, %c0_9] : memref<9x16xf32, #tpu.memory_space<vmem>>, vector<1x16xf32>
    %39 = vector.shape_cast %38 : vector<1x16xf32> to vector<16xf32>
    %40 = vector.shape_cast %39 : vector<16xf32> to vector<1x1x1x16xf32>
    %41 = vector.broadcast %40 : vector<1x1x1x16xf32> to vector<2x8x16x16xf32>
    %42 = arith.mulf %37, %41 : vector<2x8x16x16xf32>
    %43 = arith.addf %36, %42 : vector<2x8x16x16xf32>
    %44 = vector.extract_strided_slice %0 {offsets = [0, 2, 0, 0], sizes = [2, 8, 16, 16], strides = [1, 1, 1, 1]} : vector<2x10x18x16xf32> to vector<2x8x16x16xf32>
    %c6 = arith.constant 6 : index
    %c0_10 = arith.constant 0 : index
    %45 = vector.load %arg2[%c6, %c0_10] : memref<9x16xf32, #tpu.memory_space<vmem>>, vector<1x16xf32>
    %46 = vector.shape_cast %45 : vector<1x16xf32> to vector<16xf32>
    %47 = vector.shape_cast %46 : vector<16xf32> to vector<1x1x1x16xf32>
    %48 = vector.broadcast %47 : vector<1x1x1x16xf32> to vector<2x8x16x16xf32>
    %49 = arith.mulf %44, %48 : vector<2x8x16x16xf32>
    %50 = arith.addf %43, %49 : vector<2x8x16x16xf32>
    %51 = vector.extract_strided_slice %0 {offsets = [0, 2, 1, 0], sizes = [2, 8, 16, 16], strides = [1, 1, 1, 1]} : vector<2x10x18x16xf32> to vector<2x8x16x16xf32>
    %c7 = arith.constant 7 : index
    %c0_11 = arith.constant 0 : index
    %52 = vector.load %arg2[%c7, %c0_11] : memref<9x16xf32, #tpu.memory_space<vmem>>, vector<1x16xf32>
    %53 = vector.shape_cast %52 : vector<1x16xf32> to vector<16xf32>
    %54 = vector.shape_cast %53 : vector<16xf32> to vector<1x1x1x16xf32>
    %55 = vector.broadcast %54 : vector<1x1x1x16xf32> to vector<2x8x16x16xf32>
    %56 = arith.mulf %51, %55 : vector<2x8x16x16xf32>
    %57 = arith.addf %50, %56 : vector<2x8x16x16xf32>
    %58 = vector.extract_strided_slice %0 {offsets = [0, 2, 2, 0], sizes = [2, 8, 16, 16], strides = [1, 1, 1, 1]} : vector<2x10x18x16xf32> to vector<2x8x16x16xf32>
    %c8 = arith.constant 8 : index
    %c0_12 = arith.constant 0 : index
    %59 = vector.load %arg2[%c8, %c0_12] : memref<9x16xf32, #tpu.memory_space<vmem>>, vector<1x16xf32>
    %60 = vector.shape_cast %59 : vector<1x16xf32> to vector<16xf32>
    %61 = vector.shape_cast %60 : vector<16xf32> to vector<1x1x1x16xf32>
    %62 = vector.broadcast %61 : vector<1x1x1x16xf32> to vector<2x8x16x16xf32>
    %63 = arith.mulf %58, %62 : vector<2x8x16x16xf32>
    %64 = arith.addf %57, %63 : vector<2x8x16x16xf32>
    %c0_13 = arith.constant 0 : index
    %c0_14 = arith.constant 0 : index
    %c0_15 = arith.constant 0 : index
    %c0_16 = arith.constant 0 : index
    %65 = vector.load %arg3[%c0_13, %c0_14, %c0_15, %c0_16] : memref<2x8x16x16xf32, #tpu.memory_space<vmem>>, vector<2x8x16x16xf32>
    tpu.vector_store %arg3[%c0_13, %c0_14, %c0_15, %c0_16], %64 {strides = array<i32>} : memref<2x8x16x16xf32, #tpu.memory_space<vmem>>, vector<2x8x16x16xf32>,
    return
  }
  func.func @transform_0(%arg0: i32) -> (i32, i32, i32, i32) {
    %c0_i32 = arith.constant 0 : i32
    %c0_i32_0 = arith.constant 0 : i32
    %c0_i32_1 = arith.constant 0 : i32
    %c0_i32_2 = arith.constant 0 : i32
    %c0_i32_3 = arith.constant 0 : i32
    return %c0_i32, %c0_i32_0, %c0_i32_1, %c0_i32_2 : i32, i32, i32, i32
  }
  func.func @transform_1(%arg0: i32) -> (i32, i32) {
    %c0_i32 = arith.constant 0 : i32
    %c0_i32_0 = arith.constant 0 : i32
    %c0_i32_1 = arith.constant 0 : i32
    return %c0_i32, %c0_i32_0 : i32, i32
  }
  func.func @transform_2(%arg0: i32) -> (i32, i32, i32, i32) {
    %c0_i32 = arith.constant 0 : i32
    %c0_i32_0 = arith.constant 0 : i32
    %c0_i32_1 = arith.constant 0 : i32
    %c0_i32_2 = arith.constant 0 : i32
    %c0_i32_3 = arith.constant 0 : i32
    return %c0_i32, %c0_i32_0, %c0_i32_1, %c0_i32_2 : i32, i32, i32, i32
  }
}

module attributes {stable_mosaic.version = 11 : i64} {
  func.func @_matmul_bias_kernel(%arg0: i32, %arg1: memref<256x16xf32, #tpu.memory_space<vmem>>, %arg2: memref<16x128xf32, #tpu.memory_space<vmem>>, %arg3: memref<1x128xf32, #tpu.memory_space<vmem>>, %arg4: memref<256x128xf32, #tpu.memory_space<vmem>>) attributes {dimension_semantics = [#tpu.dimension_semantics<parallel>], iteration_bounds = array<i64: 1>, scalar_prefetch = 0 : i64, scratch_operands = 0 : i64, tpu.core_type = #tpu.core_type<tc>, window_params = [{transform_indices = @transform_0, window_bounds = array<i64: 256, 16>}, {pipeline_mode = #tpu.pipeline_mode<synchronous>, transform_indices = @transform_1, window_bounds = array<i64: 16, 128>}, {pipeline_mode = #tpu.pipeline_mode<synchronous>, transform_indices = @transform_2, window_bounds = array<i64: 1, 128>}, {transform_indices = @transform_3, window_bounds = array<i64: 256, 128>}]} {
    %c0 = arith.constant 0 : index
    %c0_0 = arith.constant 0 : index
    %0 = vector.load %arg1[%c0, %c0_0] : memref<256x16xf32, #tpu.memory_space<vmem>>, vector<256x16xf32>
    %1 = arith.truncf %0 : vector<256x16xf32> to vector<256x16xbf16>
    %c0_1 = arith.constant 0 : index
    %c0_2 = arith.constant 0 : index
    %2 = vector.load %arg2[%c0_1, %c0_2] : memref<16x128xf32, #tpu.memory_space<vmem>>, vector<16x128xf32>
    %3 = arith.truncf %2 : vector<16x128xf32> to vector<16x128xbf16>
    %cst = arith.constant dense<0.000000e+00> : vector<256x128xf32>
    %4 = tpu.matmul %1, %3, %cst {dimension_numbers = #tpu.dot_dimension_numbers<[1], [0], [0], [1], [0, 0, 1, 1], [], []>} : vector<256x16xbf16>, vector<16x128xbf16>, vector<256x128xf32> -> vector<256x128xf32>
    %c0_3 = arith.constant 0 : index
    %c0_4 = arith.constant 0 : index
    %5 = vector.load %arg3[%c0_3, %c0_4] : memref<1x128xf32, #tpu.memory_space<vmem>>, vector<1x128xf32>
    %6 = vector.broadcast %5 : vector<1x128xf32> to vector<256x128xf32>
    %7 = arith.addf %4, %6 : vector<256x128xf32>
    %cst_5 = arith.constant 0.000000e+00 : f32
    %8 = vector.broadcast %cst_5 : f32 to vector<256x128xf32>
    %9 = arith.maximumf %7, %8 : vector<256x128xf32>
    %c0_6 = arith.constant 0 : index
    %c0_7 = arith.constant 0 : index
    %10 = vector.load %arg4[%c0_6, %c0_7] : memref<256x128xf32, #tpu.memory_space<vmem>>, vector<256x128xf32>
    tpu.vector_store %arg4[%c0_6, %c0_7], %9 {strides = array<i32>} : memref<256x128xf32, #tpu.memory_space<vmem>>, vector<256x128xf32>,
    return
  }
  func.func @transform_0(%arg0: i32) -> (i32, i32) {
    %c0_i32 = arith.constant 0 : i32
    %c0_i32_0 = arith.constant 0 : i32
    return %arg0, %c0_i32 : i32, i32
  }
  func.func @transform_1(%arg0: i32) -> (i32, i32) {
    %c0_i32 = arith.constant 0 : i32
    %c0_i32_0 = arith.constant 0 : i32
    %c0_i32_1 = arith.constant 0 : i32
    return %c0_i32, %c0_i32_0 : i32, i32
  }
  func.func @transform_2(%arg0: i32) -> (i32, i32) {
    %c0_i32 = arith.constant 0 : i32
    %c0_i32_0 = arith.constant 0 : i32
    %c0_i32_1 = arith.constant 0 : i32
    return %c0_i32, %c0_i32_0 : i32, i32
  }
  func.func @transform_3(%arg0: i32) -> (i32, i32) {
    %c0_i32 = arith.constant 0 : i32
    %c0_i32_0 = arith.constant 0 : i32
    return %arg0, %c0_i32 : i32, i32
  }
}

module attributes {stable_mosaic.version = 11 : i64} {
  func.func @_matmul_bias_kernel(%arg0: i32, %arg1: memref<64x32xf32, #tpu.memory_space<vmem>>, %arg2: memref<32x128xf32, #tpu.memory_space<vmem>>, %arg3: memref<1x128xf32, #tpu.memory_space<vmem>>, %arg4: memref<64x128xf32, #tpu.memory_space<vmem>>) attributes {dimension_semantics = [#tpu.dimension_semantics<parallel>], iteration_bounds = array<i64: 1>, scalar_prefetch = 0 : i64, scratch_operands = 0 : i64, tpu.core_type = #tpu.core_type<tc>, window_params = [{transform_indices = @transform_0, window_bounds = array<i64: 64, 32>}, {pipeline_mode = #tpu.pipeline_mode<synchronous>, transform_indices = @transform_1, window_bounds = array<i64: 32, 128>}, {pipeline_mode = #tpu.pipeline_mode<synchronous>, transform_indices = @transform_2, window_bounds = array<i64: 1, 128>}, {transform_indices = @transform_3, window_bounds = array<i64: 64, 128>}]} {
    %c0 = arith.constant 0 : index
    %c0_0 = arith.constant 0 : index
    %0 = vector.load %arg1[%c0, %c0_0] : memref<64x32xf32, #tpu.memory_space<vmem>>, vector<64x32xf32>
    %1 = arith.truncf %0 : vector<64x32xf32> to vector<64x32xbf16>
    %c0_1 = arith.constant 0 : index
    %c0_2 = arith.constant 0 : index
    %2 = vector.load %arg2[%c0_1, %c0_2] : memref<32x128xf32, #tpu.memory_space<vmem>>, vector<32x128xf32>
    %3 = arith.truncf %2 : vector<32x128xf32> to vector<32x128xbf16>
    %cst = arith.constant dense<0.000000e+00> : vector<64x128xf32>
    %4 = tpu.matmul %1, %3, %cst {dimension_numbers = #tpu.dot_dimension_numbers<[1], [0], [0], [1], [0, 0, 1, 1], [], []>} : vector<64x32xbf16>, vector<32x128xbf16>, vector<64x128xf32> -> vector<64x128xf32>
    %c0_3 = arith.constant 0 : index
    %c0_4 = arith.constant 0 : index
    %5 = vector.load %arg3[%c0_3, %c0_4] : memref<1x128xf32, #tpu.memory_space<vmem>>, vector<1x128xf32>
    %6 = vector.broadcast %5 : vector<1x128xf32> to vector<64x128xf32>
    %7 = arith.addf %4, %6 : vector<64x128xf32>
    %cst_5 = arith.constant 0.000000e+00 : f32
    %8 = vector.broadcast %cst_5 : f32 to vector<64x128xf32>
    %9 = arith.maximumf %7, %8 : vector<64x128xf32>
    %c0_6 = arith.constant 0 : index
    %c0_7 = arith.constant 0 : index
    %10 = vector.load %arg4[%c0_6, %c0_7] : memref<64x128xf32, #tpu.memory_space<vmem>>, vector<64x128xf32>
    tpu.vector_store %arg4[%c0_6, %c0_7], %9 {strides = array<i32>} : memref<64x128xf32, #tpu.memory_space<vmem>>, vector<64x128xf32>,
    return
  }
  func.func @transform_0(%arg0: i32) -> (i32, i32) {
    %c0_i32 = arith.constant 0 : i32
    %c0_i32_0 = arith.constant 0 : i32
    return %arg0, %c0_i32 : i32, i32
  }
  func.func @transform_1(%arg0: i32) -> (i32, i32) {
    %c0_i32 = arith.constant 0 : i32
    %c0_i32_0 = arith.constant 0 : i32
    %c0_i32_1 = arith.constant 0 : i32
    return %c0_i32, %c0_i32_0 : i32, i32
  }
  func.func @transform_2(%arg0: i32) -> (i32, i32) {
    %c0_i32 = arith.constant 0 : i32
    %c0_i32_0 = arith.constant 0 : i32
    %c0_i32_1 = arith.constant 0 : i32
    return %c0_i32, %c0_i32_0 : i32, i32
  }
  func.func @transform_3(%arg0: i32) -> (i32, i32) {
    %c0_i32 = arith.constant 0 : i32
    %c0_i32_0 = arith.constant 0 : i32
    return %arg0, %c0_i32 : i32, i32
  }
}

module attributes {stable_mosaic.version = 11 : i64} {
  func.func @_avgpool_h_kernel(%arg0: i32, %arg1: memref<2x4x8x64xf32, #tpu.memory_space<vmem>>, %arg2: memref<2x8x64xf32, #tpu.memory_space<vmem>>) attributes {dimension_semantics = [#tpu.dimension_semantics<arbitrary>], iteration_bounds = array<i64: 1>, scalar_prefetch = 0 : i64, scratch_operands = 0 : i64, tpu.core_type = #tpu.core_type<tc>, window_params = [{pipeline_mode = #tpu.pipeline_mode<synchronous>, transform_indices = @transform_0, window_bounds = array<i64: 2, 4, 8, 64>}, {pipeline_mode = #tpu.pipeline_mode<synchronous>, transform_indices = @transform_1, window_bounds = array<i64: 2, 8, 64>}]} {
    %c0 = arith.constant 0 : index
    %c0_0 = arith.constant 0 : index
    %c0_1 = arith.constant 0 : index
    %c0_2 = arith.constant 0 : index
    %0 = vector.load %arg1[%c0, %c0_0, %c0_1, %c0_2] : memref<2x4x8x64xf32, #tpu.memory_space<vmem>>, vector<2x4x8x64xf32>
    %cst = arith.constant dense<0.000000e+00> : vector<2x8x64xf32>
    %1 = vector.multi_reduction <add>, %0, %cst [1] : vector<2x4x8x64xf32> to vector<2x8x64xf32>
    %cst_3 = arith.constant 4.000000e+00 : f32
    %2 = vector.broadcast %cst_3 : f32 to vector<2x8x64xf32>
    %3 = arith.divf %1, %2 : vector<2x8x64xf32>
    %c0_4 = arith.constant 0 : index
    %c0_5 = arith.constant 0 : index
    %c0_6 = arith.constant 0 : index
    %4 = vector.load %arg2[%c0_4, %c0_5, %c0_6] : memref<2x8x64xf32, #tpu.memory_space<vmem>>, vector<2x8x64xf32>
    tpu.vector_store %arg2[%c0_4, %c0_5, %c0_6], %3 {strides = array<i32>} : memref<2x8x64xf32, #tpu.memory_space<vmem>>, vector<2x8x64xf32>,
    return
  }
  func.func @transform_0(%arg0: i32) -> (i32, i32, i32, i32) {
    %c0_i32 = arith.constant 0 : i32
    %c0_i32_0 = arith.constant 0 : i32
    %c0_i32_1 = arith.constant 0 : i32
    %c0_i32_2 = arith.constant 0 : i32
    %c0_i32_3 = arith.constant 0 : i32
    return %c0_i32, %c0_i32_0, %c0_i32_1, %c0_i32_2 : i32, i32, i32, i32
  }
  func.func @transform_1(%arg0: i32) -> (i32, i32, i32) {
    %c0_i32 = arith.constant 0 : i32
    %c0_i32_0 = arith.constant 0 : i32
    %c0_i32_1 = arith.constant 0 : i32
    %c0_i32_2 = arith.constant 0 : i32
    return %c0_i32, %c0_i32_0, %c0_i32_1 : i32, i32, i32
  }
}

module attributes {stable_mosaic.version = 11 : i64} {
  func.func @_matmul_bias_kernel(%arg0: i32, %arg1: memref<16x64xf32, #tpu.memory_space<vmem>>, %arg2: memref<64x256xf32, #tpu.memory_space<vmem>>, %arg3: memref<1x256xf32, #tpu.memory_space<vmem>>, %arg4: memref<16x256xf32, #tpu.memory_space<vmem>>) attributes {dimension_semantics = [#tpu.dimension_semantics<parallel>], iteration_bounds = array<i64: 1>, scalar_prefetch = 0 : i64, scratch_operands = 0 : i64, tpu.core_type = #tpu.core_type<tc>, window_params = [{transform_indices = @transform_0, window_bounds = array<i64: 16, 64>}, {pipeline_mode = #tpu.pipeline_mode<synchronous>, transform_indices = @transform_1, window_bounds = array<i64: 64, 256>}, {pipeline_mode = #tpu.pipeline_mode<synchronous>, transform_indices = @transform_2, window_bounds = array<i64: 1, 256>}, {transform_indices = @transform_3, window_bounds = array<i64: 16, 256>}]} {
    %c0 = arith.constant 0 : index
    %c0_0 = arith.constant 0 : index
    %0 = vector.load %arg1[%c0, %c0_0] : memref<16x64xf32, #tpu.memory_space<vmem>>, vector<16x64xf32>
    %1 = arith.truncf %0 : vector<16x64xf32> to vector<16x64xbf16>
    %c0_1 = arith.constant 0 : index
    %c0_2 = arith.constant 0 : index
    %2 = vector.load %arg2[%c0_1, %c0_2] : memref<64x256xf32, #tpu.memory_space<vmem>>, vector<64x256xf32>
    %3 = arith.truncf %2 : vector<64x256xf32> to vector<64x256xbf16>
    %cst = arith.constant dense<0.000000e+00> : vector<16x256xf32>
    %4 = tpu.matmul %1, %3, %cst {dimension_numbers = #tpu.dot_dimension_numbers<[1], [0], [0], [1], [0, 0, 1, 1], [], []>} : vector<16x64xbf16>, vector<64x256xbf16>, vector<16x256xf32> -> vector<16x256xf32>
    %c0_3 = arith.constant 0 : index
    %c0_4 = arith.constant 0 : index
    %5 = vector.load %arg3[%c0_3, %c0_4] : memref<1x256xf32, #tpu.memory_space<vmem>>, vector<1x256xf32>
    %6 = vector.broadcast %5 : vector<1x256xf32> to vector<16x256xf32>
    %7 = arith.addf %4, %6 : vector<16x256xf32>
    %c0_5 = arith.constant 0 : index
    %c0_6 = arith.constant 0 : index
    %8 = vector.load %arg4[%c0_5, %c0_6] : memref<16x256xf32, #tpu.memory_space<vmem>>, vector<16x256xf32>
    tpu.vector_store %arg4[%c0_5, %c0_6], %7 {strides = array<i32>} : memref<16x256xf32, #tpu.memory_space<vmem>>, vector<16x256xf32>,
    return
  }
  func.func @transform_0(%arg0: i32) -> (i32, i32) {
    %c0_i32 = arith.constant 0 : i32
    %c0_i32_0 = arith.constant 0 : i32
    return %arg0, %c0_i32 : i32, i32
  }
  func.func @transform_1(%arg0: i32) -> (i32, i32) {
    %c0_i32 = arith.constant 0 : i32
    %c0_i32_0 = arith.constant 0 : i32
    %c0_i32_1 = arith.constant 0 : i32
    return %c0_i32, %c0_i32_0 : i32, i32
  }
  func.func @transform_2(%arg0: i32) -> (i32, i32) {
    %c0_i32 = arith.constant 0 : i32
    %c0_i32_0 = arith.constant 0 : i32
    %c0_i32_1 = arith.constant 0 : i32
    return %c0_i32, %c0_i32_0 : i32, i32
  }
  func.func @transform_3(%arg0: i32) -> (i32, i32) {
    %c0_i32 = arith.constant 0 : i32
    %c0_i32_0 = arith.constant 0 : i32
    return %arg0, %c0_i32 : i32, i32
  }
}

module attributes {stable_mosaic.version = 11 : i64} {
  func.func @_bilstm_kernel(%arg0: i32, %arg1: memref<8x2x256xf32, #tpu.memory_space<vmem>>, %arg2: memref<32x128xf32, #tpu.memory_space<vmem>>, %arg3: memref<32x128xf32, #tpu.memory_space<vmem>>, %arg4: memref<8x2x32xf32, #tpu.memory_space<vmem>>, %arg5: memref<8x2x32xf32, #tpu.memory_space<vmem>>, %arg6: memref<2x32xf32, #tpu.memory_space<vmem>>, %arg7: memref<2x32xf32, #tpu.memory_space<vmem>>, %arg8: memref<2x32xf32, #tpu.memory_space<vmem>>, %arg9: memref<2x32xf32, #tpu.memory_space<vmem>>) attributes {dimension_semantics = [#tpu.dimension_semantics<arbitrary>], iteration_bounds = array<i64: 1>, scalar_prefetch = 0 : i64, scratch_operands = 4 : i64, tpu.core_type = #tpu.core_type<tc>, window_params = [{pipeline_mode = #tpu.pipeline_mode<synchronous>, transform_indices = @transform_0, window_bounds = array<i64: 8, 2, 256>}, {pipeline_mode = #tpu.pipeline_mode<synchronous>, transform_indices = @transform_1, window_bounds = array<i64: 32, 128>}, {pipeline_mode = #tpu.pipeline_mode<synchronous>, transform_indices = @transform_2, window_bounds = array<i64: 32, 128>}, {pipeline_mode = #tpu.pipeline_mode<synchronous>, transform_indices = @transform_3, window_bounds = array<i64: 8, 2, 32>}, {pipeline_mode = #tpu.pipeline_mode<synchronous>, transform_indices = @transform_4, window_bounds = array<i64: 8, 2, 32>}]} {
    %cst = arith.constant 0.000000e+00 : f32
    %0 = vector.broadcast %cst : f32 to vector<2x32xf32>
    %c0 = arith.constant 0 : index
    %c0_0 = arith.constant 0 : index
    %1 = vector.load %arg6[%c0, %c0_0] : memref<2x32xf32, #tpu.memory_space<vmem>>, vector<2x32xf32>
    tpu.vector_store %arg6[%c0, %c0_0], %0 {strides = array<i32>} : memref<2x32xf32, #tpu.memory_space<vmem>>, vector<2x32xf32>,
    %cst_1 = arith.constant 0.000000e+00 : f32
    %2 = vector.broadcast %cst_1 : f32 to vector<2x32xf32>
    %c0_2 = arith.constant 0 : index
    %c0_3 = arith.constant 0 : index
    %3 = vector.load %arg7[%c0_2, %c0_3] : memref<2x32xf32, #tpu.memory_space<vmem>>, vector<2x32xf32>
    tpu.vector_store %arg7[%c0_2, %c0_3], %2 {strides = array<i32>} : memref<2x32xf32, #tpu.memory_space<vmem>>, vector<2x32xf32>,
    %cst_4 = arith.constant 0.000000e+00 : f32
    %4 = vector.broadcast %cst_4 : f32 to vector<2x32xf32>
    %c0_5 = arith.constant 0 : index
    %c0_6 = arith.constant 0 : index
    %5 = vector.load %arg8[%c0_5, %c0_6] : memref<2x32xf32, #tpu.memory_space<vmem>>, vector<2x32xf32>
    tpu.vector_store %arg8[%c0_5, %c0_6], %4 {strides = array<i32>} : memref<2x32xf32, #tpu.memory_space<vmem>>, vector<2x32xf32>,
    %cst_7 = arith.constant 0.000000e+00 : f32
    %6 = vector.broadcast %cst_7 : f32 to vector<2x32xf32>
    %c0_8 = arith.constant 0 : index
    %c0_9 = arith.constant 0 : index
    %7 = vector.load %arg9[%c0_8, %c0_9] : memref<2x32xf32, #tpu.memory_space<vmem>>, vector<2x32xf32>
    tpu.vector_store %arg9[%c0_8, %c0_9], %6 {strides = array<i32>} : memref<2x32xf32, #tpu.memory_space<vmem>>, vector<2x32xf32>,
    %c0_10 = arith.constant 0 : index
    %c0_11 = arith.constant 0 : index
    %8 = vector.load %arg2[%c0_10, %c0_11] : memref<32x128xf32, #tpu.memory_space<vmem>>, vector<32x128xf32>
    %9 = arith.truncf %8 : vector<32x128xf32> to vector<32x128xbf16>
    %c0_12 = arith.constant 0 : index
    %c0_13 = arith.constant 0 : index
    %10 = vector.load %arg3[%c0_12, %c0_13] : memref<32x128xf32, #tpu.memory_space<vmem>>, vector<32x128xf32>
    %11 = arith.truncf %10 : vector<32x128xf32> to vector<32x128xbf16>
    %c0_i32 = arith.constant 0 : i32
    %c1_i32 = arith.constant 1 : i32
    %12 = arith.muli %c0_i32, %c1_i32 : i32
    %c0_i32_14 = arith.constant 0 : i32
    %13 = arith.addi %c0_i32_14, %12 : i32
    %c7_i32 = arith.constant 7 : i32
    %14 = arith.subi %c7_i32, %13 : i32
    %15 = arith.index_cast %13 : i32 to index
    %c0_15 = arith.constant 0 : index
    %c0_16 = arith.constant 0 : index
    %16 = vector.load %arg1[%15, %c0_15, %c0_16] : memref<8x2x256xf32, #tpu.memory_space<vmem>>, vector<1x2x256xf32>
    %17 = vector.shape_cast %16 : vector<1x2x256xf32> to vector<2x256xf32>
    %18 = arith.index_cast %14 : i32 to index
    %c0_17 = arith.constant 0 : index
    %c0_18 = arith.constant 0 : index
    %19 = vector.load %arg1[%18, %c0_17, %c0_18] : memref<8x2x256xf32, #tpu.memory_space<vmem>>, vector<1x2x256xf32>
    %20 = vector.shape_cast %19 : vector<1x2x256xf32> to vector<2x256xf32>
    %21 = vector.extract_strided_slice %17 {offsets = [0, 0], sizes = [2, 128], strides = [1, 1]} : vector<2x256xf32> to vector<2x128xf32>
    %c0_19 = arith.constant 0 : index
    %c0_20 = arith.constant 0 : index
    %22 = vector.load %arg6[%c0_19, %c0_20] : memref<2x32xf32, #tpu.memory_space<vmem>>, vector<2x32xf32>
    %23 = arith.truncf %22 : vector<2x32xf32> to vector<2x32xbf16>
    %cst_21 = arith.constant dense<0.000000e+00> : vector<2x128xf32>
    %24 = tpu.matmul %23, %9, %cst_21 {dimension_numbers = #tpu.dot_dimension_numbers<[1], [0], [0], [1], [0, 0, 1, 1], [], []>} : vector<2x32xbf16>, vector<32x128xbf16>, vector<2x128xf32> -> vector<2x128xf32>
    %25 = arith.addf %21, %24 : vector<2x128xf32>
    %26 = vector.extract_strided_slice %20 {offsets = [0, 128], sizes = [2, 128], strides = [1, 1]} : vector<2x256xf32> to vector<2x128xf32>
    %c0_22 = arith.constant 0 : index
    %c0_23 = arith.constant 0 : index
    %27 = vector.load %arg8[%c0_22, %c0_23] : memref<2x32xf32, #tpu.memory_space<vmem>>, vector<2x32xf32>
    %28 = arith.truncf %27 : vector<2x32xf32> to vector<2x32xbf16>
    %cst_24 = arith.constant dense<0.000000e+00> : vector<2x128xf32>
    %29 = tpu.matmul %28, %11, %cst_24 {dimension_numbers = #tpu.dot_dimension_numbers<[1], [0], [0], [1], [0, 0, 1, 1], [], []>} : vector<2x32xbf16>, vector<32x128xbf16>, vector<2x128xf32> -> vector<2x128xf32>
    %30 = arith.addf %26, %29 : vector<2x128xf32>
    %c0_25 = arith.constant 0 : index
    %c0_26 = arith.constant 0 : index
    %31 = vector.load %arg7[%c0_25, %c0_26] : memref<2x32xf32, #tpu.memory_space<vmem>>, vector<2x32xf32>
    %32 = vector.extract_strided_slice %25 {offsets = [0, 0], sizes = [2, 32], strides = [1, 1]} : vector<2x128xf32> to vector<2x32xf32>
    %33 = arith.negf %32 : vector<2x32xf32>
    %34 = math.exp %33 : vector<2x32xf32>
    %cst_27 = arith.constant 1.000000e+00 : f32
    %35 = vector.broadcast %cst_27 : f32 to vector<2x32xf32>
    %36 = arith.addf %35, %34 : vector<2x32xf32>
    %37 = arith.divf %35, %36 : vector<2x32xf32>
    %38 = vector.extract_strided_slice %25 {offsets = [0, 32], sizes = [2, 32], strides = [1, 1]} : vector<2x128xf32> to vector<2x32xf32>
    %39 = arith.negf %38 : vector<2x32xf32>
    %40 = math.exp %39 : vector<2x32xf32>
    %cst_28 = arith.constant 1.000000e+00 : f32
    %41 = vector.broadcast %cst_28 : f32 to vector<2x32xf32>
    %42 = arith.addf %41, %40 : vector<2x32xf32>
    %43 = arith.divf %41, %42 : vector<2x32xf32>
    %44 = vector.extract_strided_slice %25 {offsets = [0, 64], sizes = [2, 32], strides = [1, 1]} : vector<2x128xf32> to vector<2x32xf32>
    %45 = math.tanh %44 : vector<2x32xf32>
    %46 = vector.extract_strided_slice %25 {offsets = [0, 96], sizes = [2, 32], strides = [1, 1]} : vector<2x128xf32> to vector<2x32xf32>
    %47 = arith.negf %46 : vector<2x32xf32>
    %48 = math.exp %47 : vector<2x32xf32>
    %cst_29 = arith.constant 1.000000e+00 : f32
    %49 = vector.broadcast %cst_29 : f32 to vector<2x32xf32>
    %50 = arith.addf %49, %48 : vector<2x32xf32>
    %51 = arith.divf %49, %50 : vector<2x32xf32>
    %52 = arith.mulf %43, %31 : vector<2x32xf32>
    %53 = arith.mulf %37, %45 : vector<2x32xf32>
    %54 = arith.addf %52, %53 : vector<2x32xf32>
    %55 = math.tanh %54 : vector<2x32xf32>
    %56 = arith.mulf %51, %55 : vector<2x32xf32>
    %c0_30 = arith.constant 0 : index
    %c0_31 = arith.constant 0 : index
    %57 = vector.load %arg9[%c0_30, %c0_31] : memref<2x32xf32, #tpu.memory_space<vmem>>, vector<2x32xf32>
    %58 = vector.extract_strided_slice %30 {offsets = [0, 0], sizes = [2, 32], strides = [1, 1]} : vector<2x128xf32> to vector<2x32xf32>
    %59 = arith.negf %58 : vector<2x32xf32>
    %60 = math.exp %59 : vector<2x32xf32>
    %cst_32 = arith.constant 1.000000e+00 : f32
    %61 = vector.broadcast %cst_32 : f32 to vector<2x32xf32>
    %62 = arith.addf %61, %60 : vector<2x32xf32>
    %63 = arith.divf %61, %62 : vector<2x32xf32>
    %64 = vector.extract_strided_slice %30 {offsets = [0, 32], sizes = [2, 32], strides = [1, 1]} : vector<2x128xf32> to vector<2x32xf32>
    %65 = arith.negf %64 : vector<2x32xf32>
    %66 = math.exp %65 : vector<2x32xf32>
    %cst_33 = arith.constant 1.000000e+00 : f32
    %67 = vector.broadcast %cst_33 : f32 to vector<2x32xf32>
    %68 = arith.addf %67, %66 : vector<2x32xf32>
    %69 = arith.divf %67, %68 : vector<2x32xf32>
    %70 = vector.extract_strided_slice %30 {offsets = [0, 64], sizes = [2, 32], strides = [1, 1]} : vector<2x128xf32> to vector<2x32xf32>
    %71 = math.tanh %70 : vector<2x32xf32>
    %72 = vector.extract_strided_slice %30 {offsets = [0, 96], sizes = [2, 32], strides = [1, 1]} : vector<2x128xf32> to vector<2x32xf32>
    %73 = arith.negf %72 : vector<2x32xf32>
    %74 = math.exp %73 : vector<2x32xf32>
    %cst_34 = arith.constant 1.000000e+00 : f32
    %75 = vector.broadcast %cst_34 : f32 to vector<2x32xf32>
    %76 = arith.addf %75, %74 : vector<2x32xf32>
    %77 = arith.divf %75, %76 : vector<2x32xf32>
    %78 = arith.mulf %69, %57 : vector<2x32xf32>
    %79 = arith.mulf %63, %71 : vector<2x32xf32>
    %80 = arith.addf %78, %79 : vector<2x32xf32>
    %81 = math.tanh %80 : vector<2x32xf32>
    %82 = arith.mulf %77, %81 : vector<2x32xf32>
    %c0_35 = arith.constant 0 : index
    %c0_36 = arith.constant 0 : index
    %83 = vector.load %arg6[%c0_35, %c0_36] : memref<2x32xf32, #tpu.memory_space<vmem>>, vector<2x32xf32>
    tpu.vector_store %arg6[%c0_35, %c0_36], %56 {strides = array<i32>} : memref<2x32xf32, #tpu.memory_space<vmem>>, vector<2x32xf32>,
    %c0_37 = arith.constant 0 : index
    %c0_38 = arith.constant 0 : index
    %84 = vector.load %arg7[%c0_37, %c0_38] : memref<2x32xf32, #tpu.memory_space<vmem>>, vector<2x32xf32>
    tpu.vector_store %arg7[%c0_37, %c0_38], %54 {strides = array<i32>} : memref<2x32xf32, #tpu.memory_space<vmem>>, vector<2x32xf32>,
    %c0_39 = arith.constant 0 : index
    %c0_40 = arith.constant 0 : index
    %85 = vector.load %arg8[%c0_39, %c0_40] : memref<2x32xf32, #tpu.memory_space<vmem>>, vector<2x32xf32>
    tpu.vector_store %arg8[%c0_39, %c0_40], %82 {strides = array<i32>} : memref<2x32xf32, #tpu.memory_space<vmem>>, vector<2x32xf32>,
    %c0_41 = arith.constant 0 : index
    %c0_42 = arith.constant 0 : index
    %86 = vector.load %arg9[%c0_41, %c0_42] : memref<2x32xf32, #tpu.memory_space<vmem>>, vector<2x32xf32>
    tpu.vector_store %arg9[%c0_41, %c0_42], %80 {strides = array<i32>} : memref<2x32xf32, #tpu.memory_space<vmem>>, vector<2x32xf32>,
    %87 = arith.index_cast %13 : i32 to index
    %c0_43 = arith.constant 0 : index
    %c0_44 = arith.constant 0 : index
    %88 = vector.load %arg4[%87, %c0_43, %c0_44] : memref<8x2x32xf32, #tpu.memory_space<vmem>>, vector<1x2x32xf32>
    %89 = vector.shape_cast %88 : vector<1x2x32xf32> to vector<2x32xf32>
    %90 = vector.shape_cast %56 : vector<2x32xf32> to vector<1x2x32xf32>
    tpu.vector_store %arg4[%87, %c0_43, %c0_44], %90 {strides = array<i32>} : memref<8x2x32xf32, #tpu.memory_space<vmem>>, vector<1x2x32xf32>,
    %91 = arith.index_cast %14 : i32 to index
    %c0_45 = arith.constant 0 : index
    %c0_46 = arith.constant 0 : index
    %92 = vector.load %arg5[%91, %c0_45, %c0_46] : memref<8x2x32xf32, #tpu.memory_space<vmem>>, vector<1x2x32xf32>
    %93 = vector.shape_cast %92 : vector<1x2x32xf32> to vector<2x32xf32>
    %94 = vector.shape_cast %82 : vector<2x32xf32> to vector<1x2x32xf32>
    tpu.vector_store %arg5[%91, %c0_45, %c0_46], %94 {strides = array<i32>} : memref<8x2x32xf32, #tpu.memory_space<vmem>>, vector<1x2x32xf32>,
    %c1_i32_47 = arith.constant 1 : i32
    %c1_i32_48 = arith.constant 1 : i32
    %95 = arith.muli %c1_i32_47, %c1_i32_48 : i32
    %c0_i32_49 = arith.constant 0 : i32
    %96 = arith.addi %c0_i32_49, %95 : i32
    %c7_i32_50 = arith.constant 7 : i32
    %97 = arith.subi %c7_i32_50, %96 : i32
    %98 = arith.index_cast %96 : i32 to index
    %c0_51 = arith.constant 0 : index
    %c0_52 = arith.constant 0 : index
    %99 = vector.load %arg1[%98, %c0_51, %c0_52] : memref<8x2x256xf32, #tpu.memory_space<vmem>>, vector<1x2x256xf32>
    %100 = vector.shape_cast %99 : vector<1x2x256xf32> to vector<2x256xf32>
    %101 = arith.index_cast %97 : i32 to index
    %c0_53 = arith.constant 0 : index
    %c0_54 = arith.constant 0 : index
    %102 = vector.load %arg1[%101, %c0_53, %c0_54] : memref<8x2x256xf32, #tpu.memory_space<vmem>>, vector<1x2x256xf32>
    %103 = vector.shape_cast %102 : vector<1x2x256xf32> to vector<2x256xf32>
    %104 = vector.extract_strided_slice %100 {offsets = [0, 0], sizes = [2, 128], strides = [1, 1]} : vector<2x256xf32> to vector<2x128xf32>
    %c0_55 = arith.constant 0 : index
    %c0_56 = arith.constant 0 : index
    %105 = vector.load %arg6[%c0_55, %c0_56] : memref<2x32xf32, #tpu.memory_space<vmem>>, vector<2x32xf32>
    %106 = arith.truncf %105 : vector<2x32xf32> to vector<2x32xbf16>
    %cst_57 = arith.constant dense<0.000000e+00> : vector<2x128xf32>
    %107 = tpu.matmul %106, %9, %cst_57 {dimension_numbers = #tpu.dot_dimension_numbers<[1], [0], [0], [1], [0, 0, 1, 1], [], []>} : vector<2x32xbf16>, vector<32x128xbf16>, vector<2x128xf32> -> vector<2x128xf32>
    %108 = arith.addf %104, %107 : vector<2x128xf32>
    %109 = vector.extract_strided_slice %103 {offsets = [0, 128], sizes = [2, 128], strides = [1, 1]} : vector<2x256xf32> to vector<2x128xf32>
    %c0_58 = arith.constant 0 : index
    %c0_59 = arith.constant 0 : index
    %110 = vector.load %arg8[%c0_58, %c0_59] : memref<2x32xf32, #tpu.memory_space<vmem>>, vector<2x32xf32>
    %111 = arith.truncf %110 : vector<2x32xf32> to vector<2x32xbf16>
    %cst_60 = arith.constant dense<0.000000e+00> : vector<2x128xf32>
    %112 = tpu.matmul %111, %11, %cst_60 {dimension_numbers = #tpu.dot_dimension_numbers<[1], [0], [0], [1], [0, 0, 1, 1], [], []>} : vector<2x32xbf16>, vector<32x128xbf16>, vector<2x128xf32> -> vector<2x128xf32>
    %113 = arith.addf %109, %112 : vector<2x128xf32>
    %c0_61 = arith.constant 0 : index
    %c0_62 = arith.constant 0 : index
    %114 = vector.load %arg7[%c0_61, %c0_62] : memref<2x32xf32, #tpu.memory_space<vmem>>, vector<2x32xf32>
    %115 = vector.extract_strided_slice %108 {offsets = [0, 0], sizes = [2, 32], strides = [1, 1]} : vector<2x128xf32> to vector<2x32xf32>
    %116 = arith.negf %115 : vector<2x32xf32>
    %117 = math.exp %116 : vector<2x32xf32>
    %cst_63 = arith.constant 1.000000e+00 : f32
    %118 = vector.broadcast %cst_63 : f32 to vector<2x32xf32>
    %119 = arith.addf %118, %117 : vector<2x32xf32>
    %120 = arith.divf %118, %119 : vector<2x32xf32>
    %121 = vector.extract_strided_slice %108 {offsets = [0, 32], sizes = [2, 32], strides = [1, 1]} : vector<2x128xf32> to vector<2x32xf32>
    %122 = arith.negf %121 : vector<2x32xf32>
    %123 = math.exp %122 : vector<2x32xf32>
    %cst_64 = arith.constant 1.000000e+00 : f32
    %124 = vector.broadcast %cst_64 : f32 to vector<2x32xf32>
    %125 = arith.addf %124, %123 : vector<2x32xf32>
    %126 = arith.divf %124, %125 : vector<2x32xf32>
    %127 = vector.extract_strided_slice %108 {offsets = [0, 64], sizes = [2, 32], strides = [1, 1]} : vector<2x128xf32> to vector<2x32xf32>
    %128 = math.tanh %127 : vector<2x32xf32>
    %129 = vector.extract_strided_slice %108 {offsets = [0, 96], sizes = [2, 32], strides = [1, 1]} : vector<2x128xf32> to vector<2x32xf32>
    %130 = arith.negf %129 : vector<2x32xf32>
    %131 = math.exp %130 : vector<2x32xf32>
    %cst_65 = arith.constant 1.000000e+00 : f32
    %132 = vector.broadcast %cst_65 : f32 to vector<2x32xf32>
    %133 = arith.addf %132, %131 : vector<2x32xf32>
    %134 = arith.divf %132, %133 : vector<2x32xf32>
    %135 = arith.mulf %126, %114 : vector<2x32xf32>
    %136 = arith.mulf %120, %128 : vector<2x32xf32>
    %137 = arith.addf %135, %136 : vector<2x32xf32>
    %138 = math.tanh %137 : vector<2x32xf32>
    %139 = arith.mulf %134, %138 : vector<2x32xf32>
    %c0_66 = arith.constant 0 : index
    %c0_67 = arith.constant 0 : index
    %140 = vector.load %arg9[%c0_66, %c0_67] : memref<2x32xf32, #tpu.memory_space<vmem>>, vector<2x32xf32>
    %141 = vector.extract_strided_slice %113 {offsets = [0, 0], sizes = [2, 32], strides = [1, 1]} : vector<2x128xf32> to vector<2x32xf32>
    %142 = arith.negf %141 : vector<2x32xf32>
    %143 = math.exp %142 : vector<2x32xf32>
    %cst_68 = arith.constant 1.000000e+00 : f32
    %144 = vector.broadcast %cst_68 : f32 to vector<2x32xf32>
    %145 = arith.addf %144, %143 : vector<2x32xf32>
    %146 = arith.divf %144, %145 : vector<2x32xf32>
    %147 = vector.extract_strided_slice %113 {offsets = [0, 32], sizes = [2, 32], strides = [1, 1]} : vector<2x128xf32> to vector<2x32xf32>
    %148 = arith.negf %147 : vector<2x32xf32>
    %149 = math.exp %148 : vector<2x32xf32>
    %cst_69 = arith.constant 1.000000e+00 : f32
    %150 = vector.broadcast %cst_69 : f32 to vector<2x32xf32>
    %151 = arith.addf %150, %149 : vector<2x32xf32>
    %152 = arith.divf %150, %151 : vector<2x32xf32>
    %153 = vector.extract_strided_slice %113 {offsets = [0, 64], sizes = [2, 32], strides = [1, 1]} : vector<2x128xf32> to vector<2x32xf32>
    %154 = math.tanh %153 : vector<2x32xf32>
    %155 = vector.extract_strided_slice %113 {offsets = [0, 96], sizes = [2, 32], strides = [1, 1]} : vector<2x128xf32> to vector<2x32xf32>
    %156 = arith.negf %155 : vector<2x32xf32>
    %157 = math.exp %156 : vector<2x32xf32>
    %cst_70 = arith.constant 1.000000e+00 : f32
    %158 = vector.broadcast %cst_70 : f32 to vector<2x32xf32>
    %159 = arith.addf %158, %157 : vector<2x32xf32>
    %160 = arith.divf %158, %159 : vector<2x32xf32>
    %161 = arith.mulf %152, %140 : vector<2x32xf32>
    %162 = arith.mulf %146, %154 : vector<2x32xf32>
    %163 = arith.addf %161, %162 : vector<2x32xf32>
    %164 = math.tanh %163 : vector<2x32xf32>
    %165 = arith.mulf %160, %164 : vector<2x32xf32>
    %c0_71 = arith.constant 0 : index
    %c0_72 = arith.constant 0 : index
    %166 = vector.load %arg6[%c0_71, %c0_72] : memref<2x32xf32, #tpu.memory_space<vmem>>, vector<2x32xf32>
    tpu.vector_store %arg6[%c0_71, %c0_72], %139 {strides = array<i32>} : memref<2x32xf32, #tpu.memory_space<vmem>>, vector<2x32xf32>,
    %c0_73 = arith.constant 0 : index
    %c0_74 = arith.constant 0 : index
    %167 = vector.load %arg7[%c0_73, %c0_74] : memref<2x32xf32, #tpu.memory_space<vmem>>, vector<2x32xf32>
    tpu.vector_store %arg7[%c0_73, %c0_74], %137 {strides = array<i32>} : memref<2x32xf32, #tpu.memory_space<vmem>>, vector<2x32xf32>,
    %c0_75 = arith.constant 0 : index
    %c0_76 = arith.constant 0 : index
    %168 = vector.load %arg8[%c0_75, %c0_76] : memref<2x32xf32, #tpu.memory_space<vmem>>, vector<2x32xf32>
    tpu.vector_store %arg8[%c0_75, %c0_76], %165 {strides = array<i32>} : memref<2x32xf32, #tpu.memory_space<vmem>>, vector<2x32xf32>,
    %c0_77 = arith.constant 0 : index
    %c0_78 = arith.constant 0 : index
    %169 = vector.load %arg9[%c0_77, %c0_78] : memref<2x32xf32, #tpu.memory_space<vmem>>, vector<2x32xf32>
    tpu.vector_store %arg9[%c0_77, %c0_78], %163 {strides = array<i32>} : memref<2x32xf32, #tpu.memory_space<vmem>>, vector<2x32xf32>,
    %170 = arith.index_cast %96 : i32 to index
    %c0_79 = arith.constant 0 : index
    %c0_80 = arith.constant 0 : index
    %171 = vector.load %arg4[%170, %c0_79, %c0_80] : memref<8x2x32xf32, #tpu.memory_space<vmem>>, vector<1x2x32xf32>
    %172 = vector.shape_cast %171 : vector<1x2x32xf32> to vector<2x32xf32>
    %173 = vector.shape_cast %139 : vector<2x32xf32> to vector<1x2x32xf32>
    tpu.vector_store %arg4[%170, %c0_79, %c0_80], %173 {strides = array<i32>} : memref<8x2x32xf32, #tpu.memory_space<vmem>>, vector<1x2x32xf32>,
    %174 = arith.index_cast %97 : i32 to index
    %c0_81 = arith.constant 0 : index
    %c0_82 = arith.constant 0 : index
    %175 = vector.load %arg5[%174, %c0_81, %c0_82] : memref<8x2x32xf32, #tpu.memory_space<vmem>>, vector<1x2x32xf32>
    %176 = vector.shape_cast %175 : vector<1x2x32xf32> to vector<2x32xf32>
    %177 = vector.shape_cast %165 : vector<2x32xf32> to vector<1x2x32xf32>
    tpu.vector_store %arg5[%174, %c0_81, %c0_82], %177 {strides = array<i32>} : memref<8x2x32xf32, #tpu.memory_space<vmem>>, vector<1x2x32xf32>,
    %c2_i32 = arith.constant 2 : i32
    %c1_i32_83 = arith.constant 1 : i32
    %178 = arith.muli %c2_i32, %c1_i32_83 : i32
    %c0_i32_84 = arith.constant 0 : i32
    %179 = arith.addi %c0_i32_84, %178 : i32
    %c7_i32_85 = arith.constant 7 : i32
    %180 = arith.subi %c7_i32_85, %179 : i32
    %181 = arith.index_cast %179 : i32 to index
    %c0_86 = arith.constant 0 : index
    %c0_87 = arith.constant 0 : index
    %182 = vector.load %arg1[%181, %c0_86, %c0_87] : memref<8x2x256xf32, #tpu.memory_space<vmem>>, vector<1x2x256xf32>
    %183 = vector.shape_cast %182 : vector<1x2x256xf32> to vector<2x256xf32>
    %184 = arith.index_cast %180 : i32 to index
    %c0_88 = arith.constant 0 : index
    %c0_89 = arith.constant 0 : index
    %185 = vector.load %arg1[%184, %c0_88, %c0_89] : memref<8x2x256xf32, #tpu.memory_space<vmem>>, vector<1x2x256xf32>
    %186 = vector.shape_cast %185 : vector<1x2x256xf32> to vector<2x256xf32>
    %187 = vector.extract_strided_slice %183 {offsets = [0, 0], sizes = [2, 128], strides = [1, 1]} : vector<2x256xf32> to vector<2x128xf32>
    %c0_90 = arith.constant 0 : index
    %c0_91 = arith.constant 0 : index
    %188 = vector.load %arg6[%c0_90, %c0_91] : memref<2x32xf32, #tpu.memory_space<vmem>>, vector<2x32xf32>
    %189 = arith.truncf %188 : vector<2x32xf32> to vector<2x32xbf16>
    %cst_92 = arith.constant dense<0.000000e+00> : vector<2x128xf32>
    %190 = tpu.matmul %189, %9, %cst_92 {dimension_numbers = #tpu.dot_dimension_numbers<[1], [0], [0], [1], [0, 0, 1, 1], [], []>} : vector<2x32xbf16>, vector<32x128xbf16>, vector<2x128xf32> -> vector<2x128xf32>
    %191 = arith.addf %187, %190 : vector<2x128xf32>
    %192 = vector.extract_strided_slice %186 {offsets = [0, 128], sizes = [2, 128], strides = [1, 1]} : vector<2x256xf32> to vector<2x128xf32>
    %c0_93 = arith.constant 0 : index
    %c0_94 = arith.constant 0 : index
    %193 = vector.load %arg8[%c0_93, %c0_94] : memref<2x32xf32, #tpu.memory_space<vmem>>, vector<2x32xf32>
    %194 = arith.truncf %193 : vector<2x32xf32> to vector<2x32xbf16>
    %cst_95 = arith.constant dense<0.000000e+00> : vector<2x128xf32>
    %195 = tpu.matmul %194, %11, %cst_95 {dimension_numbers = #tpu.dot_dimension_numbers<[1], [0], [0], [1], [0, 0, 1, 1], [], []>} : vector<2x32xbf16>, vector<32x128xbf16>, vector<2x128xf32> -> vector<2x128xf32>
    %196 = arith.addf %192, %195 : vector<2x128xf32>
    %c0_96 = arith.constant 0 : index
    %c0_97 = arith.constant 0 : index
    %197 = vector.load %arg7[%c0_96, %c0_97] : memref<2x32xf32, #tpu.memory_space<vmem>>, vector<2x32xf32>
    %198 = vector.extract_strided_slice %191 {offsets = [0, 0], sizes = [2, 32], strides = [1, 1]} : vector<2x128xf32> to vector<2x32xf32>
    %199 = arith.negf %198 : vector<2x32xf32>
    %200 = math.exp %199 : vector<2x32xf32>
    %cst_98 = arith.constant 1.000000e+00 : f32
    %201 = vector.broadcast %cst_98 : f32 to vector<2x32xf32>
    %202 = arith.addf %201, %200 : vector<2x32xf32>
    %203 = arith.divf %201, %202 : vector<2x32xf32>
    %204 = vector.extract_strided_slice %191 {offsets = [0, 32], sizes = [2, 32], strides = [1, 1]} : vector<2x128xf32> to vector<2x32xf32>
    %205 = arith.negf %204 : vector<2x32xf32>
    %206 = math.exp %205 : vector<2x32xf32>
    %cst_99 = arith.constant 1.000000e+00 : f32
    %207 = vector.broadcast %cst_99 : f32 to vector<2x32xf32>
    %208 = arith.addf %207, %206 : vector<2x32xf32>
    %209 = arith.divf %207, %208 : vector<2x32xf32>
    %210 = vector.extract_strided_slice %191 {offsets = [0, 64], sizes = [2, 32], strides = [1, 1]} : vector<2x128xf32> to vector<2x32xf32>
    %211 = math.tanh %210 : vector<2x32xf32>
    %212 = vector.extract_strided_slice %191 {offsets = [0, 96], sizes = [2, 32], strides = [1, 1]} : vector<2x128xf32> to vector<2x32xf32>
    %213 = arith.negf %212 : vector<2x32xf32>
    %214 = math.exp %213 : vector<2x32xf32>
    %cst_100 = arith.constant 1.000000e+00 : f32
    %215 = vector.broadcast %cst_100 : f32 to vector<2x32xf32>
    %216 = arith.addf %215, %214 : vector<2x32xf32>
    %217 = arith.divf %215, %216 : vector<2x32xf32>
    %218 = arith.mulf %209, %197 : vector<2x32xf32>
    %219 = arith.mulf %203, %211 : vector<2x32xf32>
    %220 = arith.addf %218, %219 : vector<2x32xf32>
    %221 = math.tanh %220 : vector<2x32xf32>
    %222 = arith.mulf %217, %221 : vector<2x32xf32>
    %c0_101 = arith.constant 0 : index
    %c0_102 = arith.constant 0 : index
    %223 = vector.load %arg9[%c0_101, %c0_102] : memref<2x32xf32, #tpu.memory_space<vmem>>, vector<2x32xf32>
    %224 = vector.extract_strided_slice %196 {offsets = [0, 0], sizes = [2, 32], strides = [1, 1]} : vector<2x128xf32> to vector<2x32xf32>
    %225 = arith.negf %224 : vector<2x32xf32>
    %226 = math.exp %225 : vector<2x32xf32>
    %cst_103 = arith.constant 1.000000e+00 : f32
    %227 = vector.broadcast %cst_103 : f32 to vector<2x32xf32>
    %228 = arith.addf %227, %226 : vector<2x32xf32>
    %229 = arith.divf %227, %228 : vector<2x32xf32>
    %230 = vector.extract_strided_slice %196 {offsets = [0, 32], sizes = [2, 32], strides = [1, 1]} : vector<2x128xf32> to vector<2x32xf32>
    %231 = arith.negf %230 : vector<2x32xf32>
    %232 = math.exp %231 : vector<2x32xf32>
    %cst_104 = arith.constant 1.000000e+00 : f32
    %233 = vector.broadcast %cst_104 : f32 to vector<2x32xf32>
    %234 = arith.addf %233, %232 : vector<2x32xf32>
    %235 = arith.divf %233, %234 : vector<2x32xf32>
    %236 = vector.extract_strided_slice %196 {offsets = [0, 64], sizes = [2, 32], strides = [1, 1]} : vector<2x128xf32> to vector<2x32xf32>
    %237 = math.tanh %236 : vector<2x32xf32>
    %238 = vector.extract_strided_slice %196 {offsets = [0, 96], sizes = [2, 32], strides = [1, 1]} : vector<2x128xf32> to vector<2x32xf32>
    %239 = arith.negf %238 : vector<2x32xf32>
    %240 = math.exp %239 : vector<2x32xf32>
    %cst_105 = arith.constant 1.000000e+00 : f32
    %241 = vector.broadcast %cst_105 : f32 to vector<2x32xf32>
    %242 = arith.addf %241, %240 : vector<2x32xf32>
    %243 = arith.divf %241, %242 : vector<2x32xf32>
    %244 = arith.mulf %235, %223 : vector<2x32xf32>
    %245 = arith.mulf %229, %237 : vector<2x32xf32>
    %246 = arith.addf %244, %245 : vector<2x32xf32>
    %247 = math.tanh %246 : vector<2x32xf32>
    %248 = arith.mulf %243, %247 : vector<2x32xf32>
    %c0_106 = arith.constant 0 : index
    %c0_107 = arith.constant 0 : index
    %249 = vector.load %arg6[%c0_106, %c0_107] : memref<2x32xf32, #tpu.memory_space<vmem>>, vector<2x32xf32>
    tpu.vector_store %arg6[%c0_106, %c0_107], %222 {strides = array<i32>} : memref<2x32xf32, #tpu.memory_space<vmem>>, vector<2x32xf32>,
    %c0_108 = arith.constant 0 : index
    %c0_109 = arith.constant 0 : index
    %250 = vector.load %arg7[%c0_108, %c0_109] : memref<2x32xf32, #tpu.memory_space<vmem>>, vector<2x32xf32>
    tpu.vector_store %arg7[%c0_108, %c0_109], %220 {strides = array<i32>} : memref<2x32xf32, #tpu.memory_space<vmem>>, vector<2x32xf32>,
    %c0_110 = arith.constant 0 : index
    %c0_111 = arith.constant 0 : index
    %251 = vector.load %arg8[%c0_110, %c0_111] : memref<2x32xf32, #tpu.memory_space<vmem>>, vector<2x32xf32>
    tpu.vector_store %arg8[%c0_110, %c0_111], %248 {strides = array<i32>} : memref<2x32xf32, #tpu.memory_space<vmem>>, vector<2x32xf32>,
    %c0_112 = arith.constant 0 : index
    %c0_113 = arith.constant 0 : index
    %252 = vector.load %arg9[%c0_112, %c0_113] : memref<2x32xf32, #tpu.memory_space<vmem>>, vector<2x32xf32>
    tpu.vector_store %arg9[%c0_112, %c0_113], %246 {strides = array<i32>} : memref<2x32xf32, #tpu.memory_space<vmem>>, vector<2x32xf32>,
    %253 = arith.index_cast %179 : i32 to index
    %c0_114 = arith.constant 0 : index
    %c0_115 = arith.constant 0 : index
    %254 = vector.load %arg4[%253, %c0_114, %c0_115] : memref<8x2x32xf32, #tpu.memory_space<vmem>>, vector<1x2x32xf32>
    %255 = vector.shape_cast %254 : vector<1x2x32xf32> to vector<2x32xf32>
    %256 = vector.shape_cast %222 : vector<2x32xf32> to vector<1x2x32xf32>
    tpu.vector_store %arg4[%253, %c0_114, %c0_115], %256 {strides = array<i32>} : memref<8x2x32xf32, #tpu.memory_space<vmem>>, vector<1x2x32xf32>,
    %257 = arith.index_cast %180 : i32 to index
    %c0_116 = arith.constant 0 : index
    %c0_117 = arith.constant 0 : index
    %258 = vector.load %arg5[%257, %c0_116, %c0_117] : memref<8x2x32xf32, #tpu.memory_space<vmem>>, vector<1x2x32xf32>
    %259 = vector.shape_cast %258 : vector<1x2x32xf32> to vector<2x32xf32>
    %260 = vector.shape_cast %248 : vector<2x32xf32> to vector<1x2x32xf32>
    tpu.vector_store %arg5[%257, %c0_116, %c0_117], %260 {strides = array<i32>} : memref<8x2x32xf32, #tpu.memory_space<vmem>>, vector<1x2x32xf32>,
    %c3_i32 = arith.constant 3 : i32
    %c1_i32_118 = arith.constant 1 : i32
    %261 = arith.muli %c3_i32, %c1_i32_118 : i32
    %c0_i32_119 = arith.constant 0 : i32
    %262 = arith.addi %c0_i32_119, %261 : i32
    %c7_i32_120 = arith.constant 7 : i32
    %263 = arith.subi %c7_i32_120, %262 : i32
    %264 = arith.index_cast %262 : i32 to index
    %c0_121 = arith.constant 0 : index
    %c0_122 = arith.constant 0 : index
    %265 = vector.load %arg1[%264, %c0_121, %c0_122] : memref<8x2x256xf32, #tpu.memory_space<vmem>>, vector<1x2x256xf32>
    %266 = vector.shape_cast %265 : vector<1x2x256xf32> to vector<2x256xf32>
    %267 = arith.index_cast %263 : i32 to index
    %c0_123 = arith.constant 0 : index
    %c0_124 = arith.constant 0 : index
    %268 = vector.load %arg1[%267, %c0_123, %c0_124] : memref<8x2x256xf32, #tpu.memory_space<vmem>>, vector<1x2x256xf32>
    %269 = vector.shape_cast %268 : vector<1x2x256xf32> to vector<2x256xf32>
    %270 = vector.extract_strided_slice %266 {offsets = [0, 0], sizes = [2, 128], strides = [1, 1]} : vector<2x256xf32> to vector<2x128xf32>
    %c0_125 = arith.constant 0 : index
    %c0_126 = arith.constant 0 : index
    %271 = vector.load %arg6[%c0_125, %c0_126] : memref<2x32xf32, #tpu.memory_space<vmem>>, vector<2x32xf32>
    %272 = arith.truncf %271 : vector<2x32xf32> to vector<2x32xbf16>
    %cst_127 = arith.constant dense<0.000000e+00> : vector<2x128xf32>
    %273 = tpu.matmul %272, %9, %cst_127 {dimension_numbers = #tpu.dot_dimension_numbers<[1], [0], [0], [1], [0, 0, 1, 1], [], []>} : vector<2x32xbf16>, vector<32x128xbf16>, vector<2x128xf32> -> vector<2x128xf32>
    %274 = arith.addf %270, %273 : vector<2x128xf32>
    %275 = vector.extract_strided_slice %269 {offsets = [0, 128], sizes = [2, 128], strides = [1, 1]} : vector<2x256xf32> to vector<2x128xf32>
    %c0_128 = arith.constant 0 : index
    %c0_129 = arith.constant 0 : index
    %276 = vector.load %arg8[%c0_128, %c0_129] : memref<2x32xf32, #tpu.memory_space<vmem>>, vector<2x32xf32>
    %277 = arith.truncf %276 : vector<2x32xf32> to vector<2x32xbf16>
    %cst_130 = arith.constant dense<0.000000e+00> : vector<2x128xf32>
    %278 = tpu.matmul %277, %11, %cst_130 {dimension_numbers = #tpu.dot_dimension_numbers<[1], [0], [0], [1], [0, 0, 1, 1], [], []>} : vector<2x32xbf16>, vector<32x128xbf16>, vector<2x128xf32> -> vector<2x128xf32>
    %279 = arith.addf %275, %278 : vector<2x128xf32>
    %c0_131 = arith.constant 0 : index
    %c0_132 = arith.constant 0 : index
    %280 = vector.load %arg7[%c0_131, %c0_132] : memref<2x32xf32, #tpu.memory_space<vmem>>, vector<2x32xf32>
    %281 = vector.extract_strided_slice %274 {offsets = [0, 0], sizes = [2, 32], strides = [1, 1]} : vector<2x128xf32> to vector<2x32xf32>
    %282 = arith.negf %281 : vector<2x32xf32>
    %283 = math.exp %282 : vector<2x32xf32>
    %cst_133 = arith.constant 1.000000e+00 : f32
    %284 = vector.broadcast %cst_133 : f32 to vector<2x32xf32>
    %285 = arith.addf %284, %283 : vector<2x32xf32>
    %286 = arith.divf %284, %285 : vector<2x32xf32>
    %287 = vector.extract_strided_slice %274 {offsets = [0, 32], sizes = [2, 32], strides = [1, 1]} : vector<2x128xf32> to vector<2x32xf32>
    %288 = arith.negf %287 : vector<2x32xf32>
    %289 = math.exp %288 : vector<2x32xf32>
    %cst_134 = arith.constant 1.000000e+00 : f32
    %290 = vector.broadcast %cst_134 : f32 to vector<2x32xf32>
    %291 = arith.addf %290, %289 : vector<2x32xf32>
    %292 = arith.divf %290, %291 : vector<2x32xf32>
    %293 = vector.extract_strided_slice %274 {offsets = [0, 64], sizes = [2, 32], strides = [1, 1]} : vector<2x128xf32> to vector<2x32xf32>
    %294 = math.tanh %293 : vector<2x32xf32>
    %295 = vector.extract_strided_slice %274 {offsets = [0, 96], sizes = [2, 32], strides = [1, 1]} : vector<2x128xf32> to vector<2x32xf32>
    %296 = arith.negf %295 : vector<2x32xf32>
    %297 = math.exp %296 : vector<2x32xf32>
    %cst_135 = arith.constant 1.000000e+00 : f32
    %298 = vector.broadcast %cst_135 : f32 to vector<2x32xf32>
    %299 = arith.addf %298, %297 : vector<2x32xf32>
    %300 = arith.divf %298, %299 : vector<2x32xf32>
    %301 = arith.mulf %292, %280 : vector<2x32xf32>
    %302 = arith.mulf %286, %294 : vector<2x32xf32>
    %303 = arith.addf %301, %302 : vector<2x32xf32>
    %304 = math.tanh %303 : vector<2x32xf32>
    %305 = arith.mulf %300, %304 : vector<2x32xf32>
    %c0_136 = arith.constant 0 : index
    %c0_137 = arith.constant 0 : index
    %306 = vector.load %arg9[%c0_136, %c0_137] : memref<2x32xf32, #tpu.memory_space<vmem>>, vector<2x32xf32>
    %307 = vector.extract_strided_slice %279 {offsets = [0, 0], sizes = [2, 32], strides = [1, 1]} : vector<2x128xf32> to vector<2x32xf32>
    %308 = arith.negf %307 : vector<2x32xf32>
    %309 = math.exp %308 : vector<2x32xf32>
    %cst_138 = arith.constant 1.000000e+00 : f32
    %310 = vector.broadcast %cst_138 : f32 to vector<2x32xf32>
    %311 = arith.addf %310, %309 : vector<2x32xf32>
    %312 = arith.divf %310, %311 : vector<2x32xf32>
    %313 = vector.extract_strided_slice %279 {offsets = [0, 32], sizes = [2, 32], strides = [1, 1]} : vector<2x128xf32> to vector<2x32xf32>
    %314 = arith.negf %313 : vector<2x32xf32>
    %315 = math.exp %314 : vector<2x32xf32>
    %cst_139 = arith.constant 1.000000e+00 : f32
    %316 = vector.broadcast %cst_139 : f32 to vector<2x32xf32>
    %317 = arith.addf %316, %315 : vector<2x32xf32>
    %318 = arith.divf %316, %317 : vector<2x32xf32>
    %319 = vector.extract_strided_slice %279 {offsets = [0, 64], sizes = [2, 32], strides = [1, 1]} : vector<2x128xf32> to vector<2x32xf32>
    %320 = math.tanh %319 : vector<2x32xf32>
    %321 = vector.extract_strided_slice %279 {offsets = [0, 96], sizes = [2, 32], strides = [1, 1]} : vector<2x128xf32> to vector<2x32xf32>
    %322 = arith.negf %321 : vector<2x32xf32>
    %323 = math.exp %322 : vector<2x32xf32>
    %cst_140 = arith.constant 1.000000e+00 : f32
    %324 = vector.broadcast %cst_140 : f32 to vector<2x32xf32>
    %325 = arith.addf %324, %323 : vector<2x32xf32>
    %326 = arith.divf %324, %325 : vector<2x32xf32>
    %327 = arith.mulf %318, %306 : vector<2x32xf32>
    %328 = arith.mulf %312, %320 : vector<2x32xf32>
    %329 = arith.addf %327, %328 : vector<2x32xf32>
    %330 = math.tanh %329 : vector<2x32xf32>
    %331 = arith.mulf %326, %330 : vector<2x32xf32>
    %c0_141 = arith.constant 0 : index
    %c0_142 = arith.constant 0 : index
    %332 = vector.load %arg6[%c0_141, %c0_142] : memref<2x32xf32, #tpu.memory_space<vmem>>, vector<2x32xf32>
    tpu.vector_store %arg6[%c0_141, %c0_142], %305 {strides = array<i32>} : memref<2x32xf32, #tpu.memory_space<vmem>>, vector<2x32xf32>,
    %c0_143 = arith.constant 0 : index
    %c0_144 = arith.constant 0 : index
    %333 = vector.load %arg7[%c0_143, %c0_144] : memref<2x32xf32, #tpu.memory_space<vmem>>, vector<2x32xf32>
    tpu.vector_store %arg7[%c0_143, %c0_144], %303 {strides = array<i32>} : memref<2x32xf32, #tpu.memory_space<vmem>>, vector<2x32xf32>,
    %c0_145 = arith.constant 0 : index
    %c0_146 = arith.constant 0 : index
    %334 = vector.load %arg8[%c0_145, %c0_146] : memref<2x32xf32, #tpu.memory_space<vmem>>, vector<2x32xf32>
    tpu.vector_store %arg8[%c0_145, %c0_146], %331 {strides = array<i32>} : memref<2x32xf32, #tpu.memory_space<vmem>>, vector<2x32xf32>,
    %c0_147 = arith.constant 0 : index
    %c0_148 = arith.constant 0 : index
    %335 = vector.load %arg9[%c0_147, %c0_148] : memref<2x32xf32, #tpu.memory_space<vmem>>, vector<2x32xf32>
    tpu.vector_store %arg9[%c0_147, %c0_148], %329 {strides = array<i32>} : memref<2x32xf32, #tpu.memory_space<vmem>>, vector<2x32xf32>,
    %336 = arith.index_cast %262 : i32 to index
    %c0_149 = arith.constant 0 : index
    %c0_150 = arith.constant 0 : index
    %337 = vector.load %arg4[%336, %c0_149, %c0_150] : memref<8x2x32xf32, #tpu.memory_space<vmem>>, vector<1x2x32xf32>
    %338 = vector.shape_cast %337 : vector<1x2x32xf32> to vector<2x32xf32>
    %339 = vector.shape_cast %305 : vector<2x32xf32> to vector<1x2x32xf32>
    tpu.vector_store %arg4[%336, %c0_149, %c0_150], %339 {strides = array<i32>} : memref<8x2x32xf32, #tpu.memory_space<vmem>>, vector<1x2x32xf32>,
    %340 = arith.index_cast %263 : i32 to index
    %c0_151 = arith.constant 0 : index
    %c0_152 = arith.constant 0 : index
    %341 = vector.load %arg5[%340, %c0_151, %c0_152] : memref<8x2x32xf32, #tpu.memory_space<vmem>>, vector<1x2x32xf32>
    %342 = vector.shape_cast %341 : vector<1x2x32xf32> to vector<2x32xf32>
    %343 = vector.shape_cast %331 : vector<2x32xf32> to vector<1x2x32xf32>
    tpu.vector_store %arg5[%340, %c0_151, %c0_152], %343 {strides = array<i32>} : memref<8x2x32xf32, #tpu.memory_space<vmem>>, vector<1x2x32xf32>,
    %c4_i32 = arith.constant 4 : i32
    %c1_i32_153 = arith.constant 1 : i32
    %344 = arith.muli %c4_i32, %c1_i32_153 : i32
    %c0_i32_154 = arith.constant 0 : i32
    %345 = arith.addi %c0_i32_154, %344 : i32
    %c7_i32_155 = arith.constant 7 : i32
    %346 = arith.subi %c7_i32_155, %345 : i32
    %347 = arith.index_cast %345 : i32 to index
    %c0_156 = arith.constant 0 : index
    %c0_157 = arith.constant 0 : index
    %348 = vector.load %arg1[%347, %c0_156, %c0_157] : memref<8x2x256xf32, #tpu.memory_space<vmem>>, vector<1x2x256xf32>
    %349 = vector.shape_cast %348 : vector<1x2x256xf32> to vector<2x256xf32>
    %350 = arith.index_cast %346 : i32 to index
    %c0_158 = arith.constant 0 : index
    %c0_159 = arith.constant 0 : index
    %351 = vector.load %arg1[%350, %c0_158, %c0_159] : memref<8x2x256xf32, #tpu.memory_space<vmem>>, vector<1x2x256xf32>
    %352 = vector.shape_cast %351 : vector<1x2x256xf32> to vector<2x256xf32>
    %353 = vector.extract_strided_slice %349 {offsets = [0, 0], sizes = [2, 128], strides = [1, 1]} : vector<2x256xf32> to vector<2x128xf32>
    %c0_160 = arith.constant 0 : index
    %c0_161 = arith.constant 0 : index
    %354 = vector.load %arg6[%c0_160, %c0_161] : memref<2x32xf32, #tpu.memory_space<vmem>>, vector<2x32xf32>
    %355 = arith.truncf %354 : vector<2x32xf32> to vector<2x32xbf16>
    %cst_162 = arith.constant dense<0.000000e+00> : vector<2x128xf32>
    %356 = tpu.matmul %355, %9, %cst_162 {dimension_numbers = #tpu.dot_dimension_numbers<[1], [0], [0], [1], [0, 0, 1, 1], [], []>} : vector<2x32xbf16>, vector<32x128xbf16>, vector<2x128xf32> -> vector<2x128xf32>
    %357 = arith.addf %353, %356 : vector<2x128xf32>
    %358 = vector.extract_strided_slice %352 {offsets = [0, 128], sizes = [2, 128], strides = [1, 1]} : vector<2x256xf32> to vector<2x128xf32>
    %c0_163 = arith.constant 0 : index
    %c0_164 = arith.constant 0 : index
    %359 = vector.load %arg8[%c0_163, %c0_164] : memref<2x32xf32, #tpu.memory_space<vmem>>, vector<2x32xf32>
    %360 = arith.truncf %359 : vector<2x32xf32> to vector<2x32xbf16>
    %cst_165 = arith.constant dense<0.000000e+00> : vector<2x128xf32>
    %361 = tpu.matmul %360, %11, %cst_165 {dimension_numbers = #tpu.dot_dimension_numbers<[1], [0], [0], [1], [0, 0, 1, 1], [], []>} : vector<2x32xbf16>, vector<32x128xbf16>, vector<2x128xf32> -> vector<2x128xf32>
    %362 = arith.addf %358, %361 : vector<2x128xf32>
    %c0_166 = arith.constant 0 : index
    %c0_167 = arith.constant 0 : index
    %363 = vector.load %arg7[%c0_166, %c0_167] : memref<2x32xf32, #tpu.memory_space<vmem>>, vector<2x32xf32>
    %364 = vector.extract_strided_slice %357 {offsets = [0, 0], sizes = [2, 32], strides = [1, 1]} : vector<2x128xf32> to vector<2x32xf32>
    %365 = arith.negf %364 : vector<2x32xf32>
    %366 = math.exp %365 : vector<2x32xf32>
    %cst_168 = arith.constant 1.000000e+00 : f32
    %367 = vector.broadcast %cst_168 : f32 to vector<2x32xf32>
    %368 = arith.addf %367, %366 : vector<2x32xf32>
    %369 = arith.divf %367, %368 : vector<2x32xf32>
    %370 = vector.extract_strided_slice %357 {offsets = [0, 32], sizes = [2, 32], strides = [1, 1]} : vector<2x128xf32> to vector<2x32xf32>
    %371 = arith.negf %370 : vector<2x32xf32>
    %372 = math.exp %371 : vector<2x32xf32>
    %cst_169 = arith.constant 1.000000e+00 : f32
    %373 = vector.broadcast %cst_169 : f32 to vector<2x32xf32>
    %374 = arith.addf %373, %372 : vector<2x32xf32>
    %375 = arith.divf %373, %374 : vector<2x32xf32>
    %376 = vector.extract_strided_slice %357 {offsets = [0, 64], sizes = [2, 32], strides = [1, 1]} : vector<2x128xf32> to vector<2x32xf32>
    %377 = math.tanh %376 : vector<2x32xf32>
    %378 = vector.extract_strided_slice %357 {offsets = [0, 96], sizes = [2, 32], strides = [1, 1]} : vector<2x128xf32> to vector<2x32xf32>
    %379 = arith.negf %378 : vector<2x32xf32>
    %380 = math.exp %379 : vector<2x32xf32>
    %cst_170 = arith.constant 1.000000e+00 : f32
    %381 = vector.broadcast %cst_170 : f32 to vector<2x32xf32>
    %382 = arith.addf %381, %380 : vector<2x32xf32>
    %383 = arith.divf %381, %382 : vector<2x32xf32>
    %384 = arith.mulf %375, %363 : vector<2x32xf32>
    %385 = arith.mulf %369, %377 : vector<2x32xf32>
    %386 = arith.addf %384, %385 : vector<2x32xf32>
    %387 = math.tanh %386 : vector<2x32xf32>
    %388 = arith.mulf %383, %387 : vector<2x32xf32>
    %c0_171 = arith.constant 0 : index
    %c0_172 = arith.constant 0 : index
    %389 = vector.load %arg9[%c0_171, %c0_172] : memref<2x32xf32, #tpu.memory_space<vmem>>, vector<2x32xf32>
    %390 = vector.extract_strided_slice %362 {offsets = [0, 0], sizes = [2, 32], strides = [1, 1]} : vector<2x128xf32> to vector<2x32xf32>
    %391 = arith.negf %390 : vector<2x32xf32>
    %392 = math.exp %391 : vector<2x32xf32>
    %cst_173 = arith.constant 1.000000e+00 : f32
    %393 = vector.broadcast %cst_173 : f32 to vector<2x32xf32>
    %394 = arith.addf %393, %392 : vector<2x32xf32>
    %395 = arith.divf %393, %394 : vector<2x32xf32>
    %396 = vector.extract_strided_slice %362 {offsets = [0, 32], sizes = [2, 32], strides = [1, 1]} : vector<2x128xf32> to vector<2x32xf32>
    %397 = arith.negf %396 : vector<2x32xf32>
    %398 = math.exp %397 : vector<2x32xf32>
    %cst_174 = arith.constant 1.000000e+00 : f32
    %399 = vector.broadcast %cst_174 : f32 to vector<2x32xf32>
    %400 = arith.addf %399, %398 : vector<2x32xf32>
    %401 = arith.divf %399, %400 : vector<2x32xf32>
    %402 = vector.extract_strided_slice %362 {offsets = [0, 64], sizes = [2, 32], strides = [1, 1]} : vector<2x128xf32> to vector<2x32xf32>
    %403 = math.tanh %402 : vector<2x32xf32>
    %404 = vector.extract_strided_slice %362 {offsets = [0, 96], sizes = [2, 32], strides = [1, 1]} : vector<2x128xf32> to vector<2x32xf32>
    %405 = arith.negf %404 : vector<2x32xf32>
    %406 = math.exp %405 : vector<2x32xf32>
    %cst_175 = arith.constant 1.000000e+00 : f32
    %407 = vector.broadcast %cst_175 : f32 to vector<2x32xf32>
    %408 = arith.addf %407, %406 : vector<2x32xf32>
    %409 = arith.divf %407, %408 : vector<2x32xf32>
    %410 = arith.mulf %401, %389 : vector<2x32xf32>
    %411 = arith.mulf %395, %403 : vector<2x32xf32>
    %412 = arith.addf %410, %411 : vector<2x32xf32>
    %413 = math.tanh %412 : vector<2x32xf32>
    %414 = arith.mulf %409, %413 : vector<2x32xf32>
    %c0_176 = arith.constant 0 : index
    %c0_177 = arith.constant 0 : index
    %415 = vector.load %arg6[%c0_176, %c0_177] : memref<2x32xf32, #tpu.memory_space<vmem>>, vector<2x32xf32>
    tpu.vector_store %arg6[%c0_176, %c0_177], %388 {strides = array<i32>} : memref<2x32xf32, #tpu.memory_space<vmem>>, vector<2x32xf32>,
    %c0_178 = arith.constant 0 : index
    %c0_179 = arith.constant 0 : index
    %416 = vector.load %arg7[%c0_178, %c0_179] : memref<2x32xf32, #tpu.memory_space<vmem>>, vector<2x32xf32>
    tpu.vector_store %arg7[%c0_178, %c0_179], %386 {strides = array<i32>} : memref<2x32xf32, #tpu.memory_space<vmem>>, vector<2x32xf32>,
    %c0_180 = arith.constant 0 : index
    %c0_181 = arith.constant 0 : index
    %417 = vector.load %arg8[%c0_180, %c0_181] : memref<2x32xf32, #tpu.memory_space<vmem>>, vector<2x32xf32>
    tpu.vector_store %arg8[%c0_180, %c0_181], %414 {strides = array<i32>} : memref<2x32xf32, #tpu.memory_space<vmem>>, vector<2x32xf32>,
    %c0_182 = arith.constant 0 : index
    %c0_183 = arith.constant 0 : index
    %418 = vector.load %arg9[%c0_182, %c0_183] : memref<2x32xf32, #tpu.memory_space<vmem>>, vector<2x32xf32>
    tpu.vector_store %arg9[%c0_182, %c0_183], %412 {strides = array<i32>} : memref<2x32xf32, #tpu.memory_space<vmem>>, vector<2x32xf32>,
    %419 = arith.index_cast %345 : i32 to index
    %c0_184 = arith.constant 0 : index
    %c0_185 = arith.constant 0 : index
    %420 = vector.load %arg4[%419, %c0_184, %c0_185] : memref<8x2x32xf32, #tpu.memory_space<vmem>>, vector<1x2x32xf32>
    %421 = vector.shape_cast %420 : vector<1x2x32xf32> to vector<2x32xf32>
    %422 = vector.shape_cast %388 : vector<2x32xf32> to vector<1x2x32xf32>
    tpu.vector_store %arg4[%419, %c0_184, %c0_185], %422 {strides = array<i32>} : memref<8x2x32xf32, #tpu.memory_space<vmem>>, vector<1x2x32xf32>,
    %423 = arith.index_cast %346 : i32 to index
    %c0_186 = arith.constant 0 : index
    %c0_187 = arith.constant 0 : index
    %424 = vector.load %arg5[%423, %c0_186, %c0_187] : memref<8x2x32xf32, #tpu.memory_space<vmem>>, vector<1x2x32xf32>
    %425 = vector.shape_cast %424 : vector<1x2x32xf32> to vector<2x32xf32>
    %426 = vector.shape_cast %414 : vector<2x32xf32> to vector<1x2x32xf32>
    tpu.vector_store %arg5[%423, %c0_186, %c0_187], %426 {strides = array<i32>} : memref<8x2x32xf32, #tpu.memory_space<vmem>>, vector<1x2x32xf32>,
    %c5_i32 = arith.constant 5 : i32
    %c1_i32_188 = arith.constant 1 : i32
    %427 = arith.muli %c5_i32, %c1_i32_188 : i32
    %c0_i32_189 = arith.constant 0 : i32
    %428 = arith.addi %c0_i32_189, %427 : i32
    %c7_i32_190 = arith.constant 7 : i32
    %429 = arith.subi %c7_i32_190, %428 : i32
    %430 = arith.index_cast %428 : i32 to index
    %c0_191 = arith.constant 0 : index
    %c0_192 = arith.constant 0 : index
    %431 = vector.load %arg1[%430, %c0_191, %c0_192] : memref<8x2x256xf32, #tpu.memory_space<vmem>>, vector<1x2x256xf32>
    %432 = vector.shape_cast %431 : vector<1x2x256xf32> to vector<2x256xf32>
    %433 = arith.index_cast %429 : i32 to index
    %c0_193 = arith.constant 0 : index
    %c0_194 = arith.constant 0 : index
    %434 = vector.load %arg1[%433, %c0_193, %c0_194] : memref<8x2x256xf32, #tpu.memory_space<vmem>>, vector<1x2x256xf32>
    %435 = vector.shape_cast %434 : vector<1x2x256xf32> to vector<2x256xf32>
    %436 = vector.extract_strided_slice %432 {offsets = [0, 0], sizes = [2, 128], strides = [1, 1]} : vector<2x256xf32> to vector<2x128xf32>
    %c0_195 = arith.constant 0 : index
    %c0_196 = arith.constant 0 : index
    %437 = vector.load %arg6[%c0_195, %c0_196] : memref<2x32xf32, #tpu.memory_space<vmem>>, vector<2x32xf32>
    %438 = arith.truncf %437 : vector<2x32xf32> to vector<2x32xbf16>
    %cst_197 = arith.constant dense<0.000000e+00> : vector<2x128xf32>
    %439 = tpu.matmul %438, %9, %cst_197 {dimension_numbers = #tpu.dot_dimension_numbers<[1], [0], [0], [1], [0, 0, 1, 1], [], []>} : vector<2x32xbf16>, vector<32x128xbf16>, vector<2x128xf32> -> vector<2x128xf32>
    %440 = arith.addf %436, %439 : vector<2x128xf32>
    %441 = vector.extract_strided_slice %435 {offsets = [0, 128], sizes = [2, 128], strides = [1, 1]} : vector<2x256xf32> to vector<2x128xf32>
    %c0_198 = arith.constant 0 : index
    %c0_199 = arith.constant 0 : index
    %442 = vector.load %arg8[%c0_198, %c0_199] : memref<2x32xf32, #tpu.memory_space<vmem>>, vector<2x32xf32>
    %443 = arith.truncf %442 : vector<2x32xf32> to vector<2x32xbf16>
    %cst_200 = arith.constant dense<0.000000e+00> : vector<2x128xf32>
    %444 = tpu.matmul %443, %11, %cst_200 {dimension_numbers = #tpu.dot_dimension_numbers<[1], [0], [0], [1], [0, 0, 1, 1], [], []>} : vector<2x32xbf16>, vector<32x128xbf16>, vector<2x128xf32> -> vector<2x128xf32>
    %445 = arith.addf %441, %444 : vector<2x128xf32>
    %c0_201 = arith.constant 0 : index
    %c0_202 = arith.constant 0 : index
    %446 = vector.load %arg7[%c0_201, %c0_202] : memref<2x32xf32, #tpu.memory_space<vmem>>, vector<2x32xf32>
    %447 = vector.extract_strided_slice %440 {offsets = [0, 0], sizes = [2, 32], strides = [1, 1]} : vector<2x128xf32> to vector<2x32xf32>
    %448 = arith.negf %447 : vector<2x32xf32>
    %449 = math.exp %448 : vector<2x32xf32>
    %cst_203 = arith.constant 1.000000e+00 : f32
    %450 = vector.broadcast %cst_203 : f32 to vector<2x32xf32>
    %451 = arith.addf %450, %449 : vector<2x32xf32>
    %452 = arith.divf %450, %451 : vector<2x32xf32>
    %453 = vector.extract_strided_slice %440 {offsets = [0, 32], sizes = [2, 32], strides = [1, 1]} : vector<2x128xf32> to vector<2x32xf32>
    %454 = arith.negf %453 : vector<2x32xf32>
    %455 = math.exp %454 : vector<2x32xf32>
    %cst_204 = arith.constant 1.000000e+00 : f32
    %456 = vector.broadcast %cst_204 : f32 to vector<2x32xf32>
    %457 = arith.addf %456, %455 : vector<2x32xf32>
    %458 = arith.divf %456, %457 : vector<2x32xf32>
    %459 = vector.extract_strided_slice %440 {offsets = [0, 64], sizes = [2, 32], strides = [1, 1]} : vector<2x128xf32> to vector<2x32xf32>
    %460 = math.tanh %459 : vector<2x32xf32>
    %461 = vector.extract_strided_slice %440 {offsets = [0, 96], sizes = [2, 32], strides = [1, 1]} : vector<2x128xf32> to vector<2x32xf32>
    %462 = arith.negf %461 : vector<2x32xf32>
    %463 = math.exp %462 : vector<2x32xf32>
    %cst_205 = arith.constant 1.000000e+00 : f32
    %464 = vector.broadcast %cst_205 : f32 to vector<2x32xf32>
    %465 = arith.addf %464, %463 : vector<2x32xf32>
    %466 = arith.divf %464, %465 : vector<2x32xf32>
    %467 = arith.mulf %458, %446 : vector<2x32xf32>
    %468 = arith.mulf %452, %460 : vector<2x32xf32>
    %469 = arith.addf %467, %468 : vector<2x32xf32>
    %470 = math.tanh %469 : vector<2x32xf32>
    %471 = arith.mulf %466, %470 : vector<2x32xf32>
    %c0_206 = arith.constant 0 : index
    %c0_207 = arith.constant 0 : index
    %472 = vector.load %arg9[%c0_206, %c0_207] : memref<2x32xf32, #tpu.memory_space<vmem>>, vector<2x32xf32>
    %473 = vector.extract_strided_slice %445 {offsets = [0, 0], sizes = [2, 32], strides = [1, 1]} : vector<2x128xf32> to vector<2x32xf32>
    %474 = arith.negf %473 : vector<2x32xf32>
    %475 = math.exp %474 : vector<2x32xf32>
    %cst_208 = arith.constant 1.000000e+00 : f32
    %476 = vector.broadcast %cst_208 : f32 to vector<2x32xf32>
    %477 = arith.addf %476, %475 : vector<2x32xf32>
    %478 = arith.divf %476, %477 : vector<2x32xf32>
    %479 = vector.extract_strided_slice %445 {offsets = [0, 32], sizes = [2, 32], strides = [1, 1]} : vector<2x128xf32> to vector<2x32xf32>
    %480 = arith.negf %479 : vector<2x32xf32>
    %481 = math.exp %480 : vector<2x32xf32>
    %cst_209 = arith.constant 1.000000e+00 : f32
    %482 = vector.broadcast %cst_209 : f32 to vector<2x32xf32>
    %483 = arith.addf %482, %481 : vector<2x32xf32>
    %484 = arith.divf %482, %483 : vector<2x32xf32>
    %485 = vector.extract_strided_slice %445 {offsets = [0, 64], sizes = [2, 32], strides = [1, 1]} : vector<2x128xf32> to vector<2x32xf32>
    %486 = math.tanh %485 : vector<2x32xf32>
    %487 = vector.extract_strided_slice %445 {offsets = [0, 96], sizes = [2, 32], strides = [1, 1]} : vector<2x128xf32> to vector<2x32xf32>
    %488 = arith.negf %487 : vector<2x32xf32>
    %489 = math.exp %488 : vector<2x32xf32>
    %cst_210 = arith.constant 1.000000e+00 : f32
    %490 = vector.broadcast %cst_210 : f32 to vector<2x32xf32>
    %491 = arith.addf %490, %489 : vector<2x32xf32>
    %492 = arith.divf %490, %491 : vector<2x32xf32>
    %493 = arith.mulf %484, %472 : vector<2x32xf32>
    %494 = arith.mulf %478, %486 : vector<2x32xf32>
    %495 = arith.addf %493, %494 : vector<2x32xf32>
    %496 = math.tanh %495 : vector<2x32xf32>
    %497 = arith.mulf %492, %496 : vector<2x32xf32>
    %c0_211 = arith.constant 0 : index
    %c0_212 = arith.constant 0 : index
    %498 = vector.load %arg6[%c0_211, %c0_212] : memref<2x32xf32, #tpu.memory_space<vmem>>, vector<2x32xf32>
    tpu.vector_store %arg6[%c0_211, %c0_212], %471 {strides = array<i32>} : memref<2x32xf32, #tpu.memory_space<vmem>>, vector<2x32xf32>,
    %c0_213 = arith.constant 0 : index
    %c0_214 = arith.constant 0 : index
    %499 = vector.load %arg7[%c0_213, %c0_214] : memref<2x32xf32, #tpu.memory_space<vmem>>, vector<2x32xf32>
    tpu.vector_store %arg7[%c0_213, %c0_214], %469 {strides = array<i32>} : memref<2x32xf32, #tpu.memory_space<vmem>>, vector<2x32xf32>,
    %c0_215 = arith.constant 0 : index
    %c0_216 = arith.constant 0 : index
    %500 = vector.load %arg8[%c0_215, %c0_216] : memref<2x32xf32, #tpu.memory_space<vmem>>, vector<2x32xf32>
    tpu.vector_store %arg8[%c0_215, %c0_216], %497 {strides = array<i32>} : memref<2x32xf32, #tpu.memory_space<vmem>>, vector<2x32xf32>,
    %c0_217 = arith.constant 0 : index
    %c0_218 = arith.constant 0 : index
    %501 = vector.load %arg9[%c0_217, %c0_218] : memref<2x32xf32, #tpu.memory_space<vmem>>, vector<2x32xf32>
    tpu.vector_store %arg9[%c0_217, %c0_218], %495 {strides = array<i32>} : memref<2x32xf32, #tpu.memory_space<vmem>>, vector<2x32xf32>,
    %502 = arith.index_cast %428 : i32 to index
    %c0_219 = arith.constant 0 : index
    %c0_220 = arith.constant 0 : index
    %503 = vector.load %arg4[%502, %c0_219, %c0_220] : memref<8x2x32xf32, #tpu.memory_space<vmem>>, vector<1x2x32xf32>
    %504 = vector.shape_cast %503 : vector<1x2x32xf32> to vector<2x32xf32>
    %505 = vector.shape_cast %471 : vector<2x32xf32> to vector<1x2x32xf32>
    tpu.vector_store %arg4[%502, %c0_219, %c0_220], %505 {strides = array<i32>} : memref<8x2x32xf32, #tpu.memory_space<vmem>>, vector<1x2x32xf32>,
    %506 = arith.index_cast %429 : i32 to index
    %c0_221 = arith.constant 0 : index
    %c0_222 = arith.constant 0 : index
    %507 = vector.load %arg5[%506, %c0_221, %c0_222] : memref<8x2x32xf32, #tpu.memory_space<vmem>>, vector<1x2x32xf32>
    %508 = vector.shape_cast %507 : vector<1x2x32xf32> to vector<2x32xf32>
    %509 = vector.shape_cast %497 : vector<2x32xf32> to vector<1x2x32xf32>
    tpu.vector_store %arg5[%506, %c0_221, %c0_222], %509 {strides = array<i32>} : memref<8x2x32xf32, #tpu.memory_space<vmem>>, vector<1x2x32xf32>,
    %c6_i32 = arith.constant 6 : i32
    %c1_i32_223 = arith.constant 1 : i32
    %510 = arith.muli %c6_i32, %c1_i32_223 : i32
    %c0_i32_224 = arith.constant 0 : i32
    %511 = arith.addi %c0_i32_224, %510 : i32
    %c7_i32_225 = arith.constant 7 : i32
    %512 = arith.subi %c7_i32_225, %511 : i32
    %513 = arith.index_cast %511 : i32 to index
    %c0_226 = arith.constant 0 : index
    %c0_227 = arith.constant 0 : index
    %514 = vector.load %arg1[%513, %c0_226, %c0_227] : memref<8x2x256xf32, #tpu.memory_space<vmem>>, vector<1x2x256xf32>
    %515 = vector.shape_cast %514 : vector<1x2x256xf32> to vector<2x256xf32>
    %516 = arith.index_cast %512 : i32 to index
    %c0_228 = arith.constant 0 : index
    %c0_229 = arith.constant 0 : index
    %517 = vector.load %arg1[%516, %c0_228, %c0_229] : memref<8x2x256xf32, #tpu.memory_space<vmem>>, vector<1x2x256xf32>
    %518 = vector.shape_cast %517 : vector<1x2x256xf32> to vector<2x256xf32>
    %519 = vector.extract_strided_slice %515 {offsets = [0, 0], sizes = [2, 128], strides = [1, 1]} : vector<2x256xf32> to vector<2x128xf32>
    %c0_230 = arith.constant 0 : index
    %c0_231 = arith.constant 0 : index
    %520 = vector.load %arg6[%c0_230, %c0_231] : memref<2x32xf32, #tpu.memory_space<vmem>>, vector<2x32xf32>
    %521 = arith.truncf %520 : vector<2x32xf32> to vector<2x32xbf16>
    %cst_232 = arith.constant dense<0.000000e+00> : vector<2x128xf32>
    %522 = tpu.matmul %521, %9, %cst_232 {dimension_numbers = #tpu.dot_dimension_numbers<[1], [0], [0], [1], [0, 0, 1, 1], [], []>} : vector<2x32xbf16>, vector<32x128xbf16>, vector<2x128xf32> -> vector<2x128xf32>
    %523 = arith.addf %519, %522 : vector<2x128xf32>
    %524 = vector.extract_strided_slice %518 {offsets = [0, 128], sizes = [2, 128], strides = [1, 1]} : vector<2x256xf32> to vector<2x128xf32>
    %c0_233 = arith.constant 0 : index
    %c0_234 = arith.constant 0 : index
    %525 = vector.load %arg8[%c0_233, %c0_234] : memref<2x32xf32, #tpu.memory_space<vmem>>, vector<2x32xf32>
    %526 = arith.truncf %525 : vector<2x32xf32> to vector<2x32xbf16>
    %cst_235 = arith.constant dense<0.000000e+00> : vector<2x128xf32>
    %527 = tpu.matmul %526, %11, %cst_235 {dimension_numbers = #tpu.dot_dimension_numbers<[1], [0], [0], [1], [0, 0, 1, 1], [], []>} : vector<2x32xbf16>, vector<32x128xbf16>, vector<2x128xf32> -> vector<2x128xf32>
    %528 = arith.addf %524, %527 : vector<2x128xf32>
    %c0_236 = arith.constant 0 : index
    %c0_237 = arith.constant 0 : index
    %529 = vector.load %arg7[%c0_236, %c0_237] : memref<2x32xf32, #tpu.memory_space<vmem>>, vector<2x32xf32>
    %530 = vector.extract_strided_slice %523 {offsets = [0, 0], sizes = [2, 32], strides = [1, 1]} : vector<2x128xf32> to vector<2x32xf32>
    %531 = arith.negf %530 : vector<2x32xf32>
    %532 = math.exp %531 : vector<2x32xf32>
    %cst_238 = arith.constant 1.000000e+00 : f32
    %533 = vector.broadcast %cst_238 : f32 to vector<2x32xf32>
    %534 = arith.addf %533, %532 : vector<2x32xf32>
    %535 = arith.divf %533, %534 : vector<2x32xf32>
    %536 = vector.extract_strided_slice %523 {offsets = [0, 32], sizes = [2, 32], strides = [1, 1]} : vector<2x128xf32> to vector<2x32xf32>
    %537 = arith.negf %536 : vector<2x32xf32>
    %538 = math.exp %537 : vector<2x32xf32>
    %cst_239 = arith.constant 1.000000e+00 : f32
    %539 = vector.broadcast %cst_239 : f32 to vector<2x32xf32>
    %540 = arith.addf %539, %538 : vector<2x32xf32>
    %541 = arith.divf %539, %540 : vector<2x32xf32>
    %542 = vector.extract_strided_slice %523 {offsets = [0, 64], sizes = [2, 32], strides = [1, 1]} : vector<2x128xf32> to vector<2x32xf32>
    %543 = math.tanh %542 : vector<2x32xf32>
    %544 = vector.extract_strided_slice %523 {offsets = [0, 96], sizes = [2, 32], strides = [1, 1]} : vector<2x128xf32> to vector<2x32xf32>
    %545 = arith.negf %544 : vector<2x32xf32>
    %546 = math.exp %545 : vector<2x32xf32>
    %cst_240 = arith.constant 1.000000e+00 : f32
    %547 = vector.broadcast %cst_240 : f32 to vector<2x32xf32>
    %548 = arith.addf %547, %546 : vector<2x32xf32>
    %549 = arith.divf %547, %548 : vector<2x32xf32>
    %550 = arith.mulf %541, %529 : vector<2x32xf32>
    %551 = arith.mulf %535, %543 : vector<2x32xf32>
    %552 = arith.addf %550, %551 : vector<2x32xf32>
    %553 = math.tanh %552 : vector<2x32xf32>
    %554 = arith.mulf %549, %553 : vector<2x32xf32>
    %c0_241 = arith.constant 0 : index
    %c0_242 = arith.constant 0 : index
    %555 = vector.load %arg9[%c0_241, %c0_242] : memref<2x32xf32, #tpu.memory_space<vmem>>, vector<2x32xf32>
    %556 = vector.extract_strided_slice %528 {offsets = [0, 0], sizes = [2, 32], strides = [1, 1]} : vector<2x128xf32> to vector<2x32xf32>
    %557 = arith.negf %556 : vector<2x32xf32>
    %558 = math.exp %557 : vector<2x32xf32>
    %cst_243 = arith.constant 1.000000e+00 : f32
    %559 = vector.broadcast %cst_243 : f32 to vector<2x32xf32>
    %560 = arith.addf %559, %558 : vector<2x32xf32>
    %561 = arith.divf %559, %560 : vector<2x32xf32>
    %562 = vector.extract_strided_slice %528 {offsets = [0, 32], sizes = [2, 32], strides = [1, 1]} : vector<2x128xf32> to vector<2x32xf32>
    %563 = arith.negf %562 : vector<2x32xf32>
    %564 = math.exp %563 : vector<2x32xf32>
    %cst_244 = arith.constant 1.000000e+00 : f32
    %565 = vector.broadcast %cst_244 : f32 to vector<2x32xf32>
    %566 = arith.addf %565, %564 : vector<2x32xf32>
    %567 = arith.divf %565, %566 : vector<2x32xf32>
    %568 = vector.extract_strided_slice %528 {offsets = [0, 64], sizes = [2, 32], strides = [1, 1]} : vector<2x128xf32> to vector<2x32xf32>
    %569 = math.tanh %568 : vector<2x32xf32>
    %570 = vector.extract_strided_slice %528 {offsets = [0, 96], sizes = [2, 32], strides = [1, 1]} : vector<2x128xf32> to vector<2x32xf32>
    %571 = arith.negf %570 : vector<2x32xf32>
    %572 = math.exp %571 : vector<2x32xf32>
    %cst_245 = arith.constant 1.000000e+00 : f32
    %573 = vector.broadcast %cst_245 : f32 to vector<2x32xf32>
    %574 = arith.addf %573, %572 : vector<2x32xf32>
    %575 = arith.divf %573, %574 : vector<2x32xf32>
    %576 = arith.mulf %567, %555 : vector<2x32xf32>
    %577 = arith.mulf %561, %569 : vector<2x32xf32>
    %578 = arith.addf %576, %577 : vector<2x32xf32>
    %579 = math.tanh %578 : vector<2x32xf32>
    %580 = arith.mulf %575, %579 : vector<2x32xf32>
    %c0_246 = arith.constant 0 : index
    %c0_247 = arith.constant 0 : index
    %581 = vector.load %arg6[%c0_246, %c0_247] : memref<2x32xf32, #tpu.memory_space<vmem>>, vector<2x32xf32>
    tpu.vector_store %arg6[%c0_246, %c0_247], %554 {strides = array<i32>} : memref<2x32xf32, #tpu.memory_space<vmem>>, vector<2x32xf32>,
    %c0_248 = arith.constant 0 : index
    %c0_249 = arith.constant 0 : index
    %582 = vector.load %arg7[%c0_248, %c0_249] : memref<2x32xf32, #tpu.memory_space<vmem>>, vector<2x32xf32>
    tpu.vector_store %arg7[%c0_248, %c0_249], %552 {strides = array<i32>} : memref<2x32xf32, #tpu.memory_space<vmem>>, vector<2x32xf32>,
    %c0_250 = arith.constant 0 : index
    %c0_251 = arith.constant 0 : index
    %583 = vector.load %arg8[%c0_250, %c0_251] : memref<2x32xf32, #tpu.memory_space<vmem>>, vector<2x32xf32>
    tpu.vector_store %arg8[%c0_250, %c0_251], %580 {strides = array<i32>} : memref<2x32xf32, #tpu.memory_space<vmem>>, vector<2x32xf32>,
    %c0_252 = arith.constant 0 : index
    %c0_253 = arith.constant 0 : index
    %584 = vector.load %arg9[%c0_252, %c0_253] : memref<2x32xf32, #tpu.memory_space<vmem>>, vector<2x32xf32>
    tpu.vector_store %arg9[%c0_252, %c0_253], %578 {strides = array<i32>} : memref<2x32xf32, #tpu.memory_space<vmem>>, vector<2x32xf32>,
    %585 = arith.index_cast %511 : i32 to index
    %c0_254 = arith.constant 0 : index
    %c0_255 = arith.constant 0 : index
    %586 = vector.load %arg4[%585, %c0_254, %c0_255] : memref<8x2x32xf32, #tpu.memory_space<vmem>>, vector<1x2x32xf32>
    %587 = vector.shape_cast %586 : vector<1x2x32xf32> to vector<2x32xf32>
    %588 = vector.shape_cast %554 : vector<2x32xf32> to vector<1x2x32xf32>
    tpu.vector_store %arg4[%585, %c0_254, %c0_255], %588 {strides = array<i32>} : memref<8x2x32xf32, #tpu.memory_space<vmem>>, vector<1x2x32xf32>,
    %589 = arith.index_cast %512 : i32 to index
    %c0_256 = arith.constant 0 : index
    %c0_257 = arith.constant 0 : index
    %590 = vector.load %arg5[%589, %c0_256, %c0_257] : memref<8x2x32xf32, #tpu.memory_space<vmem>>, vector<1x2x32xf32>
    %591 = vector.shape_cast %590 : vector<1x2x32xf32> to vector<2x32xf32>
    %592 = vector.shape_cast %580 : vector<2x32xf32> to vector<1x2x32xf32>
    tpu.vector_store %arg5[%589, %c0_256, %c0_257], %592 {strides = array<i32>} : memref<8x2x32xf32, #tpu.memory_space<vmem>>, vector<1x2x32xf32>,
    %c7_i32_258 = arith.constant 7 : i32
    %c1_i32_259 = arith.constant 1 : i32
    %593 = arith.muli %c7_i32_258, %c1_i32_259 : i32
    %c0_i32_260 = arith.constant 0 : i32
    %594 = arith.addi %c0_i32_260, %593 : i32
    %c7_i32_261 = arith.constant 7 : i32
    %595 = arith.subi %c7_i32_261, %594 : i32
    %596 = arith.index_cast %594 : i32 to index
    %c0_262 = arith.constant 0 : index
    %c0_263 = arith.constant 0 : index
    %597 = vector.load %arg1[%596, %c0_262, %c0_263] : memref<8x2x256xf32, #tpu.memory_space<vmem>>, vector<1x2x256xf32>
    %598 = vector.shape_cast %597 : vector<1x2x256xf32> to vector<2x256xf32>
    %599 = arith.index_cast %595 : i32 to index
    %c0_264 = arith.constant 0 : index
    %c0_265 = arith.constant 0 : index
    %600 = vector.load %arg1[%599, %c0_264, %c0_265] : memref<8x2x256xf32, #tpu.memory_space<vmem>>, vector<1x2x256xf32>
    %601 = vector.shape_cast %600 : vector<1x2x256xf32> to vector<2x256xf32>
    %602 = vector.extract_strided_slice %598 {offsets = [0, 0], sizes = [2, 128], strides = [1, 1]} : vector<2x256xf32> to vector<2x128xf32>
    %c0_266 = arith.constant 0 : index
    %c0_267 = arith.constant 0 : index
    %603 = vector.load %arg6[%c0_266, %c0_267] : memref<2x32xf32, #tpu.memory_space<vmem>>, vector<2x32xf32>
    %604 = arith.truncf %603 : vector<2x32xf32> to vector<2x32xbf16>
    %cst_268 = arith.constant dense<0.000000e+00> : vector<2x128xf32>
    %605 = tpu.matmul %604, %9, %cst_268 {dimension_numbers = #tpu.dot_dimension_numbers<[1], [0], [0], [1], [0, 0, 1, 1], [], []>} : vector<2x32xbf16>, vector<32x128xbf16>, vector<2x128xf32> -> vector<2x128xf32>
    %606 = arith.addf %602, %605 : vector<2x128xf32>
    %607 = vector.extract_strided_slice %601 {offsets = [0, 128], sizes = [2, 128], strides = [1, 1]} : vector<2x256xf32> to vector<2x128xf32>
    %c0_269 = arith.constant 0 : index
    %c0_270 = arith.constant 0 : index
    %608 = vector.load %arg8[%c0_269, %c0_270] : memref<2x32xf32, #tpu.memory_space<vmem>>, vector<2x32xf32>
    %609 = arith.truncf %608 : vector<2x32xf32> to vector<2x32xbf16>
    %cst_271 = arith.constant dense<0.000000e+00> : vector<2x128xf32>
    %610 = tpu.matmul %609, %11, %cst_271 {dimension_numbers = #tpu.dot_dimension_numbers<[1], [0], [0], [1], [0, 0, 1, 1], [], []>} : vector<2x32xbf16>, vector<32x128xbf16>, vector<2x128xf32> -> vector<2x128xf32>
    %611 = arith.addf %607, %610 : vector<2x128xf32>
    %c0_272 = arith.constant 0 : index
    %c0_273 = arith.constant 0 : index
    %612 = vector.load %arg7[%c0_272, %c0_273] : memref<2x32xf32, #tpu.memory_space<vmem>>, vector<2x32xf32>
    %613 = vector.extract_strided_slice %606 {offsets = [0, 0], sizes = [2, 32], strides = [1, 1]} : vector<2x128xf32> to vector<2x32xf32>
    %614 = arith.negf %613 : vector<2x32xf32>
    %615 = math.exp %614 : vector<2x32xf32>
    %cst_274 = arith.constant 1.000000e+00 : f32
    %616 = vector.broadcast %cst_274 : f32 to vector<2x32xf32>
    %617 = arith.addf %616, %615 : vector<2x32xf32>
    %618 = arith.divf %616, %617 : vector<2x32xf32>
    %619 = vector.extract_strided_slice %606 {offsets = [0, 32], sizes = [2, 32], strides = [1, 1]} : vector<2x128xf32> to vector<2x32xf32>
    %620 = arith.negf %619 : vector<2x32xf32>
    %621 = math.exp %620 : vector<2x32xf32>
    %cst_275 = arith.constant 1.000000e+00 : f32
    %622 = vector.broadcast %cst_275 : f32 to vector<2x32xf32>
    %623 = arith.addf %622, %621 : vector<2x32xf32>
    %624 = arith.divf %622, %623 : vector<2x32xf32>
    %625 = vector.extract_strided_slice %606 {offsets = [0, 64], sizes = [2, 32], strides = [1, 1]} : vector<2x128xf32> to vector<2x32xf32>
    %626 = math.tanh %625 : vector<2x32xf32>
    %627 = vector.extract_strided_slice %606 {offsets = [0, 96], sizes = [2, 32], strides = [1, 1]} : vector<2x128xf32> to vector<2x32xf32>
    %628 = arith.negf %627 : vector<2x32xf32>
    %629 = math.exp %628 : vector<2x32xf32>
    %cst_276 = arith.constant 1.000000e+00 : f32
    %630 = vector.broadcast %cst_276 : f32 to vector<2x32xf32>
    %631 = arith.addf %630, %629 : vector<2x32xf32>
    %632 = arith.divf %630, %631 : vector<2x32xf32>
    %633 = arith.mulf %624, %612 : vector<2x32xf32>
    %634 = arith.mulf %618, %626 : vector<2x32xf32>
    %635 = arith.addf %633, %634 : vector<2x32xf32>
    %636 = math.tanh %635 : vector<2x32xf32>
    %637 = arith.mulf %632, %636 : vector<2x32xf32>
    %c0_277 = arith.constant 0 : index
    %c0_278 = arith.constant 0 : index
    %638 = vector.load %arg9[%c0_277, %c0_278] : memref<2x32xf32, #tpu.memory_space<vmem>>, vector<2x32xf32>
    %639 = vector.extract_strided_slice %611 {offsets = [0, 0], sizes = [2, 32], strides = [1, 1]} : vector<2x128xf32> to vector<2x32xf32>
    %640 = arith.negf %639 : vector<2x32xf32>
    %641 = math.exp %640 : vector<2x32xf32>
    %cst_279 = arith.constant 1.000000e+00 : f32
    %642 = vector.broadcast %cst_279 : f32 to vector<2x32xf32>
    %643 = arith.addf %642, %641 : vector<2x32xf32>
    %644 = arith.divf %642, %643 : vector<2x32xf32>
    %645 = vector.extract_strided_slice %611 {offsets = [0, 32], sizes = [2, 32], strides = [1, 1]} : vector<2x128xf32> to vector<2x32xf32>
    %646 = arith.negf %645 : vector<2x32xf32>
    %647 = math.exp %646 : vector<2x32xf32>
    %cst_280 = arith.constant 1.000000e+00 : f32
    %648 = vector.broadcast %cst_280 : f32 to vector<2x32xf32>
    %649 = arith.addf %648, %647 : vector<2x32xf32>
    %650 = arith.divf %648, %649 : vector<2x32xf32>
    %651 = vector.extract_strided_slice %611 {offsets = [0, 64], sizes = [2, 32], strides = [1, 1]} : vector<2x128xf32> to vector<2x32xf32>
    %652 = math.tanh %651 : vector<2x32xf32>
    %653 = vector.extract_strided_slice %611 {offsets = [0, 96], sizes = [2, 32], strides = [1, 1]} : vector<2x128xf32> to vector<2x32xf32>
    %654 = arith.negf %653 : vector<2x32xf32>
    %655 = math.exp %654 : vector<2x32xf32>
    %cst_281 = arith.constant 1.000000e+00 : f32
    %656 = vector.broadcast %cst_281 : f32 to vector<2x32xf32>
    %657 = arith.addf %656, %655 : vector<2x32xf32>
    %658 = arith.divf %656, %657 : vector<2x32xf32>
    %659 = arith.mulf %650, %638 : vector<2x32xf32>
    %660 = arith.mulf %644, %652 : vector<2x32xf32>
    %661 = arith.addf %659, %660 : vector<2x32xf32>
    %662 = math.tanh %661 : vector<2x32xf32>
    %663 = arith.mulf %658, %662 : vector<2x32xf32>
    %c0_282 = arith.constant 0 : index
    %c0_283 = arith.constant 0 : index
    %664 = vector.load %arg6[%c0_282, %c0_283] : memref<2x32xf32, #tpu.memory_space<vmem>>, vector<2x32xf32>
    tpu.vector_store %arg6[%c0_282, %c0_283], %637 {strides = array<i32>} : memref<2x32xf32, #tpu.memory_space<vmem>>, vector<2x32xf32>,
    %c0_284 = arith.constant 0 : index
    %c0_285 = arith.constant 0 : index
    %665 = vector.load %arg7[%c0_284, %c0_285] : memref<2x32xf32, #tpu.memory_space<vmem>>, vector<2x32xf32>
    tpu.vector_store %arg7[%c0_284, %c0_285], %635 {strides = array<i32>} : memref<2x32xf32, #tpu.memory_space<vmem>>, vector<2x32xf32>,
    %c0_286 = arith.constant 0 : index
    %c0_287 = arith.constant 0 : index
    %666 = vector.load %arg8[%c0_286, %c0_287] : memref<2x32xf32, #tpu.memory_space<vmem>>, vector<2x32xf32>
    tpu.vector_store %arg8[%c0_286, %c0_287], %663 {strides = array<i32>} : memref<2x32xf32, #tpu.memory_space<vmem>>, vector<2x32xf32>,
    %c0_288 = arith.constant 0 : index
    %c0_289 = arith.constant 0 : index
    %667 = vector.load %arg9[%c0_288, %c0_289] : memref<2x32xf32, #tpu.memory_space<vmem>>, vector<2x32xf32>
    tpu.vector_store %arg9[%c0_288, %c0_289], %661 {strides = array<i32>} : memref<2x32xf32, #tpu.memory_space<vmem>>, vector<2x32xf32>,
    %668 = arith.index_cast %594 : i32 to index
    %c0_290 = arith.constant 0 : index
    %c0_291 = arith.constant 0 : index
    %669 = vector.load %arg4[%668, %c0_290, %c0_291] : memref<8x2x32xf32, #tpu.memory_space<vmem>>, vector<1x2x32xf32>
    %670 = vector.shape_cast %669 : vector<1x2x32xf32> to vector<2x32xf32>
    %671 = vector.shape_cast %637 : vector<2x32xf32> to vector<1x2x32xf32>
    tpu.vector_store %arg4[%668, %c0_290, %c0_291], %671 {strides = array<i32>} : memref<8x2x32xf32, #tpu.memory_space<vmem>>, vector<1x2x32xf32>,
    %672 = arith.index_cast %595 : i32 to index
    %c0_292 = arith.constant 0 : index
    %c0_293 = arith.constant 0 : index
    %673 = vector.load %arg5[%672, %c0_292, %c0_293] : memref<8x2x32xf32, #tpu.memory_space<vmem>>, vector<1x2x32xf32>
    %674 = vector.shape_cast %673 : vector<1x2x32xf32> to vector<2x32xf32>
    %675 = vector.shape_cast %663 : vector<2x32xf32> to vector<1x2x32xf32>
    tpu.vector_store %arg5[%672, %c0_292, %c0_293], %675 {strides = array<i32>} : memref<8x2x32xf32, #tpu.memory_space<vmem>>, vector<1x2x32xf32>,
    %c8_i32 = arith.constant 8 : i32
    return
  }
  func.func @transform_0(%arg0: i32) -> (i32, i32, i32) {
    %c0_i32 = arith.constant 0 : i32
    %c0_i32_0 = arith.constant 0 : i32
    %c0_i32_1 = arith.constant 0 : i32
    %c0_i32_2 = arith.constant 0 : i32
    return %c0_i32, %c0_i32_0, %c0_i32_1 : i32, i32, i32
  }
  func.func @transform_1(%arg0: i32) -> (i32, i32) {
    %c0_i32 = arith.constant 0 : i32
    %c0_i32_0 = arith.constant 0 : i32
    %c0_i32_1 = arith.constant 0 : i32
    return %c0_i32, %c0_i32_0 : i32, i32
  }
  func.func @transform_2(%arg0: i32) -> (i32, i32) {
    %c0_i32 = arith.constant 0 : i32
    %c0_i32_0 = arith.constant 0 : i32
    %c0_i32_1 = arith.constant 0 : i32
    return %c0_i32, %c0_i32_0 : i32, i32
  }
  func.func @transform_3(%arg0: i32) -> (i32, i32, i32) {
    %c0_i32 = arith.constant 0 : i32
    %c0_i32_0 = arith.constant 0 : i32
    %c0_i32_1 = arith.constant 0 : i32
    %c0_i32_2 = arith.constant 0 : i32
    return %c0_i32, %c0_i32_0, %c0_i32_1 : i32, i32, i32
  }
  func.func @transform_4(%arg0: i32) -> (i32, i32, i32) {
    %c0_i32 = arith.constant 0 : i32
    %c0_i32_0 = arith.constant 0 : i32
    %c0_i32_1 = arith.constant 0 : i32
    %c0_i32_2 = arith.constant 0 : i32
    return %c0_i32, %c0_i32_0, %c0_i32_1 : i32, i32, i32
  }
}

module attributes {stable_mosaic.version = 11 : i64} {
  func.func @_matmul_bias_kernel(%arg0: i32, %arg1: memref<16x64xf32, #tpu.memory_space<vmem>>, %arg2: memref<64x128xf32, #tpu.memory_space<vmem>>, %arg3: memref<1x128xf32, #tpu.memory_space<vmem>>, %arg4: memref<16x128xf32, #tpu.memory_space<vmem>>) attributes {dimension_semantics = [#tpu.dimension_semantics<parallel>], iteration_bounds = array<i64: 1>, scalar_prefetch = 0 : i64, scratch_operands = 0 : i64, tpu.core_type = #tpu.core_type<tc>, window_params = [{transform_indices = @transform_0, window_bounds = array<i64: 16, 64>}, {pipeline_mode = #tpu.pipeline_mode<synchronous>, transform_indices = @transform_1, window_bounds = array<i64: 64, 128>}, {pipeline_mode = #tpu.pipeline_mode<synchronous>, transform_indices = @transform_2, window_bounds = array<i64: 1, 128>}, {transform_indices = @transform_3, window_bounds = array<i64: 16, 128>}]} {
    %c0 = arith.constant 0 : index
    %c0_0 = arith.constant 0 : index
    %0 = vector.load %arg1[%c0, %c0_0] : memref<16x64xf32, #tpu.memory_space<vmem>>, vector<16x64xf32>
    %1 = arith.truncf %0 : vector<16x64xf32> to vector<16x64xbf16>
    %c0_1 = arith.constant 0 : index
    %c0_2 = arith.constant 0 : index
    %2 = vector.load %arg2[%c0_1, %c0_2] : memref<64x128xf32, #tpu.memory_space<vmem>>, vector<64x128xf32>
    %3 = arith.truncf %2 : vector<64x128xf32> to vector<64x128xbf16>
    %cst = arith.constant dense<0.000000e+00> : vector<16x128xf32>
    %4 = tpu.matmul %1, %3, %cst {dimension_numbers = #tpu.dot_dimension_numbers<[1], [0], [0], [1], [0, 0, 1, 1], [], []>} : vector<16x64xbf16>, vector<64x128xbf16>, vector<16x128xf32> -> vector<16x128xf32>
    %c0_3 = arith.constant 0 : index
    %c0_4 = arith.constant 0 : index
    %5 = vector.load %arg3[%c0_3, %c0_4] : memref<1x128xf32, #tpu.memory_space<vmem>>, vector<1x128xf32>
    %6 = vector.broadcast %5 : vector<1x128xf32> to vector<16x128xf32>
    %7 = arith.addf %4, %6 : vector<16x128xf32>
    %c0_5 = arith.constant 0 : index
    %c0_6 = arith.constant 0 : index
    %8 = vector.load %arg4[%c0_5, %c0_6] : memref<16x128xf32, #tpu.memory_space<vmem>>, vector<16x128xf32>
    tpu.vector_store %arg4[%c0_5, %c0_6], %7 {strides = array<i32>} : memref<16x128xf32, #tpu.memory_space<vmem>>, vector<16x128xf32>,
    return
  }
  func.func @transform_0(%arg0: i32) -> (i32, i32) {
    %c0_i32 = arith.constant 0 : i32
    %c0_i32_0 = arith.constant 0 : i32
    return %arg0, %c0_i32 : i32, i32
  }
  func.func @transform_1(%arg0: i32) -> (i32, i32) {
    %c0_i32 = arith.constant 0 : i32
    %c0_i32_0 = arith.constant 0 : i32
    %c0_i32_1 = arith.constant 0 : i32
    return %c0_i32, %c0_i32_0 : i32, i32
  }
  func.func @transform_2(%arg0: i32) -> (i32, i32) {
    %c0_i32 = arith.constant 0 : i32
    %c0_i32_0 = arith.constant 0 : i32
    %c0_i32_1 = arith.constant 0 : i32
    return %c0_i32, %c0_i32_0 : i32, i32
  }
  func.func @transform_3(%arg0: i32) -> (i32, i32) {
    %c0_i32 = arith.constant 0 : i32
    %c0_i32_0 = arith.constant 0 : i32
    return %arg0, %c0_i32 : i32, i32
  }
}

</mosaic_0001>

<llo_original>
// kernel: crnn_forward.12
$region0: #{crnn_forward.12}
  #allocation0 [shape = 'u32[]', space=smem, size = 0x4, offset = 0x4, fixed_abs, tag = 'smem constant byte address 0x4 - core index']
  #allocation1 [shape = 'u32[144,128]{1,0:T(1,128)}', space=vmem, size = 0x12000, scoped, tag = 'internal scratch']
  %s0 = inlined_call_operand.vmem [shape: f32[256,16], index: 0, kind: input, shape index: {}]
  %s1 = inlined_call_operand.vmem [shape: f32[16,128], index: 1, kind: input, shape index: {}]
  %s2 = inlined_call_operand.vmem [shape: f32[1,128], index: 2, kind: input, shape index: {}]
  %s3 = inlined_call_operand.vmem [shape: f32[256,128], index: 3, kind: output, shape index: {}]
  %s4 = sld [smem:[#allocation0]]
  $region22: #{crnn_forward.12} parent=0
    _
  %s6 = ssub.s32 1, %s4
  %s7 = scalar_select 0, %s6, %s4
  // Predicated region
  $region2: #{crnn_forward.12} parent=0 // pred_check
    _
  $region3: #{crnn_forward.12} parent=0 // pred_check_branch
    %9 = sbr.rel (0) target = $region5
  $region4: #{crnn_forward.12} parent=0 // pred_region
    _
  $region5: #{crnn_forward.12} parent=0 // pred_fallthru
    _
  // Predicated region
  $region6: #{crnn_forward.12} parent=0 // pred_check
    _
  $region7: #{crnn_forward.12} parent=0 // pred_check_branch
    %11 = sbr.rel (0) target = $region9
  $region8: #{crnn_forward.12} parent=0 // pred_region
    _
  $region9: #{crnn_forward.12} parent=0 // pred_fallthru
    _
  // Predicated region
  $region10: #{crnn_forward.12} parent=0 // pred_check
    _
  $region11: #{crnn_forward.12} parent=0 // pred_check_branch
    %13 = sbr.rel (0) target = $region13
  $region12: #{crnn_forward.12} parent=0 // pred_region
    _
  $region13: #{crnn_forward.12} parent=0 // pred_fallthru
    _
  %v15 = vld [vmem:[%s0] sm:$0xff]
  %v16 = vld [vmem:[%s0 + $0x8] sm:$0xff]
  %v17 = vld [vmem:[%s0 + $0x10] sm:$0xff]
  %v18 = vld [vmem:[%s0 + $0x18] sm:$0xff]
  %v19 = vld [vmem:[%s0 + $0x20] sm:$0xff]
  %v20 = vld [vmem:[%s0 + $0x28] sm:$0xff]
  %v21 = vld [vmem:[%s0 + $0x30] sm:$0xff]
  %v22 = vld [vmem:[%s0 + $0x38] sm:$0xff]
  %v23 = vld [vmem:[%s0 + $0x40] sm:$0xff]
  %v24 = vld [vmem:[%s0 + $0x48] sm:$0xff]
  %v25 = vld [vmem:[%s0 + $0x50] sm:$0xff]
  %v26 = vld [vmem:[%s0 + $0x58] sm:$0xff]
  %v27 = vld [vmem:[%s0 + $0x60] sm:$0xff]
  %v28 = vld [vmem:[%s0 + $0x68] sm:$0xff]
  %v29 = vld [vmem:[%s0 + $0x70] sm:$0xff]
  %v30 = vld [vmem:[%s0 + $0x78] sm:$0xff]
  %v31 = vld [vmem:[%s0 + $0x80] sm:$0xff]
  %v32 = vld [vmem:[%s0 + $0x88] sm:$0xff]
  %v33 = vld [vmem:[%s0 + $0x90] sm:$0xff]
  %v34 = vld [vmem:[%s0 + $0x98] sm:$0xff]
  %v35 = vld [vmem:[%s0 + $0xa0] sm:$0xff]
  %v36 = vld [vmem:[%s0 + $0xa8] sm:$0xff]
  %v37 = vld [vmem:[%s0 + $0xb0] sm:$0xff]
  %v38 = vld [vmem:[%s0 + $0xb8] sm:$0xff]
  %v39 = vld [vmem:[%s0 + $0xc0] sm:$0xff]
  %v40 = vld [vmem:[%s0 + $0xc8] sm:$0xff]
  %v41 = vld [vmem:[%s0 + $0xd0] sm:$0xff]
  %v42 = vld [vmem:[%s0 + $0xd8] sm:$0xff]
  %v43 = vld [vmem:[%s0 + $0xe0] sm:$0xff]
  %v44 = vld [vmem:[%s0 + $0xe8] sm:$0xff]
  %v45 = vld [vmem:[%s0 + $0xf0] sm:$0xff]
  %v46 = vld [vmem:[%s0 + $0xf8] sm:$0xff]
  %v47 = vpack.c.bf16 %v16, %v15
  %v48 = vpack.c.bf16 %v18, %v17
  %v49 = vpack.c.bf16 %v20, %v19
  %v50 = vpack.c.bf16 %v22, %v21
  %v51 = vpack.c.bf16 %v24, %v23
  %v52 = vpack.c.bf16 %v26, %v25
  %v53 = vpack.c.bf16 %v28, %v27
  %v54 = vpack.c.bf16 %v30, %v29
  %v55 = vpack.c.bf16 %v32, %v31
  %v56 = vpack.c.bf16 %v34, %v33
  %v57 = vpack.c.bf16 %v36, %v35
  %v58 = vpack.c.bf16 %v38, %v37
  %v59 = vpack.c.bf16 %v40, %v39
  %v60 = vpack.c.bf16 %v42, %v41
  %v61 = vpack.c.bf16 %v44, %v43
  %v62 = vpack.c.bf16 %v46, %v45
  %v63 = vld [vmem:[%s1] sm:$0xff]
  %v64 = vld [vmem:[%s1 + $0x8] sm:$0xff]
  %v65 = vpack.c.bf16 %v64, %v63
  %v66 = vld [vmem:[%s2] sm:$0x1]
  %v68 = vlaneseq
  %v69 = vshrl.u32 %v68, 7
  %v70 = vsub.s32 0, %v69
  %v71 = vrot.slane %v66, %v70
  %vm73 = vcmask 130048
  %v75 = vsel %vm73, %v47, 0
  %v78 = vsel %vm73, %v48, 0
  %v81 = vsel %vm73, %v49, 0
  %v84 = vsel %vm73, %v50, 0
  %v87 = vsel %vm73, %v51, 0
  %v90 = vsel %vm73, %v52, 0
  %v93 = vsel %vm73, %v53, 0
  %v96 = vsel %vm73, %v54, 0
  %v99 = vsel %vm73, %v55, 0
  %v102 = vsel %vm73, %v56, 0
  %v105 = vsel %vm73, %v57, 0
  %v108 = vsel %vm73, %v58, 0
  %v111 = vsel %vm73, %v59, 0
  %v114 = vsel %vm73, %v60, 0
  %v117 = vsel %vm73, %v61, 0
  %v120 = vsel %vm73, %v62, 0
  %122 = vmatprep.subr.bf16.mxu0 0
  %123 = vmatpush1.bf16.msra.mxu0 %v65
  %124 = vmatprep.subr.bf16.mxu0 0
  %125 = vmatpush1.bf16.msra.mxu0 0
  %126 = vmatprep.subr.bf16.mxu0 0
  %127 = vmatpush1.bf16.msra.mxu0 0
  %128 = vmatprep.subr.bf16.mxu0 0
  %129 = vmatpush1.bf16.msra.mxu0 0
  %130 = vmatprep.subr.bf16.mxu0 0
  %131 = vmatpush1.bf16.msra.mxu0 0
  %132 = vmatprep.subr.bf16.mxu0 0
  %133 = vmatpush1.bf16.msra.mxu0 0
  %134 = vmatprep.subr.bf16.mxu0 0
  %135 = vmatpush1.bf16.msra.mxu0 0
  %136 = vmatprep.subr.bf16.mxu0 0
  %137 = vmatpush1.bf16.msra.mxu0 0
  %138 = vmatprep.subr.bf16.mxu0 0
  %139 = vmatpush1.bf16.msra.mxu0 0
  %140 = vmatprep.subr.bf16.mxu0 0
  %141 = vmatpush1.bf16.msra.mxu0 0
  %142 = vmatprep.subr.bf16.mxu0 0
  %143 = vmatpush1.bf16.msra.mxu0 0
  %144 = vmatprep.subr.bf16.mxu0 0
  %145 = vmatpush1.bf16.msra.mxu0 0
  %146 = vmatprep.subr.bf16.mxu0 0
  %147 = vmatpush1.bf16.msra.mxu0 0
  %148 = vmatprep.subr.bf16.mxu0 0
  %149 = vmatpush1.bf16.msra.mxu0 0
  %150 = vmatprep.subr.bf16.mxu0 0
  %151 = vmatpush1.bf16.msra.mxu0 0
  %152 = vmatprep.subr.bf16.mxu0 0
  %153 = vmatpush1.bf16.msra.mxu0 0
  %154 = vmatprep.mubr.bf16.mxu0 0
  %155 = vmatmul.mubr.bf16.gmra.mrb[0].mxu0 %v75
  %v156 = vpop.f32.mrb[0].mxu0
  %v157 = vadd.f32 %v71, %v156
  %v158 = vpop.f32.mrb[0].mxu0
  %v159 = vpop.f32.mrb[0].mxu0
  %v160 = vadd.f32 %v71, %v159
  %v161 = vpop.f32.mrb[0].mxu0
  %162 = vmatprep.mubr.bf16.mxu0 0
  %163 = vmatmul.mubr.bf16.gmra.mrb[0].mxu0 %v78
  %v164 = vpop.f32.mrb[0].mxu0
  %v165 = vadd.f32 %v71, %v164
  %v166 = vpop.f32.mrb[0].mxu0
  %v167 = vpop.f32.mrb[0].mxu0
  %v168 = vadd.f32 %v71, %v167
  %v169 = vpop.f32.mrb[0].mxu0
  %170 = vmatprep.mubr.bf16.mxu0 0
  %171 = vmatmul.mubr.bf16.gmra.mrb[0].mxu0 %v81
  %v172 = vpop.f32.mrb[0].mxu0
  %v173 = vadd.f32 %v71, %v172
  %v174 = vpop.f32.mrb[0].mxu0
  %v175 = vpop.f32.mrb[0].mxu0
  %v176 = vadd.f32 %v71, %v175
  %v177 = vpop.f32.mrb[0].mxu0
  %178 = vmatprep.mubr.bf16.mxu0 0
  %179 = vmatmul.mubr.bf16.gmra.mrb[0].mxu0 %v84
  %v180 = vpop.f32.mrb[0].mxu0
  %v181 = vadd.f32 %v71, %v180
  %v182 = vpop.f32.mrb[0].mxu0
  %v183 = vpop.f32.mrb[0].mxu0
  %v184 = vadd.f32 %v71, %v183
  %v185 = vpop.f32.mrb[0].mxu0
  %186 = vmatprep.mubr.bf16.mxu0 0
  %187 = vmatmul.mubr.bf16.gmra.mrb[0].mxu0 %v87
  %v188 = vpop.f32.mrb[0].mxu0
  %v189 = vadd.f32 %v71, %v188
  %v190 = vpop.f32.mrb[0].mxu0
  %v191 = vpop.f32.mrb[0].mxu0
  %v192 = vadd.f32 %v71, %v191
  %v193 = vpop.f32.mrb[0].mxu0
  %194 = vmatprep.mubr.bf16.mxu0 0
  %195 = vmatmul.mubr.bf16.gmra.mrb[0].mxu0 %v90
  %v196 = vpop.f32.mrb[0].mxu0
  %v197 = vadd.f32 %v71, %v196
  %v198 = vpop.f32.mrb[0].mxu0
  %v199 = vpop.f32.mrb[0].mxu0
  %v200 = vadd.f32 %v71, %v199
  %v201 = vpop.f32.mrb[0].mxu0
  %202 = vmatprep.mubr.bf16.mxu0 0
  %203 = vmatmul.mubr.bf16.gmra.mrb[0].mxu0 %v93
  %v204 = vpop.f32.mrb[0].mxu0
  %v205 = vadd.f32 %v71, %v204
  %v206 = vpop.f32.mrb[0].mxu0
  %v207 = vpop.f32.mrb[0].mxu0
  %v208 = vadd.f32 %v71, %v207
  %v209 = vpop.f32.mrb[0].mxu0
  %210 = vmatprep.mubr.bf16.mxu0 0
  %211 = vmatmul.mubr.bf16.gmra.mrb[0].mxu0 %v96
  %v212 = vpop.f32.mrb[0].mxu0
  %v213 = vadd.f32 %v71, %v212
  %v214 = vpop.f32.mrb[0].mxu0
  %v215 = vpop.f32.mrb[0].mxu0
  %v216 = vadd.f32 %v71, %v215
  %v217 = vpop.f32.mrb[0].mxu0
  %218 = vmatprep.mubr.bf16.mxu0 0
  %219 = vmatmul.mubr.bf16.gmra.mrb[0].mxu0 %v99
  %v220 = vpop.f32.mrb[0].mxu0
  %v221 = vadd.f32 %v71, %v220
  %v222 = vpop.f32.mrb[0].mxu0
  %v223 = vpop.f32.mrb[0].mxu0
  %v224 = vadd.f32 %v71, %v223
  %v225 = vpop.f32.mrb[0].mxu0
  %226 = vmatprep.mubr.bf16.mxu0 0
  %227 = vmatmul.mubr.bf16.gmra.mrb[0].mxu0 %v102
  %v228 = vpop.f32.mrb[0].mxu0
  %v229 = vadd.f32 %v71, %v228
  %v230 = vpop.f32.mrb[0].mxu0
  %v231 = vpop.f32.mrb[0].mxu0
  %v232 = vadd.f32 %v71, %v231
  %v233 = vpop.f32.mrb[0].mxu0
  %234 = vmatprep.mubr.bf16.mxu0 0
  %235 = vmatmul.mubr.bf16.gmra.mrb[0].mxu0 %v105
  %v236 = vpop.f32.mrb[0].mxu0
  %v237 = vadd.f32 %v71, %v236
  %v238 = vpop.f32.mrb[0].mxu0
  %v239 = vpop.f32.mrb[0].mxu0
  %v240 = vadd.f32 %v71, %v239
  %v241 = vpop.f32.mrb[0].mxu0
  %242 = vmatprep.mubr.bf16.mxu0 0
  %243 = vmatmul.mubr.bf16.gmra.mrb[0].mxu0 %v108
  %v244 = vpop.f32.mrb[0].mxu0
  %v245 = vadd.f32 %v71, %v244
  %v246 = vpop.f32.mrb[0].mxu0
  %v247 = vpop.f32.mrb[0].mxu0
  %v248 = vadd.f32 %v71, %v247
  %v249 = vpop.f32.mrb[0].mxu0
  %250 = vmatprep.mubr.bf16.mxu0 0
  %251 = vmatmul.mubr.bf16.gmra.mrb[0].mxu0 %v111
  %v252 = vpop.f32.mrb[0].mxu0
  %v253 = vadd.f32 %v71, %v252
  %v254 = vpop.f32.mrb[0].mxu0
  %v255 = vpop.f32.mrb[0].mxu0
  %v256 = vadd.f32 %v71, %v255
  %v257 = vpop.f32.mrb[0].mxu0
  %258 = vmatprep.mubr.bf16.mxu0 0
  %259 = vmatmul.mubr.bf16.gmra.mrb[0].mxu0 %v114
  %v260 = vpop.f32.mrb[0].mxu0
  %v261 = vadd.f32 %v71, %v260
  %v262 = vpop.f32.mrb[0].mxu0
  %v263 = vpop.f32.mrb[0].mxu0
  %v264 = vadd.f32 %v71, %v263
  %v265 = vpop.f32.mrb[0].mxu0
  %266 = vmatprep.mubr.bf16.mxu0 0
  %267 = vmatmul.mubr.bf16.gmra.mrb[0].mxu0 %v117
  %v268 = vpop.f32.mrb[0].mxu0
  %v269 = vadd.f32 %v71, %v268
  %v270 = vpop.f32.mrb[0].mxu0
  %v271 = vpop.f32.mrb[0].mxu0
  %v272 = vadd.f32 %v71, %v271
  %v273 = vpop.f32.mrb[0].mxu0
  %274 = vmatprep.mubr.bf16.mxu0 0
  %275 = vmatmul.mubr.bf16.gmra.mrb[0].mxu0 %v120
  %v276 = vpop.f32.mrb[0].mxu0
  %v277 = vadd.f32 %v71, %v276
  %v278 = vpop.f32.mrb[0].mxu0
  %v279 = vpop.f32.mrb[0].mxu0
  %v280 = vadd.f32 %v71, %v279
  %v281 = vpop.f32.mrb[0].mxu0
  %282 = vdwg.mxu0
  %v283 = vmax.f32 %v157, 0.0
  %v284 = vmax.f32 %v160, 0.0
  %v285 = vmax.f32 %v165, 0.0
  %v286 = vmax.f32 %v168, 0.0
  %v287 = vmax.f32 %v173, 0.0
  %v288 = vmax.f32 %v176, 0.0
  %v289 = vmax.f32 %v181, 0.0
  %v290 = vmax.f32 %v184, 0.0
  %v291 = vmax.f32 %v189, 0.0
  %v292 = vmax.f32 %v192, 0.0
  %v293 = vmax.f32 %v197, 0.0
  %v294 = vmax.f32 %v200, 0.0
  %v295 = vmax.f32 %v205, 0.0
  %v296 = vmax.f32 %v208, 0.0
  %v297 = vmax.f32 %v213, 0.0
  %v298 = vmax.f32 %v216, 0.0
  %v299 = vmax.f32 %v221, 0.0
  %v300 = vmax.f32 %v224, 0.0
  %v301 = vmax.f32 %v229, 0.0
  %v302 = vmax.f32 %v232, 0.0
  %v303 = vmax.f32 %v237, 0.0
  %v304 = vmax.f32 %v240, 0.0
  %v305 = vmax.f32 %v245, 0.0
  %v306 = vmax.f32 %v248, 0.0
  %v307 = vmax.f32 %v253, 0.0
  %v308 = vmax.f32 %v256, 0.0
  %v309 = vmax.f32 %v261, 0.0
  %v310 = vmax.f32 %v264, 0.0
  %v311 = vmax.f32 %v269, 0.0
  %v312 = vmax.f32 %v272, 0.0
  %v313 = vmax.f32 %v277, 0.0
  %v314 = vmax.f32 %v280, 0.0
  %315 = vst [vmem:[%s3] sm:$0xff] %v283
  %316 = vst [vmem:[%s3 + $0x8] sm:$0xff] %v284
  %317 = vst [vmem:[%s3 + $0x10] sm:$0xff] %v285
  %318 = vst [vmem:[%s3 + $0x18] sm:$0xff] %v286
  %319 = vst [vmem:[%s3 + $0x20] sm:$0xff] %v287
  %320 = vst [vmem:[%s3 + $0x28] sm:$0xff] %v288
  %321 = vst [vmem:[%s3 + $0x30] sm:$0xff] %v289
  %322 = vst [vmem:[%s3 + $0x38] sm:$0xff] %v290
  %323 = vst [vmem:[%s3 + $0x40] sm:$0xff] %v291
  %324 = vst [vmem:[%s3 + $0x48] sm:$0xff] %v292
  %325 = vst [vmem:[%s3 + $0x50] sm:$0xff] %v293
  %326 = vst [vmem:[%s3 + $0x58] sm:$0xff] %v294
  %327 = vst [vmem:[%s3 + $0x60] sm:$0xff] %v295
  %328 = vst [vmem:[%s3 + $0x68] sm:$0xff] %v296
  %329 = vst [vmem:[%s3 + $0x70] sm:$0xff] %v297
  %330 = vst [vmem:[%s3 + $0x78] sm:$0xff] %v298
  %331 = vst [vmem:[%s3 + $0x80] sm:$0xff] %v299
  %332 = vst [vmem:[%s3 + $0x88] sm:$0xff] %v300
  %333 = vst [vmem:[%s3 + $0x90] sm:$0xff] %v301
  %334 = vst [vmem:[%s3 + $0x98] sm:$0xff] %v302
  %335 = vst [vmem:[%s3 + $0xa0] sm:$0xff] %v303
  %336 = vst [vmem:[%s3 + $0xa8] sm:$0xff] %v304
  %337 = vst [vmem:[%s3 + $0xb0] sm:$0xff] %v305
  %338 = vst [vmem:[%s3 + $0xb8] sm:$0xff] %v306
  %339 = vst [vmem:[%s3 + $0xc0] sm:$0xff] %v307
  %340 = vst [vmem:[%s3 + $0xc8] sm:$0xff] %v308
  %341 = vst [vmem:[%s3 + $0xd0] sm:$0xff] %v309
  %342 = vst [vmem:[%s3 + $0xd8] sm:$0xff] %v310
  %343 = vst [vmem:[%s3 + $0xe0] sm:$0xff] %v311
  %344 = vst [vmem:[%s3 + $0xe8] sm:$0xff] %v312
  %345 = vst [vmem:[%s3 + $0xf0] sm:$0xff] %v313
  %346 = vst [vmem:[%s3 + $0xf8] sm:$0xff] %v314
  // Predicated region
  $region14: #{crnn_forward.12} parent=0 // pred_check
    _
  $region15: #{crnn_forward.12} parent=0 // pred_check_branch
    %348 = sbr.rel (0) target = $region17
  $region16: #{crnn_forward.12} parent=0 // pred_region
    _
  $region17: #{crnn_forward.12} parent=0 // pred_fallthru
    _
  // Predicated region
  $region18: #{crnn_forward.12} parent=0 // pred_check
    _
  $region19: #{crnn_forward.12} parent=0 // pred_check_branch
    %350 = sbr.rel (0) target = $region21
  $region20: #{crnn_forward.12} parent=0 // pred_region
    _
  $region21: #{crnn_forward.12} parent=0 // pred_fallthru
    _

// kernel: crnn_forward.11
$region0: #{crnn_forward.11}
  #allocation0 [shape = 'u32[]', space=smem, size = 0x4, offset = 0x4, fixed_abs, tag = 'smem constant byte address 0x4 - core index']
  #allocation1 [shape = 'u32[144,128]{1,0:T(1,128)}', space=vmem, size = 0x12000, scoped, tag = 'internal scratch']
  %s0 = inlined_call_operand.vmem [shape: f32[2,10,18,16], index: 0, kind: input, shape index: {}]
  %s1 = inlined_call_operand.vmem [shape: f32[9,16], index: 1, kind: input, shape index: {}]
  %s2 = inlined_call_operand.vmem [shape: f32[2,8,16,16], index: 2, kind: output, shape index: {}]
  %s3 = sld [smem:[#allocation0]]
  $region18: #{crnn_forward.11} parent=0
    _
  %s5 = ssub.s32 1, %s3
  %s6 = scalar_select 0, %s5, %s3
  // Predicated region
  $region2: #{crnn_forward.11} parent=0 // pred_check
    _
  $region3: #{crnn_forward.11} parent=0 // pred_check_branch
    %8 = sbr.rel (0) target = $region5
  $region4: #{crnn_forward.11} parent=0 // pred_region
    _
  $region5: #{crnn_forward.11} parent=0 // pred_fallthru
    _
  // Predicated region
  $region6: #{crnn_forward.11} parent=0 // pred_check
    _
  $region7: #{crnn_forward.11} parent=0 // pred_check_branch
    %10 = sbr.rel (0) target = $region9
  $region8: #{crnn_forward.11} parent=0 // pred_region
    _
  $region9: #{crnn_forward.11} parent=0 // pred_fallthru
    _
  %v11 = vld [vmem:[%s0] sm:$0xff]
  %v12 = vld [vmem:[%s0 + $0x8] sm:$0xff]
  %v13 = vld [vmem:[%s0 + $0x10] sm:$0x3]
  %v14 = vld [vmem:[%s0 + $0x18] sm:$0xff]
  %v15 = vld [vmem:[%s0 + $0x20] sm:$0xff]
  %v16 = vld [vmem:[%s0 + $0x28] sm:$0x3]
  %v17 = vld [vmem:[%s0 + $0x30] sm:$0xff]
  %v18 = vld [vmem:[%s0 + $0x38] sm:$0xff]
  %v19 = vld [vmem:[%s0 + $0x40] sm:$0x3]
  %v20 = vld [vmem:[%s0 + $0x48] sm:$0xff]
  %v21 = vld [vmem:[%s0 + $0x50] sm:$0xff]
  %v22 = vld [vmem:[%s0 + $0x58] sm:$0x3]
  %v23 = vld [vmem:[%s0 + $0x60] sm:$0xff]
  %v24 = vld [vmem:[%s0 + $0x68] sm:$0xff]
  %v25 = vld [vmem:[%s0 + $0x70] sm:$0x3]
  %v26 = vld [vmem:[%s0 + $0x78] sm:$0xff]
  %v27 = vld [vmem:[%s0 + $0x80] sm:$0xff]
  %v28 = vld [vmem:[%s0 + $0x88] sm:$0x3]
  %v29 = vld [vmem:[%s0 + $0x90] sm:$0xff]
  %v30 = vld [vmem:[%s0 + $0x98] sm:$0xff]
  %v31 = vld [vmem:[%s0 + $0xa0] sm:$0x3]
  %v32 = vld [vmem:[%s0 + $0xa8] sm:$0xff]
  %v33 = vld [vmem:[%s0 + $0xb0] sm:$0xff]
  %v34 = vld [vmem:[%s0 + $0xb8] sm:$0x3]
  %v35 = vld [vmem:[%s0 + $0xc0] sm:$0xff]
  %v36 = vld [vmem:[%s0 + $0xc8] sm:$0xff]
  %v37 = vld [vmem:[%s0 + $0xd0] sm:$0x3]
  %v38 = vld [vmem:[%s0 + $0xd8] sm:$0xff]
  %v39 = vld [vmem:[%s0 + $0xe0] sm:$0xff]
  %v40 = vld [vmem:[%s0 + $0xe8] sm:$0x3]
  %v41 = vld [vmem:[%s0 + $0xf0] sm:$0xff]
  %v42 = vld [vmem:[%s0 + $0xf8] sm:$0xff]
  %v43 = vld [vmem:[%s0 + $0x100] sm:$0x3]
  %v44 = vld [vmem:[%s0 + $0x108] sm:$0xff]
  %v45 = vld [vmem:[%s0 + $0x110] sm:$0xff]
  %v46 = vld [vmem:[%s0 + $0x118] sm:$0x3]
  %v47 = vld [vmem:[%s0 + $0x120] sm:$0xff]
  %v48 = vld [vmem:[%s0 + $0x128] sm:$0xff]
  %v49 = vld [vmem:[%s0 + $0x130] sm:$0x3]
  %v50 = vld [vmem:[%s0 + $0x138] sm:$0xff]
  %v51 = vld [vmem:[%s0 + $0x140] sm:$0xff]
  %v52 = vld [vmem:[%s0 + $0x148] sm:$0x3]
  %v53 = vld [vmem:[%s0 + $0x150] sm:$0xff]
  %v54 = vld [vmem:[%s0 + $0x158] sm:$0xff]
  %v55 = vld [vmem:[%s0 + $0x160] sm:$0x3]
  %v56 = vld [vmem:[%s0 + $0x168] sm:$0xff]
  %v57 = vld [vmem:[%s0 + $0x170] sm:$0xff]
  %v58 = vld [vmem:[%s0 + $0x178] sm:$0x3]
  %v59 = vld [vmem:[%s0 + $0x180] sm:$0xff]
  %v60 = vld [vmem:[%s0 + $0x188] sm:$0xff]
  %v61 = vld [vmem:[%s0 + $0x190] sm:$0x3]
  %v62 = vld [vmem:[%s0 + $0x198] sm:$0xff]
  %v63 = vld [vmem:[%s0 + $0x1a0] sm:$0xff]
  %v64 = vld [vmem:[%s0 + $0x1a8] sm:$0x3]
  %v65 = vld [vmem:[%s0 + $0x1b0] sm:$0xff]
  %v66 = vld [vmem:[%s0 + $0x1b8] sm:$0xff]
  %v67 = vld [vmem:[%s0 + $0x1c0] sm:$0x3]
  %v68 = vld [vmem:[%s0 + $0x1c8] sm:$0xff]
  %v69 = vld [vmem:[%s0 + $0x1d0] sm:$0xff]
  %v70 = vld [vmem:[%s0 + $0x1d8] sm:$0x3]
  %v71 = vld [vmem:[%s1] sm:$0x1]
  %v72 = vlaneseq
  %v73 = vshrl.u32 %v72, 7
  %v74 = vsub.s32 0, %v73
  %v75 = vrot.slane %v71, %v74
  %v76 = vmul.f32 %v11, %v75
  %v77 = vmul.f32 %v12, %v75
  %v78 = vmul.f32 %v14, %v75
  %v79 = vmul.f32 %v15, %v75
  %v80 = vmul.f32 %v17, %v75
  %v81 = vmul.f32 %v18, %v75
  %v82 = vmul.f32 %v20, %v75
  %v83 = vmul.f32 %v21, %v75
  %v84 = vmul.f32 %v23, %v75
  %v85 = vmul.f32 %v24, %v75
  %v86 = vmul.f32 %v26, %v75
  %v87 = vmul.f32 %v27, %v75
  %v88 = vmul.f32 %v29, %v75
  %v89 = vmul.f32 %v30, %v75
  %v90 = vmul.f32 %v32, %v75
  %v91 = vmul.f32 %v33, %v75
  %v92 = vmul.f32 %v41, %v75
  %v93 = vmul.f32 %v42, %v75
  %v94 = vmul.f32 %v44, %v75
  %v95 = vmul.f32 %v45, %v75
  %v96 = vmul.f32 %v47, %v75
  %v97 = vmul.f32 %v48, %v75
  %v98 = vmul.f32 %v50, %v75
  %v99 = vmul.f32 %v51, %v75
  %v100 = vmul.f32 %v53, %v75
  %v101 = vmul.f32 %v54, %v75
  %v102 = vmul.f32 %v56, %v75
  %v103 = vmul.f32 %v57, %v75
  %v104 = vmul.f32 %v59, %v75
  %v105 = vmul.f32 %v60, %v75
  %v106 = vmul.f32 %v62, %v75
  %v107 = vmul.f32 %v63, %v75
  %v108 = vadd.f32 %v76, 0.0
  %v109 = vadd.f32 %v77, 0.0
  %v110 = vadd.f32 %v78, 0.0
  %v111 = vadd.f32 %v79, 0.0
  %v112 = vadd.f32 %v80, 0.0
  %v113 = vadd.f32 %v81, 0.0
  %v114 = vadd.f32 %v82, 0.0
  %v115 = vadd.f32 %v83, 0.0
  %v116 = vadd.f32 %v84, 0.0
  %v117 = vadd.f32 %v85, 0.0
  %v118 = vadd.f32 %v86, 0.0
  %v119 = vadd.f32 %v87, 0.0
  %v120 = vadd.f32 %v88, 0.0
  %v121 = vadd.f32 %v89, 0.0
  %v122 = vadd.f32 %v90, 0.0
  %v123 = vadd.f32 %v91, 0.0
  %v124 = vadd.f32 %v92, 0.0
  %v125 = vadd.f32 %v93, 0.0
  %v126 = vadd.f32 %v94, 0.0
  %v127 = vadd.f32 %v95, 0.0
  %v128 = vadd.f32 %v96, 0.0
  %v129 = vadd.f32 %v97, 0.0
  %v130 = vadd.f32 %v98, 0.0
  %v131 = vadd.f32 %v99, 0.0
  %v132 = vadd.f32 %v100, 0.0
  %v133 = vadd.f32 %v101, 0.0
  %v134 = vadd.f32 %v102, 0.0
  %v135 = vadd.f32 %v103, 0.0
  %v136 = vadd.f32 %v104, 0.0
  %v137 = vadd.f32 %v105, 0.0
  %v138 = vadd.f32 %v106, 0.0
  %v139 = vadd.f32 %v107, 0.0
  %v140 = vld [vmem:[%s1 + $0x1] sm:$0x1]
  %v141 = vlaneseq
  %v142 = vshrl.u32 %v141, 7
  %v143 = vsub.s32 0, %v142
  %v144 = vrot.slane %v140, %v143
  %v145 = vmul.f32 %v11, %v144
  %v146 = vmul.f32 %v12, %v144
  %v147 = vmul.f32 %v13, %v144
  %v148 = vmul.f32 %v14, %v144
  %v149 = vmul.f32 %v15, %v144
  %v150 = vmul.f32 %v16, %v144
  %v151 = vmul.f32 %v17, %v144
  %v152 = vmul.f32 %v18, %v144
  %v153 = vmul.f32 %v19, %v144
  %v154 = vmul.f32 %v20, %v144
  %v155 = vmul.f32 %v21, %v144
  %v156 = vmul.f32 %v22, %v144
  %v157 = vmul.f32 %v23, %v144
  %v158 = vmul.f32 %v24, %v144
  %v159 = vmul.f32 %v25, %v144
  %v160 = vmul.f32 %v26, %v144
  %v161 = vmul.f32 %v27, %v144
  %v162 = vmul.f32 %v28, %v144
  %v163 = vmul.f32 %v29, %v144
  %v164 = vmul.f32 %v30, %v144
  %v165 = vmul.f32 %v31, %v144
  %v166 = vmul.f32 %v32, %v144
  %v167 = vmul.f32 %v33, %v144
  %v168 = vmul.f32 %v34, %v144
  %v169 = vmul.f32 %v41, %v144
  %v170 = vmul.f32 %v42, %v144
  %v171 = vmul.f32 %v43, %v144
  %v172 = vmul.f32 %v44, %v144
  %v173 = vmul.f32 %v45, %v144
  %v174 = vmul.f32 %v46, %v144
  %v175 = vmul.f32 %v47, %v144
  %v176 = vmul.f32 %v48, %v144
  %v177 = vmul.f32 %v49, %v144
  %v178 = vmul.f32 %v50, %v144
  %v179 = vmul.f32 %v51, %v144
  %v180 = vmul.f32 %v52, %v144
  %v181 = vmul.f32 %v53, %v144
  %v182 = vmul.f32 %v54, %v144
  %v183 = vmul.f32 %v55, %v144
  %v184 = vmul.f32 %v56, %v144
  %v185 = vmul.f32 %v57, %v144
  %v186 = vmul.f32 %v58, %v144
  %v187 = vmul.f32 %v59, %v144
  %v188 = vmul.f32 %v60, %v144
  %v189 = vmul.f32 %v61, %v144
  %v190 = vmul.f32 %v62, %v144
  %v191 = vmul.f32 %v63, %v144
  %v192 = vmul.f32 %v64, %v144
  %vm241 = vcmask 1046528
  %v242 = vrot.slane %v145, 1
  %v243 = vrot.slane %v146, 1
  %v244 = vsel %vm241, %v242, %v243
  %v245 = vrot.slane %v147, 1
  %v246 = vsel %vm241, %v243, %v245
  %v247 = vrot.slane %v148, 1
  %v248 = vrot.slane %v149, 1
  %v249 = vsel %vm241, %v247, %v248
  %v250 = vrot.slane %v150, 1
  %v251 = vsel %vm241, %v248, %v250
  %v252 = vrot.slane %v151, 1
  %v253 = vrot.slane %v152, 1
  %v254 = vsel %vm241, %v252, %v253
  %v255 = vrot.slane %v153, 1
  %v256 = vsel %vm241, %v253, %v255
  %v257 = vrot.slane %v154, 1
  %v258 = vrot.slane %v155, 1
  %v259 = vsel %vm241, %v257, %v258
  %v260 = vrot.slane %v156, 1
  %v261 = vsel %vm241, %v258, %v260
  %v262 = vrot.slane %v157, 1
  %v263 = vrot.slane %v158, 1
  %v264 = vsel %vm241, %v262, %v263
  %v265 = vrot.slane %v159, 1
  %v266 = vsel %vm241, %v263, %v265
  %v267 = vrot.slane %v160, 1
  %v268 = vrot.slane %v161, 1
  %v269 = vsel %vm241, %v267, %v268
  %v270 = vrot.slane %v162, 1
  %v271 = vsel %vm241, %v268, %v270
  %v272 = vrot.slane %v163, 1
  %v273 = vrot.slane %v164, 1
  %v274 = vsel %vm241, %v272, %v273
  %v275 = vrot.slane %v165, 1
  %v276 = vsel %vm241, %v273, %v275
  %v277 = vrot.slane %v166, 1
  %v278 = vrot.slane %v167, 1
  %v279 = vsel %vm241, %v277, %v278
  %v280 = vrot.slane %v168, 1
  %v281 = vsel %vm241, %v278, %v280
  %v282 = vrot.slane %v169, 1
  %v283 = vrot.slane %v170, 1
  %v284 = vsel %vm241, %v282, %v283
  %v285 = vrot.slane %v171, 1
  %v286 = vsel %vm241, %v283, %v285
  %v287 = vrot.slane %v172, 1
  %v288 = vrot.slane %v173, 1
  %v289 = vsel %vm241, %v287, %v288
  %v290 = vrot.slane %v174, 1
  %v291 = vsel %vm241, %v288, %v290
  %v292 = vrot.slane %v175, 1
  %v293 = vrot.slane %v176, 1
  %v294 = vsel %vm241, %v292, %v293
  %v295 = vrot.slane %v177, 1
  %v296 = vsel %vm241, %v293, %v295
  %v297 = vrot.slane %v178, 1
  %v298 = vrot.slane %v179, 1
  %v299 = vsel %vm241, %v297, %v298
  %v300 = vrot.slane %v180, 1
  %v301 = vsel %vm241, %v298, %v300
  %v302 = vrot.slane %v181, 1
  %v303 = vrot.slane %v182, 1
  %v304 = vsel %vm241, %v302, %v303
  %v305 = vrot.slane %v183, 1
  %v306 = vsel %vm241, %v303, %v305
  %v307 = vrot.slane %v184, 1
  %v308 = vrot.slane %v185, 1
  %v309 = vsel %vm241, %v307, %v308
  %v310 = vrot.slane %v186, 1
  %v311 = vsel %vm241, %v308, %v310
  %v312 = vrot.slane %v187, 1
  %v313 = vrot.slane %v188, 1
  %v314 = vsel %vm241, %v312, %v313
  %v315 = vrot.slane %v189, 1
  %v316 = vsel %vm241, %v313, %v315
  %v317 = vrot.slane %v190, 1
  %v318 = vrot.slane %v191, 1
  %v319 = vsel %vm241, %v317, %v318
  %v320 = vrot.slane %v192, 1
  %v321 = vsel %vm241, %v318, %v320
  %v354 = vadd.f32 %v108, %v244
  %v355 = vadd.f32 %v109, %v246
  %v356 = vadd.f32 %v110, %v249
  %v357 = vadd.f32 %v111, %v251
  %v358 = vadd.f32 %v112, %v254
  %v359 = vadd.f32 %v113, %v256
  %v360 = vadd.f32 %v114, %v259
  %v361 = vadd.f32 %v115, %v261
  %v362 = vadd.f32 %v116, %v264
  %v363 = vadd.f32 %v117, %v266
  %v364 = vadd.f32 %v118, %v269
  %v365 = vadd.f32 %v119, %v271
  %v366 = vadd.f32 %v120, %v274
  %v367 = vadd.f32 %v121, %v276
  %v368 = vadd.f32 %v122, %v279
  %v369 = vadd.f32 %v123, %v281
  %v370 = vadd.f32 %v124, %v284
  %v371 = vadd.f32 %v125, %v286
  %v372 = vadd.f32 %v126, %v289
  %v373 = vadd.f32 %v127, %v291
  %v374 = vadd.f32 %v128, %v294
  %v375 = vadd.f32 %v129, %v296
  %v376 = vadd.f32 %v130, %v299
  %v377 = vadd.f32 %v131, %v301
  %v378 = vadd.f32 %v132, %v304
  %v379 = vadd.f32 %v133, %v306
  %v380 = vadd.f32 %v134, %v309
  %v381 = vadd.f32 %v135, %v311
  %v382 = vadd.f32 %v136, %v314
  %v383 = vadd.f32 %v137, %v316
  %v384 = vadd.f32 %v138, %v319
  %v385 = vadd.f32 %v139, %v321
  %v386 = vld [vmem:[%s1 + $0x2] sm:$0x1]
  %v387 = vlaneseq
  %v388 = vshrl.u32 %v387, 7
  %v389 = vsub.s32 0, %v388
  %v390 = vrot.slane %v386, %v389
  %v391 = vmul.f32 %v11, %v390
  %v392 = vmul.f32 %v12, %v390
  %v393 = vmul.f32 %v13, %v390
  %v394 = vmul.f32 %v14, %v390
  %v395 = vmul.f32 %v15, %v390
  %v396 = vmul.f32 %v16, %v390
  %v397 = vmul.f32 %v17, %v390
  %v398 = vmul.f32 %v18, %v390
  %v399 = vmul.f32 %v19, %v390
  %v400 = vmul.f32 %v20, %v390
  %v401 = vmul.f32 %v21, %v390
  %v402 = vmul.f32 %v22, %v390
  %v403 = vmul.f32 %v23, %v390
  %v404 = vmul.f32 %v24, %v390
  %v405 = vmul.f32 %v25, %v390
  %v406 = vmul.f32 %v26, %v390
  %v407 = vmul.f32 %v27, %v390
  %v408 = vmul.f32 %v28, %v390
  %v409 = vmul.f32 %v29, %v390
  %v410 = vmul.f32 %v30, %v390
  %v411 = vmul.f32 %v31, %v390
  %v412 = vmul.f32 %v32, %v390
  %v413 = vmul.f32 %v33, %v390
  %v414 = vmul.f32 %v34, %v390
  %v415 = vmul.f32 %v41, %v390
  %v416 = vmul.f32 %v42, %v390
  %v417 = vmul.f32 %v43, %v390
  %v418 = vmul.f32 %v44, %v390
  %v419 = vmul.f32 %v45, %v390
  %v420 = vmul.f32 %v46, %v390
  %v421 = vmul.f32 %v47, %v390
  %v422 = vmul.f32 %v48, %v390
  %v423 = vmul.f32 %v49, %v390
  %v424 = vmul.f32 %v50, %v390
  %v425 = vmul.f32 %v51, %v390
  %v426 = vmul.f32 %v52, %v390
  %v427 = vmul.f32 %v53, %v390
  %v428 = vmul.f32 %v54, %v390
  %v429 = vmul.f32 %v55, %v390
  %v430 = vmul.f32 %v56, %v390
  %v431 = vmul.f32 %v57, %v390
  %v432 = vmul.f32 %v58, %v390
  %v433 = vmul.f32 %v59, %v390
  %v434 = vmul.f32 %v60, %v390
  %v435 = vmul.f32 %v61, %v390
  %v436 = vmul.f32 %v62, %v390
  %v437 = vmul.f32 %v63, %v390
  %v438 = vmul.f32 %v64, %v390
  %vm487 = vcmask 1045504
  %v488 = vrot.slane %v391, 2
  %v489 = vrot.slane %v392, 2
  %v490 = vsel %vm487, %v488, %v489
  %v491 = vrot.slane %v393, 2
  %v492 = vsel %vm487, %v489, %v491
  %v493 = vrot.slane %v394, 2
  %v494 = vrot.slane %v395, 2
  %v495 = vsel %vm487, %v493, %v494
  %v496 = vrot.slane %v396, 2
  %v497 = vsel %vm487, %v494, %v496
  %v498 = vrot.slane %v397, 2
  %v499 = vrot.slane %v398, 2
  %v500 = vsel %vm487, %v498, %v499
  %v501 = vrot.slane %v399, 2
  %v502 = vsel %vm487, %v499, %v501
  %v503 = vrot.slane %v400, 2
  %v504 = vrot.slane %v401, 2
  %v505 = vsel %vm487, %v503, %v504
  %v506 = vrot.slane %v402, 2
  %v507 = vsel %vm487, %v504, %v506
  %v508 = vrot.slane %v403, 2
  %v509 = vrot.slane %v404, 2
  %v510 = vsel %vm487, %v508, %v509
  %v511 = vrot.slane %v405, 2
  %v512 = vsel %vm487, %v509, %v511
  %v513 = vrot.slane %v406, 2
  %v514 = vrot.slane %v407, 2
  %v515 = vsel %vm487, %v513, %v514
  %v516 = vrot.slane %v408, 2
  %v517 = vsel %vm487, %v514, %v516
  %v518 = vrot.slane %v409, 2
  %v519 = vrot.slane %v410, 2
  %v520 = vsel %vm487, %v518, %v519
  %v521 = vrot.slane %v411, 2
  %v522 = vsel %vm487, %v519, %v521
  %v523 = vrot.slane %v412, 2
  %v524 = vrot.slane %v413, 2
  %v525 = vsel %vm487, %v523, %v524
  %v526 = vrot.slane %v414, 2
  %v527 = vsel %vm487, %v524, %v526
  %v528 = vrot.slane %v415, 2
  %v529 = vrot.slane %v416, 2
  %v530 = vsel %vm487, %v528, %v529
  %v531 = vrot.slane %v417, 2
  %v532 = vsel %vm487, %v529, %v531
  %v533 = vrot.slane %v418, 2
  %v534 = vrot.slane %v419, 2
  %v535 = vsel %vm487, %v533, %v534
  %v536 = vrot.slane %v420, 2
  %v537 = vsel %vm487, %v534, %v536
  %v538 = vrot.slane %v421, 2
  %v539 = vrot.slane %v422, 2
  %v540 = vsel %vm487, %v538, %v539
  %v541 = vrot.slane %v423, 2
  %v542 = vsel %vm487, %v539, %v541
  %v543 = vrot.slane %v424, 2
  %v544 = vrot.slane %v425, 2
  %v545 = vsel %vm487, %v543, %v544
  %v546 = vrot.slane %v426, 2
  %v547 = vsel %vm487, %v544, %v546
  %v548 = vrot.slane %v427, 2
  %v549 = vrot.slane %v428, 2
  %v550 = vsel %vm487, %v548, %v549
  %v551 = vrot.slane %v429, 2
  %v552 = vsel %vm487, %v549, %v551
  %v553 = vrot.slane %v430, 2
  %v554 = vrot.slane %v431, 2
  %v555 = vsel %vm487, %v553, %v554
  %v556 = vrot.slane %v432, 2
  %v557 = vsel %vm487, %v554, %v556
  %v558 = vrot.slane %v433, 2
  %v559 = vrot.slane %v434, 2
  %v560 = vsel %vm487, %v558, %v559
  %v561 = vrot.slane %v435, 2
  %v562 = vsel %vm487, %v559, %v561
  %v563 = vrot.slane %v436, 2
  %v564 = vrot.slane %v437, 2
  %v565 = vsel %vm487, %v563, %v564
  %v566 = vrot.slane %v438, 2
  %v567 = vsel %vm487, %v564, %v566
  %v600 = vadd.f32 %v354, %v490
  %v601 = vadd.f32 %v355, %v492
  %v602 = vadd.f32 %v356, %v495
  %v603 = vadd.f32 %v357, %v497
  %v604 = vadd.f32 %v358, %v500
  %v605 = vadd.f32 %v359, %v502
  %v606 = vadd.f32 %v360, %v505
  %v607 = vadd.f32 %v361, %v507
  %v608 = vadd.f32 %v362, %v510
  %v609 = vadd.f32 %v363, %v512
  %v610 = vadd.f32 %v364, %v515
  %v611 = vadd.f32 %v365, %v517
  %v612 = vadd.f32 %v366, %v520
  %v613 = vadd.f32 %v367, %v522
  %v614 = vadd.f32 %v368, %v525
  %v615 = vadd.f32 %v369, %v527
  %v616 = vadd.f32 %v370, %v530
  %v617 = vadd.f32 %v371, %v532
  %v618 = vadd.f32 %v372, %v535
  %v619 = vadd.f32 %v373, %v537
  %v620 = vadd.f32 %v374, %v540
  %v621 = vadd.f32 %v375, %v542
  %v622 = vadd.f32 %v376, %v545
  %v623 = vadd.f32 %v377, %v547
  %v624 = vadd.f32 %v378, %v550
  %v625 = vadd.f32 %v379, %v552
  %v626 = vadd.f32 %v380, %v555
  %v627 = vadd.f32 %v381, %v557
  %v628 = vadd.f32 %v382, %v560
  %v629 = vadd.f32 %v383, %v562
  %v630 = vadd.f32 %v384, %v565
  %v631 = vadd.f32 %v385, %v567
  %v632 = vld [vmem:[%s1 + $0x3] sm:$0x1]
  %v633 = vlaneseq
  %v634 = vshrl.u32 %v633, 7
  %v635 = vsub.s32 0, %v634
  %v636 = vrot.slane %v632, %v635
  %v637 = vmul.f32 %v14, %v636
  %v638 = vmul.f32 %v15, %v636
  %v639 = vmul.f32 %v17, %v636
  %v640 = vmul.f32 %v18, %v636
  %v641 = vmul.f32 %v20, %v636
  %v642 = vmul.f32 %v21, %v636
  %v643 = vmul.f32 %v23, %v636
  %v644 = vmul.f32 %v24, %v636
  %v645 = vmul.f32 %v26, %v636
  %v646 = vmul.f32 %v27, %v636
  %v647 = vmul.f32 %v29, %v636
  %v648 = vmul.f32 %v30, %v636
  %v649 = vmul.f32 %v32, %v636
  %v650 = vmul.f32 %v33, %v636
  %v651 = vmul.f32 %v35, %v636
  %v652 = vmul.f32 %v36, %v636
  %v653 = vmul.f32 %v44, %v636
  %v654 = vmul.f32 %v45, %v636
  %v655 = vmul.f32 %v47, %v636
  %v656 = vmul.f32 %v48, %v636
  %v657 = vmul.f32 %v50, %v636
  %v658 = vmul.f32 %v51, %v636
  %v659 = vmul.f32 %v53, %v636
  %v660 = vmul.f32 %v54, %v636
  %v661 = vmul.f32 %v56, %v636
  %v662 = vmul.f32 %v57, %v636
  %v663 = vmul.f32 %v59, %v636
  %v664 = vmul.f32 %v60, %v636
  %v665 = vmul.f32 %v62, %v636
  %v666 = vmul.f32 %v63, %v636
  %v667 = vmul.f32 %v65, %v636
  %v668 = vmul.f32 %v66, %v636
  %v669 = vadd.f32 %v600, %v637
  %v670 = vadd.f32 %v601, %v638
  %v671 = vadd.f32 %v602, %v639
  %v672 = vadd.f32 %v603, %v640
  %v673 = vadd.f32 %v604, %v641
  %v674 = vadd.f32 %v605, %v642
  %v675 = vadd.f32 %v606, %v643
  %v676 = vadd.f32 %v607, %v644
  %v677 = vadd.f32 %v608, %v645
  %v678 = vadd.f32 %v609, %v646
  %v679 = vadd.f32 %v610, %v647
  %v680 = vadd.f32 %v611, %v648
  %v681 = vadd.f32 %v612, %v649
  %v682 = vadd.f32 %v613, %v650
  %v683 = vadd.f32 %v614, %v651
  %v684 = vadd.f32 %v615, %v652
  %v685 = vadd.f32 %v616, %v653
  %v686 = vadd.f32 %v617, %v654
  %v687 = vadd.f32 %v618, %v655
  %v688 = vadd.f32 %v619, %v656
  %v689 = vadd.f32 %v620, %v657
  %v690 = vadd.f32 %v621, %v658
  %v691 = vadd.f32 %v622, %v659
  %v692 = vadd.f32 %v623, %v660
  %v693 = vadd.f32 %v624, %v661
  %v694 = vadd.f32 %v625, %v662
  %v695 = vadd.f32 %v626, %v663
  %v696 = vadd.f32 %v627, %v664
  %v697 = vadd.f32 %v628, %v665
  %v698 = vadd.f32 %v629, %v666
  %v699 = vadd.f32 %v630, %v667
  %v700 = vadd.f32 %v631, %v668
  %v701 = vld [vmem:[%s1 + $0x4] sm:$0x1]
  %v702 = vlaneseq
  %v703 = vshrl.u32 %v702, 7
  %v704 = vsub.s32 0, %v703
  %v705 = vrot.slane %v701, %v704
  %v706 = vmul.f32 %v14, %v705
  %v707 = vmul.f32 %v15, %v705
  %v708 = vmul.f32 %v16, %v705
  %v709 = vmul.f32 %v17, %v705
  %v710 = vmul.f32 %v18, %v705
  %v711 = vmul.f32 %v19, %v705
  %v712 = vmul.f32 %v20, %v705
  %v713 = vmul.f32 %v21, %v705
  %v714 = vmul.f32 %v22, %v705
  %v715 = vmul.f32 %v23, %v705
  %v716 = vmul.f32 %v24, %v705
  %v717 = vmul.f32 %v25, %v705
  %v718 = vmul.f32 %v26, %v705
  %v719 = vmul.f32 %v27, %v705
  %v720 = vmul.f32 %v28, %v705
  %v721 = vmul.f32 %v29, %v705
  %v722 = vmul.f32 %v30, %v705
  %v723 = vmul.f32 %v31, %v705
  %v724 = vmul.f32 %v32, %v705
  %v725 = vmul.f32 %v33, %v705
  %v726 = vmul.f32 %v34, %v705
  %v727 = vmul.f32 %v35, %v705
  %v728 = vmul.f32 %v36, %v705
  %v729 = vmul.f32 %v37, %v705
  %v730 = vmul.f32 %v44, %v705
  %v731 = vmul.f32 %v45, %v705
  %v732 = vmul.f32 %v46, %v705
  %v733 = vmul.f32 %v47, %v705
  %v734 = vmul.f32 %v48, %v705
  %v735 = vmul.f32 %v49, %v705
  %v736 = vmul.f32 %v50, %v705
  %v737 = vmul.f32 %v51, %v705
  %v738 = vmul.f32 %v52, %v705
  %v739 = vmul.f32 %v53, %v705
  %v740 = vmul.f32 %v54, %v705
  %v741 = vmul.f32 %v55, %v705
  %v742 = vmul.f32 %v56, %v705
  %v743 = vmul.f32 %v57, %v705
  %v744 = vmul.f32 %v58, %v705
  %v745 = vmul.f32 %v59, %v705
  %v746 = vmul.f32 %v60, %v705
  %v747 = vmul.f32 %v61, %v705
  %v748 = vmul.f32 %v62, %v705
  %v749 = vmul.f32 %v63, %v705
  %v750 = vmul.f32 %v64, %v705
  %v751 = vmul.f32 %v65, %v705
  %v752 = vmul.f32 %v66, %v705
  %v753 = vmul.f32 %v67, %v705
  %v802 = vrot.slane %v706, 1
  %v803 = vrot.slane %v707, 1
  %v804 = vsel %vm241, %v802, %v803
  %v805 = vrot.slane %v708, 1
  %v806 = vsel %vm241, %v803, %v805
  %v807 = vrot.slane %v709, 1
  %v808 = vrot.slane %v710, 1
  %v809 = vsel %vm241, %v807, %v808
  %v810 = vrot.slane %v711, 1
  %v811 = vsel %vm241, %v808, %v810
  %v812 = vrot.slane %v712, 1
  %v813 = vrot.slane %v713, 1
  %v814 = vsel %vm241, %v812, %v813
  %v815 = vrot.slane %v714, 1
  %v816 = vsel %vm241, %v813, %v815
  %v817 = vrot.slane %v715, 1
  %v818 = vrot.slane %v716, 1
  %v819 = vsel %vm241, %v817, %v818
  %v820 = vrot.slane %v717, 1
  %v821 = vsel %vm241, %v818, %v820
  %v822 = vrot.slane %v718, 1
  %v823 = vrot.slane %v719, 1
  %v824 = vsel %vm241, %v822, %v823
  %v825 = vrot.slane %v720, 1
  %v826 = vsel %vm241, %v823, %v825
  %v827 = vrot.slane %v721, 1
  %v828 = vrot.slane %v722, 1
  %v829 = vsel %vm241, %v827, %v828
  %v830 = vrot.slane %v723, 1
  %v831 = vsel %vm241, %v828, %v830
  %v832 = vrot.slane %v724, 1
  %v833 = vrot.slane %v725, 1
  %v834 = vsel %vm241, %v832, %v833
  %v835 = vrot.slane %v726, 1
  %v836 = vsel %vm241, %v833, %v835
  %v837 = vrot.slane %v727, 1
  %v838 = vrot.slane %v728, 1
  %v839 = vsel %vm241, %v837, %v838
  %v840 = vrot.slane %v729, 1
  %v841 = vsel %vm241, %v838, %v840
  %v842 = vrot.slane %v730, 1
  %v843 = vrot.slane %v731, 1
  %v844 = vsel %vm241, %v842, %v843
  %v845 = vrot.slane %v732, 1
  %v846 = vsel %vm241, %v843, %v845
  %v847 = vrot.slane %v733, 1
  %v848 = vrot.slane %v734, 1
  %v849 = vsel %vm241, %v847, %v848
  %v850 = vrot.slane %v735, 1
  %v851 = vsel %vm241, %v848, %v850
  %v852 = vrot.slane %v736, 1
  %v853 = vrot.slane %v737, 1
  %v854 = vsel %vm241, %v852, %v853
  %v855 = vrot.slane %v738, 1
  %v856 = vsel %vm241, %v853, %v855
  %v857 = vrot.slane %v739, 1
  %v858 = vrot.slane %v740, 1
  %v859 = vsel %vm241, %v857, %v858
  %v860 = vrot.slane %v741, 1
  %v861 = vsel %vm241, %v858, %v860
  %v862 = vrot.slane %v742, 1
  %v863 = vrot.slane %v743, 1
  %v864 = vsel %vm241, %v862, %v863
  %v865 = vrot.slane %v744, 1
  %v866 = vsel %vm241, %v863, %v865
  %v867 = vrot.slane %v745, 1
  %v868 = vrot.slane %v746, 1
  %v869 = vsel %vm241, %v867, %v868
  %v870 = vrot.slane %v747, 1
  %v871 = vsel %vm241, %v868, %v870
  %v872 = vrot.slane %v748, 1
  %v873 = vrot.slane %v749, 1
  %v874 = vsel %vm241, %v872, %v873
  %v875 = vrot.slane %v750, 1
  %v876 = vsel %vm241, %v873, %v875
  %v877 = vrot.slane %v751, 1
  %v878 = vrot.slane %v752, 1
  %v879 = vsel %vm241, %v877, %v878
  %v880 = vrot.slane %v753, 1
  %v881 = vsel %vm241, %v878, %v880
  %v914 = vadd.f32 %v669, %v804
  %v915 = vadd.f32 %v670, %v806
  %v916 = vadd.f32 %v671, %v809
  %v917 = vadd.f32 %v672, %v811
  %v918 = vadd.f32 %v673, %v814
  %v919 = vadd.f32 %v674, %v816
  %v920 = vadd.f32 %v675, %v819
  %v921 = vadd.f32 %v676, %v821
  %v922 = vadd.f32 %v677, %v824
  %v923 = vadd.f32 %v678, %v826
  %v924 = vadd.f32 %v679, %v829
  %v925 = vadd.f32 %v680, %v831
  %v926 = vadd.f32 %v681, %v834
  %v927 = vadd.f32 %v682, %v836
  %v928 = vadd.f32 %v683, %v839
  %v929 = vadd.f32 %v684, %v841
  %v930 = vadd.f32 %v685, %v844
  %v931 = vadd.f32 %v686, %v846
  %v932 = vadd.f32 %v687, %v849
  %v933 = vadd.f32 %v688, %v851
  %v934 = vadd.f32 %v689, %v854
  %v935 = vadd.f32 %v690, %v856
  %v936 = vadd.f32 %v691, %v859
  %v937 = vadd.f32 %v692, %v861
  %v938 = vadd.f32 %v693, %v864
  %v939 = vadd.f32 %v694, %v866
  %v940 = vadd.f32 %v695, %v869
  %v941 = vadd.f32 %v696, %v871
  %v942 = vadd.f32 %v697, %v874
  %v943 = vadd.f32 %v698, %v876
  %v944 = vadd.f32 %v699, %v879
  %v945 = vadd.f32 %v700, %v881
  %v946 = vld [vmem:[%s1 + $0x5] sm:$0x1]
  %v947 = vlaneseq
  %v948 = vshrl.u32 %v947, 7
  %v949 = vsub.s32 0, %v948
  %v950 = vrot.slane %v946, %v949
  %v951 = vmul.f32 %v14, %v950
  %v952 = vmul.f32 %v15, %v950
  %v953 = vmul.f32 %v16, %v950
  %v954 = vmul.f32 %v17, %v950
  %v955 = vmul.f32 %v18, %v950
  %v956 = vmul.f32 %v19, %v950
  %v957 = vmul.f32 %v20, %v950
  %v958 = vmul.f32 %v21, %v950
  %v959 = vmul.f32 %v22, %v950
  %v960 = vmul.f32 %v23, %v950
  %v961 = vmul.f32 %v24, %v950
  %v962 = vmul.f32 %v25, %v950
  %v963 = vmul.f32 %v26, %v950
  %v964 = vmul.f32 %v27, %v950
  %v965 = vmul.f32 %v28, %v950
  %v966 = vmul.f32 %v29, %v950
  %v967 = vmul.f32 %v30, %v950
  %v968 = vmul.f32 %v31, %v950
  %v969 = vmul.f32 %v32, %v950
  %v970 = vmul.f32 %v33, %v950
  %v971 = vmul.f32 %v34, %v950
  %v972 = vmul.f32 %v35, %v950
  %v973 = vmul.f32 %v36, %v950
  %v974 = vmul.f32 %v37, %v950
  %v975 = vmul.f32 %v44, %v950
  %v976 = vmul.f32 %v45, %v950
  %v977 = vmul.f32 %v46, %v950
  %v978 = vmul.f32 %v47, %v950
  %v979 = vmul.f32 %v48, %v950
  %v980 = vmul.f32 %v49, %v950
  %v981 = vmul.f32 %v50, %v950
  %v982 = vmul.f32 %v51, %v950
  %v983 = vmul.f32 %v52, %v950
  %v984 = vmul.f32 %v53, %v950
  %v985 = vmul.f32 %v54, %v950
  %v986 = vmul.f32 %v55, %v950
  %v987 = vmul.f32 %v56, %v950
  %v988 = vmul.f32 %v57, %v950
  %v989 = vmul.f32 %v58, %v950
  %v990 = vmul.f32 %v59, %v950
  %v991 = vmul.f32 %v60, %v950
  %v992 = vmul.f32 %v61, %v950
  %v993 = vmul.f32 %v62, %v950
  %v994 = vmul.f32 %v63, %v950
  %v995 = vmul.f32 %v64, %v950
  %v996 = vmul.f32 %v65, %v950
  %v997 = vmul.f32 %v66, %v950
  %v998 = vmul.f32 %v67, %v950
  %v1047 = vrot.slane %v951, 2
  %v1048 = vrot.slane %v952, 2
  %v1049 = vsel %vm487, %v1047, %v1048
  %v1050 = vrot.slane %v953, 2
  %v1051 = vsel %vm487, %v1048, %v1050
  %v1052 = vrot.slane %v954, 2
  %v1053 = vrot.slane %v955, 2
  %v1054 = vsel %vm487, %v1052, %v1053
  %v1055 = vrot.slane %v956, 2
  %v1056 = vsel %vm487, %v1053, %v1055
  %v1057 = vrot.slane %v957, 2
  %v1058 = vrot.slane %v958, 2
  %v1059 = vsel %vm487, %v1057, %v1058
  %v1060 = vrot.slane %v959, 2
  %v1061 = vsel %vm487, %v1058, %v1060
  %v1062 = vrot.slane %v960, 2
  %v1063 = vrot.slane %v961, 2
  %v1064 = vsel %vm487, %v1062, %v1063
  %v1065 = vrot.slane %v962, 2
  %v1066 = vsel %vm487, %v1063, %v1065
  %v1067 = vrot.slane %v963, 2
  %v1068 = vrot.slane %v964, 2
  %v1069 = vsel %vm487, %v1067, %v1068
  %v1070 = vrot.slane %v965, 2
  %v1071 = vsel %vm487, %v1068, %v1070
  %v1072 = vrot.slane %v966, 2
  %v1073 = vrot.slane %v967, 2
  %v1074 = vsel %vm487, %v1072, %v1073
  %v1075 = vrot.slane %v968, 2
  %v1076 = vsel %vm487, %v1073, %v1075
  %v1077 = vrot.slane %v969, 2
  %v1078 = vrot.slane %v970, 2
  %v1079 = vsel %vm487, %v1077, %v1078
  %v1080 = vrot.slane %v971, 2
  %v1081 = vsel %vm487, %v1078, %v1080
  %v1082 = vrot.slane %v972, 2
  %v1083 = vrot.slane %v973, 2
  %v1084 = vsel %vm487, %v1082, %v1083
  %v1085 = vrot.slane %v974, 2
  %v1086 = vsel %vm487, %v1083, %v1085
  %v1087 = vrot.slane %v975, 2
  %v1088 = vrot.slane %v976, 2
  %v1089 = vsel %vm487, %v1087, %v1088
  %v1090 = vrot.slane %v977, 2
  %v1091 = vsel %vm487, %v1088, %v1090
  %v1092 = vrot.slane %v978, 2
  %v1093 = vrot.slane %v979, 2
  %v1094 = vsel %vm487, %v1092, %v1093
  %v1095 = vrot.slane %v980, 2
  %v1096 = vsel %vm487, %v1093, %v1095
  %v1097 = vrot.slane %v981, 2
  %v1098 = vrot.slane %v982, 2
  %v1099 = vsel %vm487, %v1097, %v1098
  %v1100 = vrot.slane %v983, 2
  %v1101 = vsel %vm487, %v1098, %v1100
  %v1102 = vrot.slane %v984, 2
  %v1103 = vrot.slane %v985, 2
  %v1104 = vsel %vm487, %v1102, %v1103
  %v1105 = vrot.slane %v986, 2
  %v1106 = vsel %vm487, %v1103, %v1105
  %v1107 = vrot.slane %v987, 2
  %v1108 = vrot.slane %v988, 2
  %v1109 = vsel %vm487, %v1107, %v1108
  %v1110 = vrot.slane %v989, 2
  %v1111 = vsel %vm487, %v1108, %v1110
  %v1112 = vrot.slane %v990, 2
  %v1113 = vrot.slane %v991, 2
  %v1114 = vsel %vm487, %v1112, %v1113
  %v1115 = vrot.slane %v992, 2
  %v1116 = vsel %vm487, %v1113, %v1115
  %v1117 = vrot.slane %v993, 2
  %v1118 = vrot.slane %v994, 2
  %v1119 = vsel %vm487, %v1117, %v1118
  %v1120 = vrot.slane %v995, 2
  %v1121 = vsel %vm487, %v1118, %v1120
  %v1122 = vrot.slane %v996, 2
  %v1123 = vrot.slane %v997, 2
  %v1124 = vsel %vm487, %v1122, %v1123
  %v1125 = vrot.slane %v998, 2
  %v1126 = vsel %vm487, %v1123, %v1125
  %v1159 = vadd.f32 %v914, %v1049
  %v1160 = vadd.f32 %v915, %v1051
  %v1161 = vadd.f32 %v916, %v1054
  %v1162 = vadd.f32 %v917, %v1056
  %v1163 = vadd.f32 %v918, %v1059
  %v1164 = vadd.f32 %v919, %v1061
  %v1165 = vadd.f32 %v920, %v1064
  %v1166 = vadd.f32 %v921, %v1066
  %v1167 = vadd.f32 %v922, %v1069
  %v1168 = vadd.f32 %v923, %v1071
  %v1169 = vadd.f32 %v924, %v1074
  %v1170 = vadd.f32 %v925, %v1076
  %v1171 = vadd.f32 %v926, %v1079
  %v1172 = vadd.f32 %v927, %v1081
  %v1173 = vadd.f32 %v928, %v1084
  %v1174 = vadd.f32 %v929, %v1086
  %v1175 = vadd.f32 %v930, %v1089
  %v1176 = vadd.f32 %v931, %v1091
  %v1177 = vadd.f32 %v932, %v1094
  %v1178 = vadd.f32 %v933, %v1096
  %v1179 = vadd.f32 %v934, %v1099
  %v1180 = vadd.f32 %v935, %v1101
  %v1181 = vadd.f32 %v936, %v1104
  %v1182 = vadd.f32 %v937, %v1106
  %v1183 = vadd.f32 %v938, %v1109
  %v1184 = vadd.f32 %v939, %v1111
  %v1185 = vadd.f32 %v940, %v1114
  %v1186 = vadd.f32 %v941, %v1116
  %v1187 = vadd.f32 %v942, %v1119
  %v1188 = vadd.f32 %v943, %v1121
  %v1189 = vadd.f32 %v944, %v1124
  %v1190 = vadd.f32 %v945, %v1126
  %v1191 = vld [vmem:[%s1 + $0x6] sm:$0x1]
  %v1192 = vlaneseq
  %v1193 = vshrl.u32 %v1192, 7
  %v1194 = vsub.s32 0, %v1193
  %v1195 = vrot.slane %v1191, %v1194
  %v1196 = vmul.f32 %v17, %v1195
  %v1197 = vmul.f32 %v18, %v1195
  %v1198 = vmul.f32 %v20, %v1195
  %v1199 = vmul.f32 %v21, %v1195
  %v1200 = vmul.f32 %v23, %v1195
  %v1201 = vmul.f32 %v24, %v1195
  %v1202 = vmul.f32 %v26, %v1195
  %v1203 = vmul.f32 %v27, %v1195
  %v1204 = vmul.f32 %v29, %v1195
  %v1205 = vmul.f32 %v30, %v1195
  %v1206 = vmul.f32 %v32, %v1195
  %v1207 = vmul.f32 %v33, %v1195
  %v1208 = vmul.f32 %v35, %v1195
  %v1209 = vmul.f32 %v36, %v1195
  %v1210 = vmul.f32 %v38, %v1195
  %v1211 = vmul.f32 %v39, %v1195
  %v1212 = vmul.f32 %v47, %v1195
  %v1213 = vmul.f32 %v48, %v1195
  %v1214 = vmul.f32 %v50, %v1195
  %v1215 = vmul.f32 %v51, %v1195
  %v1216 = vmul.f32 %v53, %v1195
  %v1217 = vmul.f32 %v54, %v1195
  %v1218 = vmul.f32 %v56, %v1195
  %v1219 = vmul.f32 %v57, %v1195
  %v1220 = vmul.f32 %v59, %v1195
  %v1221 = vmul.f32 %v60, %v1195
  %v1222 = vmul.f32 %v62, %v1195
  %v1223 = vmul.f32 %v63, %v1195
  %v1224 = vmul.f32 %v65, %v1195
  %v1225 = vmul.f32 %v66, %v1195
  %v1226 = vmul.f32 %v68, %v1195
  %v1227 = vmul.f32 %v69, %v1195
  %v1228 = vadd.f32 %v1159, %v1196
  %v1229 = vadd.f32 %v1160, %v1197
  %v1230 = vadd.f32 %v1161, %v1198
  %v1231 = vadd.f32 %v1162, %v1199
  %v1232 = vadd.f32 %v1163, %v1200
  %v1233 = vadd.f32 %v1164, %v1201
  %v1234 = vadd.f32 %v1165, %v1202
  %v1235 = vadd.f32 %v1166, %v1203
  %v1236 = vadd.f32 %v1167, %v1204
  %v1237 = vadd.f32 %v1168, %v1205
  %v1238 = vadd.f32 %v1169, %v1206
  %v1239 = vadd.f32 %v1170, %v1207
  %v1240 = vadd.f32 %v1171, %v1208
  %v1241 = vadd.f32 %v1172, %v1209
  %v1242 = vadd.f32 %v1173, %v1210
  %v1243 = vadd.f32 %v1174, %v1211
  %v1244 = vadd.f32 %v1175, %v1212
  %v1245 = vadd.f32 %v1176, %v1213
  %v1246 = vadd.f32 %v1177, %v1214
  %v1247 = vadd.f32 %v1178, %v1215
  %v1248 = vadd.f32 %v1179, %v1216
  %v1249 = vadd.f32 %v1180, %v1217
  %v1250 = vadd.f32 %v1181, %v1218
  %v1251 = vadd.f32 %v1182, %v1219
  %v1252 = vadd.f32 %v1183, %v1220
  %v1253 = vadd.f32 %v1184, %v1221
  %v1254 = vadd.f32 %v1185, %v1222
  %v1255 = vadd.f32 %v1186, %v1223
  %v1256 = vadd.f32 %v1187, %v1224
  %v1257 = vadd.f32 %v1188, %v1225
  %v1258 = vadd.f32 %v1189, %v1226
  %v1259 = vadd.f32 %v1190, %v1227
  %v1260 = vld [vmem:[%s1 + $0x7] sm:$0x1]
  %v1261 = vlaneseq
  %v1262 = vshrl.u32 %v1261, 7
  %v1263 = vsub.s32 0, %v1262
  %v1264 = vrot.slane %v1260, %v1263
  %v1265 = vmul.f32 %v17, %v1264
  %v1266 = vmul.f32 %v18, %v1264
  %v1267 = vmul.f32 %v19, %v1264
  %v1268 = vmul.f32 %v20, %v1264
  %v1269 = vmul.f32 %v21, %v1264
  %v1270 = vmul.f32 %v22, %v1264
  %v1271 = vmul.f32 %v23, %v1264
  %v1272 = vmul.f32 %v24, %v1264
  %v1273 = vmul.f32 %v25, %v1264
  %v1274 = vmul.f32 %v26, %v1264
  %v1275 = vmul.f32 %v27, %v1264
  %v1276 = vmul.f32 %v28, %v1264
  %v1277 = vmul.f32 %v29, %v1264
  %v1278 = vmul.f32 %v30, %v1264
  %v1279 = vmul.f32 %v31, %v1264
  %v1280 = vmul.f32 %v32, %v1264
  %v1281 = vmul.f32 %v33, %v1264
  %v1282 = vmul.f32 %v34, %v1264
  %v1283 = vmul.f32 %v35, %v1264
  %v1284 = vmul.f32 %v36, %v1264
  %v1285 = vmul.f32 %v37, %v1264
  %v1286 = vmul.f32 %v38, %v1264
  %v1287 = vmul.f32 %v39, %v1264
  %v1288 = vmul.f32 %v40, %v1264
  %v1289 = vmul.f32 %v47, %v1264
  %v1290 = vmul.f32 %v48, %v1264
  %v1291 = vmul.f32 %v49, %v1264
  %v1292 = vmul.f32 %v50, %v1264
  %v1293 = vmul.f32 %v51, %v1264
  %v1294 = vmul.f32 %v52, %v1264
  %v1295 = vmul.f32 %v53, %v1264
  %v1296 = vmul.f32 %v54, %v1264
  %v1297 = vmul.f32 %v55, %v1264
  %v1298 = vmul.f32 %v56, %v1264
  %v1299 = vmul.f32 %v57, %v1264
  %v1300 = vmul.f32 %v58, %v1264
  %v1301 = vmul.f32 %v59, %v1264
  %v1302 = vmul.f32 %v60, %v1264
  %v1303 = vmul.f32 %v61, %v1264
  %v1304 = vmul.f32 %v62, %v1264
  %v1305 = vmul.f32 %v63, %v1264
  %v1306 = vmul.f32 %v64, %v1264
  %v1307 = vmul.f32 %v65, %v1264
  %v1308 = vmul.f32 %v66, %v1264
  %v1309 = vmul.f32 %v67, %v1264
  %v1310 = vmul.f32 %v68, %v1264
  %v1311 = vmul.f32 %v69, %v1264
  %v1312 = vmul.f32 %v70, %v1264
  %v1361 = vrot.slane %v1265, 1
  %v1362 = vrot.slane %v1266, 1
  %v1363 = vsel %vm241, %v1361, %v1362
  %v1364 = vrot.slane %v1267, 1
  %v1365 = vsel %vm241, %v1362, %v1364
  %v1366 = vrot.slane %v1268, 1
  %v1367 = vrot.slane %v1269, 1
  %v1368 = vsel %vm241, %v1366, %v1367
  %v1369 = vrot.slane %v1270, 1
  %v1370 = vsel %vm241, %v1367, %v1369
  %v1371 = vrot.slane %v1271, 1
  %v1372 = vrot.slane %v1272, 1
  %v1373 = vsel %vm241, %v1371, %v1372
  %v1374 = vrot.slane %v1273, 1
  %v1375 = vsel %vm241, %v1372, %v1374
  %v1376 = vrot.slane %v1274, 1
  %v1377 = vrot.slane %v1275, 1
  %v1378 = vsel %vm241, %v1376, %v1377
  %v1379 = vrot.slane %v1276, 1
  %v1380 = vsel %vm241, %v1377, %v1379
  %v1381 = vrot.slane %v1277, 1
  %v1382 = vrot.slane %v1278, 1
  %v1383 = vsel %vm241, %v1381, %v1382
  %v1384 = vrot.slane %v1279, 1
  %v1385 = vsel %vm241, %v1382, %v1384
  %v1386 = vrot.slane %v1280, 1
  %v1387 = vrot.slane %v1281, 1
  %v1388 = vsel %vm241, %v1386, %v1387
  %v1389 = vrot.slane %v1282, 1
  %v1390 = vsel %vm241, %v1387, %v1389
  %v1391 = vrot.slane %v1283, 1
  %v1392 = vrot.slane %v1284, 1
  %v1393 = vsel %vm241, %v1391, %v1392
  %v1394 = vrot.slane %v1285, 1
  %v1395 = vsel %vm241, %v1392, %v1394
  %v1396 = vrot.slane %v1286, 1
  %v1397 = vrot.slane %v1287, 1
  %v1398 = vsel %vm241, %v1396, %v1397
  %v1399 = vrot.slane %v1288, 1
  %v1400 = vsel %vm241, %v1397, %v1399
  %v1401 = vrot.slane %v1289, 1
  %v1402 = vrot.slane %v1290, 1
  %v1403 = vsel %vm241, %v1401, %v1402
  %v1404 = vrot.slane %v1291, 1
  %v1405 = vsel %vm241, %v1402, %v1404
  %v1406 = vrot.slane %v1292, 1
  %v1407 = vrot.slane %v1293, 1
  %v1408 = vsel %vm241, %v1406, %v1407
  %v1409 = vrot.slane %v1294, 1
  %v1410 = vsel %vm241, %v1407, %v1409
  %v1411 = vrot.slane %v1295, 1
  %v1412 = vrot.slane %v1296, 1
  %v1413 = vsel %vm241, %v1411, %v1412
  %v1414 = vrot.slane %v1297, 1
  %v1415 = vsel %vm241, %v1412, %v1414
  %v1416 = vrot.slane %v1298, 1
  %v1417 = vrot.slane %v1299, 1
  %v1418 = vsel %vm241, %v1416, %v1417
  %v1419 = vrot.slane %v1300, 1
  %v1420 = vsel %vm241, %v1417, %v1419
  %v1421 = vrot.slane %v1301, 1
  %v1422 = vrot.slane %v1302, 1
  %v1423 = vsel %vm241, %v1421, %v1422
  %v1424 = vrot.slane %v1303, 1
  %v1425 = vsel %vm241, %v1422, %v1424
  %v1426 = vrot.slane %v1304, 1
  %v1427 = vrot.slane %v1305, 1
  %v1428 = vsel %vm241, %v1426, %v1427
  %v1429 = vrot.slane %v1306, 1
  %v1430 = vsel %vm241, %v1427, %v1429
  %v1431 = vrot.slane %v1307, 1
  %v1432 = vrot.slane %v1308, 1
  %v1433 = vsel %vm241, %v1431, %v1432
  %v1434 = vrot.slane %v1309, 1
  %v1435 = vsel %vm241, %v1432, %v1434
  %v1436 = vrot.slane %v1310, 1
  %v1437 = vrot.slane %v1311, 1
  %v1438 = vsel %vm241, %v1436, %v1437
  %v1439 = vrot.slane %v1312, 1
  %v1440 = vsel %vm241, %v1437, %v1439
  %v1473 = vadd.f32 %v1228, %v1363
  %v1474 = vadd.f32 %v1229, %v1365
  %v1475 = vadd.f32 %v1230, %v1368
  %v1476 = vadd.f32 %v1231, %v1370
  %v1477 = vadd.f32 %v1232, %v1373
  %v1478 = vadd.f32 %v1233, %v1375
  %v1479 = vadd.f32 %v1234, %v1378
  %v1480 = vadd.f32 %v1235, %v1380
  %v1481 = vadd.f32 %v1236, %v1383
  %v1482 = vadd.f32 %v1237, %v1385
  %v1483 = vadd.f32 %v1238, %v1388
  %v1484 = vadd.f32 %v1239, %v1390
  %v1485 = vadd.f32 %v1240, %v1393
  %v1486 = vadd.f32 %v1241, %v1395
  %v1487 = vadd.f32 %v1242, %v1398
  %v1488 = vadd.f32 %v1243, %v1400
  %v1489 = vadd.f32 %v1244, %v1403
  %v1490 = vadd.f32 %v1245, %v1405
  %v1491 = vadd.f32 %v1246, %v1408
  %v1492 = vadd.f32 %v1247, %v1410
  %v1493 = vadd.f32 %v1248, %v1413
  %v1494 = vadd.f32 %v1249, %v1415
  %v1495 = vadd.f32 %v1250, %v1418
  %v1496 = vadd.f32 %v1251, %v1420
  %v1497 = vadd.f32 %v1252, %v1423
  %v1498 = vadd.f32 %v1253, %v1425
  %v1499 = vadd.f32 %v1254, %v1428
  %v1500 = vadd.f32 %v1255, %v1430
  %v1501 = vadd.f32 %v1256, %v1433
  %v1502 = vadd.f32 %v1257, %v1435
  %v1503 = vadd.f32 %v1258, %v1438
  %v1504 = vadd.f32 %v1259, %v1440
  %v1505 = vld [vmem:[%s1 + $0x8] sm:$0x1]
  %v1506 = vlaneseq
  %v1507 = vshrl.u32 %v1506, 7
  %v1508 = vsub.s32 0, %v1507
  %v1509 = vrot.slane %v1505, %v1508
  %v1510 = vmul.f32 %v17, %v1509
  %v1511 = vmul.f32 %v18, %v1509
  %v1512 = vmul.f32 %v19, %v1509
  %v1513 = vmul.f32 %v20, %v1509
  %v1514 = vmul.f32 %v21, %v1509
  %v1515 = vmul.f32 %v22, %v1509
  %v1516 = vmul.f32 %v23, %v1509
  %v1517 = vmul.f32 %v24, %v1509
  %v1518 = vmul.f32 %v25, %v1509
  %v1519 = vmul.f32 %v26, %v1509
  %v1520 = vmul.f32 %v27, %v1509
  %v1521 = vmul.f32 %v28, %v1509
  %v1522 = vmul.f32 %v29, %v1509
  %v1523 = vmul.f32 %v30, %v1509
  %v1524 = vmul.f32 %v31, %v1509
  %v1525 = vmul.f32 %v32, %v1509
  %v1526 = vmul.f32 %v33, %v1509
  %v1527 = vmul.f32 %v34, %v1509
  %v1528 = vmul.f32 %v35, %v1509
  %v1529 = vmul.f32 %v36, %v1509
  %v1530 = vmul.f32 %v37, %v1509
  %v1531 = vmul.f32 %v38, %v1509
  %v1532 = vmul.f32 %v39, %v1509
  %v1533 = vmul.f32 %v40, %v1509
  %v1534 = vmul.f32 %v47, %v1509
  %v1535 = vmul.f32 %v48, %v1509
  %v1536 = vmul.f32 %v49, %v1509
  %v1537 = vmul.f32 %v50, %v1509
  %v1538 = vmul.f32 %v51, %v1509
  %v1539 = vmul.f32 %v52, %v1509
  %v1540 = vmul.f32 %v53, %v1509
  %v1541 = vmul.f32 %v54, %v1509
  %v1542 = vmul.f32 %v55, %v1509
  %v1543 = vmul.f32 %v56, %v1509
  %v1544 = vmul.f32 %v57, %v1509
  %v1545 = vmul.f32 %v58, %v1509
  %v1546 = vmul.f32 %v59, %v1509
  %v1547 = vmul.f32 %v60, %v1509
  %v1548 = vmul.f32 %v61, %v1509
  %v1549 = vmul.f32 %v62, %v1509
  %v1550 = vmul.f32 %v63, %v1509
  %v1551 = vmul.f32 %v64, %v1509
  %v1552 = vmul.f32 %v65, %v1509
  %v1553 = vmul.f32 %v66, %v1509
  %v1554 = vmul.f32 %v67, %v1509
  %v1555 = vmul.f32 %v68, %v1509
  %v1556 = vmul.f32 %v69, %v1509
  %v1557 = vmul.f32 %v70, %v1509
  %v1606 = vrot.slane %v1510, 2
  %v1607 = vrot.slane %v1511, 2
  %v1608 = vsel %vm487, %v1606, %v1607
  %v1609 = vrot.slane %v1512, 2
  %v1610 = vsel %vm487, %v1607, %v1609
  %v1611 = vrot.slane %v1513, 2
  %v1612 = vrot.slane %v1514, 2
  %v1613 = vsel %vm487, %v1611, %v1612
  %v1614 = vrot.slane %v1515, 2
  %v1615 = vsel %vm487, %v1612, %v1614
  %v1616 = vrot.slane %v1516, 2
  %v1617 = vrot.slane %v1517, 2
  %v1618 = vsel %vm487, %v1616, %v1617
  %v1619 = vrot.slane %v1518, 2
  %v1620 = vsel %vm487, %v1617, %v1619
  %v1621 = vrot.slane %v1519, 2
  %v1622 = vrot.slane %v1520, 2
  %v1623 = vsel %vm487, %v1621, %v1622
  %v1624 = vrot.slane %v1521, 2
  %v1625 = vsel %vm487, %v1622, %v1624
  %v1626 = vrot.slane %v1522, 2
  %v1627 = vrot.slane %v1523, 2
  %v1628 = vsel %vm487, %v1626, %v1627
  %v1629 = vrot.slane %v1524, 2
  %v1630 = vsel %vm487, %v1627, %v1629
  %v1631 = vrot.slane %v1525, 2
  %v1632 = vrot.slane %v1526, 2
  %v1633 = vsel %vm487, %v1631, %v1632
  %v1634 = vrot.slane %v1527, 2
  %v1635 = vsel %vm487, %v1632, %v1634
  %v1636 = vrot.slane %v1528, 2
  %v1637 = vrot.slane %v1529, 2
  %v1638 = vsel %vm487, %v1636, %v1637
  %v1639 = vrot.slane %v1530, 2
  %v1640 = vsel %vm487, %v1637, %v1639
  %v1641 = vrot.slane %v1531, 2
  %v1642 = vrot.slane %v1532, 2
  %v1643 = vsel %vm487, %v1641, %v1642
  %v1644 = vrot.slane %v1533, 2
  %v1645 = vsel %vm487, %v1642, %v1644
  %v1646 = vrot.slane %v1534, 2
  %v1647 = vrot.slane %v1535, 2
  %v1648 = vsel %vm487, %v1646, %v1647
  %v1649 = vrot.slane %v1536, 2
  %v1650 = vsel %vm487, %v1647, %v1649
  %v1651 = vrot.slane %v1537, 2
  %v1652 = vrot.slane %v1538, 2
  %v1653 = vsel %vm487, %v1651, %v1652
  %v1654 = vrot.slane %v1539, 2
  %v1655 = vsel %vm487, %v1652, %v1654
  %v1656 = vrot.slane %v1540, 2
  %v1657 = vrot.slane %v1541, 2
  %v1658 = vsel %vm487, %v1656, %v1657
  %v1659 = vrot.slane %v1542, 2
  %v1660 = vsel %vm487, %v1657, %v1659
  %v1661 = vrot.slane %v1543, 2
  %v1662 = vrot.slane %v1544, 2
  %v1663 = vsel %vm487, %v1661, %v1662
  %v1664 = vrot.slane %v1545, 2
  %v1665 = vsel %vm487, %v1662, %v1664
  %v1666 = vrot.slane %v1546, 2
  %v1667 = vrot.slane %v1547, 2
  %v1668 = vsel %vm487, %v1666, %v1667
  %v1669 = vrot.slane %v1548, 2
  %v1670 = vsel %vm487, %v1667, %v1669
  %v1671 = vrot.slane %v1549, 2
  %v1672 = vrot.slane %v1550, 2
  %v1673 = vsel %vm487, %v1671, %v1672
  %v1674 = vrot.slane %v1551, 2
  %v1675 = vsel %vm487, %v1672, %v1674
  %v1676 = vrot.slane %v1552, 2
  %v1677 = vrot.slane %v1553, 2
  %v1678 = vsel %vm487, %v1676, %v1677
  %v1679 = vrot.slane %v1554, 2
  %v1680 = vsel %vm487, %v1677, %v1679
  %v1681 = vrot.slane %v1555, 2
  %v1682 = vrot.slane %v1556, 2
  %v1683 = vsel %vm487, %v1681, %v1682
  %v1684 = vrot.slane %v1557, 2
  %v1685 = vsel %vm487, %v1682, %v1684
  %v1718 = vadd.f32 %v1473, %v1608
  %v1719 = vadd.f32 %v1474, %v1610
  %v1720 = vadd.f32 %v1475, %v1613
  %v1721 = vadd.f32 %v1476, %v1615
  %v1722 = vadd.f32 %v1477, %v1618
  %v1723 = vadd.f32 %v1478, %v1620
  %v1724 = vadd.f32 %v1479, %v1623
  %v1725 = vadd.f32 %v1480, %v1625
  %v1726 = vadd.f32 %v1481, %v1628
  %v1727 = vadd.f32 %v1482, %v1630
  %v1728 = vadd.f32 %v1483, %v1633
  %v1729 = vadd.f32 %v1484, %v1635
  %v1730 = vadd.f32 %v1485, %v1638
  %v1731 = vadd.f32 %v1486, %v1640
  %v1732 = vadd.f32 %v1487, %v1643
  %v1733 = vadd.f32 %v1488, %v1645
  %v1734 = vadd.f32 %v1489, %v1648
  %v1735 = vadd.f32 %v1490, %v1650
  %v1736 = vadd.f32 %v1491, %v1653
  %v1737 = vadd.f32 %v1492, %v1655
  %v1738 = vadd.f32 %v1493, %v1658
  %v1739 = vadd.f32 %v1494, %v1660
  %v1740 = vadd.f32 %v1495, %v1663
  %v1741 = vadd.f32 %v1496, %v1665
  %v1742 = vadd.f32 %v1497, %v1668
  %v1743 = vadd.f32 %v1498, %v1670
  %v1744 = vadd.f32 %v1499, %v1673
  %v1745 = vadd.f32 %v1500, %v1675
  %v1746 = vadd.f32 %v1501, %v1678
  %v1747 = vadd.f32 %v1502, %v1680
  %v1748 = vadd.f32 %v1503, %v1683
  %v1749 = vadd.f32 %v1504, %v1685
  %vm1750 = vcmask 130048
  %1751 = vst.msk [vmem:[%s2] sm:$0xff] %vm1750, %v1718
  %1752 = vst.msk [vmem:[%s2 + $0x8] sm:$0xff] %vm1750, %v1719
  %1753 = vst.msk [vmem:[%s2 + $0x10] sm:$0xff] %vm1750, %v1720
  %1754 = vst.msk [vmem:[%s2 + $0x18] sm:$0xff] %vm1750, %v1721
  %1755 = vst.msk [vmem:[%s2 + $0x20] sm:$0xff] %vm1750, %v1722
  %1756 = vst.msk [vmem:[%s2 + $0x28] sm:$0xff] %vm1750, %v1723
  %1757 = vst.msk [vmem:[%s2 + $0x30] sm:$0xff] %vm1750, %v1724
  %1758 = vst.msk [vmem:[%s2 + $0x38] sm:$0xff] %vm1750, %v1725
  %1759 = vst.msk [vmem:[%s2 + $0x40] sm:$0xff] %vm1750, %v1726
  %1760 = vst.msk [vmem:[%s2 + $0x48] sm:$0xff] %vm1750, %v1727
  %1761 = vst.msk [vmem:[%s2 + $0x50] sm:$0xff] %vm1750, %v1728
  %1762 = vst.msk [vmem:[%s2 + $0x58] sm:$0xff] %vm1750, %v1729
  %1763 = vst.msk [vmem:[%s2 + $0x60] sm:$0xff] %vm1750, %v1730
  %1764 = vst.msk [vmem:[%s2 + $0x68] sm:$0xff] %vm1750, %v1731
  %1765 = vst.msk [vmem:[%s2 + $0x70] sm:$0xff] %vm1750, %v1732
  %1766 = vst.msk [vmem:[%s2 + $0x78] sm:$0xff] %vm1750, %v1733
  %1767 = vst.msk [vmem:[%s2 + $0x80] sm:$0xff] %vm1750, %v1734
  %1768 = vst.msk [vmem:[%s2 + $0x88] sm:$0xff] %vm1750, %v1735
  %1769 = vst.msk [vmem:[%s2 + $0x90] sm:$0xff] %vm1750, %v1736
  %1770 = vst.msk [vmem:[%s2 + $0x98] sm:$0xff] %vm1750, %v1737
  %1771 = vst.msk [vmem:[%s2 + $0xa0] sm:$0xff] %vm1750, %v1738
  %1772 = vst.msk [vmem:[%s2 + $0xa8] sm:$0xff] %vm1750, %v1739
  %1773 = vst.msk [vmem:[%s2 + $0xb0] sm:$0xff] %vm1750, %v1740
  %1774 = vst.msk [vmem:[%s2 + $0xb8] sm:$0xff] %vm1750, %v1741
  %1775 = vst.msk [vmem:[%s2 + $0xc0] sm:$0xff] %vm1750, %v1742
  %1776 = vst.msk [vmem:[%s2 + $0xc8] sm:$0xff] %vm1750, %v1743
  %1777 = vst.msk [vmem:[%s2 + $0xd0] sm:$0xff] %vm1750, %v1744
  %1778 = vst.msk [vmem:[%s2 + $0xd8] sm:$0xff] %vm1750, %v1745
  %1779 = vst.msk [vmem:[%s2 + $0xe0] sm:$0xff] %vm1750, %v1746
  %1780 = vst.msk [vmem:[%s2 + $0xe8] sm:$0xff] %vm1750, %v1747
  %1781 = vst.msk [vmem:[%s2 + $0xf0] sm:$0xff] %vm1750, %v1748
  %1782 = vst.msk [vmem:[%s2 + $0xf8] sm:$0xff] %vm1750, %v1749
  // Predicated region
  $region10: #{crnn_forward.11} parent=0 // pred_check
    _
  $region11: #{crnn_forward.11} parent=0 // pred_check_branch
    %1784 = sbr.rel (0) target = $region13
  $region12: #{crnn_forward.11} parent=0 // pred_region
    _
  $region13: #{crnn_forward.11} parent=0 // pred_fallthru
    _
  // Predicated region
  $region14: #{crnn_forward.11} parent=0 // pred_check
    _
  $region15: #{crnn_forward.11} parent=0 // pred_check_branch
    %1786 = sbr.rel (0) target = $region17
  $region16: #{crnn_forward.11} parent=0 // pred_region
    _
  $region17: #{crnn_forward.11} parent=0 // pred_fallthru
    _

// kernel: crnn_forward.13
$region0: #{crnn_forward.13}
  #allocation0 [shape = 'u32[]', space=smem, size = 0x4, offset = 0x4, fixed_abs, tag = 'smem constant byte address 0x4 - core index']
  #allocation1 [shape = 'u32[144,128]{1,0:T(1,128)}', space=vmem, size = 0x12000, scoped, tag = 'internal scratch']
  %s0 = inlined_call_operand.vmem [shape: f32[64,32], index: 0, kind: input, shape index: {}]
  %s1 = inlined_call_operand.vmem [shape: f32[32,128], index: 1, kind: input, shape index: {}]
  %s2 = inlined_call_operand.vmem [shape: f32[1,128], index: 2, kind: input, shape index: {}]
  %s3 = inlined_call_operand.vmem [shape: f32[64,128], index: 3, kind: output, shape index: {}]
  %s4 = sld [smem:[#allocation0]]
  $region22: #{crnn_forward.13} parent=0
    _
  %s6 = ssub.s32 1, %s4
  %s7 = scalar_select 0, %s6, %s4
  // Predicated region
  $region2: #{crnn_forward.13} parent=0 // pred_check
    _
  $region3: #{crnn_forward.13} parent=0 // pred_check_branch
    %9 = sbr.rel (0) target = $region5
  $region4: #{crnn_forward.13} parent=0 // pred_region
    _
  $region5: #{crnn_forward.13} parent=0 // pred_fallthru
    _
  // Predicated region
  $region6: #{crnn_forward.13} parent=0 // pred_check
    _
  $region7: #{crnn_forward.13} parent=0 // pred_check_branch
    %11 = sbr.rel (0) target = $region9
  $region8: #{crnn_forward.13} parent=0 // pred_region
    _
  $region9: #{crnn_forward.13} parent=0 // pred_fallthru
    _
  // Predicated region
  $region10: #{crnn_forward.13} parent=0 // pred_check
    _
  $region11: #{crnn_forward.13} parent=0 // pred_check_branch
    %13 = sbr.rel (0) target = $region13
  $region12: #{crnn_forward.13} parent=0 // pred_region
    _
  $region13: #{crnn_forward.13} parent=0 // pred_fallthru
    _
  %v15 = vld [vmem:[%s0] sm:$0xff]
  %v16 = vld [vmem:[%s0 + $0x8] sm:$0xff]
  %v17 = vld [vmem:[%s0 + $0x10] sm:$0xff]
  %v18 = vld [vmem:[%s0 + $0x18] sm:$0xff]
  %v19 = vld [vmem:[%s0 + $0x20] sm:$0xff]
  %v20 = vld [vmem:[%s0 + $0x28] sm:$0xff]
  %v21 = vld [vmem:[%s0 + $0x30] sm:$0xff]
  %v22 = vld [vmem:[%s0 + $0x38] sm:$0xff]
  %v23 = vpack.c.bf16 %v16, %v15
  %v24 = vpack.c.bf16 %v18, %v17
  %v25 = vpack.c.bf16 %v20, %v19
  %v26 = vpack.c.bf16 %v22, %v21
  %v27 = vld [vmem:[%s1] sm:$0xff]
  %v28 = vld [vmem:[%s1 + $0x8] sm:$0xff]
  %v29 = vld [vmem:[%s1 + $0x10] sm:$0xff]
  %v30 = vld [vmem:[%s1 + $0x18] sm:$0xff]
  %v31 = vpack.c.bf16 %v28, %v27
  %v32 = vpack.c.bf16 %v30, %v29
  %v33 = vld [vmem:[%s2] sm:$0x1]
  %v35 = vlaneseq
  %v36 = vshrl.u32 %v35, 7
  %v37 = vsub.s32 0, %v36
  %v38 = vrot.slane %v33, %v37
  %vm40 = vcmask 261120
  %v42 = vsel %vm40, %v23, 0
  %v45 = vsel %vm40, %v24, 0
  %v48 = vsel %vm40, %v25, 0
  %v51 = vsel %vm40, %v26, 0
  %53 = vmatprep.subr.bf16.mxu0 0
  %54 = vmatpush1.bf16.msra.mxu0 %v31
  %55 = vmatprep.subr.bf16.mxu0 0
  %56 = vmatpush1.bf16.msra.mxu0 %v32
  %57 = vmatprep.subr.bf16.mxu0 0
  %58 = vmatpush1.bf16.msra.mxu0 0
  %59 = vmatprep.subr.bf16.mxu0 0
  %60 = vmatpush1.bf16.msra.mxu0 0
  %61 = vmatprep.subr.bf16.mxu0 0
  %62 = vmatpush1.bf16.msra.mxu0 0
  %63 = vmatprep.subr.bf16.mxu0 0
  %64 = vmatpush1.bf16.msra.mxu0 0
  %65 = vmatprep.subr.bf16.mxu0 0
  %66 = vmatpush1.bf16.msra.mxu0 0
  %67 = vmatprep.subr.bf16.mxu0 0
  %68 = vmatpush1.bf16.msra.mxu0 0
  %69 = vmatprep.subr.bf16.mxu0 0
  %70 = vmatpush1.bf16.msra.mxu0 0
  %71 = vmatprep.subr.bf16.mxu0 0
  %72 = vmatpush1.bf16.msra.mxu0 0
  %73 = vmatprep.subr.bf16.mxu0 0
  %74 = vmatpush1.bf16.msra.mxu0 0
  %75 = vmatprep.subr.bf16.mxu0 0
  %76 = vmatpush1.bf16.msra.mxu0 0
  %77 = vmatprep.subr.bf16.mxu0 0
  %78 = vmatpush1.bf16.msra.mxu0 0
  %79 = vmatprep.subr.bf16.mxu0 0
  %80 = vmatpush1.bf16.msra.mxu0 0
  %81 = vmatprep.subr.bf16.mxu0 0
  %82 = vmatpush1.bf16.msra.mxu0 0
  %83 = vmatprep.subr.bf16.mxu0 0
  %84 = vmatpush1.bf16.msra.mxu0 0
  %85 = vmatprep.mubr.bf16.mxu0 0
  %86 = vmatmul.mubr.bf16.gmra.mrb[0].mxu0 %v42
  %v87 = vpop.f32.mrb[0].mxu0
  %v88 = vadd.f32 %v38, %v87
  %v89 = vpop.f32.mrb[0].mxu0
  %v90 = vpop.f32.mrb[0].mxu0
  %v91 = vadd.f32 %v38, %v90
  %v92 = vpop.f32.mrb[0].mxu0
  %93 = vmatprep.mubr.bf16.mxu0 0
  %94 = vmatmul.mubr.bf16.gmra.mrb[0].mxu0 %v45
  %v95 = vpop.f32.mrb[0].mxu0
  %v96 = vadd.f32 %v38, %v95
  %v97 = vpop.f32.mrb[0].mxu0
  %v98 = vpop.f32.mrb[0].mxu0
  %v99 = vadd.f32 %v38, %v98
  %v100 = vpop.f32.mrb[0].mxu0
  %101 = vmatprep.mubr.bf16.mxu0 0
  %102 = vmatmul.mubr.bf16.gmra.mrb[0].mxu0 %v48
  %v103 = vpop.f32.mrb[0].mxu0
  %v104 = vadd.f32 %v38, %v103
  %v105 = vpop.f32.mrb[0].mxu0
  %v106 = vpop.f32.mrb[0].mxu0
  %v107 = vadd.f32 %v38, %v106
  %v108 = vpop.f32.mrb[0].mxu0
  %109 = vmatprep.mubr.bf16.mxu0 0
  %110 = vmatmul.mubr.bf16.gmra.mrb[0].mxu0 %v51
  %v111 = vpop.f32.mrb[0].mxu0
  %v112 = vadd.f32 %v38, %v111
  %v113 = vpop.f32.mrb[0].mxu0
  %v114 = vpop.f32.mrb[0].mxu0
  %v115 = vadd.f32 %v38, %v114
  %v116 = vpop.f32.mrb[0].mxu0
  %117 = vdwg.mxu0
  %v118 = vmax.f32 %v88, 0.0
  %v119 = vmax.f32 %v91, 0.0
  %v120 = vmax.f32 %v96, 0.0
  %v121 = vmax.f32 %v99, 0.0
  %v122 = vmax.f32 %v104, 0.0
  %v123 = vmax.f32 %v107, 0.0
  %v124 = vmax.f32 %v112, 0.0
  %v125 = vmax.f32 %v115, 0.0
  %126 = vst [vmem:[%s3] sm:$0xff] %v118
  %127 = vst [vmem:[%s3 + $0x8] sm:$0xff] %v119
  %128 = vst [vmem:[%s3 + $0x10] sm:$0xff] %v120
  %129 = vst [vmem:[%s3 + $0x18] sm:$0xff] %v121
  %130 = vst [vmem:[%s3 + $0x20] sm:$0xff] %v122
  %131 = vst [vmem:[%s3 + $0x28] sm:$0xff] %v123
  %132 = vst [vmem:[%s3 + $0x30] sm:$0xff] %v124
  %133 = vst [vmem:[%s3 + $0x38] sm:$0xff] %v125
  // Predicated region
  $region14: #{crnn_forward.13} parent=0 // pred_check
    _
  $region15: #{crnn_forward.13} parent=0 // pred_check_branch
    %135 = sbr.rel (0) target = $region17
  $region16: #{crnn_forward.13} parent=0 // pred_region
    _
  $region17: #{crnn_forward.13} parent=0 // pred_fallthru
    _
  // Predicated region
  $region18: #{crnn_forward.13} parent=0 // pred_check
    _
  $region19: #{crnn_forward.13} parent=0 // pred_check_branch
    %137 = sbr.rel (0) target = $region21
  $region20: #{crnn_forward.13} parent=0 // pred_region
    _
  $region21: #{crnn_forward.13} parent=0 // pred_fallthru
    _

// kernel: crnn_forward.14
$region0: #{crnn_forward.14}
  #allocation0 [shape = 'u32[]', space=smem, size = 0x4, offset = 0x4, fixed_abs, tag = 'smem constant byte address 0x4 - core index']
  #allocation1 [shape = 'u32[144,128]{1,0:T(1,128)}', space=vmem, size = 0x12000, scoped, tag = 'internal scratch']
  %s0 = inlined_call_operand.vmem [shape: f32[2,4,8,64], index: 0, kind: input, shape index: {}]
  %s1 = inlined_call_operand.vmem [shape: f32[2,8,64], index: 1, kind: output, shape index: {}]
  %s2 = sld [smem:[#allocation0]]
  $region14: #{crnn_forward.14} parent=0
    _
  %s4 = ssub.s32 1, %s2
  %s5 = scalar_select 0, %s4, %s2
  // Predicated region
  $region2: #{crnn_forward.14} parent=0 // pred_check
    _
  $region3: #{crnn_forward.14} parent=0 // pred_check_branch
    %7 = sbr.rel (0) target = $region5
  $region4: #{crnn_forward.14} parent=0 // pred_region
    _
  $region5: #{crnn_forward.14} parent=0 // pred_fallthru
    _
  %v8 = vld [vmem:[%s0] sm:$0xff]
  %v9 = vld [vmem:[%s0 + $0x8] sm:$0xff]
  %v10 = vld [vmem:[%s0 + $0x10] sm:$0xff]
  %v11 = vld [vmem:[%s0 + $0x18] sm:$0xff]
  %v12 = vld [vmem:[%s0 + $0x20] sm:$0xff]
  %v13 = vld [vmem:[%s0 + $0x28] sm:$0xff]
  %v14 = vld [vmem:[%s0 + $0x30] sm:$0xff]
  %v15 = vld [vmem:[%s0 + $0x38] sm:$0xff]
  %vm16 = vcmask 523264
  %v17 = vsel %vm16, %v8, 0.0
  %v18 = vsel %vm16, %v9, 0.0
  %v19 = vadd.f32 %v17, %v18
  %v20 = vsel %vm16, %v10, 0.0
  %v21 = vadd.f32 %v19, %v20
  %v22 = vsel %vm16, %v11, 0.0
  %v23 = vadd.f32 %v21, %v22
  %v24 = vsel %vm16, %v12, 0.0
  %v25 = vsel %vm16, %v13, 0.0
  %v26 = vadd.f32 %v24, %v25
  %v27 = vsel %vm16, %v14, 0.0
  %v28 = vadd.f32 %v26, %v27
  %v29 = vsel %vm16, %v15, 0.0
  %v30 = vadd.f32 %v28, %v29
  %v31 = vrcp.pop 4.0
  %v32 = vmul.f32 %v23, %v31
  %v33 = vmul.f32 %v30, %v31
  %34 = vst.msk [vmem:[%s1] sm:$0xff] %vm16, %v32
  %35 = vst.msk [vmem:[%s1 + $0x8] sm:$0xff] %vm16, %v33
  // Predicated region
  $region6: #{crnn_forward.14} parent=0 // pred_check
    _
  $region7: #{crnn_forward.14} parent=0 // pred_check_branch
    %37 = sbr.rel (0) target = $region9
  $region8: #{crnn_forward.14} parent=0 // pred_region
    _
  $region9: #{crnn_forward.14} parent=0 // pred_fallthru
    _
  // Predicated region
  $region10: #{crnn_forward.14} parent=0 // pred_check
    _
  $region11: #{crnn_forward.14} parent=0 // pred_check_branch
    %39 = sbr.rel (0) target = $region13
  $region12: #{crnn_forward.14} parent=0 // pred_region
    _
  $region13: #{crnn_forward.14} parent=0 // pred_fallthru
    _

// kernel: crnn_forward.15
$region0: #{crnn_forward.15}
  #allocation0 [shape = 'u32[]', space=smem, size = 0x4, offset = 0x4, fixed_abs, tag = 'smem constant byte address 0x4 - core index']
  #allocation1 [shape = 'u32[144,128]{1,0:T(1,128)}', space=vmem, size = 0x12000, scoped, tag = 'internal scratch']
  %s0 = inlined_call_operand.vmem [shape: f32[16,64], index: 0, kind: input, shape index: {}]
  %s1 = inlined_call_operand.vmem [shape: f32[64,256], index: 1, kind: input, shape index: {}]
  %s2 = inlined_call_operand.vmem [shape: f32[1,256], index: 2, kind: input, shape index: {}]
  %s3 = inlined_call_operand.vmem [shape: f32[16,256], index: 3, kind: output, shape index: {}]
  %s4 = sld [smem:[#allocation0]]
  $region22: #{crnn_forward.15} parent=0
    _
  %s6 = ssub.s32 1, %s4
  %s7 = scalar_select 0, %s6, %s4
  // Predicated region
  $region2: #{crnn_forward.15} parent=0 // pred_check
    _
  $region3: #{crnn_forward.15} parent=0 // pred_check_branch
    %9 = sbr.rel (0) target = $region5
  $region4: #{crnn_forward.15} parent=0 // pred_region
    _
  $region5: #{crnn_forward.15} parent=0 // pred_fallthru
    _
  // Predicated region
  $region6: #{crnn_forward.15} parent=0 // pred_check
    _
  $region7: #{crnn_forward.15} parent=0 // pred_check_branch
    %11 = sbr.rel (0) target = $region9
  $region8: #{crnn_forward.15} parent=0 // pred_region
    _
  $region9: #{crnn_forward.15} parent=0 // pred_fallthru
    _
  // Predicated region
  $region10: #{crnn_forward.15} parent=0 // pred_check
    _
  $region11: #{crnn_forward.15} parent=0 // pred_check_branch
    %13 = sbr.rel (0) target = $region13
  $region12: #{crnn_forward.15} parent=0 // pred_region
    _
  $region13: #{crnn_forward.15} parent=0 // pred_fallthru
    _
  %v15 = vld [vmem:[%s0] sm:$0xff]
  %v16 = vld [vmem:[%s0 + $0x8] sm:$0xff]
  %v17 = vpack.c.bf16 %v16, %v15
  %v18 = vld [vmem:[%s1] sm:$0xff]
  %v19 = vld [vmem:[%s1 + $0x8] sm:$0xff]
  %v20 = vld [vmem:[%s1 + $0x10] sm:$0xff]
  %v21 = vld [vmem:[%s1 + $0x18] sm:$0xff]
  %v22 = vld [vmem:[%s1 + $0x20] sm:$0xff]
  %v23 = vld [vmem:[%s1 + $0x28] sm:$0xff]
  %v24 = vld [vmem:[%s1 + $0x30] sm:$0xff]
  %v25 = vld [vmem:[%s1 + $0x38] sm:$0xff]
  %v26 = vld [vmem:[%s1 + $0x40] sm:$0xff]
  %v27 = vld [vmem:[%s1 + $0x48] sm:$0xff]
  %v28 = vld [vmem:[%s1 + $0x50] sm:$0xff]
  %v29 = vld [vmem:[%s1 + $0x58] sm:$0xff]
  %v30 = vld [vmem:[%s1 + $0x60] sm:$0xff]
  %v31 = vld [vmem:[%s1 + $0x68] sm:$0xff]
  %v32 = vld [vmem:[%s1 + $0x70] sm:$0xff]
  %v33 = vld [vmem:[%s1 + $0x78] sm:$0xff]
  %v34 = vpack.c.bf16 %v20, %v18
  %v35 = vpack.c.bf16 %v21, %v19
  %v36 = vpack.c.bf16 %v24, %v22
  %v37 = vpack.c.bf16 %v25, %v23
  %v38 = vpack.c.bf16 %v28, %v26
  %v39 = vpack.c.bf16 %v29, %v27
  %v40 = vpack.c.bf16 %v32, %v30
  %v41 = vpack.c.bf16 %v33, %v31
  %v42 = vld [vmem:[%s2] sm:$0x3]
  %v44 = vlaneseq
  %v45 = vshrl.u32 %v44, 7
  %v46 = vsub.s32 0, %v45
  %v47 = vrot.slane %v42, %v46
  %v48 = vlaneseq
  %v49 = vshrl.u32 %v48, 7
  %v50 = vsub.s32 1, %v49
  %v51 = vrot.slane %v42, %v50
  %vm54 = vcmask 523264
  %v56 = vsel %vm54, %v17, 0
  %58 = vmatprep.subr.bf16.mxu0 %v35
  %59 = vmatpush1.bf16.msra.mxu0 %v34
  %60 = vmatprep.subr.bf16.mxu0 %v37
  %61 = vmatpush1.bf16.msra.mxu0 %v36
  %62 = vmatprep.subr.bf16.mxu0 %v39
  %63 = vmatpush1.bf16.msra.mxu0 %v38
  %64 = vmatprep.subr.bf16.mxu0 %v41
  %65 = vmatpush1.bf16.msra.mxu0 %v40
  %66 = vmatprep.subr.bf16.mxu0 0
  %67 = vmatpush1.bf16.msra.mxu0 0
  %68 = vmatprep.subr.bf16.mxu0 0
  %69 = vmatpush1.bf16.msra.mxu0 0
  %70 = vmatprep.subr.bf16.mxu0 0
  %71 = vmatpush1.bf16.msra.mxu0 0
  %72 = vmatprep.subr.bf16.mxu0 0
  %73 = vmatpush1.bf16.msra.mxu0 0
  %74 = vmatprep.subr.bf16.mxu0 0
  %75 = vmatpush1.bf16.msra.mxu0 0
  %76 = vmatprep.subr.bf16.mxu0 0
  %77 = vmatpush1.bf16.msra.mxu0 0
  %78 = vmatprep.subr.bf16.mxu0 0
  %79 = vmatpush1.bf16.msra.mxu0 0
  %80 = vmatprep.subr.bf16.mxu0 0
  %81 = vmatpush1.bf16.msra.mxu0 0
  %82 = vmatprep.subr.bf16.mxu0 0
  %83 = vmatpush1.bf16.msra.mxu0 0
  %84 = vmatprep.subr.bf16.mxu0 0
  %85 = vmatpush1.bf16.msra.mxu0 0
  %86 = vmatprep.subr.bf16.mxu0 0
  %87 = vmatpush1.bf16.msra.mxu0 0
  %88 = vmatprep.subr.bf16.mxu0 0
  %89 = vmatpush1.bf16.msra.mxu0 0
  %90 = vmatprep.mubr.bf16.mxu0 0
  %91 = vmatmul.mubr.bf16.gmra.mrb[0].mxu0 %v56
  %v92 = vpop.f32.mrb[0].mxu0
  %v93 = vadd.f32 %v47, %v92
  %v94 = vpop.f32.mrb[0].mxu0
  %v95 = vadd.f32 %v51, %v94
  %v96 = vpop.f32.mrb[0].mxu0
  %v97 = vadd.f32 %v47, %v96
  %v98 = vpop.f32.mrb[0].mxu0
  %v99 = vadd.f32 %v51, %v98
  %100 = vdwg.mxu0
  %101 = vst [vmem:[%s3] sm:$0xff] %v93
  %102 = vst [vmem:[%s3 + $0x8] sm:$0xff] %v95
  %103 = vst [vmem:[%s3 + $0x10] sm:$0xff] %v97
  %104 = vst [vmem:[%s3 + $0x18] sm:$0xff] %v99
  // Predicated region
  $region14: #{crnn_forward.15} parent=0 // pred_check
    _
  $region15: #{crnn_forward.15} parent=0 // pred_check_branch
    %106 = sbr.rel (0) target = $region17
  $region16: #{crnn_forward.15} parent=0 // pred_region
    _
  $region17: #{crnn_forward.15} parent=0 // pred_fallthru
    _
  // Predicated region
  $region18: #{crnn_forward.15} parent=0 // pred_check
    _
  $region19: #{crnn_forward.15} parent=0 // pred_check_branch
    %108 = sbr.rel (0) target = $region21
  $region20: #{crnn_forward.15} parent=0 // pred_region
    _
  $region21: #{crnn_forward.15} parent=0 // pred_fallthru
    _

// kernel: crnn_forward.10
$region0: #{crnn_forward.10}
  #allocation0 [shape = 'u32[]', space=smem, size = 0x4, offset = 0x4, fixed_abs, tag = 'smem constant byte address 0x4 - core index']
  #allocation1 [shape = 'u32[144,128]{1,0:T(1,128)}', space=vmem, size = 0x12000, scoped, tag = 'internal scratch']
  %s0 = inlined_call_operand.vmem [shape: f32[2,18,34,1], index: 0, kind: input, shape index: {}]
  %s1 = inlined_call_operand.vmem [shape: f32[9,16], index: 1, kind: input, shape index: {}]
  %s2 = inlined_call_operand.vmem [shape: f32[1,16], index: 2, kind: input, shape index: {}]
  %s3 = inlined_call_operand.vmem [shape: f32[2,16,32,16], index: 3, kind: output, shape index: {}]
  %s4 = sld [smem:[#allocation0]]
  $region22: #{crnn_forward.10} parent=0
    _
  %s6 = ssub.s32 1, %s4
  %s7 = scalar_select 0, %s6, %s4
  // Predicated region
  $region2: #{crnn_forward.10} parent=0 // pred_check
    _
  $region3: #{crnn_forward.10} parent=0 // pred_check_branch
    %9 = sbr.rel (0) target = $region5
  $region4: #{crnn_forward.10} parent=0 // pred_region
    _
  $region5: #{crnn_forward.10} parent=0 // pred_fallthru
    _
  // Predicated region
  $region6: #{crnn_forward.10} parent=0 // pred_check
    _
  $region7: #{crnn_forward.10} parent=0 // pred_check_branch
    %11 = sbr.rel (0) target = $region9
  $region8: #{crnn_forward.10} parent=0 // pred_region
    _
  $region9: #{crnn_forward.10} parent=0 // pred_fallthru
    _
  // Predicated region
  $region10: #{crnn_forward.10} parent=0 // pred_check
    _
  $region11: #{crnn_forward.10} parent=0 // pred_check_branch
    %13 = sbr.rel (0) target = $region13
  $region12: #{crnn_forward.10} parent=0 // pred_region
    _
  $region13: #{crnn_forward.10} parent=0 // pred_fallthru
    _
  %v14 = vld [vmem:[%s0] sm:$0xff]
  %v15 = vld [vmem:[%s0 + $0x8] sm:$0xff]
  %v16 = vld [vmem:[%s0 + $0x10] sm:$0xff]
  %v17 = vld [vmem:[%s0 + $0x18] sm:$0xff]
  %v18 = vld [vmem:[%s0 + $0x20] sm:$0x3]
  %v19 = vld [vmem:[%s0 + $0x28] sm:$0xff]
  %v20 = vld [vmem:[%s0 + $0x30] sm:$0xff]
  %v21 = vld [vmem:[%s0 + $0x38] sm:$0xff]
  %v22 = vld [vmem:[%s0 + $0x40] sm:$0xff]
  %v23 = vld [vmem:[%s0 + $0x48] sm:$0x3]
  %v24 = vld [vmem:[%s0 + $0x50] sm:$0xff]
  %v25 = vld [vmem:[%s0 + $0x58] sm:$0xff]
  %v26 = vld [vmem:[%s0 + $0x60] sm:$0xff]
  %v27 = vld [vmem:[%s0 + $0x68] sm:$0xff]
  %v28 = vld [vmem:[%s0 + $0x70] sm:$0x3]
  %v29 = vld [vmem:[%s0 + $0x78] sm:$0xff]
  %v30 = vld [vmem:[%s0 + $0x80] sm:$0xff]
  %v31 = vld [vmem:[%s0 + $0x88] sm:$0xff]
  %v32 = vld [vmem:[%s0 + $0x90] sm:$0xff]
  %v33 = vld [vmem:[%s0 + $0x98] sm:$0x3]
  %v34 = vld [vmem:[%s0 + $0xa0] sm:$0xff]
  %v35 = vld [vmem:[%s0 + $0xa8] sm:$0xff]
  %v36 = vld [vmem:[%s0 + $0xb0] sm:$0xff]
  %v37 = vld [vmem:[%s0 + $0xb8] sm:$0xff]
  %v38 = vld [vmem:[%s0 + $0xc0] sm:$0x3]
  %v39 = vld [vmem:[%s0 + $0xc8] sm:$0xff]
  %v40 = vld [vmem:[%s0 + $0xd0] sm:$0xff]
  %v41 = vld [vmem:[%s0 + $0xd8] sm:$0xff]
  %v42 = vld [vmem:[%s0 + $0xe0] sm:$0xff]
  %v43 = vld [vmem:[%s0 + $0xe8] sm:$0x3]
  %v44 = vld [vmem:[%s0 + $0xf0] sm:$0xff]
  %v45 = vld [vmem:[%s0 + $0xf8] sm:$0xff]
  %v46 = vld [vmem:[%s0 + $0x100] sm:$0xff]
  %v47 = vld [vmem:[%s0 + $0x108] sm:$0xff]
  %v48 = vld [vmem:[%s0 + $0x110] sm:$0x3]
  %v49 = vld [vmem:[%s0 + $0x118] sm:$0xff]
  %v50 = vld [vmem:[%s0 + $0x120] sm:$0xff]
  %v51 = vld [vmem:[%s0 + $0x128] sm:$0xff]
  %v52 = vld [vmem:[%s0 + $0x130] sm:$0xff]
  %v53 = vld [vmem:[%s0 + $0x138] sm:$0x3]
  %v54 = vld [vmem:[%s0 + $0x140] sm:$0xff]
  %v55 = vld [vmem:[%s0 + $0x148] sm:$0xff]
  %v56 = vld [vmem:[%s0 + $0x150] sm:$0xff]
  %v57 = vld [vmem:[%s0 + $0x158] sm:$0xff]
  %v58 = vld [vmem:[%s0 + $0x160] sm:$0x3]
  %v59 = vld [vmem:[%s0 + $0x168] sm:$0xff]
  %v60 = vld [vmem:[%s0 + $0x170] sm:$0xff]
  %v61 = vld [vmem:[%s0 + $0x178] sm:$0xff]
  %v62 = vld [vmem:[%s0 + $0x180] sm:$0xff]
  %v63 = vld [vmem:[%s0 + $0x188] sm:$0x3]
  %v64 = vld [vmem:[%s0 + $0x190] sm:$0xff]
  %v65 = vld [vmem:[%s0 + $0x198] sm:$0xff]
  %v66 = vld [vmem:[%s0 + $0x1a0] sm:$0xff]
  %v67 = vld [vmem:[%s0 + $0x1a8] sm:$0xff]
  %v68 = vld [vmem:[%s0 + $0x1b0] sm:$0x3]
  %v69 = vld [vmem:[%s0 + $0x1b8] sm:$0xff]
  %v70 = vld [vmem:[%s0 + $0x1c0] sm:$0xff]
  %v71 = vld [vmem:[%s0 + $0x1c8] sm:$0xff]
  %v72 = vld [vmem:[%s0 + $0x1d0] sm:$0xff]
  %v73 = vld [vmem:[%s0 + $0x1d8] sm:$0x3]
  %v74 = vld [vmem:[%s0 + $0x1e0] sm:$0xff]
  %v75 = vld [vmem:[%s0 + $0x1e8] sm:$0xff]
  %v76 = vld [vmem:[%s0 + $0x1f0] sm:$0xff]
  %v77 = vld [vmem:[%s0 + $0x1f8] sm:$0xff]
  %v78 = vld [vmem:[%s0 + $0x200] sm:$0x3]
  %v79 = vld [vmem:[%s0 + $0x208] sm:$0xff]
  %v80 = vld [vmem:[%s0 + $0x210] sm:$0xff]
  %v81 = vld [vmem:[%s0 + $0x218] sm:$0xff]
  %v82 = vld [vmem:[%s0 + $0x220] sm:$0xff]
  %v83 = vld [vmem:[%s0 + $0x228] sm:$0x3]
  %v84 = vld [vmem:[%s0 + $0x230] sm:$0xff]
  %v85 = vld [vmem:[%s0 + $0x238] sm:$0xff]
  %v86 = vld [vmem:[%s0 + $0x240] sm:$0xff]
  %v87 = vld [vmem:[%s0 + $0x248] sm:$0xff]
  %v88 = vld [vmem:[%s0 + $0x250] sm:$0x3]
  %v89 = vld [vmem:[%s0 + $0x258] sm:$0xff]
  %v90 = vld [vmem:[%s0 + $0x260] sm:$0xff]
  %v91 = vld [vmem:[%s0 + $0x268] sm:$0xff]
  %v92 = vld [vmem:[%s0 + $0x270] sm:$0xff]
  %v93 = vld [vmem:[%s0 + $0x278] sm:$0x3]
  %v94 = vld [vmem:[%s0 + $0x280] sm:$0xff]
  %v95 = vld [vmem:[%s0 + $0x288] sm:$0xff]
  %v96 = vld [vmem:[%s0 + $0x290] sm:$0xff]
  %v97 = vld [vmem:[%s0 + $0x298] sm:$0xff]
  %v98 = vld [vmem:[%s0 + $0x2a0] sm:$0x3]
  %v99 = vld [vmem:[%s0 + $0x2a8] sm:$0xff]
  %v100 = vld [vmem:[%s0 + $0x2b0] sm:$0xff]
  %v101 = vld [vmem:[%s0 + $0x2b8] sm:$0xff]
  %v102 = vld [vmem:[%s0 + $0x2c0] sm:$0xff]
  %v103 = vld [vmem:[%s0 + $0x2c8] sm:$0x3]
  %v104 = vld [vmem:[%s0 + $0x2d0] sm:$0xff]
  %v105 = vld [vmem:[%s0 + $0x2d8] sm:$0xff]
  %v106 = vld [vmem:[%s0 + $0x2e0] sm:$0xff]
  %v107 = vld [vmem:[%s0 + $0x2e8] sm:$0xff]
  %v108 = vld [vmem:[%s0 + $0x2f0] sm:$0x3]
  %v109 = vld [vmem:[%s0 + $0x2f8] sm:$0xff]
  %v110 = vld [vmem:[%s0 + $0x300] sm:$0xff]
  %v111 = vld [vmem:[%s0 + $0x308] sm:$0xff]
  %v112 = vld [vmem:[%s0 + $0x310] sm:$0xff]
  %v113 = vld [vmem:[%s0 + $0x318] sm:$0x3]
  %v114 = vld [vmem:[%s0 + $0x320] sm:$0xff]
  %v115 = vld [vmem:[%s0 + $0x328] sm:$0xff]
  %v116 = vld [vmem:[%s0 + $0x330] sm:$0xff]
  %v117 = vld [vmem:[%s0 + $0x338] sm:$0xff]
  %v118 = vld [vmem:[%s0 + $0x340] sm:$0x3]
  %v119 = vld [vmem:[%s0 + $0x348] sm:$0xff]
  %v120 = vld [vmem:[%s0 + $0x350] sm:$0xff]
  %v121 = vld [vmem:[%s0 + $0x358] sm:$0xff]
  %v122 = vld [vmem:[%s0 + $0x360] sm:$0xff]
  %v123 = vld [vmem:[%s0 + $0x368] sm:$0x3]
  %v124 = vld [vmem:[%s0 + $0x370] sm:$0xff]
  %v125 = vld [vmem:[%s0 + $0x378] sm:$0xff]
  %v126 = vld [vmem:[%s0 + $0x380] sm:$0xff]
  %v127 = vld [vmem:[%s0 + $0x388] sm:$0xff]
  %v128 = vld [vmem:[%s0 + $0x390] sm:$0x3]
  %v129 = vld [vmem:[%s0 + $0x398] sm:$0xff]
  %v130 = vld [vmem:[%s0 + $0x3a0] sm:$0xff]
  %v131 = vld [vmem:[%s0 + $0x3a8] sm:$0xff]
  %v132 = vld [vmem:[%s0 + $0x3b0] sm:$0xff]
  %v133 = vld [vmem:[%s0 + $0x3b8] sm:$0x3]
  %v134 = vld [vmem:[%s0 + $0x3c0] sm:$0xff]
  %v135 = vld [vmem:[%s0 + $0x3c8] sm:$0xff]
  %v136 = vld [vmem:[%s0 + $0x3d0] sm:$0xff]
  %v137 = vld [vmem:[%s0 + $0x3d8] sm:$0xff]
  %v138 = vld [vmem:[%s0 + $0x3e0] sm:$0x3]
  %v139 = vld [vmem:[%s0 + $0x3e8] sm:$0xff]
  %v140 = vld [vmem:[%s0 + $0x3f0] sm:$0xff]
  %v141 = vld [vmem:[%s0 + $0x3f8] sm:$0xff]
  %v142 = vld [vmem:[%s0 + $0x400] sm:$0xff]
  %v143 = vld [vmem:[%s0 + $0x408] sm:$0x3]
  %v144 = vld [vmem:[%s0 + $0x410] sm:$0xff]
  %v145 = vld [vmem:[%s0 + $0x418] sm:$0xff]
  %v146 = vld [vmem:[%s0 + $0x420] sm:$0xff]
  %v147 = vld [vmem:[%s0 + $0x428] sm:$0xff]
  %v148 = vld [vmem:[%s0 + $0x430] sm:$0x3]
  %v149 = vld [vmem:[%s0 + $0x438] sm:$0xff]
  %v150 = vld [vmem:[%s0 + $0x440] sm:$0xff]
  %v151 = vld [vmem:[%s0 + $0x448] sm:$0xff]
  %v152 = vld [vmem:[%s0 + $0x450] sm:$0xff]
  %v153 = vld [vmem:[%s0 + $0x458] sm:$0x3]
  %v154 = vld [vmem:[%s0 + $0x460] sm:$0xff]
  %v155 = vld [vmem:[%s0 + $0x468] sm:$0xff]
  %v156 = vld [vmem:[%s0 + $0x470] sm:$0xff]
  %v157 = vld [vmem:[%s0 + $0x478] sm:$0xff]
  %v158 = vld [vmem:[%s0 + $0x480] sm:$0x3]
  %v159 = vld [vmem:[%s0 + $0x488] sm:$0xff]
  %v160 = vld [vmem:[%s0 + $0x490] sm:$0xff]
  %v161 = vld [vmem:[%s0 + $0x498] sm:$0xff]
  %v162 = vld [vmem:[%s0 + $0x4a0] sm:$0xff]
  %v163 = vld [vmem:[%s0 + $0x4a8] sm:$0x3]
  %v164 = vld [vmem:[%s0 + $0x4b0] sm:$0xff]
  %v165 = vld [vmem:[%s0 + $0x4b8] sm:$0xff]
  %v166 = vld [vmem:[%s0 + $0x4c0] sm:$0xff]
  %v167 = vld [vmem:[%s0 + $0x4c8] sm:$0xff]
  %v168 = vld [vmem:[%s0 + $0x4d0] sm:$0x3]
  %v169 = vld [vmem:[%s0 + $0x4d8] sm:$0xff]
  %v170 = vld [vmem:[%s0 + $0x4e0] sm:$0xff]
  %v171 = vld [vmem:[%s0 + $0x4e8] sm:$0xff]
  %v172 = vld [vmem:[%s0 + $0x4f0] sm:$0xff]
  %v173 = vld [vmem:[%s0 + $0x4f8] sm:$0x3]
  %v174 = vld [vmem:[%s0 + $0x500] sm:$0xff]
  %v175 = vld [vmem:[%s0 + $0x508] sm:$0xff]
  %v176 = vld [vmem:[%s0 + $0x510] sm:$0xff]
  %v177 = vld [vmem:[%s0 + $0x518] sm:$0xff]
  %v178 = vld [vmem:[%s0 + $0x520] sm:$0x3]
  %v179 = vld [vmem:[%s0 + $0x528] sm:$0xff]
  %v180 = vld [vmem:[%s0 + $0x530] sm:$0xff]
  %v181 = vld [vmem:[%s0 + $0x538] sm:$0xff]
  %v182 = vld [vmem:[%s0 + $0x540] sm:$0xff]
  %v183 = vld [vmem:[%s0 + $0x548] sm:$0x3]
  %v184 = vld [vmem:[%s0 + $0x550] sm:$0xff]
  %v185 = vld [vmem:[%s0 + $0x558] sm:$0xff]
  %v186 = vld [vmem:[%s0 + $0x560] sm:$0xff]
  %v187 = vld [vmem:[%s0 + $0x568] sm:$0xff]
  %v188 = vld [vmem:[%s0 + $0x570] sm:$0x3]
  %v189 = vld [vmem:[%s0 + $0x578] sm:$0xff]
  %v190 = vld [vmem:[%s0 + $0x580] sm:$0xff]
  %v191 = vld [vmem:[%s0 + $0x588] sm:$0xff]
  %v192 = vld [vmem:[%s0 + $0x590] sm:$0xff]
  %v193 = vld [vmem:[%s0 + $0x598] sm:$0x3]
  %v194 = vld [vmem:[%s1] sm:$0x1]
  %196 = vset.pattern.permute.xlu0 0
  %197 = vperm.xlu0 %196, %v14
  %v198 = vpop.permute.xlu0 %197
  %201 = vset.pattern.permute.xlu0 0
  %202 = vperm.xlu0 %201, %v15
  %v203 = vpop.permute.xlu0 %202
  %206 = vset.pattern.permute.xlu0 0
  %207 = vperm.xlu0 %206, %v16
  %v208 = vpop.permute.xlu0 %207
  %211 = vset.pattern.permute.xlu0 0
  %212 = vperm.xlu0 %211, %v17
  %v213 = vpop.permute.xlu0 %212
  %216 = vset.pattern.permute.xlu0 0
  %217 = vperm.xlu0 %216, %v19
  %v218 = vpop.permute.xlu0 %217
  %221 = vset.pattern.permute.xlu0 0
  %222 = vperm.xlu0 %221, %v20
  %v223 = vpop.permute.xlu0 %222
  %226 = vset.pattern.permute.xlu0 0
  %227 = vperm.xlu0 %226, %v21
  %v228 = vpop.permute.xlu0 %227
  %231 = vset.pattern.permute.xlu0 0
  %232 = vperm.xlu0 %231, %v22
  %v233 = vpop.permute.xlu0 %232
  %236 = vset.pattern.permute.xlu0 0
  %237 = vperm.xlu0 %236, %v24
  %v238 = vpop.permute.xlu0 %237
  %241 = vset.pattern.permute.xlu0 0
  %242 = vperm.xlu0 %241, %v25
  %v243 = vpop.permute.xlu0 %242
  %246 = vset.pattern.permute.xlu0 0
  %247 = vperm.xlu0 %246, %v26
  %v248 = vpop.permute.xlu0 %247
  %251 = vset.pattern.permute.xlu0 0
  %252 = vperm.xlu0 %251, %v27
  %v253 = vpop.permute.xlu0 %252
  %256 = vset.pattern.permute.xlu0 0
  %257 = vperm.xlu0 %256, %v29
  %v258 = vpop.permute.xlu0 %257
  %261 = vset.pattern.permute.xlu0 0
  %262 = vperm.xlu0 %261, %v30
  %v263 = vpop.permute.xlu0 %262
  %266 = vset.pattern.permute.xlu0 0
  %267 = vperm.xlu0 %266, %v31
  %v268 = vpop.permute.xlu0 %267
  %271 = vset.pattern.permute.xlu0 0
  %272 = vperm.xlu0 %271, %v32
  %v273 = vpop.permute.xlu0 %272
  %276 = vset.pattern.permute.xlu0 0
  %277 = vperm.xlu0 %276, %v34
  %v278 = vpop.permute.xlu0 %277
  %281 = vset.pattern.permute.xlu0 0
  %282 = vperm.xlu0 %281, %v35
  %v283 = vpop.permute.xlu0 %282
  %286 = vset.pattern.permute.xlu0 0
  %287 = vperm.xlu0 %286, %v36
  %v288 = vpop.permute.xlu0 %287
  %291 = vset.pattern.permute.xlu0 0
  %292 = vperm.xlu0 %291, %v37
  %v293 = vpop.permute.xlu0 %292
  %296 = vset.pattern.permute.xlu0 0
  %297 = vperm.xlu0 %296, %v39
  %v298 = vpop.permute.xlu0 %297
  %301 = vset.pattern.permute.xlu0 0
  %302 = vperm.xlu0 %301, %v40
  %v303 = vpop.permute.xlu0 %302
  %306 = vset.pattern.permute.xlu0 0
  %307 = vperm.xlu0 %306, %v41
  %v308 = vpop.permute.xlu0 %307
  %311 = vset.pattern.permute.xlu0 0
  %312 = vperm.xlu0 %311, %v42
  %v313 = vpop.permute.xlu0 %312
  %316 = vset.pattern.permute.xlu0 0
  %317 = vperm.xlu0 %316, %v44
  %v318 = vpop.permute.xlu0 %317
  %321 = vset.pattern.permute.xlu0 0
  %322 = vperm.xlu0 %321, %v45
  %v323 = vpop.permute.xlu0 %322
  %326 = vset.pattern.permute.xlu0 0
  %327 = vperm.xlu0 %326, %v46
  %v328 = vpop.permute.xlu0 %327
  %331 = vset.pattern.permute.xlu0 0
  %332 = vperm.xlu0 %331, %v47
  %v333 = vpop.permute.xlu0 %332
  %336 = vset.pattern.permute.xlu0 0
  %337 = vperm.xlu0 %336, %v49
  %v338 = vpop.permute.xlu0 %337
  %341 = vset.pattern.permute.xlu0 0
  %342 = vperm.xlu0 %341, %v50
  %v343 = vpop.permute.xlu0 %342
  %346 = vset.pattern.permute.xlu0 0
  %347 = vperm.xlu0 %346, %v51
  %v348 = vpop.permute.xlu0 %347
  %351 = vset.pattern.permute.xlu0 0
  %352 = vperm.xlu0 %351, %v52
  %v353 = vpop.permute.xlu0 %352
  %356 = vset.pattern.permute.xlu0 0
  %357 = vperm.xlu0 %356, %v54
  %v358 = vpop.permute.xlu0 %357
  %361 = vset.pattern.permute.xlu0 0
  %362 = vperm.xlu0 %361, %v55
  %v363 = vpop.permute.xlu0 %362
  %366 = vset.pattern.permute.xlu0 0
  %367 = vperm.xlu0 %366, %v56
  %v368 = vpop.permute.xlu0 %367
  %371 = vset.pattern.permute.xlu0 0
  %372 = vperm.xlu0 %371, %v57
  %v373 = vpop.permute.xlu0 %372
  %376 = vset.pattern.permute.xlu0 0
  %377 = vperm.xlu0 %376, %v59
  %v378 = vpop.permute.xlu0 %377
  %381 = vset.pattern.permute.xlu0 0
  %382 = vperm.xlu0 %381, %v60
  %v383 = vpop.permute.xlu0 %382
  %386 = vset.pattern.permute.xlu0 0
  %387 = vperm.xlu0 %386, %v61
  %v388 = vpop.permute.xlu0 %387
  %391 = vset.pattern.permute.xlu0 0
  %392 = vperm.xlu0 %391, %v62
  %v393 = vpop.permute.xlu0 %392
  %396 = vset.pattern.permute.xlu0 0
  %397 = vperm.xlu0 %396, %v64
  %v398 = vpop.permute.xlu0 %397
  %401 = vset.pattern.permute.xlu0 0
  %402 = vperm.xlu0 %401, %v65
  %v403 = vpop.permute.xlu0 %402
  %406 = vset.pattern.permute.xlu0 0
  %407 = vperm.xlu0 %406, %v66
  %v408 = vpop.permute.xlu0 %407
  %411 = vset.pattern.permute.xlu0 0
  %412 = vperm.xlu0 %411, %v67
  %v413 = vpop.permute.xlu0 %412
  %416 = vset.pattern.permute.xlu0 0
  %417 = vperm.xlu0 %416, %v69
  %v418 = vpop.permute.xlu0 %417
  %421 = vset.pattern.permute.xlu0 0
  %422 = vperm.xlu0 %421, %v70
  %v423 = vpop.permute.xlu0 %422
  %426 = vset.pattern.permute.xlu0 0
  %427 = vperm.xlu0 %426, %v71
  %v428 = vpop.permute.xlu0 %427
  %431 = vset.pattern.permute.xlu0 0
  %432 = vperm.xlu0 %431, %v72
  %v433 = vpop.permute.xlu0 %432
  %436 = vset.pattern.permute.xlu0 0
  %437 = vperm.xlu0 %436, %v74
  %v438 = vpop.permute.xlu0 %437
  %441 = vset.pattern.permute.xlu0 0
  %442 = vperm.xlu0 %441, %v75
  %v443 = vpop.permute.xlu0 %442
  %446 = vset.pattern.permute.xlu0 0
  %447 = vperm.xlu0 %446, %v76
  %v448 = vpop.permute.xlu0 %447
  %451 = vset.pattern.permute.xlu0 0
  %452 = vperm.xlu0 %451, %v77
  %v453 = vpop.permute.xlu0 %452
  %456 = vset.pattern.permute.xlu0 0
  %457 = vperm.xlu0 %456, %v79
  %v458 = vpop.permute.xlu0 %457
  %461 = vset.pattern.permute.xlu0 0
  %462 = vperm.xlu0 %461, %v80
  %v463 = vpop.permute.xlu0 %462
  %466 = vset.pattern.permute.xlu0 0
  %467 = vperm.xlu0 %466, %v81
  %v468 = vpop.permute.xlu0 %467
  %471 = vset.pattern.permute.xlu0 0
  %472 = vperm.xlu0 %471, %v82
  %v473 = vpop.permute.xlu0 %472
  %476 = vset.pattern.permute.xlu0 0
  %477 = vperm.xlu0 %476, %v84
  %v478 = vpop.permute.xlu0 %477
  %481 = vset.pattern.permute.xlu0 0
  %482 = vperm.xlu0 %481, %v85
  %v483 = vpop.permute.xlu0 %482
  %486 = vset.pattern.permute.xlu0 0
  %487 = vperm.xlu0 %486, %v86
  %v488 = vpop.permute.xlu0 %487
  %491 = vset.pattern.permute.xlu0 0
  %492 = vperm.xlu0 %491, %v87
  %v493 = vpop.permute.xlu0 %492
  %496 = vset.pattern.permute.xlu0 0
  %497 = vperm.xlu0 %496, %v89
  %v498 = vpop.permute.xlu0 %497
  %501 = vset.pattern.permute.xlu0 0
  %502 = vperm.xlu0 %501, %v90
  %v503 = vpop.permute.xlu0 %502
  %506 = vset.pattern.permute.xlu0 0
  %507 = vperm.xlu0 %506, %v91
  %v508 = vpop.permute.xlu0 %507
  %511 = vset.pattern.permute.xlu0 0
  %512 = vperm.xlu0 %511, %v92
  %v513 = vpop.permute.xlu0 %512
  %516 = vset.pattern.permute.xlu0 0
  %517 = vperm.xlu0 %516, %v104
  %v518 = vpop.permute.xlu0 %517
  %521 = vset.pattern.permute.xlu0 0
  %522 = vperm.xlu0 %521, %v105
  %v523 = vpop.permute.xlu0 %522
  %526 = vset.pattern.permute.xlu0 0
  %527 = vperm.xlu0 %526, %v106
  %v528 = vpop.permute.xlu0 %527
  %531 = vset.pattern.permute.xlu0 0
  %532 = vperm.xlu0 %531, %v107
  %v533 = vpop.permute.xlu0 %532
  %536 = vset.pattern.permute.xlu0 0
  %537 = vperm.xlu0 %536, %v109
  %v538 = vpop.permute.xlu0 %537
  %541 = vset.pattern.permute.xlu0 0
  %542 = vperm.xlu0 %541, %v110
  %v543 = vpop.permute.xlu0 %542
  %546 = vset.pattern.permute.xlu0 0
  %547 = vperm.xlu0 %546, %v111
  %v548 = vpop.permute.xlu0 %547
  %551 = vset.pattern.permute.xlu0 0
  %552 = vperm.xlu0 %551, %v112
  %v553 = vpop.permute.xlu0 %552
  %556 = vset.pattern.permute.xlu0 0
  %557 = vperm.xlu0 %556, %v114
  %v558 = vpop.permute.xlu0 %557
  %561 = vset.pattern.permute.xlu0 0
  %562 = vperm.xlu0 %561, %v115
  %v563 = vpop.permute.xlu0 %562
  %566 = vset.pattern.permute.xlu0 0
  %567 = vperm.xlu0 %566, %v116
  %v568 = vpop.permute.xlu0 %567
  %571 = vset.pattern.permute.xlu0 0
  %572 = vperm.xlu0 %571, %v117
  %v573 = vpop.permute.xlu0 %572
  %576 = vset.pattern.permute.xlu0 0
  %577 = vperm.xlu0 %576, %v119
  %v578 = vpop.permute.xlu0 %577
  %581 = vset.pattern.permute.xlu0 0
  %582 = vperm.xlu0 %581, %v120
  %v583 = vpop.permute.xlu0 %582
  %586 = vset.pattern.permute.xlu0 0
  %587 = vperm.xlu0 %586, %v121
  %v588 = vpop.permute.xlu0 %587
  %591 = vset.pattern.permute.xlu0 0
  %592 = vperm.xlu0 %591, %v122
  %v593 = vpop.permute.xlu0 %592
  %596 = vset.pattern.permute.xlu0 0
  %597 = vperm.xlu0 %596, %v124
  %v598 = vpop.permute.xlu0 %597
  %601 = vset.pattern.permute.xlu0 0
  %602 = vperm.xlu0 %601, %v125
  %v603 = vpop.permute.xlu0 %602
  %606 = vset.pattern.permute.xlu0 0
  %607 = vperm.xlu0 %606, %v126
  %v608 = vpop.permute.xlu0 %607
  %611 = vset.pattern.permute.xlu0 0
  %612 = vperm.xlu0 %611, %v127
  %v613 = vpop.permute.xlu0 %612
  %616 = vset.pattern.permute.xlu0 0
  %617 = vperm.xlu0 %616, %v129
  %v618 = vpop.permute.xlu0 %617
  %621 = vset.pattern.permute.xlu0 0
  %622 = vperm.xlu0 %621, %v130
  %v623 = vpop.permute.xlu0 %622
  %626 = vset.pattern.permute.xlu0 0
  %627 = vperm.xlu0 %626, %v131
  %v628 = vpop.permute.xlu0 %627
  %631 = vset.pattern.permute.xlu0 0
  %632 = vperm.xlu0 %631, %v132
  %v633 = vpop.permute.xlu0 %632
  %636 = vset.pattern.permute.xlu0 0
  %637 = vperm.xlu0 %636, %v134
  %v638 = vpop.permute.xlu0 %637
  %641 = vset.pattern.permute.xlu0 0
  %642 = vperm.xlu0 %641, %v135
  %v643 = vpop.permute.xlu0 %642
  %646 = vset.pattern.permute.xlu0 0
  %647 = vperm.xlu0 %646, %v136
  %v648 = vpop.permute.xlu0 %647
  %651 = vset.pattern.permute.xlu0 0
  %652 = vperm.xlu0 %651, %v137
  %v653 = vpop.permute.xlu0 %652
  %656 = vset.pattern.permute.xlu0 0
  %657 = vperm.xlu0 %656, %v139
  %v658 = vpop.permute.xlu0 %657
  %661 = vset.pattern.permute.xlu0 0
  %662 = vperm.xlu0 %661, %v140
  %v663 = vpop.permute.xlu0 %662
  %666 = vset.pattern.permute.xlu0 0
  %667 = vperm.xlu0 %666, %v141
  %v668 = vpop.permute.xlu0 %667
  %671 = vset.pattern.permute.xlu0 0
  %672 = vperm.xlu0 %671, %v142
  %v673 = vpop.permute.xlu0 %672
  %676 = vset.pattern.permute.xlu0 0
  %677 = vperm.xlu0 %676, %v144
  %v678 = vpop.permute.xlu0 %677
  %681 = vset.pattern.permute.xlu0 0
  %682 = vperm.xlu0 %681, %v145
  %v683 = vpop.permute.xlu0 %682
  %686 = vset.pattern.permute.xlu0 0
  %687 = vperm.xlu0 %686, %v146
  %v688 = vpop.permute.xlu0 %687
  %691 = vset.pattern.permute.xlu0 0
  %692 = vperm.xlu0 %691, %v147
  %v693 = vpop.permute.xlu0 %692
  %696 = vset.pattern.permute.xlu0 0
  %697 = vperm.xlu0 %696, %v149
  %v698 = vpop.permute.xlu0 %697
  %701 = vset.pattern.permute.xlu0 0
  %702 = vperm.xlu0 %701, %v150
  %v703 = vpop.permute.xlu0 %702
  %706 = vset.pattern.permute.xlu0 0
  %707 = vperm.xlu0 %706, %v151
  %v708 = vpop.permute.xlu0 %707
  %711 = vset.pattern.permute.xlu0 0
  %712 = vperm.xlu0 %711, %v152
  %v713 = vpop.permute.xlu0 %712
  %716 = vset.pattern.permute.xlu0 0
  %717 = vperm.xlu0 %716, %v154
  %v718 = vpop.permute.xlu0 %717
  %721 = vset.pattern.permute.xlu0 0
  %722 = vperm.xlu0 %721, %v155
  %v723 = vpop.permute.xlu0 %722
  %726 = vset.pattern.permute.xlu0 0
  %727 = vperm.xlu0 %726, %v156
  %v728 = vpop.permute.xlu0 %727
  %731 = vset.pattern.permute.xlu0 0
  %732 = vperm.xlu0 %731, %v157
  %v733 = vpop.permute.xlu0 %732
  %736 = vset.pattern.permute.xlu0 0
  %737 = vperm.xlu0 %736, %v159
  %v738 = vpop.permute.xlu0 %737
  %741 = vset.pattern.permute.xlu0 0
  %742 = vperm.xlu0 %741, %v160
  %v743 = vpop.permute.xlu0 %742
  %746 = vset.pattern.permute.xlu0 0
  %747 = vperm.xlu0 %746, %v161
  %v748 = vpop.permute.xlu0 %747
  %751 = vset.pattern.permute.xlu0 0
  %752 = vperm.xlu0 %751, %v162
  %v753 = vpop.permute.xlu0 %752
  %756 = vset.pattern.permute.xlu0 0
  %757 = vperm.xlu0 %756, %v164
  %v758 = vpop.permute.xlu0 %757
  %761 = vset.pattern.permute.xlu0 0
  %762 = vperm.xlu0 %761, %v165
  %v763 = vpop.permute.xlu0 %762
  %766 = vset.pattern.permute.xlu0 0
  %767 = vperm.xlu0 %766, %v166
  %v768 = vpop.permute.xlu0 %767
  %771 = vset.pattern.permute.xlu0 0
  %772 = vperm.xlu0 %771, %v167
  %v773 = vpop.permute.xlu0 %772
  %776 = vset.pattern.permute.xlu0 0
  %777 = vperm.xlu0 %776, %v169
  %v778 = vpop.permute.xlu0 %777
  %781 = vset.pattern.permute.xlu0 0
  %782 = vperm.xlu0 %781, %v170
  %v783 = vpop.permute.xlu0 %782
  %786 = vset.pattern.permute.xlu0 0
  %787 = vperm.xlu0 %786, %v171
  %v788 = vpop.permute.xlu0 %787
  %791 = vset.pattern.permute.xlu0 0
  %792 = vperm.xlu0 %791, %v172
  %v793 = vpop.permute.xlu0 %792
  %796 = vset.pattern.permute.xlu0 0
  %797 = vperm.xlu0 %796, %v174
  %v798 = vpop.permute.xlu0 %797
  %801 = vset.pattern.permute.xlu0 0
  %802 = vperm.xlu0 %801, %v175
  %v803 = vpop.permute.xlu0 %802
  %806 = vset.pattern.permute.xlu0 0
  %807 = vperm.xlu0 %806, %v176
  %v808 = vpop.permute.xlu0 %807
  %811 = vset.pattern.permute.xlu0 0
  %812 = vperm.xlu0 %811, %v177
  %v813 = vpop.permute.xlu0 %812
  %816 = vset.pattern.permute.xlu0 0
  %817 = vperm.xlu0 %816, %v179
  %v818 = vpop.permute.xlu0 %817
  %821 = vset.pattern.permute.xlu0 0
  %822 = vperm.xlu0 %821, %v180
  %v823 = vpop.permute.xlu0 %822
  %826 = vset.pattern.permute.xlu0 0
  %827 = vperm.xlu0 %826, %v181
  %v828 = vpop.permute.xlu0 %827
  %831 = vset.pattern.permute.xlu0 0
  %832 = vperm.xlu0 %831, %v182
  %v833 = vpop.permute.xlu0 %832
  %v835 = vlaneseq
  %v836 = vshrl.u32 %v835, 7
  %v837 = vsub.s32 0, %v836
  %v838 = vrot.slane %v194, %v837
  %v839 = vmul.f32 %v198, %v838
  %v840 = vmul.f32 %v203, %v838
  %v841 = vmul.f32 %v208, %v838
  %v842 = vmul.f32 %v213, %v838
  %v843 = vmul.f32 %v218, %v838
  %v844 = vmul.f32 %v223, %v838
  %v845 = vmul.f32 %v228, %v838
  %v846 = vmul.f32 %v233, %v838
  %v847 = vmul.f32 %v238, %v838
  %v848 = vmul.f32 %v243, %v838
  %v849 = vmul.f32 %v248, %v838
  %v850 = vmul.f32 %v253, %v838
  %v851 = vmul.f32 %v258, %v838
  %v852 = vmul.f32 %v263, %v838
  %v853 = vmul.f32 %v268, %v838
  %v854 = vmul.f32 %v273, %v838
  %v855 = vmul.f32 %v278, %v838
  %v856 = vmul.f32 %v283, %v838
  %v857 = vmul.f32 %v288, %v838
  %v858 = vmul.f32 %v293, %v838
  %v859 = vmul.f32 %v298, %v838
  %v860 = vmul.f32 %v303, %v838
  %v861 = vmul.f32 %v308, %v838
  %v862 = vmul.f32 %v313, %v838
  %v863 = vmul.f32 %v318, %v838
  %v864 = vmul.f32 %v323, %v838
  %v865 = vmul.f32 %v328, %v838
  %v866 = vmul.f32 %v333, %v838
  %v867 = vmul.f32 %v338, %v838
  %v868 = vmul.f32 %v343, %v838
  %v869 = vmul.f32 %v348, %v838
  %v870 = vmul.f32 %v353, %v838
  %v871 = vmul.f32 %v358, %v838
  %v872 = vmul.f32 %v363, %v838
  %v873 = vmul.f32 %v368, %v838
  %v874 = vmul.f32 %v373, %v838
  %v875 = vmul.f32 %v378, %v838
  %v876 = vmul.f32 %v383, %v838
  %v877 = vmul.f32 %v388, %v838
  %v878 = vmul.f32 %v393, %v838
  %v879 = vmul.f32 %v398, %v838
  %v880 = vmul.f32 %v403, %v838
  %v881 = vmul.f32 %v408, %v838
  %v882 = vmul.f32 %v413, %v838
  %v883 = vmul.f32 %v418, %v838
  %v884 = vmul.f32 %v423, %v838
  %v885 = vmul.f32 %v428, %v838
  %v886 = vmul.f32 %v433, %v838
  %v887 = vmul.f32 %v438, %v838
  %v888 = vmul.f32 %v443, %v838
  %v889 = vmul.f32 %v448, %v838
  %v890 = vmul.f32 %v453, %v838
  %v891 = vmul.f32 %v458, %v838
  %v892 = vmul.f32 %v463, %v838
  %v893 = vmul.f32 %v468, %v838
  %v894 = vmul.f32 %v473, %v838
  %v895 = vmul.f32 %v478, %v838
  %v896 = vmul.f32 %v483, %v838
  %v897 = vmul.f32 %v488, %v838
  %v898 = vmul.f32 %v493, %v838
  %v899 = vmul.f32 %v498, %v838
  %v900 = vmul.f32 %v503, %v838
  %v901 = vmul.f32 %v508, %v838
  %v902 = vmul.f32 %v513, %v838
  %v903 = vmul.f32 %v518, %v838
  %v904 = vmul.f32 %v523, %v838
  %v905 = vmul.f32 %v528, %v838
  %v906 = vmul.f32 %v533, %v838
  %v907 = vmul.f32 %v538, %v838
  %v908 = vmul.f32 %v543, %v838
  %v909 = vmul.f32 %v548, %v838
  %v910 = vmul.f32 %v553, %v838
  %v911 = vmul.f32 %v558, %v838
  %v912 = vmul.f32 %v563, %v838
  %v913 = vmul.f32 %v568, %v838
  %v914 = vmul.f32 %v573, %v838
  %v915 = vmul.f32 %v578, %v838
  %v916 = vmul.f32 %v583, %v838
  %v917 = vmul.f32 %v588, %v838
  %v918 = vmul.f32 %v593, %v838
  %v919 = vmul.f32 %v598, %v838
  %v920 = vmul.f32 %v603, %v838
  %v921 = vmul.f32 %v608, %v838
  %v922 = vmul.f32 %v613, %v838
  %v923 = vmul.f32 %v618, %v838
  %v924 = vmul.f32 %v623, %v838
  %v925 = vmul.f32 %v628, %v838
  %v926 = vmul.f32 %v633, %v838
  %v927 = vmul.f32 %v638, %v838
  %v928 = vmul.f32 %v643, %v838
  %v929 = vmul.f32 %v648, %v838
  %v930 = vmul.f32 %v653, %v838
  %v931 = vmul.f32 %v658, %v838
  %v932 = vmul.f32 %v663, %v838
  %v933 = vmul.f32 %v668, %v838
  %v934 = vmul.f32 %v673, %v838
  %v935 = vmul.f32 %v678, %v838
  %v936 = vmul.f32 %v683, %v838
  %v937 = vmul.f32 %v688, %v838
  %v938 = vmul.f32 %v693, %v838
  %v939 = vmul.f32 %v698, %v838
  %v940 = vmul.f32 %v703, %v838
  %v941 = vmul.f32 %v708, %v838
  %v942 = vmul.f32 %v713, %v838
  %v943 = vmul.f32 %v718, %v838
  %v944 = vmul.f32 %v723, %v838
  %v945 = vmul.f32 %v728, %v838
  %v946 = vmul.f32 %v733, %v838
  %v947 = vmul.f32 %v738, %v838
  %v948 = vmul.f32 %v743, %v838
  %v949 = vmul.f32 %v748, %v838
  %v950 = vmul.f32 %v753, %v838
  %v951 = vmul.f32 %v758, %v838
  %v952 = vmul.f32 %v763, %v838
  %v953 = vmul.f32 %v768, %v838
  %v954 = vmul.f32 %v773, %v838
  %v955 = vmul.f32 %v778, %v838
  %v956 = vmul.f32 %v783, %v838
  %v957 = vmul.f32 %v788, %v838
  %v958 = vmul.f32 %v793, %v838
  %v959 = vmul.f32 %v798, %v838
  %v960 = vmul.f32 %v803, %v838
  %v961 = vmul.f32 %v808, %v838
  %v962 = vmul.f32 %v813, %v838
  %v963 = vmul.f32 %v818, %v838
  %v964 = vmul.f32 %v823, %v838
  %v965 = vmul.f32 %v828, %v838
  %v966 = vmul.f32 %v833, %v838
  %v967 = vadd.f32 %v839, 0.0
  %v968 = vadd.f32 %v840, 0.0
  %v969 = vadd.f32 %v841, 0.0
  %v970 = vadd.f32 %v842, 0.0
  %v971 = vadd.f32 %v843, 0.0
  %v972 = vadd.f32 %v844, 0.0
  %v973 = vadd.f32 %v845, 0.0
  %v974 = vadd.f32 %v846, 0.0
  %v975 = vadd.f32 %v847, 0.0
  %v976 = vadd.f32 %v848, 0.0
  %v977 = vadd.f32 %v849, 0.0
  %v978 = vadd.f32 %v850, 0.0
  %v979 = vadd.f32 %v851, 0.0
  %v980 = vadd.f32 %v852, 0.0
  %v981 = vadd.f32 %v853, 0.0
  %v982 = vadd.f32 %v854, 0.0
  %v983 = vadd.f32 %v855, 0.0
  %v984 = vadd.f32 %v856, 0.0
  %v985 = vadd.f32 %v857, 0.0
  %v986 = vadd.f32 %v858, 0.0
  %v987 = vadd.f32 %v859, 0.0
  %v988 = vadd.f32 %v860, 0.0
  %v989 = vadd.f32 %v861, 0.0
  %v990 = vadd.f32 %v862, 0.0
  %v991 = vadd.f32 %v863, 0.0
  %v992 = vadd.f32 %v864, 0.0
  %v993 = vadd.f32 %v865, 0.0
  %v994 = vadd.f32 %v866, 0.0
  %v995 = vadd.f32 %v867, 0.0
  %v996 = vadd.f32 %v868, 0.0
  %v997 = vadd.f32 %v869, 0.0
  %v998 = vadd.f32 %v870, 0.0
  %v999 = vadd.f32 %v871, 0.0
  %v1000 = vadd.f32 %v872, 0.0
  %v1001 = vadd.f32 %v873, 0.0
  %v1002 = vadd.f32 %v874, 0.0
  %v1003 = vadd.f32 %v875, 0.0
  %v1004 = vadd.f32 %v876, 0.0
  %v1005 = vadd.f32 %v877, 0.0
  %v1006 = vadd.f32 %v878, 0.0
  %v1007 = vadd.f32 %v879, 0.0
  %v1008 = vadd.f32 %v880, 0.0
  %v1009 = vadd.f32 %v881, 0.0
  %v1010 = vadd.f32 %v882, 0.0
  %v1011 = vadd.f32 %v883, 0.0
  %v1012 = vadd.f32 %v884, 0.0
  %v1013 = vadd.f32 %v885, 0.0
  %v1014 = vadd.f32 %v886, 0.0
  %v1015 = vadd.f32 %v887, 0.0
  %v1016 = vadd.f32 %v888, 0.0
  %v1017 = vadd.f32 %v889, 0.0
  %v1018 = vadd.f32 %v890, 0.0
  %v1019 = vadd.f32 %v891, 0.0
  %v1020 = vadd.f32 %v892, 0.0
  %v1021 = vadd.f32 %v893, 0.0
  %v1022 = vadd.f32 %v894, 0.0
  %v1023 = vadd.f32 %v895, 0.0
  %v1024 = vadd.f32 %v896, 0.0
  %v1025 = vadd.f32 %v897, 0.0
  %v1026 = vadd.f32 %v898, 0.0
  %v1027 = vadd.f32 %v899, 0.0
  %v1028 = vadd.f32 %v900, 0.0
  %v1029 = vadd.f32 %v901, 0.0
  %v1030 = vadd.f32 %v902, 0.0
  %v1031 = vadd.f32 %v903, 0.0
  %v1032 = vadd.f32 %v904, 0.0
  %v1033 = vadd.f32 %v905, 0.0
  %v1034 = vadd.f32 %v906, 0.0
  %v1035 = vadd.f32 %v907, 0.0
  %v1036 = vadd.f32 %v908, 0.0
  %v1037 = vadd.f32 %v909, 0.0
  %v1038 = vadd.f32 %v910, 0.0
  %v1039 = vadd.f32 %v911, 0.0
  %v1040 = vadd.f32 %v912, 0.0
  %v1041 = vadd.f32 %v913, 0.0
  %v1042 = vadd.f32 %v914, 0.0
  %v1043 = vadd.f32 %v915, 0.0
  %v1044 = vadd.f32 %v916, 0.0
  %v1045 = vadd.f32 %v917, 0.0
  %v1046 = vadd.f32 %v918, 0.0
  %v1047 = vadd.f32 %v919, 0.0
  %v1048 = vadd.f32 %v920, 0.0
  %v1049 = vadd.f32 %v921, 0.0
  %v1050 = vadd.f32 %v922, 0.0
  %v1051 = vadd.f32 %v923, 0.0
  %v1052 = vadd.f32 %v924, 0.0
  %v1053 = vadd.f32 %v925, 0.0
  %v1054 = vadd.f32 %v926, 0.0
  %v1055 = vadd.f32 %v927, 0.0
  %v1056 = vadd.f32 %v928, 0.0
  %v1057 = vadd.f32 %v929, 0.0
  %v1058 = vadd.f32 %v930, 0.0
  %v1059 = vadd.f32 %v931, 0.0
  %v1060 = vadd.f32 %v932, 0.0
  %v1061 = vadd.f32 %v933, 0.0
  %v1062 = vadd.f32 %v934, 0.0
  %v1063 = vadd.f32 %v935, 0.0
  %v1064 = vadd.f32 %v936, 0.0
  %v1065 = vadd.f32 %v937, 0.0
  %v1066 = vadd.f32 %v938, 0.0
  %v1067 = vadd.f32 %v939, 0.0
  %v1068 = vadd.f32 %v940, 0.0
  %v1069 = vadd.f32 %v941, 0.0
  %v1070 = vadd.f32 %v942, 0.0
  %v1071 = vadd.f32 %v943, 0.0
  %v1072 = vadd.f32 %v944, 0.0
  %v1073 = vadd.f32 %v945, 0.0
  %v1074 = vadd.f32 %v946, 0.0
  %v1075 = vadd.f32 %v947, 0.0
  %v1076 = vadd.f32 %v948, 0.0
  %v1077 = vadd.f32 %v949, 0.0
  %v1078 = vadd.f32 %v950, 0.0
  %v1079 = vadd.f32 %v951, 0.0
  %v1080 = vadd.f32 %v952, 0.0
  %v1081 = vadd.f32 %v953, 0.0
  %v1082 = vadd.f32 %v954, 0.0
  %v1083 = vadd.f32 %v955, 0.0
  %v1084 = vadd.f32 %v956, 0.0
  %v1085 = vadd.f32 %v957, 0.0
  %v1086 = vadd.f32 %v958, 0.0
  %v1087 = vadd.f32 %v959, 0.0
  %v1088 = vadd.f32 %v960, 0.0
  %v1089 = vadd.f32 %v961, 0.0
  %v1090 = vadd.f32 %v962, 0.0
  %v1091 = vadd.f32 %v963, 0.0
  %v1092 = vadd.f32 %v964, 0.0
  %v1093 = vadd.f32 %v965, 0.0
  %v1094 = vadd.f32 %v966, 0.0
  %v1095 = vld [vmem:[%s1 + $0x1] sm:$0x1]
  %1097 = vset.pattern.permute.xlu0 0
  %1098 = vperm.xlu0 %1097, %v18
  %v1099 = vpop.permute.xlu0 %1098
  %1102 = vset.pattern.permute.xlu0 0
  %1103 = vperm.xlu0 %1102, %v23
  %v1104 = vpop.permute.xlu0 %1103
  %1107 = vset.pattern.permute.xlu0 0
  %1108 = vperm.xlu0 %1107, %v28
  %v1109 = vpop.permute.xlu0 %1108
  %1112 = vset.pattern.permute.xlu0 0
  %1113 = vperm.xlu0 %1112, %v33
  %v1114 = vpop.permute.xlu0 %1113
  %1117 = vset.pattern.permute.xlu0 0
  %1118 = vperm.xlu0 %1117, %v38
  %v1119 = vpop.permute.xlu0 %1118
  %1122 = vset.pattern.permute.xlu0 0
  %1123 = vperm.xlu0 %1122, %v43
  %v1124 = vpop.permute.xlu0 %1123
  %1127 = vset.pattern.permute.xlu0 0
  %1128 = vperm.xlu0 %1127, %v48
  %v1129 = vpop.permute.xlu0 %1128
  %1132 = vset.pattern.permute.xlu0 0
  %1133 = vperm.xlu0 %1132, %v53
  %v1134 = vpop.permute.xlu0 %1133
  %1137 = vset.pattern.permute.xlu0 0
  %1138 = vperm.xlu0 %1137, %v58
  %v1139 = vpop.permute.xlu0 %1138
  %1142 = vset.pattern.permute.xlu0 0
  %1143 = vperm.xlu0 %1142, %v63
  %v1144 = vpop.permute.xlu0 %1143
  %1147 = vset.pattern.permute.xlu0 0
  %1148 = vperm.xlu0 %1147, %v68
  %v1149 = vpop.permute.xlu0 %1148
  %1152 = vset.pattern.permute.xlu0 0
  %1153 = vperm.xlu0 %1152, %v73
  %v1154 = vpop.permute.xlu0 %1153
  %1157 = vset.pattern.permute.xlu0 0
  %1158 = vperm.xlu0 %1157, %v78
  %v1159 = vpop.permute.xlu0 %1158
  %1162 = vset.pattern.permute.xlu0 0
  %1163 = vperm.xlu0 %1162, %v83
  %v1164 = vpop.permute.xlu0 %1163
  %1167 = vset.pattern.permute.xlu0 0
  %1168 = vperm.xlu0 %1167, %v88
  %v1169 = vpop.permute.xlu0 %1168
  %1172 = vset.pattern.permute.xlu0 0
  %1173 = vperm.xlu0 %1172, %v93
  %v1174 = vpop.permute.xlu0 %1173
  %1177 = vset.pattern.permute.xlu0 0
  %1178 = vperm.xlu0 %1177, %v108
  %v1179 = vpop.permute.xlu0 %1178
  %1182 = vset.pattern.permute.xlu0 0
  %1183 = vperm.xlu0 %1182, %v113
  %v1184 = vpop.permute.xlu0 %1183
  %1187 = vset.pattern.permute.xlu0 0
  %1188 = vperm.xlu0 %1187, %v118
  %v1189 = vpop.permute.xlu0 %1188
  %1192 = vset.pattern.permute.xlu0 0
  %1193 = vperm.xlu0 %1192, %v123
  %v1194 = vpop.permute.xlu0 %1193
  %1197 = vset.pattern.permute.xlu0 0
  %1198 = vperm.xlu0 %1197, %v128
  %v1199 = vpop.permute.xlu0 %1198
  %1202 = vset.pattern.permute.xlu0 0
  %1203 = vperm.xlu0 %1202, %v133
  %v1204 = vpop.permute.xlu0 %1203
  %1207 = vset.pattern.permute.xlu0 0
  %1208 = vperm.xlu0 %1207, %v138
  %v1209 = vpop.permute.xlu0 %1208
  %1212 = vset.pattern.permute.xlu0 0
  %1213 = vperm.xlu0 %1212, %v143
  %v1214 = vpop.permute.xlu0 %1213
  %1217 = vset.pattern.permute.xlu0 0
  %1218 = vperm.xlu0 %1217, %v148
  %v1219 = vpop.permute.xlu0 %1218
  %1222 = vset.pattern.permute.xlu0 0
  %1223 = vperm.xlu0 %1222, %v153
  %v1224 = vpop.permute.xlu0 %1223
  %1227 = vset.pattern.permute.xlu0 0
  %1228 = vperm.xlu0 %1227, %v158
  %v1229 = vpop.permute.xlu0 %1228
  %1232 = vset.pattern.permute.xlu0 0
  %1233 = vperm.xlu0 %1232, %v163
  %v1234 = vpop.permute.xlu0 %1233
  %1237 = vset.pattern.permute.xlu0 0
  %1238 = vperm.xlu0 %1237, %v168
  %v1239 = vpop.permute.xlu0 %1238
  %1242 = vset.pattern.permute.xlu0 0
  %1243 = vperm.xlu0 %1242, %v173
  %v1244 = vpop.permute.xlu0 %1243
  %1247 = vset.pattern.permute.xlu0 0
  %1248 = vperm.xlu0 %1247, %v178
  %v1249 = vpop.permute.xlu0 %1248
  %1252 = vset.pattern.permute.xlu0 0
  %1253 = vperm.xlu0 %1252, %v183
  %v1254 = vpop.permute.xlu0 %1253
  %v1256 = vlaneseq
  %v1257 = vshrl.u32 %v1256, 7
  %v1258 = vsub.s32 0, %v1257
  %v1259 = vrot.slane %v1095, %v1258
  %v1260 = vmul.f32 %v198, %v1259
  %v1261 = vmul.f32 %v203, %v1259
  %v1262 = vmul.f32 %v208, %v1259
  %v1263 = vmul.f32 %v213, %v1259
  %v1264 = vmul.f32 %v1099, %v1259
  %v1265 = vmul.f32 %v218, %v1259
  %v1266 = vmul.f32 %v223, %v1259
  %v1267 = vmul.f32 %v228, %v1259
  %v1268 = vmul.f32 %v233, %v1259
  %v1269 = vmul.f32 %v1104, %v1259
  %v1270 = vmul.f32 %v238, %v1259
  %v1271 = vmul.f32 %v243, %v1259
  %v1272 = vmul.f32 %v248, %v1259
  %v1273 = vmul.f32 %v253, %v1259
  %v1274 = vmul.f32 %v1109, %v1259
  %v1275 = vmul.f32 %v258, %v1259
  %v1276 = vmul.f32 %v263, %v1259
  %v1277 = vmul.f32 %v268, %v1259
  %v1278 = vmul.f32 %v273, %v1259
  %v1279 = vmul.f32 %v1114, %v1259
  %v1280 = vmul.f32 %v278, %v1259
  %v1281 = vmul.f32 %v283, %v1259
  %v1282 = vmul.f32 %v288, %v1259
  %v1283 = vmul.f32 %v293, %v1259
  %v1284 = vmul.f32 %v1119, %v1259
  %v1285 = vmul.f32 %v298, %v1259
  %v1286 = vmul.f32 %v303, %v1259
  %v1287 = vmul.f32 %v308, %v1259
  %v1288 = vmul.f32 %v313, %v1259
  %v1289 = vmul.f32 %v1124, %v1259
  %v1290 = vmul.f32 %v318, %v1259
  %v1291 = vmul.f32 %v323, %v1259
  %v1292 = vmul.f32 %v328, %v1259
  %v1293 = vmul.f32 %v333, %v1259
  %v1294 = vmul.f32 %v1129, %v1259
  %v1295 = vmul.f32 %v338, %v1259
  %v1296 = vmul.f32 %v343, %v1259
  %v1297 = vmul.f32 %v348, %v1259
  %v1298 = vmul.f32 %v353, %v1259
  %v1299 = vmul.f32 %v1134, %v1259
  %v1300 = vmul.f32 %v358, %v1259
  %v1301 = vmul.f32 %v363, %v1259
  %v1302 = vmul.f32 %v368, %v1259
  %v1303 = vmul.f32 %v373, %v1259
  %v1304 = vmul.f32 %v1139, %v1259
  %v1305 = vmul.f32 %v378, %v1259
  %v1306 = vmul.f32 %v383, %v1259
  %v1307 = vmul.f32 %v388, %v1259
  %v1308 = vmul.f32 %v393, %v1259
  %v1309 = vmul.f32 %v1144, %v1259
  %v1310 = vmul.f32 %v398, %v1259
  %v1311 = vmul.f32 %v403, %v1259
  %v1312 = vmul.f32 %v408, %v1259
  %v1313 = vmul.f32 %v413, %v1259
  %v1314 = vmul.f32 %v1149, %v1259
  %v1315 = vmul.f32 %v418, %v1259
  %v1316 = vmul.f32 %v423, %v1259
  %v1317 = vmul.f32 %v428, %v1259
  %v1318 = vmul.f32 %v433, %v1259
  %v1319 = vmul.f32 %v1154, %v1259
  %v1320 = vmul.f32 %v438, %v1259
  %v1321 = vmul.f32 %v443, %v1259
  %v1322 = vmul.f32 %v448, %v1259
  %v1323 = vmul.f32 %v453, %v1259
  %v1324 = vmul.f32 %v1159, %v1259
  %v1325 = vmul.f32 %v458, %v1259
  %v1326 = vmul.f32 %v463, %v1259
  %v1327 = vmul.f32 %v468, %v1259
  %v1328 = vmul.f32 %v473, %v1259
  %v1329 = vmul.f32 %v1164, %v1259
  %v1330 = vmul.f32 %v478, %v1259
  %v1331 = vmul.f32 %v483, %v1259
  %v1332 = vmul.f32 %v488, %v1259
  %v1333 = vmul.f32 %v493, %v1259
  %v1334 = vmul.f32 %v1169, %v1259
  %v1335 = vmul.f32 %v498, %v1259
  %v1336 = vmul.f32 %v503, %v1259
  %v1337 = vmul.f32 %v508, %v1259
  %v1338 = vmul.f32 %v513, %v1259
  %v1339 = vmul.f32 %v1174, %v1259
  %v1340 = vmul.f32 %v518, %v1259
  %v1341 = vmul.f32 %v523, %v1259
  %v1342 = vmul.f32 %v528, %v1259
  %v1343 = vmul.f32 %v533, %v1259
  %v1344 = vmul.f32 %v1179, %v1259
  %v1345 = vmul.f32 %v538, %v1259
  %v1346 = vmul.f32 %v543, %v1259
  %v1347 = vmul.f32 %v548, %v1259
  %v1348 = vmul.f32 %v553, %v1259
  %v1349 = vmul.f32 %v1184, %v1259
  %v1350 = vmul.f32 %v558, %v1259
  %v1351 = vmul.f32 %v563, %v1259
  %v1352 = vmul.f32 %v568, %v1259
  %v1353 = vmul.f32 %v573, %v1259
  %v1354 = vmul.f32 %v1189, %v1259
  %v1355 = vmul.f32 %v578, %v1259
  %v1356 = vmul.f32 %v583, %v1259
  %v1357 = vmul.f32 %v588, %v1259
  %v1358 = vmul.f32 %v593, %v1259
  %v1359 = vmul.f32 %v1194, %v1259
  %v1360 = vmul.f32 %v598, %v1259
  %v1361 = vmul.f32 %v603, %v1259
  %v1362 = vmul.f32 %v608, %v1259
  %v1363 = vmul.f32 %v613, %v1259
  %v1364 = vmul.f32 %v1199, %v1259
  %v1365 = vmul.f32 %v618, %v1259
  %v1366 = vmul.f32 %v623, %v1259
  %v1367 = vmul.f32 %v628, %v1259
  %v1368 = vmul.f32 %v633, %v1259
  %v1369 = vmul.f32 %v1204, %v1259
  %v1370 = vmul.f32 %v638, %v1259
  %v1371 = vmul.f32 %v643, %v1259
  %v1372 = vmul.f32 %v648, %v1259
  %v1373 = vmul.f32 %v653, %v1259
  %v1374 = vmul.f32 %v1209, %v1259
  %v1375 = vmul.f32 %v658, %v1259
  %v1376 = vmul.f32 %v663, %v1259
  %v1377 = vmul.f32 %v668, %v1259
  %v1378 = vmul.f32 %v673, %v1259
  %v1379 = vmul.f32 %v1214, %v1259
  %v1380 = vmul.f32 %v678, %v1259
  %v1381 = vmul.f32 %v683, %v1259
  %v1382 = vmul.f32 %v688, %v1259
  %v1383 = vmul.f32 %v693, %v1259
  %v1384 = vmul.f32 %v1219, %v1259
  %v1385 = vmul.f32 %v698, %v1259
  %v1386 = vmul.f32 %v703, %v1259
  %v1387 = vmul.f32 %v708, %v1259
  %v1388 = vmul.f32 %v713, %v1259
  %v1389 = vmul.f32 %v1224, %v1259
  %v1390 = vmul.f32 %v718, %v1259
  %v1391 = vmul.f32 %v723, %v1259
  %v1392 = vmul.f32 %v728, %v1259
  %v1393 = vmul.f32 %v733, %v1259
  %v1394 = vmul.f32 %v1229, %v1259
  %v1395 = vmul.f32 %v738, %v1259
  %v1396 = vmul.f32 %v743, %v1259
  %v1397 = vmul.f32 %v748, %v1259
  %v1398 = vmul.f32 %v753, %v1259
  %v1399 = vmul.f32 %v1234, %v1259
  %v1400 = vmul.f32 %v758, %v1259
  %v1401 = vmul.f32 %v763, %v1259
  %v1402 = vmul.f32 %v768, %v1259
  %v1403 = vmul.f32 %v773, %v1259
  %v1404 = vmul.f32 %v1239, %v1259
  %v1405 = vmul.f32 %v778, %v1259
  %v1406 = vmul.f32 %v783, %v1259
  %v1407 = vmul.f32 %v788, %v1259
  %v1408 = vmul.f32 %v793, %v1259
  %v1409 = vmul.f32 %v1244, %v1259
  %v1410 = vmul.f32 %v798, %v1259
  %v1411 = vmul.f32 %v803, %v1259
  %v1412 = vmul.f32 %v808, %v1259
  %v1413 = vmul.f32 %v813, %v1259
  %v1414 = vmul.f32 %v1249, %v1259
  %v1415 = vmul.f32 %v818, %v1259
  %v1416 = vmul.f32 %v823, %v1259
  %v1417 = vmul.f32 %v828, %v1259
  %v1418 = vmul.f32 %v833, %v1259
  %v1419 = vmul.f32 %v1254, %v1259
  %vm1580 = vcmask 1046528
  %v1581 = vrot.slane %v1260, 1
  %v1582 = vrot.slane %v1261, 1
  %v1583 = vsel %vm1580, %v1581, %v1582
  %v1584 = vrot.slane %v1262, 1
  %v1585 = vsel %vm1580, %v1582, %v1584
  %v1586 = vrot.slane %v1263, 1
  %v1587 = vsel %vm1580, %v1584, %v1586
  %v1588 = vrot.slane %v1264, 1
  %v1589 = vsel %vm1580, %v1586, %v1588
  %v1590 = vrot.slane %v1265, 1
  %v1591 = vrot.slane %v1266, 1
  %v1592 = vsel %vm1580, %v1590, %v1591
  %v1593 = vrot.slane %v1267, 1
  %v1594 = vsel %vm1580, %v1591, %v1593
  %v1595 = vrot.slane %v1268, 1
  %v1596 = vsel %vm1580, %v1593, %v1595
  %v1597 = vrot.slane %v1269, 1
  %v1598 = vsel %vm1580, %v1595, %v1597
  %v1599 = vrot.slane %v1270, 1
  %v1600 = vrot.slane %v1271, 1
  %v1601 = vsel %vm1580, %v1599, %v1600
  %v1602 = vrot.slane %v1272, 1
  %v1603 = vsel %vm1580, %v1600, %v1602
  %v1604 = vrot.slane %v1273, 1
  %v1605 = vsel %vm1580, %v1602, %v1604
  %v1606 = vrot.slane %v1274, 1
  %v1607 = vsel %vm1580, %v1604, %v1606
  %v1608 = vrot.slane %v1275, 1
  %v1609 = vrot.slane %v1276, 1
  %v1610 = vsel %vm1580, %v1608, %v1609
  %v1611 = vrot.slane %v1277, 1
  %v1612 = vsel %vm1580, %v1609, %v1611
  %v1613 = vrot.slane %v1278, 1
  %v1614 = vsel %vm1580, %v1611, %v1613
  %v1615 = vrot.slane %v1279, 1
  %v1616 = vsel %vm1580, %v1613, %v1615
  %v1617 = vrot.slane %v1280, 1
  %v1618 = vrot.slane %v1281, 1
  %v1619 = vsel %vm1580, %v1617, %v1618
  %v1620 = vrot.slane %v1282, 1
  %v1621 = vsel %vm1580, %v1618, %v1620
  %v1622 = vrot.slane %v1283, 1
  %v1623 = vsel %vm1580, %v1620, %v1622
  %v1624 = vrot.slane %v1284, 1
  %v1625 = vsel %vm1580, %v1622, %v1624
  %v1626 = vrot.slane %v1285, 1
  %v1627 = vrot.slane %v1286, 1
  %v1628 = vsel %vm1580, %v1626, %v1627
  %v1629 = vrot.slane %v1287, 1
  %v1630 = vsel %vm1580, %v1627, %v1629
  %v1631 = vrot.slane %v1288, 1
  %v1632 = vsel %vm1580, %v1629, %v1631
  %v1633 = vrot.slane %v1289, 1
  %v1634 = vsel %vm1580, %v1631, %v1633
  %v1635 = vrot.slane %v1290, 1
  %v1636 = vrot.slane %v1291, 1
  %v1637 = vsel %vm1580, %v1635, %v1636
  %v1638 = vrot.slane %v1292, 1
  %v1639 = vsel %vm1580, %v1636, %v1638
  %v1640 = vrot.slane %v1293, 1
  %v1641 = vsel %vm1580, %v1638, %v1640
  %v1642 = vrot.slane %v1294, 1
  %v1643 = vsel %vm1580, %v1640, %v1642
  %v1644 = vrot.slane %v1295, 1
  %v1645 = vrot.slane %v1296, 1
  %v1646 = vsel %vm1580, %v1644, %v1645
  %v1647 = vrot.slane %v1297, 1
  %v1648 = vsel %vm1580, %v1645, %v1647
  %v1649 = vrot.slane %v1298, 1
  %v1650 = vsel %vm1580, %v1647, %v1649
  %v1651 = vrot.slane %v1299, 1
  %v1652 = vsel %vm1580, %v1649, %v1651
  %v1653 = vrot.slane %v1300, 1
  %v1654 = vrot.slane %v1301, 1
  %v1655 = vsel %vm1580, %v1653, %v1654
  %v1656 = vrot.slane %v1302, 1
  %v1657 = vsel %vm1580, %v1654, %v1656
  %v1658 = vrot.slane %v1303, 1
  %v1659 = vsel %vm1580, %v1656, %v1658
  %v1660 = vrot.slane %v1304, 1
  %v1661 = vsel %vm1580, %v1658, %v1660
  %v1662 = vrot.slane %v1305, 1
  %v1663 = vrot.slane %v1306, 1
  %v1664 = vsel %vm1580, %v1662, %v1663
  %v1665 = vrot.slane %v1307, 1
  %v1666 = vsel %vm1580, %v1663, %v1665
  %v1667 = vrot.slane %v1308, 1
  %v1668 = vsel %vm1580, %v1665, %v1667
  %v1669 = vrot.slane %v1309, 1
  %v1670 = vsel %vm1580, %v1667, %v1669
  %v1671 = vrot.slane %v1310, 1
  %v1672 = vrot.slane %v1311, 1
  %v1673 = vsel %vm1580, %v1671, %v1672
  %v1674 = vrot.slane %v1312, 1
  %v1675 = vsel %vm1580, %v1672, %v1674
  %v1676 = vrot.slane %v1313, 1
  %v1677 = vsel %vm1580, %v1674, %v1676
  %v1678 = vrot.slane %v1314, 1
  %v1679 = vsel %vm1580, %v1676, %v1678
  %v1680 = vrot.slane %v1315, 1
  %v1681 = vrot.slane %v1316, 1
  %v1682 = vsel %vm1580, %v1680, %v1681
  %v1683 = vrot.slane %v1317, 1
  %v1684 = vsel %vm1580, %v1681, %v1683
  %v1685 = vrot.slane %v1318, 1
  %v1686 = vsel %vm1580, %v1683, %v1685
  %v1687 = vrot.slane %v1319, 1
  %v1688 = vsel %vm1580, %v1685, %v1687
  %v1689 = vrot.slane %v1320, 1
  %v1690 = vrot.slane %v1321, 1
  %v1691 = vsel %vm1580, %v1689, %v1690
  %v1692 = vrot.slane %v1322, 1
  %v1693 = vsel %vm1580, %v1690, %v1692
  %v1694 = vrot.slane %v1323, 1
  %v1695 = vsel %vm1580, %v1692, %v1694
  %v1696 = vrot.slane %v1324, 1
  %v1697 = vsel %vm1580, %v1694, %v1696
  %v1698 = vrot.slane %v1325, 1
  %v1699 = vrot.slane %v1326, 1
  %v1700 = vsel %vm1580, %v1698, %v1699
  %v1701 = vrot.slane %v1327, 1
  %v1702 = vsel %vm1580, %v1699, %v1701
  %v1703 = vrot.slane %v1328, 1
  %v1704 = vsel %vm1580, %v1701, %v1703
  %v1705 = vrot.slane %v1329, 1
  %v1706 = vsel %vm1580, %v1703, %v1705
  %v1707 = vrot.slane %v1330, 1
  %v1708 = vrot.slane %v1331, 1
  %v1709 = vsel %vm1580, %v1707, %v1708
  %v1710 = vrot.slane %v1332, 1
  %v1711 = vsel %vm1580, %v1708, %v1710
  %v1712 = vrot.slane %v1333, 1
  %v1713 = vsel %vm1580, %v1710, %v1712
  %v1714 = vrot.slane %v1334, 1
  %v1715 = vsel %vm1580, %v1712, %v1714
  %v1716 = vrot.slane %v1335, 1
  %v1717 = vrot.slane %v1336, 1
  %v1718 = vsel %vm1580, %v1716, %v1717
  %v1719 = vrot.slane %v1337, 1
  %v1720 = vsel %vm1580, %v1717, %v1719
  %v1721 = vrot.slane %v1338, 1
  %v1722 = vsel %vm1580, %v1719, %v1721
  %v1723 = vrot.slane %v1339, 1
  %v1724 = vsel %vm1580, %v1721, %v1723
  %v1725 = vrot.slane %v1340, 1
  %v1726 = vrot.slane %v1341, 1
  %v1727 = vsel %vm1580, %v1725, %v1726
  %v1728 = vrot.slane %v1342, 1
  %v1729 = vsel %vm1580, %v1726, %v1728
  %v1730 = vrot.slane %v1343, 1
  %v1731 = vsel %vm1580, %v1728, %v1730
  %v1732 = vrot.slane %v1344, 1
  %v1733 = vsel %vm1580, %v1730, %v1732
  %v1734 = vrot.slane %v1345, 1
  %v1735 = vrot.slane %v1346, 1
  %v1736 = vsel %vm1580, %v1734, %v1735
  %v1737 = vrot.slane %v1347, 1
  %v1738 = vsel %vm1580, %v1735, %v1737
  %v1739 = vrot.slane %v1348, 1
  %v1740 = vsel %vm1580, %v1737, %v1739
  %v1741 = vrot.slane %v1349, 1
  %v1742 = vsel %vm1580, %v1739, %v1741
  %v1743 = vrot.slane %v1350, 1
  %v1744 = vrot.slane %v1351, 1
  %v1745 = vsel %vm1580, %v1743, %v1744
  %v1746 = vrot.slane %v1352, 1
  %v1747 = vsel %vm1580, %v1744, %v1746
  %v1748 = vrot.slane %v1353, 1
  %v1749 = vsel %vm1580, %v1746, %v1748
  %v1750 = vrot.slane %v1354, 1
  %v1751 = vsel %vm1580, %v1748, %v1750
  %v1752 = vrot.slane %v1355, 1
  %v1753 = vrot.slane %v1356, 1
  %v1754 = vsel %vm1580, %v1752, %v1753
  %v1755 = vrot.slane %v1357, 1
  %v1756 = vsel %vm1580, %v1753, %v1755
  %v1757 = vrot.slane %v1358, 1
  %v1758 = vsel %vm1580, %v1755, %v1757
  %v1759 = vrot.slane %v1359, 1
  %v1760 = vsel %vm1580, %v1757, %v1759
  %v1761 = vrot.slane %v1360, 1
  %v1762 = vrot.slane %v1361, 1
  %v1763 = vsel %vm1580, %v1761, %v1762
  %v1764 = vrot.slane %v1362, 1
  %v1765 = vsel %vm1580, %v1762, %v1764
  %v1766 = vrot.slane %v1363, 1
  %v1767 = vsel %vm1580, %v1764, %v1766
  %v1768 = vrot.slane %v1364, 1
  %v1769 = vsel %vm1580, %v1766, %v1768
  %v1770 = vrot.slane %v1365, 1
  %v1771 = vrot.slane %v1366, 1
  %v1772 = vsel %vm1580, %v1770, %v1771
  %v1773 = vrot.slane %v1367, 1
  %v1774 = vsel %vm1580, %v1771, %v1773
  %v1775 = vrot.slane %v1368, 1
  %v1776 = vsel %vm1580, %v1773, %v1775
  %v1777 = vrot.slane %v1369, 1
  %v1778 = vsel %vm1580, %v1775, %v1777
  %v1779 = vrot.slane %v1370, 1
  %v1780 = vrot.slane %v1371, 1
  %v1781 = vsel %vm1580, %v1779, %v1780
  %v1782 = vrot.slane %v1372, 1
  %v1783 = vsel %vm1580, %v1780, %v1782
  %v1784 = vrot.slane %v1373, 1
  %v1785 = vsel %vm1580, %v1782, %v1784
  %v1786 = vrot.slane %v1374, 1
  %v1787 = vsel %vm1580, %v1784, %v1786
  %v1788 = vrot.slane %v1375, 1
  %v1789 = vrot.slane %v1376, 1
  %v1790 = vsel %vm1580, %v1788, %v1789
  %v1791 = vrot.slane %v1377, 1
  %v1792 = vsel %vm1580, %v1789, %v1791
  %v1793 = vrot.slane %v1378, 1
  %v1794 = vsel %vm1580, %v1791, %v1793
  %v1795 = vrot.slane %v1379, 1
  %v1796 = vsel %vm1580, %v1793, %v1795
  %v1797 = vrot.slane %v1380, 1
  %v1798 = vrot.slane %v1381, 1
  %v1799 = vsel %vm1580, %v1797, %v1798
  %v1800 = vrot.slane %v1382, 1
  %v1801 = vsel %vm1580, %v1798, %v1800
  %v1802 = vrot.slane %v1383, 1
  %v1803 = vsel %vm1580, %v1800, %v1802
  %v1804 = vrot.slane %v1384, 1
  %v1805 = vsel %vm1580, %v1802, %v1804
  %v1806 = vrot.slane %v1385, 1
  %v1807 = vrot.slane %v1386, 1
  %v1808 = vsel %vm1580, %v1806, %v1807
  %v1809 = vrot.slane %v1387, 1
  %v1810 = vsel %vm1580, %v1807, %v1809
  %v1811 = vrot.slane %v1388, 1
  %v1812 = vsel %vm1580, %v1809, %v1811
  %v1813 = vrot.slane %v1389, 1
  %v1814 = vsel %vm1580, %v1811, %v1813
  %v1815 = vrot.slane %v1390, 1
  %v1816 = vrot.slane %v1391, 1
  %v1817 = vsel %vm1580, %v1815, %v1816
  %v1818 = vrot.slane %v1392, 1
  %v1819 = vsel %vm1580, %v1816, %v1818
  %v1820 = vrot.slane %v1393, 1
  %v1821 = vsel %vm1580, %v1818, %v1820
  %v1822 = vrot.slane %v1394, 1
  %v1823 = vsel %vm1580, %v1820, %v1822
  %v1824 = vrot.slane %v1395, 1
  %v1825 = vrot.slane %v1396, 1
  %v1826 = vsel %vm1580, %v1824, %v1825
  %v1827 = vrot.slane %v1397, 1
  %v1828 = vsel %vm1580, %v1825, %v1827
  %v1829 = vrot.slane %v1398, 1
  %v1830 = vsel %vm1580, %v1827, %v1829
  %v1831 = vrot.slane %v1399, 1
  %v1832 = vsel %vm1580, %v1829, %v1831
  %v1833 = vrot.slane %v1400, 1
  %v1834 = vrot.slane %v1401, 1
  %v1835 = vsel %vm1580, %v1833, %v1834
  %v1836 = vrot.slane %v1402, 1
  %v1837 = vsel %vm1580, %v1834, %v1836
  %v1838 = vrot.slane %v1403, 1
  %v1839 = vsel %vm1580, %v1836, %v1838
  %v1840 = vrot.slane %v1404, 1
  %v1841 = vsel %vm1580, %v1838, %v1840
  %v1842 = vrot.slane %v1405, 1
  %v1843 = vrot.slane %v1406, 1
  %v1844 = vsel %vm1580, %v1842, %v1843
  %v1845 = vrot.slane %v1407, 1
  %v1846 = vsel %vm1580, %v1843, %v1845
  %v1847 = vrot.slane %v1408, 1
  %v1848 = vsel %vm1580, %v1845, %v1847
  %v1849 = vrot.slane %v1409, 1
  %v1850 = vsel %vm1580, %v1847, %v1849
  %v1851 = vrot.slane %v1410, 1
  %v1852 = vrot.slane %v1411, 1
  %v1853 = vsel %vm1580, %v1851, %v1852
  %v1854 = vrot.slane %v1412, 1
  %v1855 = vsel %vm1580, %v1852, %v1854
  %v1856 = vrot.slane %v1413, 1
  %v1857 = vsel %vm1580, %v1854, %v1856
  %v1858 = vrot.slane %v1414, 1
  %v1859 = vsel %vm1580, %v1856, %v1858
  %v1860 = vrot.slane %v1415, 1
  %v1861 = vrot.slane %v1416, 1
  %v1862 = vsel %vm1580, %v1860, %v1861
  %v1863 = vrot.slane %v1417, 1
  %v1864 = vsel %vm1580, %v1861, %v1863
  %v1865 = vrot.slane %v1418, 1
  %v1866 = vsel %vm1580, %v1863, %v1865
  %v1867 = vrot.slane %v1419, 1
  %v1868 = vsel %vm1580, %v1865, %v1867
  %v1997 = vadd.f32 %v967, %v1583
  %v1998 = vadd.f32 %v968, %v1585
  %v1999 = vadd.f32 %v969, %v1587
  %v2000 = vadd.f32 %v970, %v1589
  %v2001 = vadd.f32 %v971, %v1592
  %v2002 = vadd.f32 %v972, %v1594
  %v2003 = vadd.f32 %v973, %v1596
  %v2004 = vadd.f32 %v974, %v1598
  %v2005 = vadd.f32 %v975, %v1601
  %v2006 = vadd.f32 %v976, %v1603
  %v2007 = vadd.f32 %v977, %v1605
  %v2008 = vadd.f32 %v978, %v1607
  %v2009 = vadd.f32 %v979, %v1610
  %v2010 = vadd.f32 %v980, %v1612
  %v2011 = vadd.f32 %v981, %v1614
  %v2012 = vadd.f32 %v982, %v1616
  %v2013 = vadd.f32 %v983, %v1619
  %v2014 = vadd.f32 %v984, %v1621
  %v2015 = vadd.f32 %v985, %v1623
  %v2016 = vadd.f32 %v986, %v1625
  %v2017 = vadd.f32 %v987, %v1628
  %v2018 = vadd.f32 %v988, %v1630
  %v2019 = vadd.f32 %v989, %v1632
  %v2020 = vadd.f32 %v990, %v1634
  %v2021 = vadd.f32 %v991, %v1637
  %v2022 = vadd.f32 %v992, %v1639
  %v2023 = vadd.f32 %v993, %v1641
  %v2024 = vadd.f32 %v994, %v1643
  %v2025 = vadd.f32 %v995, %v1646
  %v2026 = vadd.f32 %v996, %v1648
  %v2027 = vadd.f32 %v997, %v1650
  %v2028 = vadd.f32 %v998, %v1652
  %v2029 = vadd.f32 %v999, %v1655
  %v2030 = vadd.f32 %v1000, %v1657
  %v2031 = vadd.f32 %v1001, %v1659
  %v2032 = vadd.f32 %v1002, %v1661
  %v2033 = vadd.f32 %v1003, %v1664
  %v2034 = vadd.f32 %v1004, %v1666
  %v2035 = vadd.f32 %v1005, %v1668
  %v2036 = vadd.f32 %v1006, %v1670
  %v2037 = vadd.f32 %v1007, %v1673
  %v2038 = vadd.f32 %v1008, %v1675
  %v2039 = vadd.f32 %v1009, %v1677
  %v2040 = vadd.f32 %v1010, %v1679
  %v2041 = vadd.f32 %v1011, %v1682
  %v2042 = vadd.f32 %v1012, %v1684
  %v2043 = vadd.f32 %v1013, %v1686
  %v2044 = vadd.f32 %v1014, %v1688
  %v2045 = vadd.f32 %v1015, %v1691
  %v2046 = vadd.f32 %v1016, %v1693
  %v2047 = vadd.f32 %v1017, %v1695
  %v2048 = vadd.f32 %v1018, %v1697
  %v2049 = vadd.f32 %v1019, %v1700
  %v2050 = vadd.f32 %v1020, %v1702
  %v2051 = vadd.f32 %v1021, %v1704
  %v2052 = vadd.f32 %v1022, %v1706
  %v2053 = vadd.f32 %v1023, %v1709
  %v2054 = vadd.f32 %v1024, %v1711
  %v2055 = vadd.f32 %v1025, %v1713
  %v2056 = vadd.f32 %v1026, %v1715
  %v2057 = vadd.f32 %v1027, %v1718
  %v2058 = vadd.f32 %v1028, %v1720
  %v2059 = vadd.f32 %v1029, %v1722
  %v2060 = vadd.f32 %v1030, %v1724
  %v2061 = vadd.f32 %v1031, %v1727
  %v2062 = vadd.f32 %v1032, %v1729
  %v2063 = vadd.f32 %v1033, %v1731
  %v2064 = vadd.f32 %v1034, %v1733
  %v2065 = vadd.f32 %v1035, %v1736
  %v2066 = vadd.f32 %v1036, %v1738
  %v2067 = vadd.f32 %v1037, %v1740
  %v2068 = vadd.f32 %v1038, %v1742
  %v2069 = vadd.f32 %v1039, %v1745
  %v2070 = vadd.f32 %v1040, %v1747
  %v2071 = vadd.f32 %v1041, %v1749
  %v2072 = vadd.f32 %v1042, %v1751
  %v2073 = vadd.f32 %v1043, %v1754
  %v2074 = vadd.f32 %v1044, %v1756
  %v2075 = vadd.f32 %v1045, %v1758
  %v2076 = vadd.f32 %v1046, %v1760
  %v2077 = vadd.f32 %v1047, %v1763
  %v2078 = vadd.f32 %v1048, %v1765
  %v2079 = vadd.f32 %v1049, %v1767
  %v2080 = vadd.f32 %v1050, %v1769
  %v2081 = vadd.f32 %v1051, %v1772
  %v2082 = vadd.f32 %v1052, %v1774
  %v2083 = vadd.f32 %v1053, %v1776
  %v2084 = vadd.f32 %v1054, %v1778
  %v2085 = vadd.f32 %v1055, %v1781
  %v2086 = vadd.f32 %v1056, %v1783
  %v2087 = vadd.f32 %v1057, %v1785
  %v2088 = vadd.f32 %v1058, %v1787
  %v2089 = vadd.f32 %v1059, %v1790
  %v2090 = vadd.f32 %v1060, %v1792
  %v2091 = vadd.f32 %v1061, %v1794
  %v2092 = vadd.f32 %v1062, %v1796
  %v2093 = vadd.f32 %v1063, %v1799
  %v2094 = vadd.f32 %v1064, %v1801
  %v2095 = vadd.f32 %v1065, %v1803
  %v2096 = vadd.f32 %v1066, %v1805
  %v2097 = vadd.f32 %v1067, %v1808
  %v2098 = vadd.f32 %v1068, %v1810
  %v2099 = vadd.f32 %v1069, %v1812
  %v2100 = vadd.f32 %v1070, %v1814
  %v2101 = vadd.f32 %v1071, %v1817
  %v2102 = vadd.f32 %v1072, %v1819
  %v2103 = vadd.f32 %v1073, %v1821
  %v2104 = vadd.f32 %v1074, %v1823
  %v2105 = vadd.f32 %v1075, %v1826
  %v2106 = vadd.f32 %v1076, %v1828
  %v2107 = vadd.f32 %v1077, %v1830
  %v2108 = vadd.f32 %v1078, %v1832
  %v2109 = vadd.f32 %v1079, %v1835
  %v2110 = vadd.f32 %v1080, %v1837
  %v2111 = vadd.f32 %v1081, %v1839
  %v2112 = vadd.f32 %v1082, %v1841
  %v2113 = vadd.f32 %v1083, %v1844
  %v2114 = vadd.f32 %v1084, %v1846
  %v2115 = vadd.f32 %v1085, %v1848
  %v2116 = vadd.f32 %v1086, %v1850
  %v2117 = vadd.f32 %v1087, %v1853
  %v2118 = vadd.f32 %v1088, %v1855
  %v2119 = vadd.f32 %v1089, %v1857
  %v2120 = vadd.f32 %v1090, %v1859
  %v2121 = vadd.f32 %v1091, %v1862
  %v2122 = vadd.f32 %v1092, %v1864
  %v2123 = vadd.f32 %v1093, %v1866
  %v2124 = vadd.f32 %v1094, %v1868
  %v2125 = vld [vmem:[%s1 + $0x2] sm:$0x1]
  %v2126 = vlaneseq
  %v2127 = vshrl.u32 %v2126, 7
  %v2128 = vsub.s32 0, %v2127
  %v2129 = vrot.slane %v2125, %v2128
  %v2130 = vmul.f32 %v198, %v2129
  %v2131 = vmul.f32 %v203, %v2129
  %v2132 = vmul.f32 %v208, %v2129
  %v2133 = vmul.f32 %v213, %v2129
  %v2134 = vmul.f32 %v1099, %v2129
  %v2135 = vmul.f32 %v218, %v2129
  %v2136 = vmul.f32 %v223, %v2129
  %v2137 = vmul.f32 %v228, %v2129
  %v2138 = vmul.f32 %v233, %v2129
  %v2139 = vmul.f32 %v1104, %v2129
  %v2140 = vmul.f32 %v238, %v2129
  %v2141 = vmul.f32 %v243, %v2129
  %v2142 = vmul.f32 %v248, %v2129
  %v2143 = vmul.f32 %v253, %v2129
  %v2144 = vmul.f32 %v1109, %v2129
  %v2145 = vmul.f32 %v258, %v2129
  %v2146 = vmul.f32 %v263, %v2129
  %v2147 = vmul.f32 %v268, %v2129
  %v2148 = vmul.f32 %v273, %v2129
  %v2149 = vmul.f32 %v1114, %v2129
  %v2150 = vmul.f32 %v278, %v2129
  %v2151 = vmul.f32 %v283, %v2129
  %v2152 = vmul.f32 %v288, %v2129
  %v2153 = vmul.f32 %v293, %v2129
  %v2154 = vmul.f32 %v1119, %v2129
  %v2155 = vmul.f32 %v298, %v2129
  %v2156 = vmul.f32 %v303, %v2129
  %v2157 = vmul.f32 %v308, %v2129
  %v2158 = vmul.f32 %v313, %v2129
  %v2159 = vmul.f32 %v1124, %v2129
  %v2160 = vmul.f32 %v318, %v2129
  %v2161 = vmul.f32 %v323, %v2129
  %v2162 = vmul.f32 %v328, %v2129
  %v2163 = vmul.f32 %v333, %v2129
  %v2164 = vmul.f32 %v1129, %v2129
  %v2165 = vmul.f32 %v338, %v2129
  %v2166 = vmul.f32 %v343, %v2129
  %v2167 = vmul.f32 %v348, %v2129
  %v2168 = vmul.f32 %v353, %v2129
  %v2169 = vmul.f32 %v1134, %v2129
  %v2170 = vmul.f32 %v358, %v2129
  %v2171 = vmul.f32 %v363, %v2129
  %v2172 = vmul.f32 %v368, %v2129
  %v2173 = vmul.f32 %v373, %v2129
  %v2174 = vmul.f32 %v1139, %v2129
  %v2175 = vmul.f32 %v378, %v2129
  %v2176 = vmul.f32 %v383, %v2129
  %v2177 = vmul.f32 %v388, %v2129
  %v2178 = vmul.f32 %v393, %v2129
  %v2179 = vmul.f32 %v1144, %v2129
  %v2180 = vmul.f32 %v398, %v2129
  %v2181 = vmul.f32 %v403, %v2129
  %v2182 = vmul.f32 %v408, %v2129
  %v2183 = vmul.f32 %v413, %v2129
  %v2184 = vmul.f32 %v1149, %v2129
  %v2185 = vmul.f32 %v418, %v2129
  %v2186 = vmul.f32 %v423, %v2129
  %v2187 = vmul.f32 %v428, %v2129
  %v2188 = vmul.f32 %v433, %v2129
  %v2189 = vmul.f32 %v1154, %v2129
  %v2190 = vmul.f32 %v438, %v2129
  %v2191 = vmul.f32 %v443, %v2129
  %v2192 = vmul.f32 %v448, %v2129
  %v2193 = vmul.f32 %v453, %v2129
  %v2194 = vmul.f32 %v1159, %v2129
  %v2195 = vmul.f32 %v458, %v2129
  %v2196 = vmul.f32 %v463, %v2129
  %v2197 = vmul.f32 %v468, %v2129
  %v2198 = vmul.f32 %v473, %v2129
  %v2199 = vmul.f32 %v1164, %v2129
  %v2200 = vmul.f32 %v478, %v2129
  %v2201 = vmul.f32 %v483, %v2129
  %v2202 = vmul.f32 %v488, %v2129
  %v2203 = vmul.f32 %v493, %v2129
  %v2204 = vmul.f32 %v1169, %v2129
  %v2205 = vmul.f32 %v498, %v2129
  %v2206 = vmul.f32 %v503, %v2129
  %v2207 = vmul.f32 %v508, %v2129
  %v2208 = vmul.f32 %v513, %v2129
  %v2209 = vmul.f32 %v1174, %v2129
  %v2210 = vmul.f32 %v518, %v2129
  %v2211 = vmul.f32 %v523, %v2129
  %v2212 = vmul.f32 %v528, %v2129
  %v2213 = vmul.f32 %v533, %v2129
  %v2214 = vmul.f32 %v1179, %v2129
  %v2215 = vmul.f32 %v538, %v2129
  %v2216 = vmul.f32 %v543, %v2129
  %v2217 = vmul.f32 %v548, %v2129
  %v2218 = vmul.f32 %v553, %v2129
  %v2219 = vmul.f32 %v1184, %v2129
  %v2220 = vmul.f32 %v558, %v2129
  %v2221 = vmul.f32 %v563, %v2129
  %v2222 = vmul.f32 %v568, %v2129
  %v2223 = vmul.f32 %v573, %v2129
  %v2224 = vmul.f32 %v1189, %v2129
  %v2225 = vmul.f32 %v578, %v2129
  %v2226 = vmul.f32 %v583, %v2129
  %v2227 = vmul.f32 %v588, %v2129
  %v2228 = vmul.f32 %v593, %v2129
  %v2229 = vmul.f32 %v1194, %v2129
  %v2230 = vmul.f32 %v598, %v2129
  %v2231 = vmul.f32 %v603, %v2129
  %v2232 = vmul.f32 %v608, %v2129
  %v2233 = vmul.f32 %v613, %v2129
  %v2234 = vmul.f32 %v1199, %v2129
  %v2235 = vmul.f32 %v618, %v2129
  %v2236 = vmul.f32 %v623, %v2129
  %v2237 = vmul.f32 %v628, %v2129
  %v2238 = vmul.f32 %v633, %v2129
  %v2239 = vmul.f32 %v1204, %v2129
  %v2240 = vmul.f32 %v638, %v2129
  %v2241 = vmul.f32 %v643, %v2129
  %v2242 = vmul.f32 %v648, %v2129
  %v2243 = vmul.f32 %v653, %v2129
  %v2244 = vmul.f32 %v1209, %v2129
  %v2245 = vmul.f32 %v658, %v2129
  %v2246 = vmul.f32 %v663, %v2129
  %v2247 = vmul.f32 %v668, %v2129
  %v2248 = vmul.f32 %v673, %v2129
  %v2249 = vmul.f32 %v1214, %v2129
  %v2250 = vmul.f32 %v678, %v2129
  %v2251 = vmul.f32 %v683, %v2129
  %v2252 = vmul.f32 %v688, %v2129
  %v2253 = vmul.f32 %v693, %v2129
  %v2254 = vmul.f32 %v1219, %v2129
  %v2255 = vmul.f32 %v698, %v2129
  %v2256 = vmul.f32 %v703, %v2129
  %v2257 = vmul.f32 %v708, %v2129
  %v2258 = vmul.f32 %v713, %v2129
  %v2259 = vmul.f32 %v1224, %v2129
  %v2260 = vmul.f32 %v718, %v2129
  %v2261 = vmul.f32 %v723, %v2129
  %v2262 = vmul.f32 %v728, %v2129
  %v2263 = vmul.f32 %v733, %v2129
  %v2264 = vmul.f32 %v1229, %v2129
  %v2265 = vmul.f32 %v738, %v2129
  %v2266 = vmul.f32 %v743, %v2129
  %v2267 = vmul.f32 %v748, %v2129
  %v2268 = vmul.f32 %v753, %v2129
  %v2269 = vmul.f32 %v1234, %v2129
  %v2270 = vmul.f32 %v758, %v2129
  %v2271 = vmul.f32 %v763, %v2129
  %v2272 = vmul.f32 %v768, %v2129
  %v2273 = vmul.f32 %v773, %v2129
  %v2274 = vmul.f32 %v1239, %v2129
  %v2275 = vmul.f32 %v778, %v2129
  %v2276 = vmul.f32 %v783, %v2129
  %v2277 = vmul.f32 %v788, %v2129
  %v2278 = vmul.f32 %v793, %v2129
  %v2279 = vmul.f32 %v1244, %v2129
  %v2280 = vmul.f32 %v798, %v2129
  %v2281 = vmul.f32 %v803, %v2129
  %v2282 = vmul.f32 %v808, %v2129
  %v2283 = vmul.f32 %v813, %v2129
  %v2284 = vmul.f32 %v1249, %v2129
  %v2285 = vmul.f32 %v818, %v2129
  %v2286 = vmul.f32 %v823, %v2129
  %v2287 = vmul.f32 %v828, %v2129
  %v2288 = vmul.f32 %v833, %v2129
  %v2289 = vmul.f32 %v1254, %v2129
  %vm2450 = vcmask 1045504
  %v2451 = vrot.slane %v2130, 2
  %v2452 = vrot.slane %v2131, 2
  %v2453 = vsel %vm2450, %v2451, %v2452
  %v2454 = vrot.slane %v2132, 2
  %v2455 = vsel %vm2450, %v2452, %v2454
  %v2456 = vrot.slane %v2133, 2
  %v2457 = vsel %vm2450, %v2454, %v2456
  %v2458 = vrot.slane %v2134, 2
  %v2459 = vsel %vm2450, %v2456, %v2458
  %v2460 = vrot.slane %v2135, 2
  %v2461 = vrot.slane %v2136, 2
  %v2462 = vsel %vm2450, %v2460, %v2461
  %v2463 = vrot.slane %v2137, 2
  %v2464 = vsel %vm2450, %v2461, %v2463
  %v2465 = vrot.slane %v2138, 2
  %v2466 = vsel %vm2450, %v2463, %v2465
  %v2467 = vrot.slane %v2139, 2
  %v2468 = vsel %vm2450, %v2465, %v2467
  %v2469 = vrot.slane %v2140, 2
  %v2470 = vrot.slane %v2141, 2
  %v2471 = vsel %vm2450, %v2469, %v2470
  %v2472 = vrot.slane %v2142, 2
  %v2473 = vsel %vm2450, %v2470, %v2472
  %v2474 = vrot.slane %v2143, 2
  %v2475 = vsel %vm2450, %v2472, %v2474
  %v2476 = vrot.slane %v2144, 2
  %v2477 = vsel %vm2450, %v2474, %v2476
  %v2478 = vrot.slane %v2145, 2
  %v2479 = vrot.slane %v2146, 2
  %v2480 = vsel %vm2450, %v2478, %v2479
  %v2481 = vrot.slane %v2147, 2
  %v2482 = vsel %vm2450, %v2479, %v2481
  %v2483 = vrot.slane %v2148, 2
  %v2484 = vsel %vm2450, %v2481, %v2483
  %v2485 = vrot.slane %v2149, 2
  %v2486 = vsel %vm2450, %v2483, %v2485
  %v2487 = vrot.slane %v2150, 2
  %v2488 = vrot.slane %v2151, 2
  %v2489 = vsel %vm2450, %v2487, %v2488
  %v2490 = vrot.slane %v2152, 2
  %v2491 = vsel %vm2450, %v2488, %v2490
  %v2492 = vrot.slane %v2153, 2
  %v2493 = vsel %vm2450, %v2490, %v2492
  %v2494 = vrot.slane %v2154, 2
  %v2495 = vsel %vm2450, %v2492, %v2494
  %v2496 = vrot.slane %v2155, 2
  %v2497 = vrot.slane %v2156, 2
  %v2498 = vsel %vm2450, %v2496, %v2497
  %v2499 = vrot.slane %v2157, 2
  %v2500 = vsel %vm2450, %v2497, %v2499
  %v2501 = vrot.slane %v2158, 2
  %v2502 = vsel %vm2450, %v2499, %v2501
  %v2503 = vrot.slane %v2159, 2
  %v2504 = vsel %vm2450, %v2501, %v2503
  %v2505 = vrot.slane %v2160, 2
  %v2506 = vrot.slane %v2161, 2
  %v2507 = vsel %vm2450, %v2505, %v2506
  %v2508 = vrot.slane %v2162, 2
  %v2509 = vsel %vm2450, %v2506, %v2508
  %v2510 = vrot.slane %v2163, 2
  %v2511 = vsel %vm2450, %v2508, %v2510
  %v2512 = vrot.slane %v2164, 2
  %v2513 = vsel %vm2450, %v2510, %v2512
  %v2514 = vrot.slane %v2165, 2
  %v2515 = vrot.slane %v2166, 2
  %v2516 = vsel %vm2450, %v2514, %v2515
  %v2517 = vrot.slane %v2167, 2
  %v2518 = vsel %vm2450, %v2515, %v2517
  %v2519 = vrot.slane %v2168, 2
  %v2520 = vsel %vm2450, %v2517, %v2519
  %v2521 = vrot.slane %v2169, 2
  %v2522 = vsel %vm2450, %v2519, %v2521
  %v2523 = vrot.slane %v2170, 2
  %v2524 = vrot.slane %v2171, 2
  %v2525 = vsel %vm2450, %v2523, %v2524
  %v2526 = vrot.slane %v2172, 2
  %v2527 = vsel %vm2450, %v2524, %v2526
  %v2528 = vrot.slane %v2173, 2
  %v2529 = vsel %vm2450, %v2526, %v2528
  %v2530 = vrot.slane %v2174, 2
  %v2531 = vsel %vm2450, %v2528, %v2530
  %v2532 = vrot.slane %v2175, 2
  %v2533 = vrot.slane %v2176, 2
  %v2534 = vsel %vm2450, %v2532, %v2533
  %v2535 = vrot.slane %v2177, 2
  %v2536 = vsel %vm2450, %v2533, %v2535
  %v2537 = vrot.slane %v2178, 2
  %v2538 = vsel %vm2450, %v2535, %v2537
  %v2539 = vrot.slane %v2179, 2
  %v2540 = vsel %vm2450, %v2537, %v2539
  %v2541 = vrot.slane %v2180, 2
  %v2542 = vrot.slane %v2181, 2
  %v2543 = vsel %vm2450, %v2541, %v2542
  %v2544 = vrot.slane %v2182, 2
  %v2545 = vsel %vm2450, %v2542, %v2544
  %v2546 = vrot.slane %v2183, 2
  %v2547 = vsel %vm2450, %v2544, %v2546
  %v2548 = vrot.slane %v2184, 2
  %v2549 = vsel %vm2450, %v2546, %v2548
  %v2550 = vrot.slane %v2185, 2
  %v2551 = vrot.slane %v2186, 2
  %v2552 = vsel %vm2450, %v2550, %v2551
  %v2553 = vrot.slane %v2187, 2
  %v2554 = vsel %vm2450, %v2551, %v2553
  %v2555 = vrot.slane %v2188, 2
  %v2556 = vsel %vm2450, %v2553, %v2555
  %v2557 = vrot.slane %v2189, 2
  %v2558 = vsel %vm2450, %v2555, %v2557
  %v2559 = vrot.slane %v2190, 2
  %v2560 = vrot.slane %v2191, 2
  %v2561 = vsel %vm2450, %v2559, %v2560
  %v2562 = vrot.slane %v2192, 2
  %v2563 = vsel %vm2450, %v2560, %v2562
  %v2564 = vrot.slane %v2193, 2
  %v2565 = vsel %vm2450, %v2562, %v2564
  %v2566 = vrot.slane %v2194, 2
  %v2567 = vsel %vm2450, %v2564, %v2566
  %v2568 = vrot.slane %v2195, 2
  %v2569 = vrot.slane %v2196, 2
  %v2570 = vsel %vm2450, %v2568, %v2569
  %v2571 = vrot.slane %v2197, 2
  %v2572 = vsel %vm2450, %v2569, %v2571
  %v2573 = vrot.slane %v2198, 2
  %v2574 = vsel %vm2450, %v2571, %v2573
  %v2575 = vrot.slane %v2199, 2
  %v2576 = vsel %vm2450, %v2573, %v2575
  %v2577 = vrot.slane %v2200, 2
  %v2578 = vrot.slane %v2201, 2
  %v2579 = vsel %vm2450, %v2577, %v2578
  %v2580 = vrot.slane %v2202, 2
  %v2581 = vsel %vm2450, %v2578, %v2580
  %v2582 = vrot.slane %v2203, 2
  %v2583 = vsel %vm2450, %v2580, %v2582
  %v2584 = vrot.slane %v2204, 2
  %v2585 = vsel %vm2450, %v2582, %v2584
  %v2586 = vrot.slane %v2205, 2
  %v2587 = vrot.slane %v2206, 2
  %v2588 = vsel %vm2450, %v2586, %v2587
  %v2589 = vrot.slane %v2207, 2
  %v2590 = vsel %vm2450, %v2587, %v2589
  %v2591 = vrot.slane %v2208, 2
  %v2592 = vsel %vm2450, %v2589, %v2591
  %v2593 = vrot.slane %v2209, 2
  %v2594 = vsel %vm2450, %v2591, %v2593
  %v2595 = vrot.slane %v2210, 2
  %v2596 = vrot.slane %v2211, 2
  %v2597 = vsel %vm2450, %v2595, %v2596
  %v2598 = vrot.slane %v2212, 2
  %v2599 = vsel %vm2450, %v2596, %v2598
  %v2600 = vrot.slane %v2213, 2
  %v2601 = vsel %vm2450, %v2598, %v2600
  %v2602 = vrot.slane %v2214, 2
  %v2603 = vsel %vm2450, %v2600, %v2602
  %v2604 = vrot.slane %v2215, 2
  %v2605 = vrot.slane %v2216, 2
  %v2606 = vsel %vm2450, %v2604, %v2605
  %v2607 = vrot.slane %v2217, 2
  %v2608 = vsel %vm2450, %v2605, %v2607
  %v2609 = vrot.slane %v2218, 2
  %v2610 = vsel %vm2450, %v2607, %v2609
  %v2611 = vrot.slane %v2219, 2
  %v2612 = vsel %vm2450, %v2609, %v2611
  %v2613 = vrot.slane %v2220, 2
  %v2614 = vrot.slane %v2221, 2
  %v2615 = vsel %vm2450, %v2613, %v2614
  %v2616 = vrot.slane %v2222, 2
  %v2617 = vsel %vm2450, %v2614, %v2616
  %v2618 = vrot.slane %v2223, 2
  %v2619 = vsel %vm2450, %v2616, %v2618
  %v2620 = vrot.slane %v2224, 2
  %v2621 = vsel %vm2450, %v2618, %v2620
  %v2622 = vrot.slane %v2225, 2
  %v2623 = vrot.slane %v2226, 2
  %v2624 = vsel %vm2450, %v2622, %v2623
  %v2625 = vrot.slane %v2227, 2
  %v2626 = vsel %vm2450, %v2623, %v2625
  %v2627 = vrot.slane %v2228, 2
  %v2628 = vsel %vm2450, %v2625, %v2627
  %v2629 = vrot.slane %v2229, 2
  %v2630 = vsel %vm2450, %v2627, %v2629
  %v2631 = vrot.slane %v2230, 2
  %v2632 = vrot.slane %v2231, 2
  %v2633 = vsel %vm2450, %v2631, %v2632
  %v2634 = vrot.slane %v2232, 2
  %v2635 = vsel %vm2450, %v2632, %v2634
  %v2636 = vrot.slane %v2233, 2
  %v2637 = vsel %vm2450, %v2634, %v2636
  %v2638 = vrot.slane %v2234, 2
  %v2639 = vsel %vm2450, %v2636, %v2638
  %v2640 = vrot.slane %v2235, 2
  %v2641 = vrot.slane %v2236, 2
  %v2642 = vsel %vm2450, %v2640, %v2641
  %v2643 = vrot.slane %v2237, 2
  %v2644 = vsel %vm2450, %v2641, %v2643
  %v2645 = vrot.slane %v2238, 2
  %v2646 = vsel %vm2450, %v2643, %v2645
  %v2647 = vrot.slane %v2239, 2
  %v2648 = vsel %vm2450, %v2645, %v2647
  %v2649 = vrot.slane %v2240, 2
  %v2650 = vrot.slane %v2241, 2
  %v2651 = vsel %vm2450, %v2649, %v2650
  %v2652 = vrot.slane %v2242, 2
  %v2653 = vsel %vm2450, %v2650, %v2652
  %v2654 = vrot.slane %v2243, 2
  %v2655 = vsel %vm2450, %v2652, %v2654
  %v2656 = vrot.slane %v2244, 2
  %v2657 = vsel %vm2450, %v2654, %v2656
  %v2658 = vrot.slane %v2245, 2
  %v2659 = vrot.slane %v2246, 2
  %v2660 = vsel %vm2450, %v2658, %v2659
  %v2661 = vrot.slane %v2247, 2
  %v2662 = vsel %vm2450, %v2659, %v2661
  %v2663 = vrot.slane %v2248, 2
  %v2664 = vsel %vm2450, %v2661, %v2663
  %v2665 = vrot.slane %v2249, 2
  %v2666 = vsel %vm2450, %v2663, %v2665
  %v2667 = vrot.slane %v2250, 2
  %v2668 = vrot.slane %v2251, 2
  %v2669 = vsel %vm2450, %v2667, %v2668
  %v2670 = vrot.slane %v2252, 2
  %v2671 = vsel %vm2450, %v2668, %v2670
  %v2672 = vrot.slane %v2253, 2
  %v2673 = vsel %vm2450, %v2670, %v2672
  %v2674 = vrot.slane %v2254, 2
  %v2675 = vsel %vm2450, %v2672, %v2674
  %v2676 = vrot.slane %v2255, 2
  %v2677 = vrot.slane %v2256, 2
  %v2678 = vsel %vm2450, %v2676, %v2677
  %v2679 = vrot.slane %v2257, 2
  %v2680 = vsel %vm2450, %v2677, %v2679
  %v2681 = vrot.slane %v2258, 2
  %v2682 = vsel %vm2450, %v2679, %v2681
  %v2683 = vrot.slane %v2259, 2
  %v2684 = vsel %vm2450, %v2681, %v2683
  %v2685 = vrot.slane %v2260, 2
  %v2686 = vrot.slane %v2261, 2
  %v2687 = vsel %vm2450, %v2685, %v2686
  %v2688 = vrot.slane %v2262, 2
  %v2689 = vsel %vm2450, %v2686, %v2688
  %v2690 = vrot.slane %v2263, 2
  %v2691 = vsel %vm2450, %v2688, %v2690
  %v2692 = vrot.slane %v2264, 2
  %v2693 = vsel %vm2450, %v2690, %v2692
  %v2694 = vrot.slane %v2265, 2
  %v2695 = vrot.slane %v2266, 2
  %v2696 = vsel %vm2450, %v2694, %v2695
  %v2697 = vrot.slane %v2267, 2
  %v2698 = vsel %vm2450, %v2695, %v2697
  %v2699 = vrot.slane %v2268, 2
  %v2700 = vsel %vm2450, %v2697, %v2699
  %v2701 = vrot.slane %v2269, 2
  %v2702 = vsel %vm2450, %v2699, %v2701
  %v2703 = vrot.slane %v2270, 2
  %v2704 = vrot.slane %v2271, 2
  %v2705 = vsel %vm2450, %v2703, %v2704
  %v2706 = vrot.slane %v2272, 2
  %v2707 = vsel %vm2450, %v2704, %v2706
  %v2708 = vrot.slane %v2273, 2
  %v2709 = vsel %vm2450, %v2706, %v2708
  %v2710 = vrot.slane %v2274, 2
  %v2711 = vsel %vm2450, %v2708, %v2710
  %v2712 = vrot.slane %v2275, 2
  %v2713 = vrot.slane %v2276, 2
  %v2714 = vsel %vm2450, %v2712, %v2713
  %v2715 = vrot.slane %v2277, 2
  %v2716 = vsel %vm2450, %v2713, %v2715
  %v2717 = vrot.slane %v2278, 2
  %v2718 = vsel %vm2450, %v2715, %v2717
  %v2719 = vrot.slane %v2279, 2
  %v2720 = vsel %vm2450, %v2717, %v2719
  %v2721 = vrot.slane %v2280, 2
  %v2722 = vrot.slane %v2281, 2
  %v2723 = vsel %vm2450, %v2721, %v2722
  %v2724 = vrot.slane %v2282, 2
  %v2725 = vsel %vm2450, %v2722, %v2724
  %v2726 = vrot.slane %v2283, 2
  %v2727 = vsel %vm2450, %v2724, %v2726
  %v2728 = vrot.slane %v2284, 2
  %v2729 = vsel %vm2450, %v2726, %v2728
  %v2730 = vrot.slane %v2285, 2
  %v2731 = vrot.slane %v2286, 2
  %v2732 = vsel %vm2450, %v2730, %v2731
  %v2733 = vrot.slane %v2287, 2
  %v2734 = vsel %vm2450, %v2731, %v2733
  %v2735 = vrot.slane %v2288, 2
  %v2736 = vsel %vm2450, %v2733, %v2735
  %v2737 = vrot.slane %v2289, 2
  %v2738 = vsel %vm2450, %v2735, %v2737
  %v2867 = vadd.f32 %v1997, %v2453
  %v2868 = vadd.f32 %v1998, %v2455
  %v2869 = vadd.f32 %v1999, %v2457
  %v2870 = vadd.f32 %v2000, %v2459
  %v2871 = vadd.f32 %v2001, %v2462
  %v2872 = vadd.f32 %v2002, %v2464
  %v2873 = vadd.f32 %v2003, %v2466
  %v2874 = vadd.f32 %v2004, %v2468
  %v2875 = vadd.f32 %v2005, %v2471
  %v2876 = vadd.f32 %v2006, %v2473
  %v2877 = vadd.f32 %v2007, %v2475
  %v2878 = vadd.f32 %v2008, %v2477
  %v2879 = vadd.f32 %v2009, %v2480
  %v2880 = vadd.f32 %v2010, %v2482
  %v2881 = vadd.f32 %v2011, %v2484
  %v2882 = vadd.f32 %v2012, %v2486
  %v2883 = vadd.f32 %v2013, %v2489
  %v2884 = vadd.f32 %v2014, %v2491
  %v2885 = vadd.f32 %v2015, %v2493
  %v2886 = vadd.f32 %v2016, %v2495
  %v2887 = vadd.f32 %v2017, %v2498
  %v2888 = vadd.f32 %v2018, %v2500
  %v2889 = vadd.f32 %v2019, %v2502
  %v2890 = vadd.f32 %v2020, %v2504
  %v2891 = vadd.f32 %v2021, %v2507
  %v2892 = vadd.f32 %v2022, %v2509
  %v2893 = vadd.f32 %v2023, %v2511
  %v2894 = vadd.f32 %v2024, %v2513
  %v2895 = vadd.f32 %v2025, %v2516
  %v2896 = vadd.f32 %v2026, %v2518
  %v2897 = vadd.f32 %v2027, %v2520
  %v2898 = vadd.f32 %v2028, %v2522
  %v2899 = vadd.f32 %v2029, %v2525
  %v2900 = vadd.f32 %v2030, %v2527
  %v2901 = vadd.f32 %v2031, %v2529
  %v2902 = vadd.f32 %v2032, %v2531
  %v2903 = vadd.f32 %v2033, %v2534
  %v2904 = vadd.f32 %v2034, %v2536
  %v2905 = vadd.f32 %v2035, %v2538
  %v2906 = vadd.f32 %v2036, %v2540
  %v2907 = vadd.f32 %v2037, %v2543
  %v2908 = vadd.f32 %v2038, %v2545
  %v2909 = vadd.f32 %v2039, %v2547
  %v2910 = vadd.f32 %v2040, %v2549
  %v2911 = vadd.f32 %v2041, %v2552
  %v2912 = vadd.f32 %v2042, %v2554
  %v2913 = vadd.f32 %v2043, %v2556
  %v2914 = vadd.f32 %v2044, %v2558
  %v2915 = vadd.f32 %v2045, %v2561
  %v2916 = vadd.f32 %v2046, %v2563
  %v2917 = vadd.f32 %v2047, %v2565
  %v2918 = vadd.f32 %v2048, %v2567
  %v2919 = vadd.f32 %v2049, %v2570
  %v2920 = vadd.f32 %v2050, %v2572
  %v2921 = vadd.f32 %v2051, %v2574
  %v2922 = vadd.f32 %v2052, %v2576
  %v2923 = vadd.f32 %v2053, %v2579
  %v2924 = vadd.f32 %v2054, %v2581
  %v2925 = vadd.f32 %v2055, %v2583
  %v2926 = vadd.f32 %v2056, %v2585
  %v2927 = vadd.f32 %v2057, %v2588
  %v2928 = vadd.f32 %v2058, %v2590
  %v2929 = vadd.f32 %v2059, %v2592
  %v2930 = vadd.f32 %v2060, %v2594
  %v2931 = vadd.f32 %v2061, %v2597
  %v2932 = vadd.f32 %v2062, %v2599
  %v2933 = vadd.f32 %v2063, %v2601
  %v2934 = vadd.f32 %v2064, %v2603
  %v2935 = vadd.f32 %v2065, %v2606
  %v2936 = vadd.f32 %v2066, %v2608
  %v2937 = vadd.f32 %v2067, %v2610
  %v2938 = vadd.f32 %v2068, %v2612
  %v2939 = vadd.f32 %v2069, %v2615
  %v2940 = vadd.f32 %v2070, %v2617
  %v2941 = vadd.f32 %v2071, %v2619
  %v2942 = vadd.f32 %v2072, %v2621
  %v2943 = vadd.f32 %v2073, %v2624
  %v2944 = vadd.f32 %v2074, %v2626
  %v2945 = vadd.f32 %v2075, %v2628
  %v2946 = vadd.f32 %v2076, %v2630
  %v2947 = vadd.f32 %v2077, %v2633
  %v2948 = vadd.f32 %v2078, %v2635
  %v2949 = vadd.f32 %v2079, %v2637
  %v2950 = vadd.f32 %v2080, %v2639
  %v2951 = vadd.f32 %v2081, %v2642
  %v2952 = vadd.f32 %v2082, %v2644
  %v2953 = vadd.f32 %v2083, %v2646
  %v2954 = vadd.f32 %v2084, %v2648
  %v2955 = vadd.f32 %v2085, %v2651
  %v2956 = vadd.f32 %v2086, %v2653
  %v2957 = vadd.f32 %v2087, %v2655
  %v2958 = vadd.f32 %v2088, %v2657
  %v2959 = vadd.f32 %v2089, %v2660
  %v2960 = vadd.f32 %v2090, %v2662
  %v2961 = vadd.f32 %v2091, %v2664
  %v2962 = vadd.f32 %v2092, %v2666
  %v2963 = vadd.f32 %v2093, %v2669
  %v2964 = vadd.f32 %v2094, %v2671
  %v2965 = vadd.f32 %v2095, %v2673
  %v2966 = vadd.f32 %v2096, %v2675
  %v2967 = vadd.f32 %v2097, %v2678
  %v2968 = vadd.f32 %v2098, %v2680
  %v2969 = vadd.f32 %v2099, %v2682
  %v2970 = vadd.f32 %v2100, %v2684
  %v2971 = vadd.f32 %v2101, %v2687
  %v2972 = vadd.f32 %v2102, %v2689
  %v2973 = vadd.f32 %v2103, %v2691
  %v2974 = vadd.f32 %v2104, %v2693
  %v2975 = vadd.f32 %v2105, %v2696
  %v2976 = vadd.f32 %v2106, %v2698
  %v2977 = vadd.f32 %v2107, %v2700
  %v2978 = vadd.f32 %v2108, %v2702
  %v2979 = vadd.f32 %v2109, %v2705
  %v2980 = vadd.f32 %v2110, %v2707
  %v2981 = vadd.f32 %v2111, %v2709
  %v2982 = vadd.f32 %v2112, %v2711
  %v2983 = vadd.f32 %v2113, %v2714
  %v2984 = vadd.f32 %v2114, %v2716
  %v2985 = vadd.f32 %v2115, %v2718
  %v2986 = vadd.f32 %v2116, %v2720
  %v2987 = vadd.f32 %v2117, %v2723
  %v2988 = vadd.f32 %v2118, %v2725
  %v2989 = vadd.f32 %v2119, %v2727
  %v2990 = vadd.f32 %v2120, %v2729
  %v2991 = vadd.f32 %v2121, %v2732
  %v2992 = vadd.f32 %v2122, %v2734
  %v2993 = vadd.f32 %v2123, %v2736
  %v2994 = vadd.f32 %v2124, %v2738
  %v2995 = vld [vmem:[%s1 + $0x3] sm:$0x1]
  %2997 = vset.pattern.permute.xlu0 0
  %2998 = vperm.xlu0 %2997, %v94
  %v2999 = vpop.permute.xlu0 %2998
  %3002 = vset.pattern.permute.xlu0 0
  %3003 = vperm.xlu0 %3002, %v95
  %v3004 = vpop.permute.xlu0 %3003
  %3007 = vset.pattern.permute.xlu0 0
  %3008 = vperm.xlu0 %3007, %v96
  %v3009 = vpop.permute.xlu0 %3008
  %3012 = vset.pattern.permute.xlu0 0
  %3013 = vperm.xlu0 %3012, %v97
  %v3014 = vpop.permute.xlu0 %3013
  %3017 = vset.pattern.permute.xlu0 0
  %3018 = vperm.xlu0 %3017, %v184
  %v3019 = vpop.permute.xlu0 %3018
  %3022 = vset.pattern.permute.xlu0 0
  %3023 = vperm.xlu0 %3022, %v185
  %v3024 = vpop.permute.xlu0 %3023
  %3027 = vset.pattern.permute.xlu0 0
  %3028 = vperm.xlu0 %3027, %v186
  %v3029 = vpop.permute.xlu0 %3028
  %3032 = vset.pattern.permute.xlu0 0
  %3033 = vperm.xlu0 %3032, %v187
  %v3034 = vpop.permute.xlu0 %3033
  %v3036 = vlaneseq
  %v3037 = vshrl.u32 %v3036, 7
  %v3038 = vsub.s32 0, %v3037
  %v3039 = vrot.slane %v2995, %v3038
  %v3040 = vmul.f32 %v218, %v3039
  %v3041 = vmul.f32 %v223, %v3039
  %v3042 = vmul.f32 %v228, %v3039
  %v3043 = vmul.f32 %v233, %v3039
  %v3044 = vmul.f32 %v238, %v3039
  %v3045 = vmul.f32 %v243, %v3039
  %v3046 = vmul.f32 %v248, %v3039
  %v3047 = vmul.f32 %v253, %v3039
  %v3048 = vmul.f32 %v258, %v3039
  %v3049 = vmul.f32 %v263, %v3039
  %v3050 = vmul.f32 %v268, %v3039
  %v3051 = vmul.f32 %v273, %v3039
  %v3052 = vmul.f32 %v278, %v3039
  %v3053 = vmul.f32 %v283, %v3039
  %v3054 = vmul.f32 %v288, %v3039
  %v3055 = vmul.f32 %v293, %v3039
  %v3056 = vmul.f32 %v298, %v3039
  %v3057 = vmul.f32 %v303, %v3039
  %v3058 = vmul.f32 %v308, %v3039
  %v3059 = vmul.f32 %v313, %v3039
  %v3060 = vmul.f32 %v318, %v3039
  %v3061 = vmul.f32 %v323, %v3039
  %v3062 = vmul.f32 %v328, %v3039
  %v3063 = vmul.f32 %v333, %v3039
  %v3064 = vmul.f32 %v338, %v3039
  %v3065 = vmul.f32 %v343, %v3039
  %v3066 = vmul.f32 %v348, %v3039
  %v3067 = vmul.f32 %v353, %v3039
  %v3068 = vmul.f32 %v358, %v3039
  %v3069 = vmul.f32 %v363, %v3039
  %v3070 = vmul.f32 %v368, %v3039
  %v3071 = vmul.f32 %v373, %v3039
  %v3072 = vmul.f32 %v378, %v3039
  %v3073 = vmul.f32 %v383, %v3039
  %v3074 = vmul.f32 %v388, %v3039
  %v3075 = vmul.f32 %v393, %v3039
  %v3076 = vmul.f32 %v398, %v3039
  %v3077 = vmul.f32 %v403, %v3039
  %v3078 = vmul.f32 %v408, %v3039
  %v3079 = vmul.f32 %v413, %v3039
  %v3080 = vmul.f32 %v418, %v3039
  %v3081 = vmul.f32 %v423, %v3039
  %v3082 = vmul.f32 %v428, %v3039
  %v3083 = vmul.f32 %v433, %v3039
  %v3084 = vmul.f32 %v438, %v3039
  %v3085 = vmul.f32 %v443, %v3039
  %v3086 = vmul.f32 %v448, %v3039
  %v3087 = vmul.f32 %v453, %v3039
  %v3088 = vmul.f32 %v458, %v3039
  %v3089 = vmul.f32 %v463, %v3039
  %v3090 = vmul.f32 %v468, %v3039
  %v3091 = vmul.f32 %v473, %v3039
  %v3092 = vmul.f32 %v478, %v3039
  %v3093 = vmul.f32 %v483, %v3039
  %v3094 = vmul.f32 %v488, %v3039
  %v3095 = vmul.f32 %v493, %v3039
  %v3096 = vmul.f32 %v498, %v3039
  %v3097 = vmul.f32 %v503, %v3039
  %v3098 = vmul.f32 %v508, %v3039
  %v3099 = vmul.f32 %v513, %v3039
  %v3100 = vmul.f32 %v2999, %v3039
  %v3101 = vmul.f32 %v3004, %v3039
  %v3102 = vmul.f32 %v3009, %v3039
  %v3103 = vmul.f32 %v3014, %v3039
  %v3104 = vmul.f32 %v538, %v3039
  %v3105 = vmul.f32 %v543, %v3039
  %v3106 = vmul.f32 %v548, %v3039
  %v3107 = vmul.f32 %v553, %v3039
  %v3108 = vmul.f32 %v558, %v3039
  %v3109 = vmul.f32 %v563, %v3039
  %v3110 = vmul.f32 %v568, %v3039
  %v3111 = vmul.f32 %v573, %v3039
  %v3112 = vmul.f32 %v578, %v3039
  %v3113 = vmul.f32 %v583, %v3039
  %v3114 = vmul.f32 %v588, %v3039
  %v3115 = vmul.f32 %v593, %v3039
  %v3116 = vmul.f32 %v598, %v3039
  %v3117 = vmul.f32 %v603, %v3039
  %v3118 = vmul.f32 %v608, %v3039
  %v3119 = vmul.f32 %v613, %v3039
  %v3120 = vmul.f32 %v618, %v3039
  %v3121 = vmul.f32 %v623, %v3039
  %v3122 = vmul.f32 %v628, %v3039
  %v3123 = vmul.f32 %v633, %v3039
  %v3124 = vmul.f32 %v638, %v3039
  %v3125 = vmul.f32 %v643, %v3039
  %v3126 = vmul.f32 %v648, %v3039
  %v3127 = vmul.f32 %v653, %v3039
  %v3128 = vmul.f32 %v658, %v3039
  %v3129 = vmul.f32 %v663, %v3039
  %v3130 = vmul.f32 %v668, %v3039
  %v3131 = vmul.f32 %v673, %v3039
  %v3132 = vmul.f32 %v678, %v3039
  %v3133 = vmul.f32 %v683, %v3039
  %v3134 = vmul.f32 %v688, %v3039
  %v3135 = vmul.f32 %v693, %v3039
  %v3136 = vmul.f32 %v698, %v3039
  %v3137 = vmul.f32 %v703, %v3039
  %v3138 = vmul.f32 %v708, %v3039
  %v3139 = vmul.f32 %v713, %v3039
  %v3140 = vmul.f32 %v718, %v3039
  %v3141 = vmul.f32 %v723, %v3039
  %v3142 = vmul.f32 %v728, %v3039
  %v3143 = vmul.f32 %v733, %v3039
  %v3144 = vmul.f32 %v738, %v3039
  %v3145 = vmul.f32 %v743, %v3039
  %v3146 = vmul.f32 %v748, %v3039
  %v3147 = vmul.f32 %v753, %v3039
  %v3148 = vmul.f32 %v758, %v3039
  %v3149 = vmul.f32 %v763, %v3039
  %v3150 = vmul.f32 %v768, %v3039
  %v3151 = vmul.f32 %v773, %v3039
  %v3152 = vmul.f32 %v778, %v3039
  %v3153 = vmul.f32 %v783, %v3039
  %v3154 = vmul.f32 %v788, %v3039
  %v3155 = vmul.f32 %v793, %v3039
  %v3156 = vmul.f32 %v798, %v3039
  %v3157 = vmul.f32 %v803, %v3039
  %v3158 = vmul.f32 %v808, %v3039
  %v3159 = vmul.f32 %v813, %v3039
  %v3160 = vmul.f32 %v818, %v3039
  %v3161 = vmul.f32 %v823, %v3039
  %v3162 = vmul.f32 %v828, %v3039
  %v3163 = vmul.f32 %v833, %v3039
  %v3164 = vmul.f32 %v3019, %v3039
  %v3165 = vmul.f32 %v3024, %v3039
  %v3166 = vmul.f32 %v3029, %v3039
  %v3167 = vmul.f32 %v3034, %v3039
  %v3168 = vadd.f32 %v2867, %v3040
  %v3169 = vadd.f32 %v2868, %v3041
  %v3170 = vadd.f32 %v2869, %v3042
  %v3171 = vadd.f32 %v2870, %v3043
  %v3172 = vadd.f32 %v2871, %v3044
  %v3173 = vadd.f32 %v2872, %v3045
  %v3174 = vadd.f32 %v2873, %v3046
  %v3175 = vadd.f32 %v2874, %v3047
  %v3176 = vadd.f32 %v2875, %v3048
  %v3177 = vadd.f32 %v2876, %v3049
  %v3178 = vadd.f32 %v2877, %v3050
  %v3179 = vadd.f32 %v2878, %v3051
  %v3180 = vadd.f32 %v2879, %v3052
  %v3181 = vadd.f32 %v2880, %v3053
  %v3182 = vadd.f32 %v2881, %v3054
  %v3183 = vadd.f32 %v2882, %v3055
  %v3184 = vadd.f32 %v2883, %v3056
  %v3185 = vadd.f32 %v2884, %v3057
  %v3186 = vadd.f32 %v2885, %v3058
  %v3187 = vadd.f32 %v2886, %v3059
  %v3188 = vadd.f32 %v2887, %v3060
  %v3189 = vadd.f32 %v2888, %v3061
  %v3190 = vadd.f32 %v2889, %v3062
  %v3191 = vadd.f32 %v2890, %v3063
  %v3192 = vadd.f32 %v2891, %v3064
  %v3193 = vadd.f32 %v2892, %v3065
  %v3194 = vadd.f32 %v2893, %v3066
  %v3195 = vadd.f32 %v2894, %v3067
  %v3196 = vadd.f32 %v2895, %v3068
  %v3197 = vadd.f32 %v2896, %v3069
  %v3198 = vadd.f32 %v2897, %v3070
  %v3199 = vadd.f32 %v2898, %v3071
  %v3200 = vadd.f32 %v2899, %v3072
  %v3201 = vadd.f32 %v2900, %v3073
  %v3202 = vadd.f32 %v2901, %v3074
  %v3203 = vadd.f32 %v2902, %v3075
  %v3204 = vadd.f32 %v2903, %v3076
  %v3205 = vadd.f32 %v2904, %v3077
  %v3206 = vadd.f32 %v2905, %v3078
  %v3207 = vadd.f32 %v2906, %v3079
  %v3208 = vadd.f32 %v2907, %v3080
  %v3209 = vadd.f32 %v2908, %v3081
  %v3210 = vadd.f32 %v2909, %v3082
  %v3211 = vadd.f32 %v2910, %v3083
  %v3212 = vadd.f32 %v2911, %v3084
  %v3213 = vadd.f32 %v2912, %v3085
  %v3214 = vadd.f32 %v2913, %v3086
  %v3215 = vadd.f32 %v2914, %v3087
  %v3216 = vadd.f32 %v2915, %v3088
  %v3217 = vadd.f32 %v2916, %v3089
  %v3218 = vadd.f32 %v2917, %v3090
  %v3219 = vadd.f32 %v2918, %v3091
  %v3220 = vadd.f32 %v2919, %v3092
  %v3221 = vadd.f32 %v2920, %v3093
  %v3222 = vadd.f32 %v2921, %v3094
  %v3223 = vadd.f32 %v2922, %v3095
  %v3224 = vadd.f32 %v2923, %v3096
  %v3225 = vadd.f32 %v2924, %v3097
  %v3226 = vadd.f32 %v2925, %v3098
  %v3227 = vadd.f32 %v2926, %v3099
  %v3228 = vadd.f32 %v2927, %v3100
  %v3229 = vadd.f32 %v2928, %v3101
  %v3230 = vadd.f32 %v2929, %v3102
  %v3231 = vadd.f32 %v2930, %v3103
  %v3232 = vadd.f32 %v2931, %v3104
  %v3233 = vadd.f32 %v2932, %v3105
  %v3234 = vadd.f32 %v2933, %v3106
  %v3235 = vadd.f32 %v2934, %v3107
  %v3236 = vadd.f32 %v2935, %v3108
  %v3237 = vadd.f32 %v2936, %v3109
  %v3238 = vadd.f32 %v2937, %v3110
  %v3239 = vadd.f32 %v2938, %v3111
  %v3240 = vadd.f32 %v2939, %v3112
  %v3241 = vadd.f32 %v2940, %v3113
  %v3242 = vadd.f32 %v2941, %v3114
  %v3243 = vadd.f32 %v2942, %v3115
  %v3244 = vadd.f32 %v2943, %v3116
  %v3245 = vadd.f32 %v2944, %v3117
  %v3246 = vadd.f32 %v2945, %v3118
  %v3247 = vadd.f32 %v2946, %v3119
  %v3248 = vadd.f32 %v2947, %v3120
  %v3249 = vadd.f32 %v2948, %v3121
  %v3250 = vadd.f32 %v2949, %v3122
  %v3251 = vadd.f32 %v2950, %v3123
  %v3252 = vadd.f32 %v2951, %v3124
  %v3253 = vadd.f32 %v2952, %v3125
  %v3254 = vadd.f32 %v2953, %v3126
  %v3255 = vadd.f32 %v2954, %v3127
  %v3256 = vadd.f32 %v2955, %v3128
  %v3257 = vadd.f32 %v2956, %v3129
  %v3258 = vadd.f32 %v2957, %v3130
  %v3259 = vadd.f32 %v2958, %v3131
  %v3260 = vadd.f32 %v2959, %v3132
  %v3261 = vadd.f32 %v2960, %v3133
  %v3262 = vadd.f32 %v2961, %v3134
  %v3263 = vadd.f32 %v2962, %v3135
  %v3264 = vadd.f32 %v2963, %v3136
  %v3265 = vadd.f32 %v2964, %v3137
  %v3266 = vadd.f32 %v2965, %v3138
  %v3267 = vadd.f32 %v2966, %v3139
  %v3268 = vadd.f32 %v2967, %v3140
  %v3269 = vadd.f32 %v2968, %v3141
  %v3270 = vadd.f32 %v2969, %v3142
  %v3271 = vadd.f32 %v2970, %v3143
  %v3272 = vadd.f32 %v2971, %v3144
  %v3273 = vadd.f32 %v2972, %v3145
  %v3274 = vadd.f32 %v2973, %v3146
  %v3275 = vadd.f32 %v2974, %v3147
  %v3276 = vadd.f32 %v2975, %v3148
  %v3277 = vadd.f32 %v2976, %v3149
  %v3278 = vadd.f32 %v2977, %v3150
  %v3279 = vadd.f32 %v2978, %v3151
  %v3280 = vadd.f32 %v2979, %v3152
  %v3281 = vadd.f32 %v2980, %v3153
  %v3282 = vadd.f32 %v2981, %v3154
  %v3283 = vadd.f32 %v2982, %v3155
  %v3284 = vadd.f32 %v2983, %v3156
  %v3285 = vadd.f32 %v2984, %v3157
  %v3286 = vadd.f32 %v2985, %v3158
  %v3287 = vadd.f32 %v2986, %v3159
  %v3288 = vadd.f32 %v2987, %v3160
  %v3289 = vadd.f32 %v2988, %v3161
  %v3290 = vadd.f32 %v2989, %v3162
  %v3291 = vadd.f32 %v2990, %v3163
  %v3292 = vadd.f32 %v2991, %v3164
  %v3293 = vadd.f32 %v2992, %v3165
  %v3294 = vadd.f32 %v2993, %v3166
  %v3295 = vadd.f32 %v2994, %v3167
  %v3296 = vld [vmem:[%s1 + $0x4] sm:$0x1]
  %3298 = vset.pattern.permute.xlu0 0
  %3299 = vperm.xlu0 %3298, %v98
  %v3300 = vpop.permute.xlu0 %3299
  %3303 = vset.pattern.permute.xlu0 0
  %3304 = vperm.xlu0 %3303, %v188
  %v3305 = vpop.permute.xlu0 %3304
  %v3307 = vlaneseq
  %v3308 = vshrl.u32 %v3307, 7
  %v3309 = vsub.s32 0, %v3308
  %v3310 = vrot.slane %v3296, %v3309
  %v3311 = vmul.f32 %v218, %v3310
  %v3312 = vmul.f32 %v223, %v3310
  %v3313 = vmul.f32 %v228, %v3310
  %v3314 = vmul.f32 %v233, %v3310
  %v3315 = vmul.f32 %v1104, %v3310
  %v3316 = vmul.f32 %v238, %v3310
  %v3317 = vmul.f32 %v243, %v3310
  %v3318 = vmul.f32 %v248, %v3310
  %v3319 = vmul.f32 %v253, %v3310
  %v3320 = vmul.f32 %v1109, %v3310
  %v3321 = vmul.f32 %v258, %v3310
  %v3322 = vmul.f32 %v263, %v3310
  %v3323 = vmul.f32 %v268, %v3310
  %v3324 = vmul.f32 %v273, %v3310
  %v3325 = vmul.f32 %v1114, %v3310
  %v3326 = vmul.f32 %v278, %v3310
  %v3327 = vmul.f32 %v283, %v3310
  %v3328 = vmul.f32 %v288, %v3310
  %v3329 = vmul.f32 %v293, %v3310
  %v3330 = vmul.f32 %v1119, %v3310
  %v3331 = vmul.f32 %v298, %v3310
  %v3332 = vmul.f32 %v303, %v3310
  %v3333 = vmul.f32 %v308, %v3310
  %v3334 = vmul.f32 %v313, %v3310
  %v3335 = vmul.f32 %v1124, %v3310
  %v3336 = vmul.f32 %v318, %v3310
  %v3337 = vmul.f32 %v323, %v3310
  %v3338 = vmul.f32 %v328, %v3310
  %v3339 = vmul.f32 %v333, %v3310
  %v3340 = vmul.f32 %v1129, %v3310
  %v3341 = vmul.f32 %v338, %v3310
  %v3342 = vmul.f32 %v343, %v3310
  %v3343 = vmul.f32 %v348, %v3310
  %v3344 = vmul.f32 %v353, %v3310
  %v3345 = vmul.f32 %v1134, %v3310
  %v3346 = vmul.f32 %v358, %v3310
  %v3347 = vmul.f32 %v363, %v3310
  %v3348 = vmul.f32 %v368, %v3310
  %v3349 = vmul.f32 %v373, %v3310
  %v3350 = vmul.f32 %v1139, %v3310
  %v3351 = vmul.f32 %v378, %v3310
  %v3352 = vmul.f32 %v383, %v3310
  %v3353 = vmul.f32 %v388, %v3310
  %v3354 = vmul.f32 %v393, %v3310
  %v3355 = vmul.f32 %v1144, %v3310
  %v3356 = vmul.f32 %v398, %v3310
  %v3357 = vmul.f32 %v403, %v3310
  %v3358 = vmul.f32 %v408, %v3310
  %v3359 = vmul.f32 %v413, %v3310
  %v3360 = vmul.f32 %v1149, %v3310
  %v3361 = vmul.f32 %v418, %v3310
  %v3362 = vmul.f32 %v423, %v3310
  %v3363 = vmul.f32 %v428, %v3310
  %v3364 = vmul.f32 %v433, %v3310
  %v3365 = vmul.f32 %v1154, %v3310
  %v3366 = vmul.f32 %v438, %v3310
  %v3367 = vmul.f32 %v443, %v3310
  %v3368 = vmul.f32 %v448, %v3310
  %v3369 = vmul.f32 %v453, %v3310
  %v3370 = vmul.f32 %v1159, %v3310
  %v3371 = vmul.f32 %v458, %v3310
  %v3372 = vmul.f32 %v463, %v3310
  %v3373 = vmul.f32 %v468, %v3310
  %v3374 = vmul.f32 %v473, %v3310
  %v3375 = vmul.f32 %v1164, %v3310
  %v3376 = vmul.f32 %v478, %v3310
  %v3377 = vmul.f32 %v483, %v3310
  %v3378 = vmul.f32 %v488, %v3310
  %v3379 = vmul.f32 %v493, %v3310
  %v3380 = vmul.f32 %v1169, %v3310
  %v3381 = vmul.f32 %v498, %v3310
  %v3382 = vmul.f32 %v503, %v3310
  %v3383 = vmul.f32 %v508, %v3310
  %v3384 = vmul.f32 %v513, %v3310
  %v3385 = vmul.f32 %v1174, %v3310
  %v3386 = vmul.f32 %v2999, %v3310
  %v3387 = vmul.f32 %v3004, %v3310
  %v3388 = vmul.f32 %v3009, %v3310
  %v3389 = vmul.f32 %v3014, %v3310
  %v3390 = vmul.f32 %v3300, %v3310
  %v3391 = vmul.f32 %v538, %v3310
  %v3392 = vmul.f32 %v543, %v3310
  %v3393 = vmul.f32 %v548, %v3310
  %v3394 = vmul.f32 %v553, %v3310
  %v3395 = vmul.f32 %v1184, %v3310
  %v3396 = vmul.f32 %v558, %v3310
  %v3397 = vmul.f32 %v563, %v3310
  %v3398 = vmul.f32 %v568, %v3310
  %v3399 = vmul.f32 %v573, %v3310
  %v3400 = vmul.f32 %v1189, %v3310
  %v3401 = vmul.f32 %v578, %v3310
  %v3402 = vmul.f32 %v583, %v3310
  %v3403 = vmul.f32 %v588, %v3310
  %v3404 = vmul.f32 %v593, %v3310
  %v3405 = vmul.f32 %v1194, %v3310
  %v3406 = vmul.f32 %v598, %v3310
  %v3407 = vmul.f32 %v603, %v3310
  %v3408 = vmul.f32 %v608, %v3310
  %v3409 = vmul.f32 %v613, %v3310
  %v3410 = vmul.f32 %v1199, %v3310
  %v3411 = vmul.f32 %v618, %v3310
  %v3412 = vmul.f32 %v623, %v3310
  %v3413 = vmul.f32 %v628, %v3310
  %v3414 = vmul.f32 %v633, %v3310
  %v3415 = vmul.f32 %v1204, %v3310
  %v3416 = vmul.f32 %v638, %v3310
  %v3417 = vmul.f32 %v643, %v3310
  %v3418 = vmul.f32 %v648, %v3310
  %v3419 = vmul.f32 %v653, %v3310
  %v3420 = vmul.f32 %v1209, %v3310
  %v3421 = vmul.f32 %v658, %v3310
  %v3422 = vmul.f32 %v663, %v3310
  %v3423 = vmul.f32 %v668, %v3310
  %v3424 = vmul.f32 %v673, %v3310
  %v3425 = vmul.f32 %v1214, %v3310
  %v3426 = vmul.f32 %v678, %v3310
  %v3427 = vmul.f32 %v683, %v3310
  %v3428 = vmul.f32 %v688, %v3310
  %v3429 = vmul.f32 %v693, %v3310
  %v3430 = vmul.f32 %v1219, %v3310
  %v3431 = vmul.f32 %v698, %v3310
  %v3432 = vmul.f32 %v703, %v3310
  %v3433 = vmul.f32 %v708, %v3310
  %v3434 = vmul.f32 %v713, %v3310
  %v3435 = vmul.f32 %v1224, %v3310
  %v3436 = vmul.f32 %v718, %v3310
  %v3437 = vmul.f32 %v723, %v3310
  %v3438 = vmul.f32 %v728, %v3310
  %v3439 = vmul.f32 %v733, %v3310
  %v3440 = vmul.f32 %v1229, %v3310
  %v3441 = vmul.f32 %v738, %v3310
  %v3442 = vmul.f32 %v743, %v3310
  %v3443 = vmul.f32 %v748, %v3310
  %v3444 = vmul.f32 %v753, %v3310
  %v3445 = vmul.f32 %v1234, %v3310
  %v3446 = vmul.f32 %v758, %v3310
  %v3447 = vmul.f32 %v763, %v3310
  %v3448 = vmul.f32 %v768, %v3310
  %v3449 = vmul.f32 %v773, %v3310
  %v3450 = vmul.f32 %v1239, %v3310
  %v3451 = vmul.f32 %v778, %v3310
  %v3452 = vmul.f32 %v783, %v3310
  %v3453 = vmul.f32 %v788, %v3310
  %v3454 = vmul.f32 %v793, %v3310
  %v3455 = vmul.f32 %v1244, %v3310
  %v3456 = vmul.f32 %v798, %v3310
  %v3457 = vmul.f32 %v803, %v3310
  %v3458 = vmul.f32 %v808, %v3310
  %v3459 = vmul.f32 %v813, %v3310
  %v3460 = vmul.f32 %v1249, %v3310
  %v3461 = vmul.f32 %v818, %v3310
  %v3462 = vmul.f32 %v823, %v3310
  %v3463 = vmul.f32 %v828, %v3310
  %v3464 = vmul.f32 %v833, %v3310
  %v3465 = vmul.f32 %v1254, %v3310
  %v3466 = vmul.f32 %v3019, %v3310
  %v3467 = vmul.f32 %v3024, %v3310
  %v3468 = vmul.f32 %v3029, %v3310
  %v3469 = vmul.f32 %v3034, %v3310
  %v3470 = vmul.f32 %v3305, %v3310
  %v3631 = vrot.slane %v3311, 1
  %v3632 = vrot.slane %v3312, 1
  %v3633 = vsel %vm1580, %v3631, %v3632
  %v3634 = vrot.slane %v3313, 1
  %v3635 = vsel %vm1580, %v3632, %v3634
  %v3636 = vrot.slane %v3314, 1
  %v3637 = vsel %vm1580, %v3634, %v3636
  %v3638 = vrot.slane %v3315, 1
  %v3639 = vsel %vm1580, %v3636, %v3638
  %v3640 = vrot.slane %v3316, 1
  %v3641 = vrot.slane %v3317, 1
  %v3642 = vsel %vm1580, %v3640, %v3641
  %v3643 = vrot.slane %v3318, 1
  %v3644 = vsel %vm1580, %v3641, %v3643
  %v3645 = vrot.slane %v3319, 1
  %v3646 = vsel %vm1580, %v3643, %v3645
  %v3647 = vrot.slane %v3320, 1
  %v3648 = vsel %vm1580, %v3645, %v3647
  %v3649 = vrot.slane %v3321, 1
  %v3650 = vrot.slane %v3322, 1
  %v3651 = vsel %vm1580, %v3649, %v3650
  %v3652 = vrot.slane %v3323, 1
  %v3653 = vsel %vm1580, %v3650, %v3652
  %v3654 = vrot.slane %v3324, 1
  %v3655 = vsel %vm1580, %v3652, %v3654
  %v3656 = vrot.slane %v3325, 1
  %v3657 = vsel %vm1580, %v3654, %v3656
  %v3658 = vrot.slane %v3326, 1
  %v3659 = vrot.slane %v3327, 1
  %v3660 = vsel %vm1580, %v3658, %v3659
  %v3661 = vrot.slane %v3328, 1
  %v3662 = vsel %vm1580, %v3659, %v3661
  %v3663 = vrot.slane %v3329, 1
  %v3664 = vsel %vm1580, %v3661, %v3663
  %v3665 = vrot.slane %v3330, 1
  %v3666 = vsel %vm1580, %v3663, %v3665
  %v3667 = vrot.slane %v3331, 1
  %v3668 = vrot.slane %v3332, 1
  %v3669 = vsel %vm1580, %v3667, %v3668
  %v3670 = vrot.slane %v3333, 1
  %v3671 = vsel %vm1580, %v3668, %v3670
  %v3672 = vrot.slane %v3334, 1
  %v3673 = vsel %vm1580, %v3670, %v3672
  %v3674 = vrot.slane %v3335, 1
  %v3675 = vsel %vm1580, %v3672, %v3674
  %v3676 = vrot.slane %v3336, 1
  %v3677 = vrot.slane %v3337, 1
  %v3678 = vsel %vm1580, %v3676, %v3677
  %v3679 = vrot.slane %v3338, 1
  %v3680 = vsel %vm1580, %v3677, %v3679
  %v3681 = vrot.slane %v3339, 1
  %v3682 = vsel %vm1580, %v3679, %v3681
  %v3683 = vrot.slane %v3340, 1
  %v3684 = vsel %vm1580, %v3681, %v3683
  %v3685 = vrot.slane %v3341, 1
  %v3686 = vrot.slane %v3342, 1
  %v3687 = vsel %vm1580, %v3685, %v3686
  %v3688 = vrot.slane %v3343, 1
  %v3689 = vsel %vm1580, %v3686, %v3688
  %v3690 = vrot.slane %v3344, 1
  %v3691 = vsel %vm1580, %v3688, %v3690
  %v3692 = vrot.slane %v3345, 1
  %v3693 = vsel %vm1580, %v3690, %v3692
  %v3694 = vrot.slane %v3346, 1
  %v3695 = vrot.slane %v3347, 1
  %v3696 = vsel %vm1580, %v3694, %v3695
  %v3697 = vrot.slane %v3348, 1
  %v3698 = vsel %vm1580, %v3695, %v3697
  %v3699 = vrot.slane %v3349, 1
  %v3700 = vsel %vm1580, %v3697, %v3699
  %v3701 = vrot.slane %v3350, 1
  %v3702 = vsel %vm1580, %v3699, %v3701
  %v3703 = vrot.slane %v3351, 1
  %v3704 = vrot.slane %v3352, 1
  %v3705 = vsel %vm1580, %v3703, %v3704
  %v3706 = vrot.slane %v3353, 1
  %v3707 = vsel %vm1580, %v3704, %v3706
  %v3708 = vrot.slane %v3354, 1
  %v3709 = vsel %vm1580, %v3706, %v3708
  %v3710 = vrot.slane %v3355, 1
  %v3711 = vsel %vm1580, %v3708, %v3710
  %v3712 = vrot.slane %v3356, 1
  %v3713 = vrot.slane %v3357, 1
  %v3714 = vsel %vm1580, %v3712, %v3713
  %v3715 = vrot.slane %v3358, 1
  %v3716 = vsel %vm1580, %v3713, %v3715
  %v3717 = vrot.slane %v3359, 1
  %v3718 = vsel %vm1580, %v3715, %v3717
  %v3719 = vrot.slane %v3360, 1
  %v3720 = vsel %vm1580, %v3717, %v3719
  %v3721 = vrot.slane %v3361, 1
  %v3722 = vrot.slane %v3362, 1
  %v3723 = vsel %vm1580, %v3721, %v3722
  %v3724 = vrot.slane %v3363, 1
  %v3725 = vsel %vm1580, %v3722, %v3724
  %v3726 = vrot.slane %v3364, 1
  %v3727 = vsel %vm1580, %v3724, %v3726
  %v3728 = vrot.slane %v3365, 1
  %v3729 = vsel %vm1580, %v3726, %v3728
  %v3730 = vrot.slane %v3366, 1
  %v3731 = vrot.slane %v3367, 1
  %v3732 = vsel %vm1580, %v3730, %v3731
  %v3733 = vrot.slane %v3368, 1
  %v3734 = vsel %vm1580, %v3731, %v3733
  %v3735 = vrot.slane %v3369, 1
  %v3736 = vsel %vm1580, %v3733, %v3735
  %v3737 = vrot.slane %v3370, 1
  %v3738 = vsel %vm1580, %v3735, %v3737
  %v3739 = vrot.slane %v3371, 1
  %v3740 = vrot.slane %v3372, 1
  %v3741 = vsel %vm1580, %v3739, %v3740
  %v3742 = vrot.slane %v3373, 1
  %v3743 = vsel %vm1580, %v3740, %v3742
  %v3744 = vrot.slane %v3374, 1
  %v3745 = vsel %vm1580, %v3742, %v3744
  %v3746 = vrot.slane %v3375, 1
  %v3747 = vsel %vm1580, %v3744, %v3746
  %v3748 = vrot.slane %v3376, 1
  %v3749 = vrot.slane %v3377, 1
  %v3750 = vsel %vm1580, %v3748, %v3749
  %v3751 = vrot.slane %v3378, 1
  %v3752 = vsel %vm1580, %v3749, %v3751
  %v3753 = vrot.slane %v3379, 1
  %v3754 = vsel %vm1580, %v3751, %v3753
  %v3755 = vrot.slane %v3380, 1
  %v3756 = vsel %vm1580, %v3753, %v3755
  %v3757 = vrot.slane %v3381, 1
  %v3758 = vrot.slane %v3382, 1
  %v3759 = vsel %vm1580, %v3757, %v3758
  %v3760 = vrot.slane %v3383, 1
  %v3761 = vsel %vm1580, %v3758, %v3760
  %v3762 = vrot.slane %v3384, 1
  %v3763 = vsel %vm1580, %v3760, %v3762
  %v3764 = vrot.slane %v3385, 1
  %v3765 = vsel %vm1580, %v3762, %v3764
  %v3766 = vrot.slane %v3386, 1
  %v3767 = vrot.slane %v3387, 1
  %v3768 = vsel %vm1580, %v3766, %v3767
  %v3769 = vrot.slane %v3388, 1
  %v3770 = vsel %vm1580, %v3767, %v3769
  %v3771 = vrot.slane %v3389, 1
  %v3772 = vsel %vm1580, %v3769, %v3771
  %v3773 = vrot.slane %v3390, 1
  %v3774 = vsel %vm1580, %v3771, %v3773
  %v3775 = vrot.slane %v3391, 1
  %v3776 = vrot.slane %v3392, 1
  %v3777 = vsel %vm1580, %v3775, %v3776
  %v3778 = vrot.slane %v3393, 1
  %v3779 = vsel %vm1580, %v3776, %v3778
  %v3780 = vrot.slane %v3394, 1
  %v3781 = vsel %vm1580, %v3778, %v3780
  %v3782 = vrot.slane %v3395, 1
  %v3783 = vsel %vm1580, %v3780, %v3782
  %v3784 = vrot.slane %v3396, 1
  %v3785 = vrot.slane %v3397, 1
  %v3786 = vsel %vm1580, %v3784, %v3785
  %v3787 = vrot.slane %v3398, 1
  %v3788 = vsel %vm1580, %v3785, %v3787
  %v3789 = vrot.slane %v3399, 1
  %v3790 = vsel %vm1580, %v3787, %v3789
  %v3791 = vrot.slane %v3400, 1
  %v3792 = vsel %vm1580, %v3789, %v3791
  %v3793 = vrot.slane %v3401, 1
  %v3794 = vrot.slane %v3402, 1
  %v3795 = vsel %vm1580, %v3793, %v3794
  %v3796 = vrot.slane %v3403, 1
  %v3797 = vsel %vm1580, %v3794, %v3796
  %v3798 = vrot.slane %v3404, 1
  %v3799 = vsel %vm1580, %v3796, %v3798
  %v3800 = vrot.slane %v3405, 1
  %v3801 = vsel %vm1580, %v3798, %v3800
  %v3802 = vrot.slane %v3406, 1
  %v3803 = vrot.slane %v3407, 1
  %v3804 = vsel %vm1580, %v3802, %v3803
  %v3805 = vrot.slane %v3408, 1
  %v3806 = vsel %vm1580, %v3803, %v3805
  %v3807 = vrot.slane %v3409, 1
  %v3808 = vsel %vm1580, %v3805, %v3807
  %v3809 = vrot.slane %v3410, 1
  %v3810 = vsel %vm1580, %v3807, %v3809
  %v3811 = vrot.slane %v3411, 1
  %v3812 = vrot.slane %v3412, 1
  %v3813 = vsel %vm1580, %v3811, %v3812
  %v3814 = vrot.slane %v3413, 1
  %v3815 = vsel %vm1580, %v3812, %v3814
  %v3816 = vrot.slane %v3414, 1
  %v3817 = vsel %vm1580, %v3814, %v3816
  %v3818 = vrot.slane %v3415, 1
  %v3819 = vsel %vm1580, %v3816, %v3818
  %v3820 = vrot.slane %v3416, 1
  %v3821 = vrot.slane %v3417, 1
  %v3822 = vsel %vm1580, %v3820, %v3821
  %v3823 = vrot.slane %v3418, 1
  %v3824 = vsel %vm1580, %v3821, %v3823
  %v3825 = vrot.slane %v3419, 1
  %v3826 = vsel %vm1580, %v3823, %v3825
  %v3827 = vrot.slane %v3420, 1
  %v3828 = vsel %vm1580, %v3825, %v3827
  %v3829 = vrot.slane %v3421, 1
  %v3830 = vrot.slane %v3422, 1
  %v3831 = vsel %vm1580, %v3829, %v3830
  %v3832 = vrot.slane %v3423, 1
  %v3833 = vsel %vm1580, %v3830, %v3832
  %v3834 = vrot.slane %v3424, 1
  %v3835 = vsel %vm1580, %v3832, %v3834
  %v3836 = vrot.slane %v3425, 1
  %v3837 = vsel %vm1580, %v3834, %v3836
  %v3838 = vrot.slane %v3426, 1
  %v3839 = vrot.slane %v3427, 1
  %v3840 = vsel %vm1580, %v3838, %v3839
  %v3841 = vrot.slane %v3428, 1
  %v3842 = vsel %vm1580, %v3839, %v3841
  %v3843 = vrot.slane %v3429, 1
  %v3844 = vsel %vm1580, %v3841, %v3843
  %v3845 = vrot.slane %v3430, 1
  %v3846 = vsel %vm1580, %v3843, %v3845
  %v3847 = vrot.slane %v3431, 1
  %v3848 = vrot.slane %v3432, 1
  %v3849 = vsel %vm1580, %v3847, %v3848
  %v3850 = vrot.slane %v3433, 1
  %v3851 = vsel %vm1580, %v3848, %v3850
  %v3852 = vrot.slane %v3434, 1
  %v3853 = vsel %vm1580, %v3850, %v3852
  %v3854 = vrot.slane %v3435, 1
  %v3855 = vsel %vm1580, %v3852, %v3854
  %v3856 = vrot.slane %v3436, 1
  %v3857 = vrot.slane %v3437, 1
  %v3858 = vsel %vm1580, %v3856, %v3857
  %v3859 = vrot.slane %v3438, 1
  %v3860 = vsel %vm1580, %v3857, %v3859
  %v3861 = vrot.slane %v3439, 1
  %v3862 = vsel %vm1580, %v3859, %v3861
  %v3863 = vrot.slane %v3440, 1
  %v3864 = vsel %vm1580, %v3861, %v3863
  %v3865 = vrot.slane %v3441, 1
  %v3866 = vrot.slane %v3442, 1
  %v3867 = vsel %vm1580, %v3865, %v3866
  %v3868 = vrot.slane %v3443, 1
  %v3869 = vsel %vm1580, %v3866, %v3868
  %v3870 = vrot.slane %v3444, 1
  %v3871 = vsel %vm1580, %v3868, %v3870
  %v3872 = vrot.slane %v3445, 1
  %v3873 = vsel %vm1580, %v3870, %v3872
  %v3874 = vrot.slane %v3446, 1
  %v3875 = vrot.slane %v3447, 1
  %v3876 = vsel %vm1580, %v3874, %v3875
  %v3877 = vrot.slane %v3448, 1
  %v3878 = vsel %vm1580, %v3875, %v3877
  %v3879 = vrot.slane %v3449, 1
  %v3880 = vsel %vm1580, %v3877, %v3879
  %v3881 = vrot.slane %v3450, 1
  %v3882 = vsel %vm1580, %v3879, %v3881
  %v3883 = vrot.slane %v3451, 1
  %v3884 = vrot.slane %v3452, 1
  %v3885 = vsel %vm1580, %v3883, %v3884
  %v3886 = vrot.slane %v3453, 1
  %v3887 = vsel %vm1580, %v3884, %v3886
  %v3888 = vrot.slane %v3454, 1
  %v3889 = vsel %vm1580, %v3886, %v3888
  %v3890 = vrot.slane %v3455, 1
  %v3891 = vsel %vm1580, %v3888, %v3890
  %v3892 = vrot.slane %v3456, 1
  %v3893 = vrot.slane %v3457, 1
  %v3894 = vsel %vm1580, %v3892, %v3893
  %v3895 = vrot.slane %v3458, 1
  %v3896 = vsel %vm1580, %v3893, %v3895
  %v3897 = vrot.slane %v3459, 1
  %v3898 = vsel %vm1580, %v3895, %v3897
  %v3899 = vrot.slane %v3460, 1
  %v3900 = vsel %vm1580, %v3897, %v3899
  %v3901 = vrot.slane %v3461, 1
  %v3902 = vrot.slane %v3462, 1
  %v3903 = vsel %vm1580, %v3901, %v3902
  %v3904 = vrot.slane %v3463, 1
  %v3905 = vsel %vm1580, %v3902, %v3904
  %v3906 = vrot.slane %v3464, 1
  %v3907 = vsel %vm1580, %v3904, %v3906
  %v3908 = vrot.slane %v3465, 1
  %v3909 = vsel %vm1580, %v3906, %v3908
  %v3910 = vrot.slane %v3466, 1
  %v3911 = vrot.slane %v3467, 1
  %v3912 = vsel %vm1580, %v3910, %v3911
  %v3913 = vrot.slane %v3468, 1
  %v3914 = vsel %vm1580, %v3911, %v3913
  %v3915 = vrot.slane %v3469, 1
  %v3916 = vsel %vm1580, %v3913, %v3915
  %v3917 = vrot.slane %v3470, 1
  %v3918 = vsel %vm1580, %v3915, %v3917
  %v4047 = vadd.f32 %v3168, %v3633
  %v4048 = vadd.f32 %v3169, %v3635
  %v4049 = vadd.f32 %v3170, %v3637
  %v4050 = vadd.f32 %v3171, %v3639
  %v4051 = vadd.f32 %v3172, %v3642
  %v4052 = vadd.f32 %v3173, %v3644
  %v4053 = vadd.f32 %v3174, %v3646
  %v4054 = vadd.f32 %v3175, %v3648
  %v4055 = vadd.f32 %v3176, %v3651
  %v4056 = vadd.f32 %v3177, %v3653
  %v4057 = vadd.f32 %v3178, %v3655
  %v4058 = vadd.f32 %v3179, %v3657
  %v4059 = vadd.f32 %v3180, %v3660
  %v4060 = vadd.f32 %v3181, %v3662
  %v4061 = vadd.f32 %v3182, %v3664
  %v4062 = vadd.f32 %v3183, %v3666
  %v4063 = vadd.f32 %v3184, %v3669
  %v4064 = vadd.f32 %v3185, %v3671
  %v4065 = vadd.f32 %v3186, %v3673
  %v4066 = vadd.f32 %v3187, %v3675
  %v4067 = vadd.f32 %v3188, %v3678
  %v4068 = vadd.f32 %v3189, %v3680
  %v4069 = vadd.f32 %v3190, %v3682
  %v4070 = vadd.f32 %v3191, %v3684
  %v4071 = vadd.f32 %v3192, %v3687
  %v4072 = vadd.f32 %v3193, %v3689
  %v4073 = vadd.f32 %v3194, %v3691
  %v4074 = vadd.f32 %v3195, %v3693
  %v4075 = vadd.f32 %v3196, %v3696
  %v4076 = vadd.f32 %v3197, %v3698
  %v4077 = vadd.f32 %v3198, %v3700
  %v4078 = vadd.f32 %v3199, %v3702
  %v4079 = vadd.f32 %v3200, %v3705
  %v4080 = vadd.f32 %v3201, %v3707
  %v4081 = vadd.f32 %v3202, %v3709
  %v4082 = vadd.f32 %v3203, %v3711
  %v4083 = vadd.f32 %v3204, %v3714
  %v4084 = vadd.f32 %v3205, %v3716
  %v4085 = vadd.f32 %v3206, %v3718
  %v4086 = vadd.f32 %v3207, %v3720
  %v4087 = vadd.f32 %v3208, %v3723
  %v4088 = vadd.f32 %v3209, %v3725
  %v4089 = vadd.f32 %v3210, %v3727
  %v4090 = vadd.f32 %v3211, %v3729
  %v4091 = vadd.f32 %v3212, %v3732
  %v4092 = vadd.f32 %v3213, %v3734
  %v4093 = vadd.f32 %v3214, %v3736
  %v4094 = vadd.f32 %v3215, %v3738
  %v4095 = vadd.f32 %v3216, %v3741
  %v4096 = vadd.f32 %v3217, %v3743
  %v4097 = vadd.f32 %v3218, %v3745
  %v4098 = vadd.f32 %v3219, %v3747
  %v4099 = vadd.f32 %v3220, %v3750
  %v4100 = vadd.f32 %v3221, %v3752
  %v4101 = vadd.f32 %v3222, %v3754
  %v4102 = vadd.f32 %v3223, %v3756
  %v4103 = vadd.f32 %v3224, %v3759
  %v4104 = vadd.f32 %v3225, %v3761
  %v4105 = vadd.f32 %v3226, %v3763
  %v4106 = vadd.f32 %v3227, %v3765
  %v4107 = vadd.f32 %v3228, %v3768
  %v4108 = vadd.f32 %v3229, %v3770
  %v4109 = vadd.f32 %v3230, %v3772
  %v4110 = vadd.f32 %v3231, %v3774
  %v4111 = vadd.f32 %v3232, %v3777
  %v4112 = vadd.f32 %v3233, %v3779
  %v4113 = vadd.f32 %v3234, %v3781
  %v4114 = vadd.f32 %v3235, %v3783
  %v4115 = vadd.f32 %v3236, %v3786
  %v4116 = vadd.f32 %v3237, %v3788
  %v4117 = vadd.f32 %v3238, %v3790
  %v4118 = vadd.f32 %v3239, %v3792
  %v4119 = vadd.f32 %v3240, %v3795
  %v4120 = vadd.f32 %v3241, %v3797
  %v4121 = vadd.f32 %v3242, %v3799
  %v4122 = vadd.f32 %v3243, %v3801
  %v4123 = vadd.f32 %v3244, %v3804
  %v4124 = vadd.f32 %v3245, %v3806
  %v4125 = vadd.f32 %v3246, %v3808
  %v4126 = vadd.f32 %v3247, %v3810
  %v4127 = vadd.f32 %v3248, %v3813
  %v4128 = vadd.f32 %v3249, %v3815
  %v4129 = vadd.f32 %v3250, %v3817
  %v4130 = vadd.f32 %v3251, %v3819
  %v4131 = vadd.f32 %v3252, %v3822
  %v4132 = vadd.f32 %v3253, %v3824
  %v4133 = vadd.f32 %v3254, %v3826
  %v4134 = vadd.f32 %v3255, %v3828
  %v4135 = vadd.f32 %v3256, %v3831
  %v4136 = vadd.f32 %v3257, %v3833
  %v4137 = vadd.f32 %v3258, %v3835
  %v4138 = vadd.f32 %v3259, %v3837
  %v4139 = vadd.f32 %v3260, %v3840
  %v4140 = vadd.f32 %v3261, %v3842
  %v4141 = vadd.f32 %v3262, %v3844
  %v4142 = vadd.f32 %v3263, %v3846
  %v4143 = vadd.f32 %v3264, %v3849
  %v4144 = vadd.f32 %v3265, %v3851
  %v4145 = vadd.f32 %v3266, %v3853
  %v4146 = vadd.f32 %v3267, %v3855
  %v4147 = vadd.f32 %v3268, %v3858
  %v4148 = vadd.f32 %v3269, %v3860
  %v4149 = vadd.f32 %v3270, %v3862
  %v4150 = vadd.f32 %v3271, %v3864
  %v4151 = vadd.f32 %v3272, %v3867
  %v4152 = vadd.f32 %v3273, %v3869
  %v4153 = vadd.f32 %v3274, %v3871
  %v4154 = vadd.f32 %v3275, %v3873
  %v4155 = vadd.f32 %v3276, %v3876
  %v4156 = vadd.f32 %v3277, %v3878
  %v4157 = vadd.f32 %v3278, %v3880
  %v4158 = vadd.f32 %v3279, %v3882
  %v4159 = vadd.f32 %v3280, %v3885
  %v4160 = vadd.f32 %v3281, %v3887
  %v4161 = vadd.f32 %v3282, %v3889
  %v4162 = vadd.f32 %v3283, %v3891
  %v4163 = vadd.f32 %v3284, %v3894
  %v4164 = vadd.f32 %v3285, %v3896
  %v4165 = vadd.f32 %v3286, %v3898
  %v4166 = vadd.f32 %v3287, %v3900
  %v4167 = vadd.f32 %v3288, %v3903
  %v4168 = vadd.f32 %v3289, %v3905
  %v4169 = vadd.f32 %v3290, %v3907
  %v4170 = vadd.f32 %v3291, %v3909
  %v4171 = vadd.f32 %v3292, %v3912
  %v4172 = vadd.f32 %v3293, %v3914
  %v4173 = vadd.f32 %v3294, %v3916
  %v4174 = vadd.f32 %v3295, %v3918
  %v4175 = vld [vmem:[%s1 + $0x5] sm:$0x1]
  %v4176 = vlaneseq
  %v4177 = vshrl.u32 %v4176, 7
  %v4178 = vsub.s32 0, %v4177
  %v4179 = vrot.slane %v4175, %v4178
  %v4180 = vmul.f32 %v218, %v4179
  %v4181 = vmul.f32 %v223, %v4179
  %v4182 = vmul.f32 %v228, %v4179
  %v4183 = vmul.f32 %v233, %v4179
  %v4184 = vmul.f32 %v1104, %v4179
  %v4185 = vmul.f32 %v238, %v4179
  %v4186 = vmul.f32 %v243, %v4179
  %v4187 = vmul.f32 %v248, %v4179
  %v4188 = vmul.f32 %v253, %v4179
  %v4189 = vmul.f32 %v1109, %v4179
  %v4190 = vmul.f32 %v258, %v4179
  %v4191 = vmul.f32 %v263, %v4179
  %v4192 = vmul.f32 %v268, %v4179
  %v4193 = vmul.f32 %v273, %v4179
  %v4194 = vmul.f32 %v1114, %v4179
  %v4195 = vmul.f32 %v278, %v4179
  %v4196 = vmul.f32 %v283, %v4179
  %v4197 = vmul.f32 %v288, %v4179
  %v4198 = vmul.f32 %v293, %v4179
  %v4199 = vmul.f32 %v1119, %v4179
  %v4200 = vmul.f32 %v298, %v4179
  %v4201 = vmul.f32 %v303, %v4179
  %v4202 = vmul.f32 %v308, %v4179
  %v4203 = vmul.f32 %v313, %v4179
  %v4204 = vmul.f32 %v1124, %v4179
  %v4205 = vmul.f32 %v318, %v4179
  %v4206 = vmul.f32 %v323, %v4179
  %v4207 = vmul.f32 %v328, %v4179
  %v4208 = vmul.f32 %v333, %v4179
  %v4209 = vmul.f32 %v1129, %v4179
  %v4210 = vmul.f32 %v338, %v4179
  %v4211 = vmul.f32 %v343, %v4179
  %v4212 = vmul.f32 %v348, %v4179
  %v4213 = vmul.f32 %v353, %v4179
  %v4214 = vmul.f32 %v1134, %v4179
  %v4215 = vmul.f32 %v358, %v4179
  %v4216 = vmul.f32 %v363, %v4179
  %v4217 = vmul.f32 %v368, %v4179
  %v4218 = vmul.f32 %v373, %v4179
  %v4219 = vmul.f32 %v1139, %v4179
  %v4220 = vmul.f32 %v378, %v4179
  %v4221 = vmul.f32 %v383, %v4179
  %v4222 = vmul.f32 %v388, %v4179
  %v4223 = vmul.f32 %v393, %v4179
  %v4224 = vmul.f32 %v1144, %v4179
  %v4225 = vmul.f32 %v398, %v4179
  %v4226 = vmul.f32 %v403, %v4179
  %v4227 = vmul.f32 %v408, %v4179
  %v4228 = vmul.f32 %v413, %v4179
  %v4229 = vmul.f32 %v1149, %v4179
  %v4230 = vmul.f32 %v418, %v4179
  %v4231 = vmul.f32 %v423, %v4179
  %v4232 = vmul.f32 %v428, %v4179
  %v4233 = vmul.f32 %v433, %v4179
  %v4234 = vmul.f32 %v1154, %v4179
  %v4235 = vmul.f32 %v438, %v4179
  %v4236 = vmul.f32 %v443, %v4179
  %v4237 = vmul.f32 %v448, %v4179
  %v4238 = vmul.f32 %v453, %v4179
  %v4239 = vmul.f32 %v1159, %v4179
  %v4240 = vmul.f32 %v458, %v4179
  %v4241 = vmul.f32 %v463, %v4179
  %v4242 = vmul.f32 %v468, %v4179
  %v4243 = vmul.f32 %v473, %v4179
  %v4244 = vmul.f32 %v1164, %v4179
  %v4245 = vmul.f32 %v478, %v4179
  %v4246 = vmul.f32 %v483, %v4179
  %v4247 = vmul.f32 %v488, %v4179
  %v4248 = vmul.f32 %v493, %v4179
  %v4249 = vmul.f32 %v1169, %v4179
  %v4250 = vmul.f32 %v498, %v4179
  %v4251 = vmul.f32 %v503, %v4179
  %v4252 = vmul.f32 %v508, %v4179
  %v4253 = vmul.f32 %v513, %v4179
  %v4254 = vmul.f32 %v1174, %v4179
  %v4255 = vmul.f32 %v2999, %v4179
  %v4256 = vmul.f32 %v3004, %v4179
  %v4257 = vmul.f32 %v3009, %v4179
  %v4258 = vmul.f32 %v3014, %v4179
  %v4259 = vmul.f32 %v3300, %v4179
  %v4260 = vmul.f32 %v538, %v4179
  %v4261 = vmul.f32 %v543, %v4179
  %v4262 = vmul.f32 %v548, %v4179
  %v4263 = vmul.f32 %v553, %v4179
  %v4264 = vmul.f32 %v1184, %v4179
  %v4265 = vmul.f32 %v558, %v4179
  %v4266 = vmul.f32 %v563, %v4179
  %v4267 = vmul.f32 %v568, %v4179
  %v4268 = vmul.f32 %v573, %v4179
  %v4269 = vmul.f32 %v1189, %v4179
  %v4270 = vmul.f32 %v578, %v4179
  %v4271 = vmul.f32 %v583, %v4179
  %v4272 = vmul.f32 %v588, %v4179
  %v4273 = vmul.f32 %v593, %v4179
  %v4274 = vmul.f32 %v1194, %v4179
  %v4275 = vmul.f32 %v598, %v4179
  %v4276 = vmul.f32 %v603, %v4179
  %v4277 = vmul.f32 %v608, %v4179
  %v4278 = vmul.f32 %v613, %v4179
  %v4279 = vmul.f32 %v1199, %v4179
  %v4280 = vmul.f32 %v618, %v4179
  %v4281 = vmul.f32 %v623, %v4179
  %v4282 = vmul.f32 %v628, %v4179
  %v4283 = vmul.f32 %v633, %v4179
  %v4284 = vmul.f32 %v1204, %v4179
  %v4285 = vmul.f32 %v638, %v4179
  %v4286 = vmul.f32 %v643, %v4179
  %v4287 = vmul.f32 %v648, %v4179
  %v4288 = vmul.f32 %v653, %v4179
  %v4289 = vmul.f32 %v1209, %v4179
  %v4290 = vmul.f32 %v658, %v4179
  %v4291 = vmul.f32 %v663, %v4179
  %v4292 = vmul.f32 %v668, %v4179
  %v4293 = vmul.f32 %v673, %v4179
  %v4294 = vmul.f32 %v1214, %v4179
  %v4295 = vmul.f32 %v678, %v4179
  %v4296 = vmul.f32 %v683, %v4179
  %v4297 = vmul.f32 %v688, %v4179
  %v4298 = vmul.f32 %v693, %v4179
  %v4299 = vmul.f32 %v1219, %v4179
  %v4300 = vmul.f32 %v698, %v4179
  %v4301 = vmul.f32 %v703, %v4179
  %v4302 = vmul.f32 %v708, %v4179
  %v4303 = vmul.f32 %v713, %v4179
  %v4304 = vmul.f32 %v1224, %v4179
  %v4305 = vmul.f32 %v718, %v4179
  %v4306 = vmul.f32 %v723, %v4179
  %v4307 = vmul.f32 %v728, %v4179
  %v4308 = vmul.f32 %v733, %v4179
  %v4309 = vmul.f32 %v1229, %v4179
  %v4310 = vmul.f32 %v738, %v4179
  %v4311 = vmul.f32 %v743, %v4179
  %v4312 = vmul.f32 %v748, %v4179
  %v4313 = vmul.f32 %v753, %v4179
  %v4314 = vmul.f32 %v1234, %v4179
  %v4315 = vmul.f32 %v758, %v4179
  %v4316 = vmul.f32 %v763, %v4179
  %v4317 = vmul.f32 %v768, %v4179
  %v4318 = vmul.f32 %v773, %v4179
  %v4319 = vmul.f32 %v1239, %v4179
  %v4320 = vmul.f32 %v778, %v4179
  %v4321 = vmul.f32 %v783, %v4179
  %v4322 = vmul.f32 %v788, %v4179
  %v4323 = vmul.f32 %v793, %v4179
  %v4324 = vmul.f32 %v1244, %v4179
  %v4325 = vmul.f32 %v798, %v4179
  %v4326 = vmul.f32 %v803, %v4179
  %v4327 = vmul.f32 %v808, %v4179
  %v4328 = vmul.f32 %v813, %v4179
  %v4329 = vmul.f32 %v1249, %v4179
  %v4330 = vmul.f32 %v818, %v4179
  %v4331 = vmul.f32 %v823, %v4179
  %v4332 = vmul.f32 %v828, %v4179
  %v4333 = vmul.f32 %v833, %v4179
  %v4334 = vmul.f32 %v1254, %v4179
  %v4335 = vmul.f32 %v3019, %v4179
  %v4336 = vmul.f32 %v3024, %v4179
  %v4337 = vmul.f32 %v3029, %v4179
  %v4338 = vmul.f32 %v3034, %v4179
  %v4339 = vmul.f32 %v3305, %v4179
  %v4500 = vrot.slane %v4180, 2
  %v4501 = vrot.slane %v4181, 2
  %v4502 = vsel %vm2450, %v4500, %v4501
  %v4503 = vrot.slane %v4182, 2
  %v4504 = vsel %vm2450, %v4501, %v4503
  %v4505 = vrot.slane %v4183, 2
  %v4506 = vsel %vm2450, %v4503, %v4505
  %v4507 = vrot.slane %v4184, 2
  %v4508 = vsel %vm2450, %v4505, %v4507
  %v4509 = vrot.slane %v4185, 2
  %v4510 = vrot.slane %v4186, 2
  %v4511 = vsel %vm2450, %v4509, %v4510
  %v4512 = vrot.slane %v4187, 2
  %v4513 = vsel %vm2450, %v4510, %v4512
  %v4514 = vrot.slane %v4188, 2
  %v4515 = vsel %vm2450, %v4512, %v4514
  %v4516 = vrot.slane %v4189, 2
  %v4517 = vsel %vm2450, %v4514, %v4516
  %v4518 = vrot.slane %v4190, 2
  %v4519 = vrot.slane %v4191, 2
  %v4520 = vsel %vm2450, %v4518, %v4519
  %v4521 = vrot.slane %v4192, 2
  %v4522 = vsel %vm2450, %v4519, %v4521
  %v4523 = vrot.slane %v4193, 2
  %v4524 = vsel %vm2450, %v4521, %v4523
  %v4525 = vrot.slane %v4194, 2
  %v4526 = vsel %vm2450, %v4523, %v4525
  %v4527 = vrot.slane %v4195, 2
  %v4528 = vrot.slane %v4196, 2
  %v4529 = vsel %vm2450, %v4527, %v4528
  %v4530 = vrot.slane %v4197, 2
  %v4531 = vsel %vm2450, %v4528, %v4530
  %v4532 = vrot.slane %v4198, 2
  %v4533 = vsel %vm2450, %v4530, %v4532
  %v4534 = vrot.slane %v4199, 2
  %v4535 = vsel %vm2450, %v4532, %v4534
  %v4536 = vrot.slane %v4200, 2
  %v4537 = vrot.slane %v4201, 2
  %v4538 = vsel %vm2450, %v4536, %v4537
  %v4539 = vrot.slane %v4202, 2
  %v4540 = vsel %vm2450, %v4537, %v4539
  %v4541 = vrot.slane %v4203, 2
  %v4542 = vsel %vm2450, %v4539, %v4541
  %v4543 = vrot.slane %v4204, 2
  %v4544 = vsel %vm2450, %v4541, %v4543
  %v4545 = vrot.slane %v4205, 2
  %v4546 = vrot.slane %v4206, 2
  %v4547 = vsel %vm2450, %v4545, %v4546
  %v4548 = vrot.slane %v4207, 2
  %v4549 = vsel %vm2450, %v4546, %v4548
  %v4550 = vrot.slane %v4208, 2
  %v4551 = vsel %vm2450, %v4548, %v4550
  %v4552 = vrot.slane %v4209, 2
  %v4553 = vsel %vm2450, %v4550, %v4552
  %v4554 = vrot.slane %v4210, 2
  %v4555 = vrot.slane %v4211, 2
  %v4556 = vsel %vm2450, %v4554, %v4555
  %v4557 = vrot.slane %v4212, 2
  %v4558 = vsel %vm2450, %v4555, %v4557
  %v4559 = vrot.slane %v4213, 2
  %v4560 = vsel %vm2450, %v4557, %v4559
  %v4561 = vrot.slane %v4214, 2
  %v4562 = vsel %vm2450, %v4559, %v4561
  %v4563 = vrot.slane %v4215, 2
  %v4564 = vrot.slane %v4216, 2
  %v4565 = vsel %vm2450, %v4563, %v4564
  %v4566 = vrot.slane %v4217, 2
  %v4567 = vsel %vm2450, %v4564, %v4566
  %v4568 = vrot.slane %v4218, 2
  %v4569 = vsel %vm2450, %v4566, %v4568
  %v4570 = vrot.slane %v4219, 2
  %v4571 = vsel %vm2450, %v4568, %v4570
  %v4572 = vrot.slane %v4220, 2
  %v4573 = vrot.slane %v4221, 2
  %v4574 = vsel %vm2450, %v4572, %v4573
  %v4575 = vrot.slane %v4222, 2
  %v4576 = vsel %vm2450, %v4573, %v4575
  %v4577 = vrot.slane %v4223, 2
  %v4578 = vsel %vm2450, %v4575, %v4577
  %v4579 = vrot.slane %v4224, 2
  %v4580 = vsel %vm2450, %v4577, %v4579
  %v4581 = vrot.slane %v4225, 2
  %v4582 = vrot.slane %v4226, 2
  %v4583 = vsel %vm2450, %v4581, %v4582
  %v4584 = vrot.slane %v4227, 2
  %v4585 = vsel %vm2450, %v4582, %v4584
  %v4586 = vrot.slane %v4228, 2
  %v4587 = vsel %vm2450, %v4584, %v4586
  %v4588 = vrot.slane %v4229, 2
  %v4589 = vsel %vm2450, %v4586, %v4588
  %v4590 = vrot.slane %v4230, 2
  %v4591 = vrot.slane %v4231, 2
  %v4592 = vsel %vm2450, %v4590, %v4591
  %v4593 = vrot.slane %v4232, 2
  %v4594 = vsel %vm2450, %v4591, %v4593
  %v4595 = vrot.slane %v4233, 2
  %v4596 = vsel %vm2450, %v4593, %v4595
  %v4597 = vrot.slane %v4234, 2
  %v4598 = vsel %vm2450, %v4595, %v4597
  %v4599 = vrot.slane %v4235, 2
  %v4600 = vrot.slane %v4236, 2
  %v4601 = vsel %vm2450, %v4599, %v4600
  %v4602 = vrot.slane %v4237, 2
  %v4603 = vsel %vm2450, %v4600, %v4602
  %v4604 = vrot.slane %v4238, 2
  %v4605 = vsel %vm2450, %v4602, %v4604
  %v4606 = vrot.slane %v4239, 2
  %v4607 = vsel %vm2450, %v4604, %v4606
  %v4608 = vrot.slane %v4240, 2
  %v4609 = vrot.slane %v4241, 2
  %v4610 = vsel %vm2450, %v4608, %v4609
  %v4611 = vrot.slane %v4242, 2
  %v4612 = vsel %vm2450, %v4609, %v4611
  %v4613 = vrot.slane %v4243, 2
  %v4614 = vsel %vm2450, %v4611, %v4613
  %v4615 = vrot.slane %v4244, 2
  %v4616 = vsel %vm2450, %v4613, %v4615
  %v4617 = vrot.slane %v4245, 2
  %v4618 = vrot.slane %v4246, 2
  %v4619 = vsel %vm2450, %v4617, %v4618
  %v4620 = vrot.slane %v4247, 2
  %v4621 = vsel %vm2450, %v4618, %v4620
  %v4622 = vrot.slane %v4248, 2
  %v4623 = vsel %vm2450, %v4620, %v4622
  %v4624 = vrot.slane %v4249, 2
  %v4625 = vsel %vm2450, %v4622, %v4624
  %v4626 = vrot.slane %v4250, 2
  %v4627 = vrot.slane %v4251, 2
  %v4628 = vsel %vm2450, %v4626, %v4627
  %v4629 = vrot.slane %v4252, 2
  %v4630 = vsel %vm2450, %v4627, %v4629
  %v4631 = vrot.slane %v4253, 2
  %v4632 = vsel %vm2450, %v4629, %v4631
  %v4633 = vrot.slane %v4254, 2
  %v4634 = vsel %vm2450, %v4631, %v4633
  %v4635 = vrot.slane %v4255, 2
  %v4636 = vrot.slane %v4256, 2
  %v4637 = vsel %vm2450, %v4635, %v4636
  %v4638 = vrot.slane %v4257, 2
  %v4639 = vsel %vm2450, %v4636, %v4638
  %v4640 = vrot.slane %v4258, 2
  %v4641 = vsel %vm2450, %v4638, %v4640
  %v4642 = vrot.slane %v4259, 2
  %v4643 = vsel %vm2450, %v4640, %v4642
  %v4644 = vrot.slane %v4260, 2
  %v4645 = vrot.slane %v4261, 2
  %v4646 = vsel %vm2450, %v4644, %v4645
  %v4647 = vrot.slane %v4262, 2
  %v4648 = vsel %vm2450, %v4645, %v4647
  %v4649 = vrot.slane %v4263, 2
  %v4650 = vsel %vm2450, %v4647, %v4649
  %v4651 = vrot.slane %v4264, 2
  %v4652 = vsel %vm2450, %v4649, %v4651
  %v4653 = vrot.slane %v4265, 2
  %v4654 = vrot.slane %v4266, 2
  %v4655 = vsel %vm2450, %v4653, %v4654
  %v4656 = vrot.slane %v4267, 2
  %v4657 = vsel %vm2450, %v4654, %v4656
  %v4658 = vrot.slane %v4268, 2
  %v4659 = vsel %vm2450, %v4656, %v4658
  %v4660 = vrot.slane %v4269, 2
  %v4661 = vsel %vm2450, %v4658, %v4660
  %v4662 = vrot.slane %v4270, 2
  %v4663 = vrot.slane %v4271, 2
  %v4664 = vsel %vm2450, %v4662, %v4663
  %v4665 = vrot.slane %v4272, 2
  %v4666 = vsel %vm2450, %v4663, %v4665
  %v4667 = vrot.slane %v4273, 2
  %v4668 = vsel %vm2450, %v4665, %v4667
  %v4669 = vrot.slane %v4274, 2
  %v4670 = vsel %vm2450, %v4667, %v4669
  %v4671 = vrot.slane %v4275, 2
  %v4672 = vrot.slane %v4276, 2
  %v4673 = vsel %vm2450, %v4671, %v4672
  %v4674 = vrot.slane %v4277, 2
  %v4675 = vsel %vm2450, %v4672, %v4674
  %v4676 = vrot.slane %v4278, 2
  %v4677 = vsel %vm2450, %v4674, %v4676
  %v4678 = vrot.slane %v4279, 2
  %v4679 = vsel %vm2450, %v4676, %v4678
  %v4680 = vrot.slane %v4280, 2
  %v4681 = vrot.slane %v4281, 2
  %v4682 = vsel %vm2450, %v4680, %v4681
  %v4683 = vrot.slane %v4282, 2
  %v4684 = vsel %vm2450, %v4681, %v4683
  %v4685 = vrot.slane %v4283, 2
  %v4686 = vsel %vm2450, %v4683, %v4685
  %v4687 = vrot.slane %v4284, 2
  %v4688 = vsel %vm2450, %v4685, %v4687
  %v4689 = vrot.slane %v4285, 2
  %v4690 = vrot.slane %v4286, 2
  %v4691 = vsel %vm2450, %v4689, %v4690
  %v4692 = vrot.slane %v4287, 2
  %v4693 = vsel %vm2450, %v4690, %v4692
  %v4694 = vrot.slane %v4288, 2
  %v4695 = vsel %vm2450, %v4692, %v4694
  %v4696 = vrot.slane %v4289, 2
  %v4697 = vsel %vm2450, %v4694, %v4696
  %v4698 = vrot.slane %v4290, 2
  %v4699 = vrot.slane %v4291, 2
  %v4700 = vsel %vm2450, %v4698, %v4699
  %v4701 = vrot.slane %v4292, 2
  %v4702 = vsel %vm2450, %v4699, %v4701
  %v4703 = vrot.slane %v4293, 2
  %v4704 = vsel %vm2450, %v4701, %v4703
  %v4705 = vrot.slane %v4294, 2
  %v4706 = vsel %vm2450, %v4703, %v4705
  %v4707 = vrot.slane %v4295, 2
  %v4708 = vrot.slane %v4296, 2
  %v4709 = vsel %vm2450, %v4707, %v4708
  %v4710 = vrot.slane %v4297, 2
  %v4711 = vsel %vm2450, %v4708, %v4710
  %v4712 = vrot.slane %v4298, 2
  %v4713 = vsel %vm2450, %v4710, %v4712
  %v4714 = vrot.slane %v4299, 2
  %v4715 = vsel %vm2450, %v4712, %v4714
  %v4716 = vrot.slane %v4300, 2
  %v4717 = vrot.slane %v4301, 2
  %v4718 = vsel %vm2450, %v4716, %v4717
  %v4719 = vrot.slane %v4302, 2
  %v4720 = vsel %vm2450, %v4717, %v4719
  %v4721 = vrot.slane %v4303, 2
  %v4722 = vsel %vm2450, %v4719, %v4721
  %v4723 = vrot.slane %v4304, 2
  %v4724 = vsel %vm2450, %v4721, %v4723
  %v4725 = vrot.slane %v4305, 2
  %v4726 = vrot.slane %v4306, 2
  %v4727 = vsel %vm2450, %v4725, %v4726
  %v4728 = vrot.slane %v4307, 2
  %v4729 = vsel %vm2450, %v4726, %v4728
  %v4730 = vrot.slane %v4308, 2
  %v4731 = vsel %vm2450, %v4728, %v4730
  %v4732 = vrot.slane %v4309, 2
  %v4733 = vsel %vm2450, %v4730, %v4732
  %v4734 = vrot.slane %v4310, 2
  %v4735 = vrot.slane %v4311, 2
  %v4736 = vsel %vm2450, %v4734, %v4735
  %v4737 = vrot.slane %v4312, 2
  %v4738 = vsel %vm2450, %v4735, %v4737
  %v4739 = vrot.slane %v4313, 2
  %v4740 = vsel %vm2450, %v4737, %v4739
  %v4741 = vrot.slane %v4314, 2
  %v4742 = vsel %vm2450, %v4739, %v4741
  %v4743 = vrot.slane %v4315, 2
  %v4744 = vrot.slane %v4316, 2
  %v4745 = vsel %vm2450, %v4743, %v4744
  %v4746 = vrot.slane %v4317, 2
  %v4747 = vsel %vm2450, %v4744, %v4746
  %v4748 = vrot.slane %v4318, 2
  %v4749 = vsel %vm2450, %v4746, %v4748
  %v4750 = vrot.slane %v4319, 2
  %v4751 = vsel %vm2450, %v4748, %v4750
  %v4752 = vrot.slane %v4320, 2
  %v4753 = vrot.slane %v4321, 2
  %v4754 = vsel %vm2450, %v4752, %v4753
  %v4755 = vrot.slane %v4322, 2
  %v4756 = vsel %vm2450, %v4753, %v4755
  %v4757 = vrot.slane %v4323, 2
  %v4758 = vsel %vm2450, %v4755, %v4757
  %v4759 = vrot.slane %v4324, 2
  %v4760 = vsel %vm2450, %v4757, %v4759
  %v4761 = vrot.slane %v4325, 2
  %v4762 = vrot.slane %v4326, 2
  %v4763 = vsel %vm2450, %v4761, %v4762
  %v4764 = vrot.slane %v4327, 2
  %v4765 = vsel %vm2450, %v4762, %v4764
  %v4766 = vrot.slane %v4328, 2
  %v4767 = vsel %vm2450, %v4764, %v4766
  %v4768 = vrot.slane %v4329, 2
  %v4769 = vsel %vm2450, %v4766, %v4768
  %v4770 = vrot.slane %v4330, 2
  %v4771 = vrot.slane %v4331, 2
  %v4772 = vsel %vm2450, %v4770, %v4771
  %v4773 = vrot.slane %v4332, 2
  %v4774 = vsel %vm2450, %v4771, %v4773
  %v4775 = vrot.slane %v4333, 2
  %v4776 = vsel %vm2450, %v4773, %v4775
  %v4777 = vrot.slane %v4334, 2
  %v4778 = vsel %vm2450, %v4775, %v4777
  %v4779 = vrot.slane %v4335, 2
  %v4780 = vrot.slane %v4336, 2
  %v4781 = vsel %vm2450, %v4779, %v4780
  %v4782 = vrot.slane %v4337, 2
  %v4783 = vsel %vm2450, %v4780, %v4782
  %v4784 = vrot.slane %v4338, 2
  %v4785 = vsel %vm2450, %v4782, %v4784
  %v4786 = vrot.slane %v4339, 2
  %v4787 = vsel %vm2450, %v4784, %v4786
  %v4916 = vadd.f32 %v4047, %v4502
  %v4917 = vadd.f32 %v4048, %v4504
  %v4918 = vadd.f32 %v4049, %v4506
  %v4919 = vadd.f32 %v4050, %v4508
  %v4920 = vadd.f32 %v4051, %v4511
  %v4921 = vadd.f32 %v4052, %v4513
  %v4922 = vadd.f32 %v4053, %v4515
  %v4923 = vadd.f32 %v4054, %v4517
  %v4924 = vadd.f32 %v4055, %v4520
  %v4925 = vadd.f32 %v4056, %v4522
  %v4926 = vadd.f32 %v4057, %v4524
  %v4927 = vadd.f32 %v4058, %v4526
  %v4928 = vadd.f32 %v4059, %v4529
  %v4929 = vadd.f32 %v4060, %v4531
  %v4930 = vadd.f32 %v4061, %v4533
  %v4931 = vadd.f32 %v4062, %v4535
  %v4932 = vadd.f32 %v4063, %v4538
  %v4933 = vadd.f32 %v4064, %v4540
  %v4934 = vadd.f32 %v4065, %v4542
  %v4935 = vadd.f32 %v4066, %v4544
  %v4936 = vadd.f32 %v4067, %v4547
  %v4937 = vadd.f32 %v4068, %v4549
  %v4938 = vadd.f32 %v4069, %v4551
  %v4939 = vadd.f32 %v4070, %v4553
  %v4940 = vadd.f32 %v4071, %v4556
  %v4941 = vadd.f32 %v4072, %v4558
  %v4942 = vadd.f32 %v4073, %v4560
  %v4943 = vadd.f32 %v4074, %v4562
  %v4944 = vadd.f32 %v4075, %v4565
  %v4945 = vadd.f32 %v4076, %v4567
  %v4946 = vadd.f32 %v4077, %v4569
  %v4947 = vadd.f32 %v4078, %v4571
  %v4948 = vadd.f32 %v4079, %v4574
  %v4949 = vadd.f32 %v4080, %v4576
  %v4950 = vadd.f32 %v4081, %v4578
  %v4951 = vadd.f32 %v4082, %v4580
  %v4952 = vadd.f32 %v4083, %v4583
  %v4953 = vadd.f32 %v4084, %v4585
  %v4954 = vadd.f32 %v4085, %v4587
  %v4955 = vadd.f32 %v4086, %v4589
  %v4956 = vadd.f32 %v4087, %v4592
  %v4957 = vadd.f32 %v4088, %v4594
  %v4958 = vadd.f32 %v4089, %v4596
  %v4959 = vadd.f32 %v4090, %v4598
  %v4960 = vadd.f32 %v4091, %v4601
  %v4961 = vadd.f32 %v4092, %v4603
  %v4962 = vadd.f32 %v4093, %v4605
  %v4963 = vadd.f32 %v4094, %v4607
  %v4964 = vadd.f32 %v4095, %v4610
  %v4965 = vadd.f32 %v4096, %v4612
  %v4966 = vadd.f32 %v4097, %v4614
  %v4967 = vadd.f32 %v4098, %v4616
  %v4968 = vadd.f32 %v4099, %v4619
  %v4969 = vadd.f32 %v4100, %v4621
  %v4970 = vadd.f32 %v4101, %v4623
  %v4971 = vadd.f32 %v4102, %v4625
  %v4972 = vadd.f32 %v4103, %v4628
  %v4973 = vadd.f32 %v4104, %v4630
  %v4974 = vadd.f32 %v4105, %v4632
  %v4975 = vadd.f32 %v4106, %v4634
  %v4976 = vadd.f32 %v4107, %v4637
  %v4977 = vadd.f32 %v4108, %v4639
  %v4978 = vadd.f32 %v4109, %v4641
  %v4979 = vadd.f32 %v4110, %v4643
  %v4980 = vadd.f32 %v4111, %v4646
  %v4981 = vadd.f32 %v4112, %v4648
  %v4982 = vadd.f32 %v4113, %v4650
  %v4983 = vadd.f32 %v4114, %v4652
  %v4984 = vadd.f32 %v4115, %v4655
  %v4985 = vadd.f32 %v4116, %v4657
  %v4986 = vadd.f32 %v4117, %v4659
  %v4987 = vadd.f32 %v4118, %v4661
  %v4988 = vadd.f32 %v4119, %v4664
  %v4989 = vadd.f32 %v4120, %v4666
  %v4990 = vadd.f32 %v4121, %v4668
  %v4991 = vadd.f32 %v4122, %v4670
  %v4992 = vadd.f32 %v4123, %v4673
  %v4993 = vadd.f32 %v4124, %v4675
  %v4994 = vadd.f32 %v4125, %v4677
  %v4995 = vadd.f32 %v4126, %v4679
  %v4996 = vadd.f32 %v4127, %v4682
  %v4997 = vadd.f32 %v4128, %v4684
  %v4998 = vadd.f32 %v4129, %v4686
  %v4999 = vadd.f32 %v4130, %v4688
  %v5000 = vadd.f32 %v4131, %v4691
  %v5001 = vadd.f32 %v4132, %v4693
  %v5002 = vadd.f32 %v4133, %v4695
  %v5003 = vadd.f32 %v4134, %v4697
  %v5004 = vadd.f32 %v4135, %v4700
  %v5005 = vadd.f32 %v4136, %v4702
  %v5006 = vadd.f32 %v4137, %v4704
  %v5007 = vadd.f32 %v4138, %v4706
  %v5008 = vadd.f32 %v4139, %v4709
  %v5009 = vadd.f32 %v4140, %v4711
  %v5010 = vadd.f32 %v4141, %v4713
  %v5011 = vadd.f32 %v4142, %v4715
  %v5012 = vadd.f32 %v4143, %v4718
  %v5013 = vadd.f32 %v4144, %v4720
  %v5014 = vadd.f32 %v4145, %v4722
  %v5015 = vadd.f32 %v4146, %v4724
  %v5016 = vadd.f32 %v4147, %v4727
  %v5017 = vadd.f32 %v4148, %v4729
  %v5018 = vadd.f32 %v4149, %v4731
  %v5019 = vadd.f32 %v4150, %v4733
  %v5020 = vadd.f32 %v4151, %v4736
  %v5021 = vadd.f32 %v4152, %v4738
  %v5022 = vadd.f32 %v4153, %v4740
  %v5023 = vadd.f32 %v4154, %v4742
  %v5024 = vadd.f32 %v4155, %v4745
  %v5025 = vadd.f32 %v4156, %v4747
  %v5026 = vadd.f32 %v4157, %v4749
  %v5027 = vadd.f32 %v4158, %v4751
  %v5028 = vadd.f32 %v4159, %v4754
  %v5029 = vadd.f32 %v4160, %v4756
  %v5030 = vadd.f32 %v4161, %v4758
  %v5031 = vadd.f32 %v4162, %v4760
  %v5032 = vadd.f32 %v4163, %v4763
  %v5033 = vadd.f32 %v4164, %v4765
  %v5034 = vadd.f32 %v4165, %v4767
  %v5035 = vadd.f32 %v4166, %v4769
  %v5036 = vadd.f32 %v4167, %v4772
  %v5037 = vadd.f32 %v4168, %v4774
  %v5038 = vadd.f32 %v4169, %v4776
  %v5039 = vadd.f32 %v4170, %v4778
  %v5040 = vadd.f32 %v4171, %v4781
  %v5041 = vadd.f32 %v4172, %v4783
  %v5042 = vadd.f32 %v4173, %v4785
  %v5043 = vadd.f32 %v4174, %v4787
  %v5044 = vld [vmem:[%s1 + $0x6] sm:$0x1]
  %5046 = vset.pattern.permute.xlu0 0
  %5047 = vperm.xlu0 %5046, %v99
  %v5048 = vpop.permute.xlu0 %5047
  %5051 = vset.pattern.permute.xlu0 0
  %5052 = vperm.xlu0 %5051, %v100
  %v5053 = vpop.permute.xlu0 %5052
  %5056 = vset.pattern.permute.xlu0 0
  %5057 = vperm.xlu0 %5056, %v101
  %v5058 = vpop.permute.xlu0 %5057
  %5061 = vset.pattern.permute.xlu0 0
  %5062 = vperm.xlu0 %5061, %v102
  %v5063 = vpop.permute.xlu0 %5062
  %5066 = vset.pattern.permute.xlu0 0
  %5067 = vperm.xlu0 %5066, %v189
  %v5068 = vpop.permute.xlu0 %5067
  %5071 = vset.pattern.permute.xlu0 0
  %5072 = vperm.xlu0 %5071, %v190
  %v5073 = vpop.permute.xlu0 %5072
  %5076 = vset.pattern.permute.xlu0 0
  %5077 = vperm.xlu0 %5076, %v191
  %v5078 = vpop.permute.xlu0 %5077
  %5081 = vset.pattern.permute.xlu0 0
  %5082 = vperm.xlu0 %5081, %v192
  %v5083 = vpop.permute.xlu0 %5082
  %v5085 = vlaneseq
  %v5086 = vshrl.u32 %v5085, 7
  %v5087 = vsub.s32 0, %v5086
  %v5088 = vrot.slane %v5044, %v5087
  %v5089 = vmul.f32 %v238, %v5088
  %v5090 = vmul.f32 %v243, %v5088
  %v5091 = vmul.f32 %v248, %v5088
  %v5092 = vmul.f32 %v253, %v5088
  %v5093 = vmul.f32 %v258, %v5088
  %v5094 = vmul.f32 %v263, %v5088
  %v5095 = vmul.f32 %v268, %v5088
  %v5096 = vmul.f32 %v273, %v5088
  %v5097 = vmul.f32 %v278, %v5088
  %v5098 = vmul.f32 %v283, %v5088
  %v5099 = vmul.f32 %v288, %v5088
  %v5100 = vmul.f32 %v293, %v5088
  %v5101 = vmul.f32 %v298, %v5088
  %v5102 = vmul.f32 %v303, %v5088
  %v5103 = vmul.f32 %v308, %v5088
  %v5104 = vmul.f32 %v313, %v5088
  %v5105 = vmul.f32 %v318, %v5088
  %v5106 = vmul.f32 %v323, %v5088
  %v5107 = vmul.f32 %v328, %v5088
  %v5108 = vmul.f32 %v333, %v5088
  %v5109 = vmul.f32 %v338, %v5088
  %v5110 = vmul.f32 %v343, %v5088
  %v5111 = vmul.f32 %v348, %v5088
  %v5112 = vmul.f32 %v353, %v5088
  %v5113 = vmul.f32 %v358, %v5088
  %v5114 = vmul.f32 %v363, %v5088
  %v5115 = vmul.f32 %v368, %v5088
  %v5116 = vmul.f32 %v373, %v5088
  %v5117 = vmul.f32 %v378, %v5088
  %v5118 = vmul.f32 %v383, %v5088
  %v5119 = vmul.f32 %v388, %v5088
  %v5120 = vmul.f32 %v393, %v5088
  %v5121 = vmul.f32 %v398, %v5088
  %v5122 = vmul.f32 %v403, %v5088
  %v5123 = vmul.f32 %v408, %v5088
  %v5124 = vmul.f32 %v413, %v5088
  %v5125 = vmul.f32 %v418, %v5088
  %v5126 = vmul.f32 %v423, %v5088
  %v5127 = vmul.f32 %v428, %v5088
  %v5128 = vmul.f32 %v433, %v5088
  %v5129 = vmul.f32 %v438, %v5088
  %v5130 = vmul.f32 %v443, %v5088
  %v5131 = vmul.f32 %v448, %v5088
  %v5132 = vmul.f32 %v453, %v5088
  %v5133 = vmul.f32 %v458, %v5088
  %v5134 = vmul.f32 %v463, %v5088
  %v5135 = vmul.f32 %v468, %v5088
  %v5136 = vmul.f32 %v473, %v5088
  %v5137 = vmul.f32 %v478, %v5088
  %v5138 = vmul.f32 %v483, %v5088
  %v5139 = vmul.f32 %v488, %v5088
  %v5140 = vmul.f32 %v493, %v5088
  %v5141 = vmul.f32 %v498, %v5088
  %v5142 = vmul.f32 %v503, %v5088
  %v5143 = vmul.f32 %v508, %v5088
  %v5144 = vmul.f32 %v513, %v5088
  %v5145 = vmul.f32 %v2999, %v5088
  %v5146 = vmul.f32 %v3004, %v5088
  %v5147 = vmul.f32 %v3009, %v5088
  %v5148 = vmul.f32 %v3014, %v5088
  %v5149 = vmul.f32 %v5048, %v5088
  %v5150 = vmul.f32 %v5053, %v5088
  %v5151 = vmul.f32 %v5058, %v5088
  %v5152 = vmul.f32 %v5063, %v5088
  %v5153 = vmul.f32 %v558, %v5088
  %v5154 = vmul.f32 %v563, %v5088
  %v5155 = vmul.f32 %v568, %v5088
  %v5156 = vmul.f32 %v573, %v5088
  %v5157 = vmul.f32 %v578, %v5088
  %v5158 = vmul.f32 %v583, %v5088
  %v5159 = vmul.f32 %v588, %v5088
  %v5160 = vmul.f32 %v593, %v5088
  %v5161 = vmul.f32 %v598, %v5088
  %v5162 = vmul.f32 %v603, %v5088
  %v5163 = vmul.f32 %v608, %v5088
  %v5164 = vmul.f32 %v613, %v5088
  %v5165 = vmul.f32 %v618, %v5088
  %v5166 = vmul.f32 %v623, %v5088
  %v5167 = vmul.f32 %v628, %v5088
  %v5168 = vmul.f32 %v633, %v5088
  %v5169 = vmul.f32 %v638, %v5088
  %v5170 = vmul.f32 %v643, %v5088
  %v5171 = vmul.f32 %v648, %v5088
  %v5172 = vmul.f32 %v653, %v5088
  %v5173 = vmul.f32 %v658, %v5088
  %v5174 = vmul.f32 %v663, %v5088
  %v5175 = vmul.f32 %v668, %v5088
  %v5176 = vmul.f32 %v673, %v5088
  %v5177 = vmul.f32 %v678, %v5088
  %v5178 = vmul.f32 %v683, %v5088
  %v5179 = vmul.f32 %v688, %v5088
  %v5180 = vmul.f32 %v693, %v5088
  %v5181 = vmul.f32 %v698, %v5088
  %v5182 = vmul.f32 %v703, %v5088
  %v5183 = vmul.f32 %v708, %v5088
  %v5184 = vmul.f32 %v713, %v5088
  %v5185 = vmul.f32 %v718, %v5088
  %v5186 = vmul.f32 %v723, %v5088
  %v5187 = vmul.f32 %v728, %v5088
  %v5188 = vmul.f32 %v733, %v5088
  %v5189 = vmul.f32 %v738, %v5088
  %v5190 = vmul.f32 %v743, %v5088
  %v5191 = vmul.f32 %v748, %v5088
  %v5192 = vmul.f32 %v753, %v5088
  %v5193 = vmul.f32 %v758, %v5088
  %v5194 = vmul.f32 %v763, %v5088
  %v5195 = vmul.f32 %v768, %v5088
  %v5196 = vmul.f32 %v773, %v5088
  %v5197 = vmul.f32 %v778, %v5088
  %v5198 = vmul.f32 %v783, %v5088
  %v5199 = vmul.f32 %v788, %v5088
  %v5200 = vmul.f32 %v793, %v5088
  %v5201 = vmul.f32 %v798, %v5088
  %v5202 = vmul.f32 %v803, %v5088
  %v5203 = vmul.f32 %v808, %v5088
  %v5204 = vmul.f32 %v813, %v5088
  %v5205 = vmul.f32 %v818, %v5088
  %v5206 = vmul.f32 %v823, %v5088
  %v5207 = vmul.f32 %v828, %v5088
  %v5208 = vmul.f32 %v833, %v5088
  %v5209 = vmul.f32 %v3019, %v5088
  %v5210 = vmul.f32 %v3024, %v5088
  %v5211 = vmul.f32 %v3029, %v5088
  %v5212 = vmul.f32 %v3034, %v5088
  %v5213 = vmul.f32 %v5068, %v5088
  %v5214 = vmul.f32 %v5073, %v5088
  %v5215 = vmul.f32 %v5078, %v5088
  %v5216 = vmul.f32 %v5083, %v5088
  %v5217 = vadd.f32 %v4916, %v5089
  %v5218 = vadd.f32 %v4917, %v5090
  %v5219 = vadd.f32 %v4918, %v5091
  %v5220 = vadd.f32 %v4919, %v5092
  %v5221 = vadd.f32 %v4920, %v5093
  %v5222 = vadd.f32 %v4921, %v5094
  %v5223 = vadd.f32 %v4922, %v5095
  %v5224 = vadd.f32 %v4923, %v5096
  %v5225 = vadd.f32 %v4924, %v5097
  %v5226 = vadd.f32 %v4925, %v5098
  %v5227 = vadd.f32 %v4926, %v5099
  %v5228 = vadd.f32 %v4927, %v5100
  %v5229 = vadd.f32 %v4928, %v5101
  %v5230 = vadd.f32 %v4929, %v5102
  %v5231 = vadd.f32 %v4930, %v5103
  %v5232 = vadd.f32 %v4931, %v5104
  %v5233 = vadd.f32 %v4932, %v5105
  %v5234 = vadd.f32 %v4933, %v5106
  %v5235 = vadd.f32 %v4934, %v5107
  %v5236 = vadd.f32 %v4935, %v5108
  %v5237 = vadd.f32 %v4936, %v5109
  %v5238 = vadd.f32 %v4937, %v5110
  %v5239 = vadd.f32 %v4938, %v5111
  %v5240 = vadd.f32 %v4939, %v5112
  %v5241 = vadd.f32 %v4940, %v5113
  %v5242 = vadd.f32 %v4941, %v5114
  %v5243 = vadd.f32 %v4942, %v5115
  %v5244 = vadd.f32 %v4943, %v5116
  %v5245 = vadd.f32 %v4944, %v5117
  %v5246 = vadd.f32 %v4945, %v5118
  %v5247 = vadd.f32 %v4946, %v5119
  %v5248 = vadd.f32 %v4947, %v5120
  %v5249 = vadd.f32 %v4948, %v5121
  %v5250 = vadd.f32 %v4949, %v5122
  %v5251 = vadd.f32 %v4950, %v5123
  %v5252 = vadd.f32 %v4951, %v5124
  %v5253 = vadd.f32 %v4952, %v5125
  %v5254 = vadd.f32 %v4953, %v5126
  %v5255 = vadd.f32 %v4954, %v5127
  %v5256 = vadd.f32 %v4955, %v5128
  %v5257 = vadd.f32 %v4956, %v5129
  %v5258 = vadd.f32 %v4957, %v5130
  %v5259 = vadd.f32 %v4958, %v5131
  %v5260 = vadd.f32 %v4959, %v5132
  %v5261 = vadd.f32 %v4960, %v5133
  %v5262 = vadd.f32 %v4961, %v5134
  %v5263 = vadd.f32 %v4962, %v5135
  %v5264 = vadd.f32 %v4963, %v5136
  %v5265 = vadd.f32 %v4964, %v5137
  %v5266 = vadd.f32 %v4965, %v5138
  %v5267 = vadd.f32 %v4966, %v5139
  %v5268 = vadd.f32 %v4967, %v5140
  %v5269 = vadd.f32 %v4968, %v5141
  %v5270 = vadd.f32 %v4969, %v5142
  %v5271 = vadd.f32 %v4970, %v5143
  %v5272 = vadd.f32 %v4971, %v5144
  %v5273 = vadd.f32 %v4972, %v5145
  %v5274 = vadd.f32 %v4973, %v5146
  %v5275 = vadd.f32 %v4974, %v5147
  %v5276 = vadd.f32 %v4975, %v5148
  %v5277 = vadd.f32 %v4976, %v5149
  %v5278 = vadd.f32 %v4977, %v5150
  %v5279 = vadd.f32 %v4978, %v5151
  %v5280 = vadd.f32 %v4979, %v5152
  %v5281 = vadd.f32 %v4980, %v5153
  %v5282 = vadd.f32 %v4981, %v5154
  %v5283 = vadd.f32 %v4982, %v5155
  %v5284 = vadd.f32 %v4983, %v5156
  %v5285 = vadd.f32 %v4984, %v5157
  %v5286 = vadd.f32 %v4985, %v5158
  %v5287 = vadd.f32 %v4986, %v5159
  %v5288 = vadd.f32 %v4987, %v5160
  %v5289 = vadd.f32 %v4988, %v5161
  %v5290 = vadd.f32 %v4989, %v5162
  %v5291 = vadd.f32 %v4990, %v5163
  %v5292 = vadd.f32 %v4991, %v5164
  %v5293 = vadd.f32 %v4992, %v5165
  %v5294 = vadd.f32 %v4993, %v5166
  %v5295 = vadd.f32 %v4994, %v5167
  %v5296 = vadd.f32 %v4995, %v5168
  %v5297 = vadd.f32 %v4996, %v5169
  %v5298 = vadd.f32 %v4997, %v5170
  %v5299 = vadd.f32 %v4998, %v5171
  %v5300 = vadd.f32 %v4999, %v5172
  %v5301 = vadd.f32 %v5000, %v5173
  %v5302 = vadd.f32 %v5001, %v5174
  %v5303 = vadd.f32 %v5002, %v5175
  %v5304 = vadd.f32 %v5003, %v5176
  %v5305 = vadd.f32 %v5004, %v5177
  %v5306 = vadd.f32 %v5005, %v5178
  %v5307 = vadd.f32 %v5006, %v5179
  %v5308 = vadd.f32 %v5007, %v5180
  %v5309 = vadd.f32 %v5008, %v5181
  %v5310 = vadd.f32 %v5009, %v5182
  %v5311 = vadd.f32 %v5010, %v5183
  %v5312 = vadd.f32 %v5011, %v5184
  %v5313 = vadd.f32 %v5012, %v5185
  %v5314 = vadd.f32 %v5013, %v5186
  %v5315 = vadd.f32 %v5014, %v5187
  %v5316 = vadd.f32 %v5015, %v5188
  %v5317 = vadd.f32 %v5016, %v5189
  %v5318 = vadd.f32 %v5017, %v5190
  %v5319 = vadd.f32 %v5018, %v5191
  %v5320 = vadd.f32 %v5019, %v5192
  %v5321 = vadd.f32 %v5020, %v5193
  %v5322 = vadd.f32 %v5021, %v5194
  %v5323 = vadd.f32 %v5022, %v5195
  %v5324 = vadd.f32 %v5023, %v5196
  %v5325 = vadd.f32 %v5024, %v5197
  %v5326 = vadd.f32 %v5025, %v5198
  %v5327 = vadd.f32 %v5026, %v5199
  %v5328 = vadd.f32 %v5027, %v5200
  %v5329 = vadd.f32 %v5028, %v5201
  %v5330 = vadd.f32 %v5029, %v5202
  %v5331 = vadd.f32 %v5030, %v5203
  %v5332 = vadd.f32 %v5031, %v5204
  %v5333 = vadd.f32 %v5032, %v5205
  %v5334 = vadd.f32 %v5033, %v5206
  %v5335 = vadd.f32 %v5034, %v5207
  %v5336 = vadd.f32 %v5035, %v5208
  %v5337 = vadd.f32 %v5036, %v5209
  %v5338 = vadd.f32 %v5037, %v5210
  %v5339 = vadd.f32 %v5038, %v5211
  %v5340 = vadd.f32 %v5039, %v5212
  %v5341 = vadd.f32 %v5040, %v5213
  %v5342 = vadd.f32 %v5041, %v5214
  %v5343 = vadd.f32 %v5042, %v5215
  %v5344 = vadd.f32 %v5043, %v5216
  %v5345 = vld [vmem:[%s1 + $0x7] sm:$0x1]
  %5347 = vset.pattern.permute.xlu0 0
  %5348 = vperm.xlu0 %5347, %v103
  %v5349 = vpop.permute.xlu0 %5348
  %5352 = vset.pattern.permute.xlu0 0
  %5353 = vperm.xlu0 %5352, %v193
  %v5354 = vpop.permute.xlu0 %5353
  %v5356 = vlaneseq
  %v5357 = vshrl.u32 %v5356, 7
  %v5358 = vsub.s32 0, %v5357
  %v5359 = vrot.slane %v5345, %v5358
  %v5360 = vmul.f32 %v238, %v5359
  %v5361 = vmul.f32 %v243, %v5359
  %v5362 = vmul.f32 %v248, %v5359
  %v5363 = vmul.f32 %v253, %v5359
  %v5364 = vmul.f32 %v1109, %v5359
  %v5365 = vmul.f32 %v258, %v5359
  %v5366 = vmul.f32 %v263, %v5359
  %v5367 = vmul.f32 %v268, %v5359
  %v5368 = vmul.f32 %v273, %v5359
  %v5369 = vmul.f32 %v1114, %v5359
  %v5370 = vmul.f32 %v278, %v5359
  %v5371 = vmul.f32 %v283, %v5359
  %v5372 = vmul.f32 %v288, %v5359
  %v5373 = vmul.f32 %v293, %v5359
  %v5374 = vmul.f32 %v1119, %v5359
  %v5375 = vmul.f32 %v298, %v5359
  %v5376 = vmul.f32 %v303, %v5359
  %v5377 = vmul.f32 %v308, %v5359
  %v5378 = vmul.f32 %v313, %v5359
  %v5379 = vmul.f32 %v1124, %v5359
  %v5380 = vmul.f32 %v318, %v5359
  %v5381 = vmul.f32 %v323, %v5359
  %v5382 = vmul.f32 %v328, %v5359
  %v5383 = vmul.f32 %v333, %v5359
  %v5384 = vmul.f32 %v1129, %v5359
  %v5385 = vmul.f32 %v338, %v5359
  %v5386 = vmul.f32 %v343, %v5359
  %v5387 = vmul.f32 %v348, %v5359
  %v5388 = vmul.f32 %v353, %v5359
  %v5389 = vmul.f32 %v1134, %v5359
  %v5390 = vmul.f32 %v358, %v5359
  %v5391 = vmul.f32 %v363, %v5359
  %v5392 = vmul.f32 %v368, %v5359
  %v5393 = vmul.f32 %v373, %v5359
  %v5394 = vmul.f32 %v1139, %v5359
  %v5395 = vmul.f32 %v378, %v5359
  %v5396 = vmul.f32 %v383, %v5359
  %v5397 = vmul.f32 %v388, %v5359
  %v5398 = vmul.f32 %v393, %v5359
  %v5399 = vmul.f32 %v1144, %v5359
  %v5400 = vmul.f32 %v398, %v5359
  %v5401 = vmul.f32 %v403, %v5359
  %v5402 = vmul.f32 %v408, %v5359
  %v5403 = vmul.f32 %v413, %v5359
  %v5404 = vmul.f32 %v1149, %v5359
  %v5405 = vmul.f32 %v418, %v5359
  %v5406 = vmul.f32 %v423, %v5359
  %v5407 = vmul.f32 %v428, %v5359
  %v5408 = vmul.f32 %v433, %v5359
  %v5409 = vmul.f32 %v1154, %v5359
  %v5410 = vmul.f32 %v438, %v5359
  %v5411 = vmul.f32 %v443, %v5359
  %v5412 = vmul.f32 %v448, %v5359
  %v5413 = vmul.f32 %v453, %v5359
  %v5414 = vmul.f32 %v1159, %v5359
  %v5415 = vmul.f32 %v458, %v5359
  %v5416 = vmul.f32 %v463, %v5359
  %v5417 = vmul.f32 %v468, %v5359
  %v5418 = vmul.f32 %v473, %v5359
  %v5419 = vmul.f32 %v1164, %v5359
  %v5420 = vmul.f32 %v478, %v5359
  %v5421 = vmul.f32 %v483, %v5359
  %v5422 = vmul.f32 %v488, %v5359
  %v5423 = vmul.f32 %v493, %v5359
  %v5424 = vmul.f32 %v1169, %v5359
  %v5425 = vmul.f32 %v498, %v5359
  %v5426 = vmul.f32 %v503, %v5359
  %v5427 = vmul.f32 %v508, %v5359
  %v5428 = vmul.f32 %v513, %v5359
  %v5429 = vmul.f32 %v1174, %v5359
  %v5430 = vmul.f32 %v2999, %v5359
  %v5431 = vmul.f32 %v3004, %v5359
  %v5432 = vmul.f32 %v3009, %v5359
  %v5433 = vmul.f32 %v3014, %v5359
  %v5434 = vmul.f32 %v3300, %v5359
  %v5435 = vmul.f32 %v5048, %v5359
  %v5436 = vmul.f32 %v5053, %v5359
  %v5437 = vmul.f32 %v5058, %v5359
  %v5438 = vmul.f32 %v5063, %v5359
  %v5439 = vmul.f32 %v5349, %v5359
  %v5440 = vmul.f32 %v558, %v5359
  %v5441 = vmul.f32 %v563, %v5359
  %v5442 = vmul.f32 %v568, %v5359
  %v5443 = vmul.f32 %v573, %v5359
  %v5444 = vmul.f32 %v1189, %v5359
  %v5445 = vmul.f32 %v578, %v5359
  %v5446 = vmul.f32 %v583, %v5359
  %v5447 = vmul.f32 %v588, %v5359
  %v5448 = vmul.f32 %v593, %v5359
  %v5449 = vmul.f32 %v1194, %v5359
  %v5450 = vmul.f32 %v598, %v5359
  %v5451 = vmul.f32 %v603, %v5359
  %v5452 = vmul.f32 %v608, %v5359
  %v5453 = vmul.f32 %v613, %v5359
  %v5454 = vmul.f32 %v1199, %v5359
  %v5455 = vmul.f32 %v618, %v5359
  %v5456 = vmul.f32 %v623, %v5359
  %v5457 = vmul.f32 %v628, %v5359
  %v5458 = vmul.f32 %v633, %v5359
  %v5459 = vmul.f32 %v1204, %v5359
  %v5460 = vmul.f32 %v638, %v5359
  %v5461 = vmul.f32 %v643, %v5359
  %v5462 = vmul.f32 %v648, %v5359
  %v5463 = vmul.f32 %v653, %v5359
  %v5464 = vmul.f32 %v1209, %v5359
  %v5465 = vmul.f32 %v658, %v5359
  %v5466 = vmul.f32 %v663, %v5359
  %v5467 = vmul.f32 %v668, %v5359
  %v5468 = vmul.f32 %v673, %v5359
  %v5469 = vmul.f32 %v1214, %v5359
  %v5470 = vmul.f32 %v678, %v5359
  %v5471 = vmul.f32 %v683, %v5359
  %v5472 = vmul.f32 %v688, %v5359
  %v5473 = vmul.f32 %v693, %v5359
  %v5474 = vmul.f32 %v1219, %v5359
  %v5475 = vmul.f32 %v698, %v5359
  %v5476 = vmul.f32 %v703, %v5359
  %v5477 = vmul.f32 %v708, %v5359
  %v5478 = vmul.f32 %v713, %v5359
  %v5479 = vmul.f32 %v1224, %v5359
  %v5480 = vmul.f32 %v718, %v5359
  %v5481 = vmul.f32 %v723, %v5359
  %v5482 = vmul.f32 %v728, %v5359
  %v5483 = vmul.f32 %v733, %v5359
  %v5484 = vmul.f32 %v1229, %v5359
  %v5485 = vmul.f32 %v738, %v5359
  %v5486 = vmul.f32 %v743, %v5359
  %v5487 = vmul.f32 %v748, %v5359
  %v5488 = vmul.f32 %v753, %v5359
  %v5489 = vmul.f32 %v1234, %v5359
  %v5490 = vmul.f32 %v758, %v5359
  %v5491 = vmul.f32 %v763, %v5359
  %v5492 = vmul.f32 %v768, %v5359
  %v5493 = vmul.f32 %v773, %v5359
  %v5494 = vmul.f32 %v1239, %v5359
  %v5495 = vmul.f32 %v778, %v5359
  %v5496 = vmul.f32 %v783, %v5359
  %v5497 = vmul.f32 %v788, %v5359
  %v5498 = vmul.f32 %v793, %v5359
  %v5499 = vmul.f32 %v1244, %v5359
  %v5500 = vmul.f32 %v798, %v5359
  %v5501 = vmul.f32 %v803, %v5359
  %v5502 = vmul.f32 %v808, %v5359
  %v5503 = vmul.f32 %v813, %v5359
  %v5504 = vmul.f32 %v1249, %v5359
  %v5505 = vmul.f32 %v818, %v5359
  %v5506 = vmul.f32 %v823, %v5359
  %v5507 = vmul.f32 %v828, %v5359
  %v5508 = vmul.f32 %v833, %v5359
  %v5509 = vmul.f32 %v1254, %v5359
  %v5510 = vmul.f32 %v3019, %v5359
  %v5511 = vmul.f32 %v3024, %v5359
  %v5512 = vmul.f32 %v3029, %v5359
  %v5513 = vmul.f32 %v3034, %v5359
  %v5514 = vmul.f32 %v3305, %v5359
  %v5515 = vmul.f32 %v5068, %v5359
  %v5516 = vmul.f32 %v5073, %v5359
  %v5517 = vmul.f32 %v5078, %v5359
  %v5518 = vmul.f32 %v5083, %v5359
  %v5519 = vmul.f32 %v5354, %v5359
  %v5680 = vrot.slane %v5360, 1
  %v5681 = vrot.slane %v5361, 1
  %v5682 = vsel %vm1580, %v5680, %v5681
  %v5683 = vrot.slane %v5362, 1
  %v5684 = vsel %vm1580, %v5681, %v5683
  %v5685 = vrot.slane %v5363, 1
  %v5686 = vsel %vm1580, %v5683, %v5685
  %v5687 = vrot.slane %v5364, 1
  %v5688 = vsel %vm1580, %v5685, %v5687
  %v5689 = vrot.slane %v5365, 1
  %v5690 = vrot.slane %v5366, 1
  %v5691 = vsel %vm1580, %v5689, %v5690
  %v5692 = vrot.slane %v5367, 1
  %v5693 = vsel %vm1580, %v5690, %v5692
  %v5694 = vrot.slane %v5368, 1
  %v5695 = vsel %vm1580, %v5692, %v5694
  %v5696 = vrot.slane %v5369, 1
  %v5697 = vsel %vm1580, %v5694, %v5696
  %v5698 = vrot.slane %v5370, 1
  %v5699 = vrot.slane %v5371, 1
  %v5700 = vsel %vm1580, %v5698, %v5699
  %v5701 = vrot.slane %v5372, 1
  %v5702 = vsel %vm1580, %v5699, %v5701
  %v5703 = vrot.slane %v5373, 1
  %v5704 = vsel %vm1580, %v5701, %v5703
  %v5705 = vrot.slane %v5374, 1
  %v5706 = vsel %vm1580, %v5703, %v5705
  %v5707 = vrot.slane %v5375, 1
  %v5708 = vrot.slane %v5376, 1
  %v5709 = vsel %vm1580, %v5707, %v5708
  %v5710 = vrot.slane %v5377, 1
  %v5711 = vsel %vm1580, %v5708, %v5710
  %v5712 = vrot.slane %v5378, 1
  %v5713 = vsel %vm1580, %v5710, %v5712
  %v5714 = vrot.slane %v5379, 1
  %v5715 = vsel %vm1580, %v5712, %v5714
  %v5716 = vrot.slane %v5380, 1
  %v5717 = vrot.slane %v5381, 1
  %v5718 = vsel %vm1580, %v5716, %v5717
  %v5719 = vrot.slane %v5382, 1
  %v5720 = vsel %vm1580, %v5717, %v5719
  %v5721 = vrot.slane %v5383, 1
  %v5722 = vsel %vm1580, %v5719, %v5721
  %v5723 = vrot.slane %v5384, 1
  %v5724 = vsel %vm1580, %v5721, %v5723
  %v5725 = vrot.slane %v5385, 1
  %v5726 = vrot.slane %v5386, 1
  %v5727 = vsel %vm1580, %v5725, %v5726
  %v5728 = vrot.slane %v5387, 1
  %v5729 = vsel %vm1580, %v5726, %v5728
  %v5730 = vrot.slane %v5388, 1
  %v5731 = vsel %vm1580, %v5728, %v5730
  %v5732 = vrot.slane %v5389, 1
  %v5733 = vsel %vm1580, %v5730, %v5732
  %v5734 = vrot.slane %v5390, 1
  %v5735 = vrot.slane %v5391, 1
  %v5736 = vsel %vm1580, %v5734, %v5735
  %v5737 = vrot.slane %v5392, 1
  %v5738 = vsel %vm1580, %v5735, %v5737
  %v5739 = vrot.slane %v5393, 1
  %v5740 = vsel %vm1580, %v5737, %v5739
  %v5741 = vrot.slane %v5394, 1
  %v5742 = vsel %vm1580, %v5739, %v5741
  %v5743 = vrot.slane %v5395, 1
  %v5744 = vrot.slane %v5396, 1
  %v5745 = vsel %vm1580, %v5743, %v5744
  %v5746 = vrot.slane %v5397, 1
  %v5747 = vsel %vm1580, %v5744, %v5746
  %v5748 = vrot.slane %v5398, 1
  %v5749 = vsel %vm1580, %v5746, %v5748
  %v5750 = vrot.slane %v5399, 1
  %v5751 = vsel %vm1580, %v5748, %v5750
  %v5752 = vrot.slane %v5400, 1
  %v5753 = vrot.slane %v5401, 1
  %v5754 = vsel %vm1580, %v5752, %v5753
  %v5755 = vrot.slane %v5402, 1
  %v5756 = vsel %vm1580, %v5753, %v5755
  %v5757 = vrot.slane %v5403, 1
  %v5758 = vsel %vm1580, %v5755, %v5757
  %v5759 = vrot.slane %v5404, 1
  %v5760 = vsel %vm1580, %v5757, %v5759
  %v5761 = vrot.slane %v5405, 1
  %v5762 = vrot.slane %v5406, 1
  %v5763 = vsel %vm1580, %v5761, %v5762
  %v5764 = vrot.slane %v5407, 1
  %v5765 = vsel %vm1580, %v5762, %v5764
  %v5766 = vrot.slane %v5408, 1
  %v5767 = vsel %vm1580, %v5764, %v5766
  %v5768 = vrot.slane %v5409, 1
  %v5769 = vsel %vm1580, %v5766, %v5768
  %v5770 = vrot.slane %v5410, 1
  %v5771 = vrot.slane %v5411, 1
  %v5772 = vsel %vm1580, %v5770, %v5771
  %v5773 = vrot.slane %v5412, 1
  %v5774 = vsel %vm1580, %v5771, %v5773
  %v5775 = vrot.slane %v5413, 1
  %v5776 = vsel %vm1580, %v5773, %v5775
  %v5777 = vrot.slane %v5414, 1
  %v5778 = vsel %vm1580, %v5775, %v5777
  %v5779 = vrot.slane %v5415, 1
  %v5780 = vrot.slane %v5416, 1
  %v5781 = vsel %vm1580, %v5779, %v5780
  %v5782 = vrot.slane %v5417, 1
  %v5783 = vsel %vm1580, %v5780, %v5782
  %v5784 = vrot.slane %v5418, 1
  %v5785 = vsel %vm1580, %v5782, %v5784
  %v5786 = vrot.slane %v5419, 1
  %v5787 = vsel %vm1580, %v5784, %v5786
  %v5788 = vrot.slane %v5420, 1
  %v5789 = vrot.slane %v5421, 1
  %v5790 = vsel %vm1580, %v5788, %v5789
  %v5791 = vrot.slane %v5422, 1
  %v5792 = vsel %vm1580, %v5789, %v5791
  %v5793 = vrot.slane %v5423, 1
  %v5794 = vsel %vm1580, %v5791, %v5793
  %v5795 = vrot.slane %v5424, 1
  %v5796 = vsel %vm1580, %v5793, %v5795
  %v5797 = vrot.slane %v5425, 1
  %v5798 = vrot.slane %v5426, 1
  %v5799 = vsel %vm1580, %v5797, %v5798
  %v5800 = vrot.slane %v5427, 1
  %v5801 = vsel %vm1580, %v5798, %v5800
  %v5802 = vrot.slane %v5428, 1
  %v5803 = vsel %vm1580, %v5800, %v5802
  %v5804 = vrot.slane %v5429, 1
  %v5805 = vsel %vm1580, %v5802, %v5804
  %v5806 = vrot.slane %v5430, 1
  %v5807 = vrot.slane %v5431, 1
  %v5808 = vsel %vm1580, %v5806, %v5807
  %v5809 = vrot.slane %v5432, 1
  %v5810 = vsel %vm1580, %v5807, %v5809
  %v5811 = vrot.slane %v5433, 1
  %v5812 = vsel %vm1580, %v5809, %v5811
  %v5813 = vrot.slane %v5434, 1
  %v5814 = vsel %vm1580, %v5811, %v5813
  %v5815 = vrot.slane %v5435, 1
  %v5816 = vrot.slane %v5436, 1
  %v5817 = vsel %vm1580, %v5815, %v5816
  %v5818 = vrot.slane %v5437, 1
  %v5819 = vsel %vm1580, %v5816, %v5818
  %v5820 = vrot.slane %v5438, 1
  %v5821 = vsel %vm1580, %v5818, %v5820
  %v5822 = vrot.slane %v5439, 1
  %v5823 = vsel %vm1580, %v5820, %v5822
  %v5824 = vrot.slane %v5440, 1
  %v5825 = vrot.slane %v5441, 1
  %v5826 = vsel %vm1580, %v5824, %v5825
  %v5827 = vrot.slane %v5442, 1
  %v5828 = vsel %vm1580, %v5825, %v5827
  %v5829 = vrot.slane %v5443, 1
  %v5830 = vsel %vm1580, %v5827, %v5829
  %v5831 = vrot.slane %v5444, 1
  %v5832 = vsel %vm1580, %v5829, %v5831
  %v5833 = vrot.slane %v5445, 1
  %v5834 = vrot.slane %v5446, 1
  %v5835 = vsel %vm1580, %v5833, %v5834
  %v5836 = vrot.slane %v5447, 1
  %v5837 = vsel %vm1580, %v5834, %v5836
  %v5838 = vrot.slane %v5448, 1
  %v5839 = vsel %vm1580, %v5836, %v5838
  %v5840 = vrot.slane %v5449, 1
  %v5841 = vsel %vm1580, %v5838, %v5840
  %v5842 = vrot.slane %v5450, 1
  %v5843 = vrot.slane %v5451, 1
  %v5844 = vsel %vm1580, %v5842, %v5843
  %v5845 = vrot.slane %v5452, 1
  %v5846 = vsel %vm1580, %v5843, %v5845
  %v5847 = vrot.slane %v5453, 1
  %v5848 = vsel %vm1580, %v5845, %v5847
  %v5849 = vrot.slane %v5454, 1
  %v5850 = vsel %vm1580, %v5847, %v5849
  %v5851 = vrot.slane %v5455, 1
  %v5852 = vrot.slane %v5456, 1
  %v5853 = vsel %vm1580, %v5851, %v5852
  %v5854 = vrot.slane %v5457, 1
  %v5855 = vsel %vm1580, %v5852, %v5854
  %v5856 = vrot.slane %v5458, 1
  %v5857 = vsel %vm1580, %v5854, %v5856
  %v5858 = vrot.slane %v5459, 1
  %v5859 = vsel %vm1580, %v5856, %v5858
  %v5860 = vrot.slane %v5460, 1
  %v5861 = vrot.slane %v5461, 1
  %v5862 = vsel %vm1580, %v5860, %v5861
  %v5863 = vrot.slane %v5462, 1
  %v5864 = vsel %vm1580, %v5861, %v5863
  %v5865 = vrot.slane %v5463, 1
  %v5866 = vsel %vm1580, %v5863, %v5865
  %v5867 = vrot.slane %v5464, 1
  %v5868 = vsel %vm1580, %v5865, %v5867
  %v5869 = vrot.slane %v5465, 1
  %v5870 = vrot.slane %v5466, 1
  %v5871 = vsel %vm1580, %v5869, %v5870
  %v5872 = vrot.slane %v5467, 1
  %v5873 = vsel %vm1580, %v5870, %v5872
  %v5874 = vrot.slane %v5468, 1
  %v5875 = vsel %vm1580, %v5872, %v5874
  %v5876 = vrot.slane %v5469, 1
  %v5877 = vsel %vm1580, %v5874, %v5876
  %v5878 = vrot.slane %v5470, 1
  %v5879 = vrot.slane %v5471, 1
  %v5880 = vsel %vm1580, %v5878, %v5879
  %v5881 = vrot.slane %v5472, 1
  %v5882 = vsel %vm1580, %v5879, %v5881
  %v5883 = vrot.slane %v5473, 1
  %v5884 = vsel %vm1580, %v5881, %v5883
  %v5885 = vrot.slane %v5474, 1
  %v5886 = vsel %vm1580, %v5883, %v5885
  %v5887 = vrot.slane %v5475, 1
  %v5888 = vrot.slane %v5476, 1
  %v5889 = vsel %vm1580, %v5887, %v5888
  %v5890 = vrot.slane %v5477, 1
  %v5891 = vsel %vm1580, %v5888, %v5890
  %v5892 = vrot.slane %v5478, 1
  %v5893 = vsel %vm1580, %v5890, %v5892
  %v5894 = vrot.slane %v5479, 1
  %v5895 = vsel %vm1580, %v5892, %v5894
  %v5896 = vrot.slane %v5480, 1
  %v5897 = vrot.slane %v5481, 1
  %v5898 = vsel %vm1580, %v5896, %v5897
  %v5899 = vrot.slane %v5482, 1
  %v5900 = vsel %vm1580, %v5897, %v5899
  %v5901 = vrot.slane %v5483, 1
  %v5902 = vsel %vm1580, %v5899, %v5901
  %v5903 = vrot.slane %v5484, 1
  %v5904 = vsel %vm1580, %v5901, %v5903
  %v5905 = vrot.slane %v5485, 1
  %v5906 = vrot.slane %v5486, 1
  %v5907 = vsel %vm1580, %v5905, %v5906
  %v5908 = vrot.slane %v5487, 1
  %v5909 = vsel %vm1580, %v5906, %v5908
  %v5910 = vrot.slane %v5488, 1
  %v5911 = vsel %vm1580, %v5908, %v5910
  %v5912 = vrot.slane %v5489, 1
  %v5913 = vsel %vm1580, %v5910, %v5912
  %v5914 = vrot.slane %v5490, 1
  %v5915 = vrot.slane %v5491, 1
  %v5916 = vsel %vm1580, %v5914, %v5915
  %v5917 = vrot.slane %v5492, 1
  %v5918 = vsel %vm1580, %v5915, %v5917
  %v5919 = vrot.slane %v5493, 1
  %v5920 = vsel %vm1580, %v5917, %v5919
  %v5921 = vrot.slane %v5494, 1
  %v5922 = vsel %vm1580, %v5919, %v5921
  %v5923 = vrot.slane %v5495, 1
  %v5924 = vrot.slane %v5496, 1
  %v5925 = vsel %vm1580, %v5923, %v5924
  %v5926 = vrot.slane %v5497, 1
  %v5927 = vsel %vm1580, %v5924, %v5926
  %v5928 = vrot.slane %v5498, 1
  %v5929 = vsel %vm1580, %v5926, %v5928
  %v5930 = vrot.slane %v5499, 1
  %v5931 = vsel %vm1580, %v5928, %v5930
  %v5932 = vrot.slane %v5500, 1
  %v5933 = vrot.slane %v5501, 1
  %v5934 = vsel %vm1580, %v5932, %v5933
  %v5935 = vrot.slane %v5502, 1
  %v5936 = vsel %vm1580, %v5933, %v5935
  %v5937 = vrot.slane %v5503, 1
  %v5938 = vsel %vm1580, %v5935, %v5937
  %v5939 = vrot.slane %v5504, 1
  %v5940 = vsel %vm1580, %v5937, %v5939
  %v5941 = vrot.slane %v5505, 1
  %v5942 = vrot.slane %v5506, 1
  %v5943 = vsel %vm1580, %v5941, %v5942
  %v5944 = vrot.slane %v5507, 1
  %v5945 = vsel %vm1580, %v5942, %v5944
  %v5946 = vrot.slane %v5508, 1
  %v5947 = vsel %vm1580, %v5944, %v5946
  %v5948 = vrot.slane %v5509, 1
  %v5949 = vsel %vm1580, %v5946, %v5948
  %v5950 = vrot.slane %v5510, 1
  %v5951 = vrot.slane %v5511, 1
  %v5952 = vsel %vm1580, %v5950, %v5951
  %v5953 = vrot.slane %v5512, 1
  %v5954 = vsel %vm1580, %v5951, %v5953
  %v5955 = vrot.slane %v5513, 1
  %v5956 = vsel %vm1580, %v5953, %v5955
  %v5957 = vrot.slane %v5514, 1
  %v5958 = vsel %vm1580, %v5955, %v5957
  %v5959 = vrot.slane %v5515, 1
  %v5960 = vrot.slane %v5516, 1
  %v5961 = vsel %vm1580, %v5959, %v5960
  %v5962 = vrot.slane %v5517, 1
  %v5963 = vsel %vm1580, %v5960, %v5962
  %v5964 = vrot.slane %v5518, 1
  %v5965 = vsel %vm1580, %v5962, %v5964
  %v5966 = vrot.slane %v5519, 1
  %v5967 = vsel %vm1580, %v5964, %v5966
  %v6096 = vadd.f32 %v5217, %v5682
  %v6097 = vadd.f32 %v5218, %v5684
  %v6098 = vadd.f32 %v5219, %v5686
  %v6099 = vadd.f32 %v5220, %v5688
  %v6100 = vadd.f32 %v5221, %v5691
  %v6101 = vadd.f32 %v5222, %v5693
  %v6102 = vadd.f32 %v5223, %v5695
  %v6103 = vadd.f32 %v5224, %v5697
  %v6104 = vadd.f32 %v5225, %v5700
  %v6105 = vadd.f32 %v5226, %v5702
  %v6106 = vadd.f32 %v5227, %v5704
  %v6107 = vadd.f32 %v5228, %v5706
  %v6108 = vadd.f32 %v5229, %v5709
  %v6109 = vadd.f32 %v5230, %v5711
  %v6110 = vadd.f32 %v5231, %v5713
  %v6111 = vadd.f32 %v5232, %v5715
  %v6112 = vadd.f32 %v5233, %v5718
  %v6113 = vadd.f32 %v5234, %v5720
  %v6114 = vadd.f32 %v5235, %v5722
  %v6115 = vadd.f32 %v5236, %v5724
  %v6116 = vadd.f32 %v5237, %v5727
  %v6117 = vadd.f32 %v5238, %v5729
  %v6118 = vadd.f32 %v5239, %v5731
  %v6119 = vadd.f32 %v5240, %v5733
  %v6120 = vadd.f32 %v5241, %v5736
  %v6121 = vadd.f32 %v5242, %v5738
  %v6122 = vadd.f32 %v5243, %v5740
  %v6123 = vadd.f32 %v5244, %v5742
  %v6124 = vadd.f32 %v5245, %v5745
  %v6125 = vadd.f32 %v5246, %v5747
  %v6126 = vadd.f32 %v5247, %v5749
  %v6127 = vadd.f32 %v5248, %v5751
  %v6128 = vadd.f32 %v5249, %v5754
  %v6129 = vadd.f32 %v5250, %v5756
  %v6130 = vadd.f32 %v5251, %v5758
  %v6131 = vadd.f32 %v5252, %v5760
  %v6132 = vadd.f32 %v5253, %v5763
  %v6133 = vadd.f32 %v5254, %v5765
  %v6134 = vadd.f32 %v5255, %v5767
  %v6135 = vadd.f32 %v5256, %v5769
  %v6136 = vadd.f32 %v5257, %v5772
  %v6137 = vadd.f32 %v5258, %v5774
  %v6138 = vadd.f32 %v5259, %v5776
  %v6139 = vadd.f32 %v5260, %v5778
  %v6140 = vadd.f32 %v5261, %v5781
  %v6141 = vadd.f32 %v5262, %v5783
  %v6142 = vadd.f32 %v5263, %v5785
  %v6143 = vadd.f32 %v5264, %v5787
  %v6144 = vadd.f32 %v5265, %v5790
  %v6145 = vadd.f32 %v5266, %v5792
  %v6146 = vadd.f32 %v5267, %v5794
  %v6147 = vadd.f32 %v5268, %v5796
  %v6148 = vadd.f32 %v5269, %v5799
  %v6149 = vadd.f32 %v5270, %v5801
  %v6150 = vadd.f32 %v5271, %v5803
  %v6151 = vadd.f32 %v5272, %v5805
  %v6152 = vadd.f32 %v5273, %v5808
  %v6153 = vadd.f32 %v5274, %v5810
  %v6154 = vadd.f32 %v5275, %v5812
  %v6155 = vadd.f32 %v5276, %v5814
  %v6156 = vadd.f32 %v5277, %v5817
  %v6157 = vadd.f32 %v5278, %v5819
  %v6158 = vadd.f32 %v5279, %v5821
  %v6159 = vadd.f32 %v5280, %v5823
  %v6160 = vadd.f32 %v5281, %v5826
  %v6161 = vadd.f32 %v5282, %v5828
  %v6162 = vadd.f32 %v5283, %v5830
  %v6163 = vadd.f32 %v5284, %v5832
  %v6164 = vadd.f32 %v5285, %v5835
  %v6165 = vadd.f32 %v5286, %v5837
  %v6166 = vadd.f32 %v5287, %v5839
  %v6167 = vadd.f32 %v5288, %v5841
  %v6168 = vadd.f32 %v5289, %v5844
  %v6169 = vadd.f32 %v5290, %v5846
  %v6170 = vadd.f32 %v5291, %v5848
  %v6171 = vadd.f32 %v5292, %v5850
  %v6172 = vadd.f32 %v5293, %v5853
  %v6173 = vadd.f32 %v5294, %v5855
  %v6174 = vadd.f32 %v5295, %v5857
  %v6175 = vadd.f32 %v5296, %v5859
  %v6176 = vadd.f32 %v5297, %v5862
  %v6177 = vadd.f32 %v5298, %v5864
  %v6178 = vadd.f32 %v5299, %v5866
  %v6179 = vadd.f32 %v5300, %v5868
  %v6180 = vadd.f32 %v5301, %v5871
  %v6181 = vadd.f32 %v5302, %v5873
  %v6182 = vadd.f32 %v5303, %v5875
  %v6183 = vadd.f32 %v5304, %v5877
  %v6184 = vadd.f32 %v5305, %v5880
  %v6185 = vadd.f32 %v5306, %v5882
  %v6186 = vadd.f32 %v5307, %v5884
  %v6187 = vadd.f32 %v5308, %v5886
  %v6188 = vadd.f32 %v5309, %v5889
  %v6189 = vadd.f32 %v5310, %v5891
  %v6190 = vadd.f32 %v5311, %v5893
  %v6191 = vadd.f32 %v5312, %v5895
  %v6192 = vadd.f32 %v5313, %v5898
  %v6193 = vadd.f32 %v5314, %v5900
  %v6194 = vadd.f32 %v5315, %v5902
  %v6195 = vadd.f32 %v5316, %v5904
  %v6196 = vadd.f32 %v5317, %v5907
  %v6197 = vadd.f32 %v5318, %v5909
  %v6198 = vadd.f32 %v5319, %v5911
  %v6199 = vadd.f32 %v5320, %v5913
  %v6200 = vadd.f32 %v5321, %v5916
  %v6201 = vadd.f32 %v5322, %v5918
  %v6202 = vadd.f32 %v5323, %v5920
  %v6203 = vadd.f32 %v5324, %v5922
  %v6204 = vadd.f32 %v5325, %v5925
  %v6205 = vadd.f32 %v5326, %v5927
  %v6206 = vadd.f32 %v5327, %v5929
  %v6207 = vadd.f32 %v5328, %v5931
  %v6208 = vadd.f32 %v5329, %v5934
  %v6209 = vadd.f32 %v5330, %v5936
  %v6210 = vadd.f32 %v5331, %v5938
  %v6211 = vadd.f32 %v5332, %v5940
  %v6212 = vadd.f32 %v5333, %v5943
  %v6213 = vadd.f32 %v5334, %v5945
  %v6214 = vadd.f32 %v5335, %v5947
  %v6215 = vadd.f32 %v5336, %v5949
  %v6216 = vadd.f32 %v5337, %v5952
  %v6217 = vadd.f32 %v5338, %v5954
  %v6218 = vadd.f32 %v5339, %v5956
  %v6219 = vadd.f32 %v5340, %v5958
  %v6220 = vadd.f32 %v5341, %v5961
  %v6221 = vadd.f32 %v5342, %v5963
  %v6222 = vadd.f32 %v5343, %v5965
  %v6223 = vadd.f32 %v5344, %v5967
  %v6224 = vld [vmem:[%s1 + $0x8] sm:$0x1]
  %v6225 = vlaneseq
  %v6226 = vshrl.u32 %v6225, 7
  %v6227 = vsub.s32 0, %v6226
  %v6228 = vrot.slane %v6224, %v6227
  %v6229 = vmul.f32 %v238, %v6228
  %v6230 = vmul.f32 %v243, %v6228
  %v6231 = vmul.f32 %v248, %v6228
  %v6232 = vmul.f32 %v253, %v6228
  %v6233 = vmul.f32 %v1109, %v6228
  %v6234 = vmul.f32 %v258, %v6228
  %v6235 = vmul.f32 %v263, %v6228
  %v6236 = vmul.f32 %v268, %v6228
  %v6237 = vmul.f32 %v273, %v6228
  %v6238 = vmul.f32 %v1114, %v6228
  %v6239 = vmul.f32 %v278, %v6228
  %v6240 = vmul.f32 %v283, %v6228
  %v6241 = vmul.f32 %v288, %v6228
  %v6242 = vmul.f32 %v293, %v6228
  %v6243 = vmul.f32 %v1119, %v6228
  %v6244 = vmul.f32 %v298, %v6228
  %v6245 = vmul.f32 %v303, %v6228
  %v6246 = vmul.f32 %v308, %v6228
  %v6247 = vmul.f32 %v313, %v6228
  %v6248 = vmul.f32 %v1124, %v6228
  %v6249 = vmul.f32 %v318, %v6228
  %v6250 = vmul.f32 %v323, %v6228
  %v6251 = vmul.f32 %v328, %v6228
  %v6252 = vmul.f32 %v333, %v6228
  %v6253 = vmul.f32 %v1129, %v6228
  %v6254 = vmul.f32 %v338, %v6228
  %v6255 = vmul.f32 %v343, %v6228
  %v6256 = vmul.f32 %v348, %v6228
  %v6257 = vmul.f32 %v353, %v6228
  %v6258 = vmul.f32 %v1134, %v6228
  %v6259 = vmul.f32 %v358, %v6228
  %v6260 = vmul.f32 %v363, %v6228
  %v6261 = vmul.f32 %v368, %v6228
  %v6262 = vmul.f32 %v373, %v6228
  %v6263 = vmul.f32 %v1139, %v6228
  %v6264 = vmul.f32 %v378, %v6228
  %v6265 = vmul.f32 %v383, %v6228
  %v6266 = vmul.f32 %v388, %v6228
  %v6267 = vmul.f32 %v393, %v6228
  %v6268 = vmul.f32 %v1144, %v6228
  %v6269 = vmul.f32 %v398, %v6228
  %v6270 = vmul.f32 %v403, %v6228
  %v6271 = vmul.f32 %v408, %v6228
  %v6272 = vmul.f32 %v413, %v6228
  %v6273 = vmul.f32 %v1149, %v6228
  %v6274 = vmul.f32 %v418, %v6228
  %v6275 = vmul.f32 %v423, %v6228
  %v6276 = vmul.f32 %v428, %v6228
  %v6277 = vmul.f32 %v433, %v6228
  %v6278 = vmul.f32 %v1154, %v6228
  %v6279 = vmul.f32 %v438, %v6228
  %v6280 = vmul.f32 %v443, %v6228
  %v6281 = vmul.f32 %v448, %v6228
  %v6282 = vmul.f32 %v453, %v6228
  %v6283 = vmul.f32 %v1159, %v6228
  %v6284 = vmul.f32 %v458, %v6228
  %v6285 = vmul.f32 %v463, %v6228
  %v6286 = vmul.f32 %v468, %v6228
  %v6287 = vmul.f32 %v473, %v6228
  %v6288 = vmul.f32 %v1164, %v6228
  %v6289 = vmul.f32 %v478, %v6228
  %v6290 = vmul.f32 %v483, %v6228
  %v6291 = vmul.f32 %v488, %v6228
  %v6292 = vmul.f32 %v493, %v6228
  %v6293 = vmul.f32 %v1169, %v6228
  %v6294 = vmul.f32 %v498, %v6228
  %v6295 = vmul.f32 %v503, %v6228
  %v6296 = vmul.f32 %v508, %v6228
  %v6297 = vmul.f32 %v513, %v6228
  %v6298 = vmul.f32 %v1174, %v6228
  %v6299 = vmul.f32 %v2999, %v6228
  %v6300 = vmul.f32 %v3004, %v6228
  %v6301 = vmul.f32 %v3009, %v6228
  %v6302 = vmul.f32 %v3014, %v6228
  %v6303 = vmul.f32 %v3300, %v6228
  %v6304 = vmul.f32 %v5048, %v6228
  %v6305 = vmul.f32 %v5053, %v6228
  %v6306 = vmul.f32 %v5058, %v6228
  %v6307 = vmul.f32 %v5063, %v6228
  %v6308 = vmul.f32 %v5349, %v6228
  %v6309 = vmul.f32 %v558, %v6228
  %v6310 = vmul.f32 %v563, %v6228
  %v6311 = vmul.f32 %v568, %v6228
  %v6312 = vmul.f32 %v573, %v6228
  %v6313 = vmul.f32 %v1189, %v6228
  %v6314 = vmul.f32 %v578, %v6228
  %v6315 = vmul.f32 %v583, %v6228
  %v6316 = vmul.f32 %v588, %v6228
  %v6317 = vmul.f32 %v593, %v6228
  %v6318 = vmul.f32 %v1194, %v6228
  %v6319 = vmul.f32 %v598, %v6228
  %v6320 = vmul.f32 %v603, %v6228
  %v6321 = vmul.f32 %v608, %v6228
  %v6322 = vmul.f32 %v613, %v6228
  %v6323 = vmul.f32 %v1199, %v6228
  %v6324 = vmul.f32 %v618, %v6228
  %v6325 = vmul.f32 %v623, %v6228
  %v6326 = vmul.f32 %v628, %v6228
  %v6327 = vmul.f32 %v633, %v6228
  %v6328 = vmul.f32 %v1204, %v6228
  %v6329 = vmul.f32 %v638, %v6228
  %v6330 = vmul.f32 %v643, %v6228
  %v6331 = vmul.f32 %v648, %v6228
  %v6332 = vmul.f32 %v653, %v6228
  %v6333 = vmul.f32 %v1209, %v6228
  %v6334 = vmul.f32 %v658, %v6228
  %v6335 = vmul.f32 %v663, %v6228
  %v6336 = vmul.f32 %v668, %v6228
  %v6337 = vmul.f32 %v673, %v6228
  %v6338 = vmul.f32 %v1214, %v6228
  %v6339 = vmul.f32 %v678, %v6228
  %v6340 = vmul.f32 %v683, %v6228
  %v6341 = vmul.f32 %v688, %v6228
  %v6342 = vmul.f32 %v693, %v6228
  %v6343 = vmul.f32 %v1219, %v6228
  %v6344 = vmul.f32 %v698, %v6228
  %v6345 = vmul.f32 %v703, %v6228
  %v6346 = vmul.f32 %v708, %v6228
  %v6347 = vmul.f32 %v713, %v6228
  %v6348 = vmul.f32 %v1224, %v6228
  %v6349 = vmul.f32 %v718, %v6228
  %v6350 = vmul.f32 %v723, %v6228
  %v6351 = vmul.f32 %v728, %v6228
  %v6352 = vmul.f32 %v733, %v6228
  %v6353 = vmul.f32 %v1229, %v6228
  %v6354 = vmul.f32 %v738, %v6228
  %v6355 = vmul.f32 %v743, %v6228
  %v6356 = vmul.f32 %v748, %v6228
  %v6357 = vmul.f32 %v753, %v6228
  %v6358 = vmul.f32 %v1234, %v6228
  %v6359 = vmul.f32 %v758, %v6228
  %v6360 = vmul.f32 %v763, %v6228
  %v6361 = vmul.f32 %v768, %v6228
  %v6362 = vmul.f32 %v773, %v6228
  %v6363 = vmul.f32 %v1239, %v6228
  %v6364 = vmul.f32 %v778, %v6228
  %v6365 = vmul.f32 %v783, %v6228
  %v6366 = vmul.f32 %v788, %v6228
  %v6367 = vmul.f32 %v793, %v6228
  %v6368 = vmul.f32 %v1244, %v6228
  %v6369 = vmul.f32 %v798, %v6228
  %v6370 = vmul.f32 %v803, %v6228
  %v6371 = vmul.f32 %v808, %v6228
  %v6372 = vmul.f32 %v813, %v6228
  %v6373 = vmul.f32 %v1249, %v6228
  %v6374 = vmul.f32 %v818, %v6228
  %v6375 = vmul.f32 %v823, %v6228
  %v6376 = vmul.f32 %v828, %v6228
  %v6377 = vmul.f32 %v833, %v6228
  %v6378 = vmul.f32 %v1254, %v6228
  %v6379 = vmul.f32 %v3019, %v6228
  %v6380 = vmul.f32 %v3024, %v6228
  %v6381 = vmul.f32 %v3029, %v6228
  %v6382 = vmul.f32 %v3034, %v6228
  %v6383 = vmul.f32 %v3305, %v6228
  %v6384 = vmul.f32 %v5068, %v6228
  %v6385 = vmul.f32 %v5073, %v6228
  %v6386 = vmul.f32 %v5078, %v6228
  %v6387 = vmul.f32 %v5083, %v6228
  %v6388 = vmul.f32 %v5354, %v6228
  %v6549 = vrot.slane %v6229, 2
  %v6550 = vrot.slane %v6230, 2
  %v6551 = vsel %vm2450, %v6549, %v6550
  %v6552 = vrot.slane %v6231, 2
  %v6553 = vsel %vm2450, %v6550, %v6552
  %v6554 = vrot.slane %v6232, 2
  %v6555 = vsel %vm2450, %v6552, %v6554
  %v6556 = vrot.slane %v6233, 2
  %v6557 = vsel %vm2450, %v6554, %v6556
  %v6558 = vrot.slane %v6234, 2
  %v6559 = vrot.slane %v6235, 2
  %v6560 = vsel %vm2450, %v6558, %v6559
  %v6561 = vrot.slane %v6236, 2
  %v6562 = vsel %vm2450, %v6559, %v6561
  %v6563 = vrot.slane %v6237, 2
  %v6564 = vsel %vm2450, %v6561, %v6563
  %v6565 = vrot.slane %v6238, 2
  %v6566 = vsel %vm2450, %v6563, %v6565
  %v6567 = vrot.slane %v6239, 2
  %v6568 = vrot.slane %v6240, 2
  %v6569 = vsel %vm2450, %v6567, %v6568
  %v6570 = vrot.slane %v6241, 2
  %v6571 = vsel %vm2450, %v6568, %v6570
  %v6572 = vrot.slane %v6242, 2
  %v6573 = vsel %vm2450, %v6570, %v6572
  %v6574 = vrot.slane %v6243, 2
  %v6575 = vsel %vm2450, %v6572, %v6574
  %v6576 = vrot.slane %v6244, 2
  %v6577 = vrot.slane %v6245, 2
  %v6578 = vsel %vm2450, %v6576, %v6577
  %v6579 = vrot.slane %v6246, 2
  %v6580 = vsel %vm2450, %v6577, %v6579
  %v6581 = vrot.slane %v6247, 2
  %v6582 = vsel %vm2450, %v6579, %v6581
  %v6583 = vrot.slane %v6248, 2
  %v6584 = vsel %vm2450, %v6581, %v6583
  %v6585 = vrot.slane %v6249, 2
  %v6586 = vrot.slane %v6250, 2
  %v6587 = vsel %vm2450, %v6585, %v6586
  %v6588 = vrot.slane %v6251, 2
  %v6589 = vsel %vm2450, %v6586, %v6588
  %v6590 = vrot.slane %v6252, 2
  %v6591 = vsel %vm2450, %v6588, %v6590
  %v6592 = vrot.slane %v6253, 2
  %v6593 = vsel %vm2450, %v6590, %v6592
  %v6594 = vrot.slane %v6254, 2
  %v6595 = vrot.slane %v6255, 2
  %v6596 = vsel %vm2450, %v6594, %v6595
  %v6597 = vrot.slane %v6256, 2
  %v6598 = vsel %vm2450, %v6595, %v6597
  %v6599 = vrot.slane %v6257, 2
  %v6600 = vsel %vm2450, %v6597, %v6599
  %v6601 = vrot.slane %v6258, 2
  %v6602 = vsel %vm2450, %v6599, %v6601
  %v6603 = vrot.slane %v6259, 2
  %v6604 = vrot.slane %v6260, 2
  %v6605 = vsel %vm2450, %v6603, %v6604
  %v6606 = vrot.slane %v6261, 2
  %v6607 = vsel %vm2450, %v6604, %v6606
  %v6608 = vrot.slane %v6262, 2
  %v6609 = vsel %vm2450, %v6606, %v6608
  %v6610 = vrot.slane %v6263, 2
  %v6611 = vsel %vm2450, %v6608, %v6610
  %v6612 = vrot.slane %v6264, 2
  %v6613 = vrot.slane %v6265, 2
  %v6614 = vsel %vm2450, %v6612, %v6613
  %v6615 = vrot.slane %v6266, 2
  %v6616 = vsel %vm2450, %v6613, %v6615
  %v6617 = vrot.slane %v6267, 2
  %v6618 = vsel %vm2450, %v6615, %v6617
  %v6619 = vrot.slane %v6268, 2
  %v6620 = vsel %vm2450, %v6617, %v6619
  %v6621 = vrot.slane %v6269, 2
  %v6622 = vrot.slane %v6270, 2
  %v6623 = vsel %vm2450, %v6621, %v6622
  %v6624 = vrot.slane %v6271, 2
  %v6625 = vsel %vm2450, %v6622, %v6624
  %v6626 = vrot.slane %v6272, 2
  %v6627 = vsel %vm2450, %v6624, %v6626
  %v6628 = vrot.slane %v6273, 2
  %v6629 = vsel %vm2450, %v6626, %v6628
  %v6630 = vrot.slane %v6274, 2
  %v6631 = vrot.slane %v6275, 2
  %v6632 = vsel %vm2450, %v6630, %v6631
  %v6633 = vrot.slane %v6276, 2
  %v6634 = vsel %vm2450, %v6631, %v6633
  %v6635 = vrot.slane %v6277, 2
  %v6636 = vsel %vm2450, %v6633, %v6635
  %v6637 = vrot.slane %v6278, 2
  %v6638 = vsel %vm2450, %v6635, %v6637
  %v6639 = vrot.slane %v6279, 2
  %v6640 = vrot.slane %v6280, 2
  %v6641 = vsel %vm2450, %v6639, %v6640
  %v6642 = vrot.slane %v6281, 2
  %v6643 = vsel %vm2450, %v6640, %v6642
  %v6644 = vrot.slane %v6282, 2
  %v6645 = vsel %vm2450, %v6642, %v6644
  %v6646 = vrot.slane %v6283, 2
  %v6647 = vsel %vm2450, %v6644, %v6646
  %v6648 = vrot.slane %v6284, 2
  %v6649 = vrot.slane %v6285, 2
  %v6650 = vsel %vm2450, %v6648, %v6649
  %v6651 = vrot.slane %v6286, 2
  %v6652 = vsel %vm2450, %v6649, %v6651
  %v6653 = vrot.slane %v6287, 2
  %v6654 = vsel %vm2450, %v6651, %v6653
  %v6655 = vrot.slane %v6288, 2
  %v6656 = vsel %vm2450, %v6653, %v6655
  %v6657 = vrot.slane %v6289, 2
  %v6658 = vrot.slane %v6290, 2
  %v6659 = vsel %vm2450, %v6657, %v6658
  %v6660 = vrot.slane %v6291, 2
  %v6661 = vsel %vm2450, %v6658, %v6660
  %v6662 = vrot.slane %v6292, 2
  %v6663 = vsel %vm2450, %v6660, %v6662
  %v6664 = vrot.slane %v6293, 2
  %v6665 = vsel %vm2450, %v6662, %v6664
  %v6666 = vrot.slane %v6294, 2
  %v6667 = vrot.slane %v6295, 2
  %v6668 = vsel %vm2450, %v6666, %v6667
  %v6669 = vrot.slane %v6296, 2
  %v6670 = vsel %vm2450, %v6667, %v6669
  %v6671 = vrot.slane %v6297, 2
  %v6672 = vsel %vm2450, %v6669, %v6671
  %v6673 = vrot.slane %v6298, 2
  %v6674 = vsel %vm2450, %v6671, %v6673
  %v6675 = vrot.slane %v6299, 2
  %v6676 = vrot.slane %v6300, 2
  %v6677 = vsel %vm2450, %v6675, %v6676
  %v6678 = vrot.slane %v6301, 2
  %v6679 = vsel %vm2450, %v6676, %v6678
  %v6680 = vrot.slane %v6302, 2
  %v6681 = vsel %vm2450, %v6678, %v6680
  %v6682 = vrot.slane %v6303, 2
  %v6683 = vsel %vm2450, %v6680, %v6682
  %v6684 = vrot.slane %v6304, 2
  %v6685 = vrot.slane %v6305, 2
  %v6686 = vsel %vm2450, %v6684, %v6685
  %v6687 = vrot.slane %v6306, 2
  %v6688 = vsel %vm2450, %v6685, %v6687
  %v6689 = vrot.slane %v6307, 2
  %v6690 = vsel %vm2450, %v6687, %v6689
  %v6691 = vrot.slane %v6308, 2
  %v6692 = vsel %vm2450, %v6689, %v6691
  %v6693 = vrot.slane %v6309, 2
  %v6694 = vrot.slane %v6310, 2
  %v6695 = vsel %vm2450, %v6693, %v6694
  %v6696 = vrot.slane %v6311, 2
  %v6697 = vsel %vm2450, %v6694, %v6696
  %v6698 = vrot.slane %v6312, 2
  %v6699 = vsel %vm2450, %v6696, %v6698
  %v6700 = vrot.slane %v6313, 2
  %v6701 = vsel %vm2450, %v6698, %v6700
  %v6702 = vrot.slane %v6314, 2
  %v6703 = vrot.slane %v6315, 2
  %v6704 = vsel %vm2450, %v6702, %v6703
  %v6705 = vrot.slane %v6316, 2
  %v6706 = vsel %vm2450, %v6703, %v6705
  %v6707 = vrot.slane %v6317, 2
  %v6708 = vsel %vm2450, %v6705, %v6707
  %v6709 = vrot.slane %v6318, 2
  %v6710 = vsel %vm2450, %v6707, %v6709
  %v6711 = vrot.slane %v6319, 2
  %v6712 = vrot.slane %v6320, 2
  %v6713 = vsel %vm2450, %v6711, %v6712
  %v6714 = vrot.slane %v6321, 2
  %v6715 = vsel %vm2450, %v6712, %v6714
  %v6716 = vrot.slane %v6322, 2
  %v6717 = vsel %vm2450, %v6714, %v6716
  %v6718 = vrot.slane %v6323, 2
  %v6719 = vsel %vm2450, %v6716, %v6718
  %v6720 = vrot.slane %v6324, 2
  %v6721 = vrot.slane %v6325, 2
  %v6722 = vsel %vm2450, %v6720, %v6721
  %v6723 = vrot.slane %v6326, 2
  %v6724 = vsel %vm2450, %v6721, %v6723
  %v6725 = vrot.slane %v6327, 2
  %v6726 = vsel %vm2450, %v6723, %v6725
  %v6727 = vrot.slane %v6328, 2
  %v6728 = vsel %vm2450, %v6725, %v6727
  %v6729 = vrot.slane %v6329, 2
  %v6730 = vrot.slane %v6330, 2
  %v6731 = vsel %vm2450, %v6729, %v6730
  %v6732 = vrot.slane %v6331, 2
  %v6733 = vsel %vm2450, %v6730, %v6732
  %v6734 = vrot.slane %v6332, 2
  %v6735 = vsel %vm2450, %v6732, %v6734
  %v6736 = vrot.slane %v6333, 2
  %v6737 = vsel %vm2450, %v6734, %v6736
  %v6738 = vrot.slane %v6334, 2
  %v6739 = vrot.slane %v6335, 2
  %v6740 = vsel %vm2450, %v6738, %v6739
  %v6741 = vrot.slane %v6336, 2
  %v6742 = vsel %vm2450, %v6739, %v6741
  %v6743 = vrot.slane %v6337, 2
  %v6744 = vsel %vm2450, %v6741, %v6743
  %v6745 = vrot.slane %v6338, 2
  %v6746 = vsel %vm2450, %v6743, %v6745
  %v6747 = vrot.slane %v6339, 2
  %v6748 = vrot.slane %v6340, 2
  %v6749 = vsel %vm2450, %v6747, %v6748
  %v6750 = vrot.slane %v6341, 2
  %v6751 = vsel %vm2450, %v6748, %v6750
  %v6752 = vrot.slane %v6342, 2
  %v6753 = vsel %vm2450, %v6750, %v6752
  %v6754 = vrot.slane %v6343, 2
  %v6755 = vsel %vm2450, %v6752, %v6754
  %v6756 = vrot.slane %v6344, 2
  %v6757 = vrot.slane %v6345, 2
  %v6758 = vsel %vm2450, %v6756, %v6757
  %v6759 = vrot.slane %v6346, 2
  %v6760 = vsel %vm2450, %v6757, %v6759
  %v6761 = vrot.slane %v6347, 2
  %v6762 = vsel %vm2450, %v6759, %v6761
  %v6763 = vrot.slane %v6348, 2
  %v6764 = vsel %vm2450, %v6761, %v6763
  %v6765 = vrot.slane %v6349, 2
  %v6766 = vrot.slane %v6350, 2
  %v6767 = vsel %vm2450, %v6765, %v6766
  %v6768 = vrot.slane %v6351, 2
  %v6769 = vsel %vm2450, %v6766, %v6768
  %v6770 = vrot.slane %v6352, 2
  %v6771 = vsel %vm2450, %v6768, %v6770
  %v6772 = vrot.slane %v6353, 2
  %v6773 = vsel %vm2450, %v6770, %v6772
  %v6774 = vrot.slane %v6354, 2
  %v6775 = vrot.slane %v6355, 2
  %v6776 = vsel %vm2450, %v6774, %v6775
  %v6777 = vrot.slane %v6356, 2
  %v6778 = vsel %vm2450, %v6775, %v6777
  %v6779 = vrot.slane %v6357, 2
  %v6780 = vsel %vm2450, %v6777, %v6779
  %v6781 = vrot.slane %v6358, 2
  %v6782 = vsel %vm2450, %v6779, %v6781
  %v6783 = vrot.slane %v6359, 2
  %v6784 = vrot.slane %v6360, 2
  %v6785 = vsel %vm2450, %v6783, %v6784
  %v6786 = vrot.slane %v6361, 2
  %v6787 = vsel %vm2450, %v6784, %v6786
  %v6788 = vrot.slane %v6362, 2
  %v6789 = vsel %vm2450, %v6786, %v6788
  %v6790 = vrot.slane %v6363, 2
  %v6791 = vsel %vm2450, %v6788, %v6790
  %v6792 = vrot.slane %v6364, 2
  %v6793 = vrot.slane %v6365, 2
  %v6794 = vsel %vm2450, %v6792, %v6793
  %v6795 = vrot.slane %v6366, 2
  %v6796 = vsel %vm2450, %v6793, %v6795
  %v6797 = vrot.slane %v6367, 2
  %v6798 = vsel %vm2450, %v6795, %v6797
  %v6799 = vrot.slane %v6368, 2
  %v6800 = vsel %vm2450, %v6797, %v6799
  %v6801 = vrot.slane %v6369, 2
  %v6802 = vrot.slane %v6370, 2
  %v6803 = vsel %vm2450, %v6801, %v6802
  %v6804 = vrot.slane %v6371, 2
  %v6805 = vsel %vm2450, %v6802, %v6804
  %v6806 = vrot.slane %v6372, 2
  %v6807 = vsel %vm2450, %v6804, %v6806
  %v6808 = vrot.slane %v6373, 2
  %v6809 = vsel %vm2450, %v6806, %v6808
  %v6810 = vrot.slane %v6374, 2
  %v6811 = vrot.slane %v6375, 2
  %v6812 = vsel %vm2450, %v6810, %v6811
  %v6813 = vrot.slane %v6376, 2
  %v6814 = vsel %vm2450, %v6811, %v6813
  %v6815 = vrot.slane %v6377, 2
  %v6816 = vsel %vm2450, %v6813, %v6815
  %v6817 = vrot.slane %v6378, 2
  %v6818 = vsel %vm2450, %v6815, %v6817
  %v6819 = vrot.slane %v6379, 2
  %v6820 = vrot.slane %v6380, 2
  %v6821 = vsel %vm2450, %v6819, %v6820
  %v6822 = vrot.slane %v6381, 2
  %v6823 = vsel %vm2450, %v6820, %v6822
  %v6824 = vrot.slane %v6382, 2
  %v6825 = vsel %vm2450, %v6822, %v6824
  %v6826 = vrot.slane %v6383, 2
  %v6827 = vsel %vm2450, %v6824, %v6826
  %v6828 = vrot.slane %v6384, 2
  %v6829 = vrot.slane %v6385, 2
  %v6830 = vsel %vm2450, %v6828, %v6829
  %v6831 = vrot.slane %v6386, 2
  %v6832 = vsel %vm2450, %v6829, %v6831
  %v6833 = vrot.slane %v6387, 2
  %v6834 = vsel %vm2450, %v6831, %v6833
  %v6835 = vrot.slane %v6388, 2
  %v6836 = vsel %vm2450, %v6833, %v6835
  %v6965 = vadd.f32 %v6096, %v6551
  %v6966 = vadd.f32 %v6097, %v6553
  %v6967 = vadd.f32 %v6098, %v6555
  %v6968 = vadd.f32 %v6099, %v6557
  %v6969 = vadd.f32 %v6100, %v6560
  %v6970 = vadd.f32 %v6101, %v6562
  %v6971 = vadd.f32 %v6102, %v6564
  %v6972 = vadd.f32 %v6103, %v6566
  %v6973 = vadd.f32 %v6104, %v6569
  %v6974 = vadd.f32 %v6105, %v6571
  %v6975 = vadd.f32 %v6106, %v6573
  %v6976 = vadd.f32 %v6107, %v6575
  %v6977 = vadd.f32 %v6108, %v6578
  %v6978 = vadd.f32 %v6109, %v6580
  %v6979 = vadd.f32 %v6110, %v6582
  %v6980 = vadd.f32 %v6111, %v6584
  %v6981 = vadd.f32 %v6112, %v6587
  %v6982 = vadd.f32 %v6113, %v6589
  %v6983 = vadd.f32 %v6114, %v6591
  %v6984 = vadd.f32 %v6115, %v6593
  %v6985 = vadd.f32 %v6116, %v6596
  %v6986 = vadd.f32 %v6117, %v6598
  %v6987 = vadd.f32 %v6118, %v6600
  %v6988 = vadd.f32 %v6119, %v6602
  %v6989 = vadd.f32 %v6120, %v6605
  %v6990 = vadd.f32 %v6121, %v6607
  %v6991 = vadd.f32 %v6122, %v6609
  %v6992 = vadd.f32 %v6123, %v6611
  %v6993 = vadd.f32 %v6124, %v6614
  %v6994 = vadd.f32 %v6125, %v6616
  %v6995 = vadd.f32 %v6126, %v6618
  %v6996 = vadd.f32 %v6127, %v6620
  %v6997 = vadd.f32 %v6128, %v6623
  %v6998 = vadd.f32 %v6129, %v6625
  %v6999 = vadd.f32 %v6130, %v6627
  %v7000 = vadd.f32 %v6131, %v6629
  %v7001 = vadd.f32 %v6132, %v6632
  %v7002 = vadd.f32 %v6133, %v6634
  %v7003 = vadd.f32 %v6134, %v6636
  %v7004 = vadd.f32 %v6135, %v6638
  %v7005 = vadd.f32 %v6136, %v6641
  %v7006 = vadd.f32 %v6137, %v6643
  %v7007 = vadd.f32 %v6138, %v6645
  %v7008 = vadd.f32 %v6139, %v6647
  %v7009 = vadd.f32 %v6140, %v6650
  %v7010 = vadd.f32 %v6141, %v6652
  %v7011 = vadd.f32 %v6142, %v6654
  %v7012 = vadd.f32 %v6143, %v6656
  %v7013 = vadd.f32 %v6144, %v6659
  %v7014 = vadd.f32 %v6145, %v6661
  %v7015 = vadd.f32 %v6146, %v6663
  %v7016 = vadd.f32 %v6147, %v6665
  %v7017 = vadd.f32 %v6148, %v6668
  %v7018 = vadd.f32 %v6149, %v6670
  %v7019 = vadd.f32 %v6150, %v6672
  %v7020 = vadd.f32 %v6151, %v6674
  %v7021 = vadd.f32 %v6152, %v6677
  %v7022 = vadd.f32 %v6153, %v6679
  %v7023 = vadd.f32 %v6154, %v6681
  %v7024 = vadd.f32 %v6155, %v6683
  %v7025 = vadd.f32 %v6156, %v6686
  %v7026 = vadd.f32 %v6157, %v6688
  %v7027 = vadd.f32 %v6158, %v6690
  %v7028 = vadd.f32 %v6159, %v6692
  %v7029 = vadd.f32 %v6160, %v6695
  %v7030 = vadd.f32 %v6161, %v6697
  %v7031 = vadd.f32 %v6162, %v6699
  %v7032 = vadd.f32 %v6163, %v6701
  %v7033 = vadd.f32 %v6164, %v6704
  %v7034 = vadd.f32 %v6165, %v6706
  %v7035 = vadd.f32 %v6166, %v6708
  %v7036 = vadd.f32 %v6167, %v6710
  %v7037 = vadd.f32 %v6168, %v6713
  %v7038 = vadd.f32 %v6169, %v6715
  %v7039 = vadd.f32 %v6170, %v6717
  %v7040 = vadd.f32 %v6171, %v6719
  %v7041 = vadd.f32 %v6172, %v6722
  %v7042 = vadd.f32 %v6173, %v6724
  %v7043 = vadd.f32 %v6174, %v6726
  %v7044 = vadd.f32 %v6175, %v6728
  %v7045 = vadd.f32 %v6176, %v6731
  %v7046 = vadd.f32 %v6177, %v6733
  %v7047 = vadd.f32 %v6178, %v6735
  %v7048 = vadd.f32 %v6179, %v6737
  %v7049 = vadd.f32 %v6180, %v6740
  %v7050 = vadd.f32 %v6181, %v6742
  %v7051 = vadd.f32 %v6182, %v6744
  %v7052 = vadd.f32 %v6183, %v6746
  %v7053 = vadd.f32 %v6184, %v6749
  %v7054 = vadd.f32 %v6185, %v6751
  %v7055 = vadd.f32 %v6186, %v6753
  %v7056 = vadd.f32 %v6187, %v6755
  %v7057 = vadd.f32 %v6188, %v6758
  %v7058 = vadd.f32 %v6189, %v6760
  %v7059 = vadd.f32 %v6190, %v6762
  %v7060 = vadd.f32 %v6191, %v6764
  %v7061 = vadd.f32 %v6192, %v6767
  %v7062 = vadd.f32 %v6193, %v6769
  %v7063 = vadd.f32 %v6194, %v6771
  %v7064 = vadd.f32 %v6195, %v6773
  %v7065 = vadd.f32 %v6196, %v6776
  %v7066 = vadd.f32 %v6197, %v6778
  %v7067 = vadd.f32 %v6198, %v6780
  %v7068 = vadd.f32 %v6199, %v6782
  %v7069 = vadd.f32 %v6200, %v6785
  %v7070 = vadd.f32 %v6201, %v6787
  %v7071 = vadd.f32 %v6202, %v6789
  %v7072 = vadd.f32 %v6203, %v6791
  %v7073 = vadd.f32 %v6204, %v6794
  %v7074 = vadd.f32 %v6205, %v6796
  %v7075 = vadd.f32 %v6206, %v6798
  %v7076 = vadd.f32 %v6207, %v6800
  %v7077 = vadd.f32 %v6208, %v6803
  %v7078 = vadd.f32 %v6209, %v6805
  %v7079 = vadd.f32 %v6210, %v6807
  %v7080 = vadd.f32 %v6211, %v6809
  %v7081 = vadd.f32 %v6212, %v6812
  %v7082 = vadd.f32 %v6213, %v6814
  %v7083 = vadd.f32 %v6214, %v6816
  %v7084 = vadd.f32 %v6215, %v6818
  %v7085 = vadd.f32 %v6216, %v6821
  %v7086 = vadd.f32 %v6217, %v6823
  %v7087 = vadd.f32 %v6218, %v6825
  %v7088 = vadd.f32 %v6219, %v6827
  %v7089 = vadd.f32 %v6220, %v6830
  %v7090 = vadd.f32 %v6221, %v6832
  %v7091 = vadd.f32 %v6222, %v6834
  %v7092 = vadd.f32 %v6223, %v6836
  %v7093 = vld [vmem:[%s2] sm:$0x1]
  %v7095 = vlaneseq
  %v7096 = vshrl.u32 %v7095, 7
  %v7097 = vsub.s32 0, %v7096
  %v7098 = vrot.slane %v7093, %v7097
  %v7100 = vadd.f32 %v6965, %v7098
  %v7101 = vadd.f32 %v6966, %v7098
  %v7102 = vadd.f32 %v6967, %v7098
  %v7103 = vadd.f32 %v6968, %v7098
  %v7104 = vadd.f32 %v6969, %v7098
  %v7105 = vadd.f32 %v6970, %v7098
  %v7106 = vadd.f32 %v6971, %v7098
  %v7107 = vadd.f32 %v6972, %v7098
  %v7108 = vadd.f32 %v6973, %v7098
  %v7109 = vadd.f32 %v6974, %v7098
  %v7110 = vadd.f32 %v6975, %v7098
  %v7111 = vadd.f32 %v6976, %v7098
  %v7112 = vadd.f32 %v6977, %v7098
  %v7113 = vadd.f32 %v6978, %v7098
  %v7114 = vadd.f32 %v6979, %v7098
  %v7115 = vadd.f32 %v6980, %v7098
  %v7116 = vadd.f32 %v6981, %v7098
  %v7117 = vadd.f32 %v6982, %v7098
  %v7118 = vadd.f32 %v6983, %v7098
  %v7119 = vadd.f32 %v6984, %v7098
  %v7120 = vadd.f32 %v6985, %v7098
  %v7121 = vadd.f32 %v6986, %v7098
  %v7122 = vadd.f32 %v6987, %v7098
  %v7123 = vadd.f32 %v6988, %v7098
  %v7124 = vadd.f32 %v6989, %v7098
  %v7125 = vadd.f32 %v6990, %v7098
  %v7126 = vadd.f32 %v6991, %v7098
  %v7127 = vadd.f32 %v6992, %v7098
  %v7128 = vadd.f32 %v6993, %v7098
  %v7129 = vadd.f32 %v6994, %v7098
  %v7130 = vadd.f32 %v6995, %v7098
  %v7131 = vadd.f32 %v6996, %v7098
  %v7132 = vadd.f32 %v6997, %v7098
  %v7133 = vadd.f32 %v6998, %v7098
  %v7134 = vadd.f32 %v6999, %v7098
  %v7135 = vadd.f32 %v7000, %v7098
  %v7136 = vadd.f32 %v7001, %v7098
  %v7137 = vadd.f32 %v7002, %v7098
  %v7138 = vadd.f32 %v7003, %v7098
  %v7139 = vadd.f32 %v7004, %v7098
  %v7140 = vadd.f32 %v7005, %v7098
  %v7141 = vadd.f32 %v7006, %v7098
  %v7142 = vadd.f32 %v7007, %v7098
  %v7143 = vadd.f32 %v7008, %v7098
  %v7144 = vadd.f32 %v7009, %v7098
  %v7145 = vadd.f32 %v7010, %v7098
  %v7146 = vadd.f32 %v7011, %v7098
  %v7147 = vadd.f32 %v7012, %v7098
  %v7148 = vadd.f32 %v7013, %v7098
  %v7149 = vadd.f32 %v7014, %v7098
  %v7150 = vadd.f32 %v7015, %v7098
  %v7151 = vadd.f32 %v7016, %v7098
  %v7152 = vadd.f32 %v7017, %v7098
  %v7153 = vadd.f32 %v7018, %v7098
  %v7154 = vadd.f32 %v7019, %v7098
  %v7155 = vadd.f32 %v7020, %v7098
  %v7156 = vadd.f32 %v7021, %v7098
  %v7157 = vadd.f32 %v7022, %v7098
  %v7158 = vadd.f32 %v7023, %v7098
  %v7159 = vadd.f32 %v7024, %v7098
  %v7160 = vadd.f32 %v7025, %v7098
  %v7161 = vadd.f32 %v7026, %v7098
  %v7162 = vadd.f32 %v7027, %v7098
  %v7163 = vadd.f32 %v7028, %v7098
  %v7164 = vadd.f32 %v7029, %v7098
  %v7165 = vadd.f32 %v7030, %v7098
  %v7166 = vadd.f32 %v7031, %v7098
  %v7167 = vadd.f32 %v7032, %v7098
  %v7168 = vadd.f32 %v7033, %v7098
  %v7169 = vadd.f32 %v7034, %v7098
  %v7170 = vadd.f32 %v7035, %v7098
  %v7171 = vadd.f32 %v7036, %v7098
  %v7172 = vadd.f32 %v7037, %v7098
  %v7173 = vadd.f32 %v7038, %v7098
  %v7174 = vadd.f32 %v7039, %v7098
  %v7175 = vadd.f32 %v7040, %v7098
  %v7176 = vadd.f32 %v7041, %v7098
  %v7177 = vadd.f32 %v7042, %v7098
  %v7178 = vadd.f32 %v7043, %v7098
  %v7179 = vadd.f32 %v7044, %v7098
  %v7180 = vadd.f32 %v7045, %v7098
  %v7181 = vadd.f32 %v7046, %v7098
  %v7182 = vadd.f32 %v7047, %v7098
  %v7183 = vadd.f32 %v7048, %v7098
  %v7184 = vadd.f32 %v7049, %v7098
  %v7185 = vadd.f32 %v7050, %v7098
  %v7186 = vadd.f32 %v7051, %v7098
  %v7187 = vadd.f32 %v7052, %v7098
  %v7188 = vadd.f32 %v7053, %v7098
  %v7189 = vadd.f32 %v7054, %v7098
  %v7190 = vadd.f32 %v7055, %v7098
  %v7191 = vadd.f32 %v7056, %v7098
  %v7192 = vadd.f32 %v7057, %v7098
  %v7193 = vadd.f32 %v7058, %v7098
  %v7194 = vadd.f32 %v7059, %v7098
  %v7195 = vadd.f32 %v7060, %v7098
  %v7196 = vadd.f32 %v7061, %v7098
  %v7197 = vadd.f32 %v7062, %v7098
  %v7198 = vadd.f32 %v7063, %v7098
  %v7199 = vadd.f32 %v7064, %v7098
  %v7200 = vadd.f32 %v7065, %v7098
  %v7201 = vadd.f32 %v7066, %v7098
  %v7202 = vadd.f32 %v7067, %v7098
  %v7203 = vadd.f32 %v7068, %v7098
  %v7204 = vadd.f32 %v7069, %v7098
  %v7205 = vadd.f32 %v7070, %v7098
  %v7206 = vadd.f32 %v7071, %v7098
  %v7207 = vadd.f32 %v7072, %v7098
  %v7208 = vadd.f32 %v7073, %v7098
  %v7209 = vadd.f32 %v7074, %v7098
  %v7210 = vadd.f32 %v7075, %v7098
  %v7211 = vadd.f32 %v7076, %v7098
  %v7212 = vadd.f32 %v7077, %v7098
  %v7213 = vadd.f32 %v7078, %v7098
  %v7214 = vadd.f32 %v7079, %v7098
  %v7215 = vadd.f32 %v7080, %v7098
  %v7216 = vadd.f32 %v7081, %v7098
  %v7217 = vadd.f32 %v7082, %v7098
  %v7218 = vadd.f32 %v7083, %v7098
  %v7219 = vadd.f32 %v7084, %v7098
  %v7220 = vadd.f32 %v7085, %v7098
  %v7221 = vadd.f32 %v7086, %v7098
  %v7222 = vadd.f32 %v7087, %v7098
  %v7223 = vadd.f32 %v7088, %v7098
  %v7224 = vadd.f32 %v7089, %v7098
  %v7225 = vadd.f32 %v7090, %v7098
  %v7226 = vadd.f32 %v7091, %v7098
  %v7227 = vadd.f32 %v7092, %v7098
  %v7228 = vmax.f32 %v7100, 0.0
  %v7229 = vmax.f32 %v7101, 0.0
  %v7230 = vmax.f32 %v7102, 0.0
  %v7231 = vmax.f32 %v7103, 0.0
  %v7232 = vmax.f32 %v7104, 0.0
  %v7233 = vmax.f32 %v7105, 0.0
  %v7234 = vmax.f32 %v7106, 0.0
  %v7235 = vmax.f32 %v7107, 0.0
  %v7236 = vmax.f32 %v7108, 0.0
  %v7237 = vmax.f32 %v7109, 0.0
  %v7238 = vmax.f32 %v7110, 0.0
  %v7239 = vmax.f32 %v7111, 0.0
  %v7240 = vmax.f32 %v7112, 0.0
  %v7241 = vmax.f32 %v7113, 0.0
  %v7242 = vmax.f32 %v7114, 0.0
  %v7243 = vmax.f32 %v7115, 0.0
  %v7244 = vmax.f32 %v7116, 0.0
  %v7245 = vmax.f32 %v7117, 0.0
  %v7246 = vmax.f32 %v7118, 0.0
  %v7247 = vmax.f32 %v7119, 0.0
  %v7248 = vmax.f32 %v7120, 0.0
  %v7249 = vmax.f32 %v7121, 0.0
  %v7250 = vmax.f32 %v7122, 0.0
  %v7251 = vmax.f32 %v7123, 0.0
  %v7252 = vmax.f32 %v7124, 0.0
  %v7253 = vmax.f32 %v7125, 0.0
  %v7254 = vmax.f32 %v7126, 0.0
  %v7255 = vmax.f32 %v7127, 0.0
  %v7256 = vmax.f32 %v7128, 0.0
  %v7257 = vmax.f32 %v7129, 0.0
  %v7258 = vmax.f32 %v7130, 0.0
  %v7259 = vmax.f32 %v7131, 0.0
  %v7260 = vmax.f32 %v7132, 0.0
  %v7261 = vmax.f32 %v7133, 0.0
  %v7262 = vmax.f32 %v7134, 0.0
  %v7263 = vmax.f32 %v7135, 0.0
  %v7264 = vmax.f32 %v7136, 0.0
  %v7265 = vmax.f32 %v7137, 0.0
  %v7266 = vmax.f32 %v7138, 0.0
  %v7267 = vmax.f32 %v7139, 0.0
  %v7268 = vmax.f32 %v7140, 0.0
  %v7269 = vmax.f32 %v7141, 0.0
  %v7270 = vmax.f32 %v7142, 0.0
  %v7271 = vmax.f32 %v7143, 0.0
  %v7272 = vmax.f32 %v7144, 0.0
  %v7273 = vmax.f32 %v7145, 0.0
  %v7274 = vmax.f32 %v7146, 0.0
  %v7275 = vmax.f32 %v7147, 0.0
  %v7276 = vmax.f32 %v7148, 0.0
  %v7277 = vmax.f32 %v7149, 0.0
  %v7278 = vmax.f32 %v7150, 0.0
  %v7279 = vmax.f32 %v7151, 0.0
  %v7280 = vmax.f32 %v7152, 0.0
  %v7281 = vmax.f32 %v7153, 0.0
  %v7282 = vmax.f32 %v7154, 0.0
  %v7283 = vmax.f32 %v7155, 0.0
  %v7284 = vmax.f32 %v7156, 0.0
  %v7285 = vmax.f32 %v7157, 0.0
  %v7286 = vmax.f32 %v7158, 0.0
  %v7287 = vmax.f32 %v7159, 0.0
  %v7288 = vmax.f32 %v7160, 0.0
  %v7289 = vmax.f32 %v7161, 0.0
  %v7290 = vmax.f32 %v7162, 0.0
  %v7291 = vmax.f32 %v7163, 0.0
  %v7292 = vmax.f32 %v7164, 0.0
  %v7293 = vmax.f32 %v7165, 0.0
  %v7294 = vmax.f32 %v7166, 0.0
  %v7295 = vmax.f32 %v7167, 0.0
  %v7296 = vmax.f32 %v7168, 0.0
  %v7297 = vmax.f32 %v7169, 0.0
  %v7298 = vmax.f32 %v7170, 0.0
  %v7299 = vmax.f32 %v7171, 0.0
  %v7300 = vmax.f32 %v7172, 0.0
  %v7301 = vmax.f32 %v7173, 0.0
  %v7302 = vmax.f32 %v7174, 0.0
  %v7303 = vmax.f32 %v7175, 0.0
  %v7304 = vmax.f32 %v7176, 0.0
  %v7305 = vmax.f32 %v7177, 0.0
  %v7306 = vmax.f32 %v7178, 0.0
  %v7307 = vmax.f32 %v7179, 0.0
  %v7308 = vmax.f32 %v7180, 0.0
  %v7309 = vmax.f32 %v7181, 0.0
  %v7310 = vmax.f32 %v7182, 0.0
  %v7311 = vmax.f32 %v7183, 0.0
  %v7312 = vmax.f32 %v7184, 0.0
  %v7313 = vmax.f32 %v7185, 0.0
  %v7314 = vmax.f32 %v7186, 0.0
  %v7315 = vmax.f32 %v7187, 0.0
  %v7316 = vmax.f32 %v7188, 0.0
  %v7317 = vmax.f32 %v7189, 0.0
  %v7318 = vmax.f32 %v7190, 0.0
  %v7319 = vmax.f32 %v7191, 0.0
  %v7320 = vmax.f32 %v7192, 0.0
  %v7321 = vmax.f32 %v7193, 0.0
  %v7322 = vmax.f32 %v7194, 0.0
  %v7323 = vmax.f32 %v7195, 0.0
  %v7324 = vmax.f32 %v7196, 0.0
  %v7325 = vmax.f32 %v7197, 0.0
  %v7326 = vmax.f32 %v7198, 0.0
  %v7327 = vmax.f32 %v7199, 0.0
  %v7328 = vmax.f32 %v7200, 0.0
  %v7329 = vmax.f32 %v7201, 0.0
  %v7330 = vmax.f32 %v7202, 0.0
  %v7331 = vmax.f32 %v7203, 0.0
  %v7332 = vmax.f32 %v7204, 0.0
  %v7333 = vmax.f32 %v7205, 0.0
  %v7334 = vmax.f32 %v7206, 0.0
  %v7335 = vmax.f32 %v7207, 0.0
  %v7336 = vmax.f32 %v7208, 0.0
  %v7337 = vmax.f32 %v7209, 0.0
  %v7338 = vmax.f32 %v7210, 0.0
  %v7339 = vmax.f32 %v7211, 0.0
  %v7340 = vmax.f32 %v7212, 0.0
  %v7341 = vmax.f32 %v7213, 0.0
  %v7342 = vmax.f32 %v7214, 0.0
  %v7343 = vmax.f32 %v7215, 0.0
  %v7344 = vmax.f32 %v7216, 0.0
  %v7345 = vmax.f32 %v7217, 0.0
  %v7346 = vmax.f32 %v7218, 0.0
  %v7347 = vmax.f32 %v7219, 0.0
  %v7348 = vmax.f32 %v7220, 0.0
  %v7349 = vmax.f32 %v7221, 0.0
  %v7350 = vmax.f32 %v7222, 0.0
  %v7351 = vmax.f32 %v7223, 0.0
  %v7352 = vmax.f32 %v7224, 0.0
  %v7353 = vmax.f32 %v7225, 0.0
  %v7354 = vmax.f32 %v7226, 0.0
  %v7355 = vmax.f32 %v7227, 0.0
  %vm7356 = vcmask 130048
  %7357 = vst.msk [vmem:[%s3] sm:$0xff] %vm7356, %v7228
  %7358 = vst.msk [vmem:[%s3 + $0x8] sm:$0xff] %vm7356, %v7229
  %7359 = vst.msk [vmem:[%s3 + $0x10] sm:$0xff] %vm7356, %v7230
  %7360 = vst.msk [vmem:[%s3 + $0x18] sm:$0xff] %vm7356, %v7231
  %7361 = vst.msk [vmem:[%s3 + $0x20] sm:$0xff] %vm7356, %v7232
  %7362 = vst.msk [vmem:[%s3 + $0x28] sm:$0xff] %vm7356, %v7233
  %7363 = vst.msk [vmem:[%s3 + $0x30] sm:$0xff] %vm7356, %v7234
  %7364 = vst.msk [vmem:[%s3 + $0x38] sm:$0xff] %vm7356, %v7235
  %7365 = vst.msk [vmem:[%s3 + $0x40] sm:$0xff] %vm7356, %v7236
  %7366 = vst.msk [vmem:[%s3 + $0x48] sm:$0xff] %vm7356, %v7237
  %7367 = vst.msk [vmem:[%s3 + $0x50] sm:$0xff] %vm7356, %v7238
  %7368 = vst.msk [vmem:[%s3 + $0x58] sm:$0xff] %vm7356, %v7239
  %7369 = vst.msk [vmem:[%s3 + $0x60] sm:$0xff] %vm7356, %v7240
  %7370 = vst.msk [vmem:[%s3 + $0x68] sm:$0xff] %vm7356, %v7241
  %7371 = vst.msk [vmem:[%s3 + $0x70] sm:$0xff] %vm7356, %v7242
  %7372 = vst.msk [vmem:[%s3 + $0x78] sm:$0xff] %vm7356, %v7243
  %7373 = vst.msk [vmem:[%s3 + $0x80] sm:$0xff] %vm7356, %v7244
  %7374 = vst.msk [vmem:[%s3 + $0x88] sm:$0xff] %vm7356, %v7245
  %7375 = vst.msk [vmem:[%s3 + $0x90] sm:$0xff] %vm7356, %v7246
  %7376 = vst.msk [vmem:[%s3 + $0x98] sm:$0xff] %vm7356, %v7247
  %7377 = vst.msk [vmem:[%s3 + $0xa0] sm:$0xff] %vm7356, %v7248
  %7378 = vst.msk [vmem:[%s3 + $0xa8] sm:$0xff] %vm7356, %v7249
  %7379 = vst.msk [vmem:[%s3 + $0xb0] sm:$0xff] %vm7356, %v7250
  %7380 = vst.msk [vmem:[%s3 + $0xb8] sm:$0xff] %vm7356, %v7251
  %7381 = vst.msk [vmem:[%s3 + $0xc0] sm:$0xff] %vm7356, %v7252
  %7382 = vst.msk [vmem:[%s3 + $0xc8] sm:$0xff] %vm7356, %v7253
  %7383 = vst.msk [vmem:[%s3 + $0xd0] sm:$0xff] %vm7356, %v7254
  %7384 = vst.msk [vmem:[%s3 + $0xd8] sm:$0xff] %vm7356, %v7255
  %7385 = vst.msk [vmem:[%s3 + $0xe0] sm:$0xff] %vm7356, %v7256
  %7386 = vst.msk [vmem:[%s3 + $0xe8] sm:$0xff] %vm7356, %v7257
  %7387 = vst.msk [vmem:[%s3 + $0xf0] sm:$0xff] %vm7356, %v7258
  %7388 = vst.msk [vmem:[%s3 + $0xf8] sm:$0xff] %vm7356, %v7259
  %7389 = vst.msk [vmem:[%s3 + $0x100] sm:$0xff] %vm7356, %v7260
  %7390 = vst.msk [vmem:[%s3 + $0x108] sm:$0xff] %vm7356, %v7261
  %7391 = vst.msk [vmem:[%s3 + $0x110] sm:$0xff] %vm7356, %v7262
  %7392 = vst.msk [vmem:[%s3 + $0x118] sm:$0xff] %vm7356, %v7263
  %7393 = vst.msk [vmem:[%s3 + $0x120] sm:$0xff] %vm7356, %v7264
  %7394 = vst.msk [vmem:[%s3 + $0x128] sm:$0xff] %vm7356, %v7265
  %7395 = vst.msk [vmem:[%s3 + $0x130] sm:$0xff] %vm7356, %v7266
  %7396 = vst.msk [vmem:[%s3 + $0x138] sm:$0xff] %vm7356, %v7267
  %7397 = vst.msk [vmem:[%s3 + $0x140] sm:$0xff] %vm7356, %v7268
  %7398 = vst.msk [vmem:[%s3 + $0x148] sm:$0xff] %vm7356, %v7269
  %7399 = vst.msk [vmem:[%s3 + $0x150] sm:$0xff] %vm7356, %v7270
  %7400 = vst.msk [vmem:[%s3 + $0x158] sm:$0xff] %vm7356, %v7271
  %7401 = vst.msk [vmem:[%s3 + $0x160] sm:$0xff] %vm7356, %v7272
  %7402 = vst.msk [vmem:[%s3 + $0x168] sm:$0xff] %vm7356, %v7273
  %7403 = vst.msk [vmem:[%s3 + $0x170] sm:$0xff] %vm7356, %v7274
  %7404 = vst.msk [vmem:[%s3 + $0x178] sm:$0xff] %vm7356, %v7275
  %7405 = vst.msk [vmem:[%s3 + $0x180] sm:$0xff] %vm7356, %v7276
  %7406 = vst.msk [vmem:[%s3 + $0x188] sm:$0xff] %vm7356, %v7277
  %7407 = vst.msk [vmem:[%s3 + $0x190] sm:$0xff] %vm7356, %v7278
  %7408 = vst.msk [vmem:[%s3 + $0x198] sm:$0xff] %vm7356, %v7279
  %7409 = vst.msk [vmem:[%s3 + $0x1a0] sm:$0xff] %vm7356, %v7280
  %7410 = vst.msk [vmem:[%s3 + $0x1a8] sm:$0xff] %vm7356, %v7281
  %7411 = vst.msk [vmem:[%s3 + $0x1b0] sm:$0xff] %vm7356, %v7282
  %7412 = vst.msk [vmem:[%s3 + $0x1b8] sm:$0xff] %vm7356, %v7283
  %7413 = vst.msk [vmem:[%s3 + $0x1c0] sm:$0xff] %vm7356, %v7284
  %7414 = vst.msk [vmem:[%s3 + $0x1c8] sm:$0xff] %vm7356, %v7285
  %7415 = vst.msk [vmem:[%s3 + $0x1d0] sm:$0xff] %vm7356, %v7286
  %7416 = vst.msk [vmem:[%s3 + $0x1d8] sm:$0xff] %vm7356, %v7287
  %7417 = vst.msk [vmem:[%s3 + $0x1e0] sm:$0xff] %vm7356, %v7288
  %7418 = vst.msk [vmem:[%s3 + $0x1e8] sm:$0xff] %vm7356, %v7289
  %7419 = vst.msk [vmem:[%s3 + $0x1f0] sm:$0xff] %vm7356, %v7290
  %7420 = vst.msk [vmem:[%s3 + $0x1f8] sm:$0xff] %vm7356, %v7291
  %7421 = vst.msk [vmem:[%s3 + $0x200] sm:$0xff] %vm7356, %v7292
  %7422 = vst.msk [vmem:[%s3 + $0x208] sm:$0xff] %vm7356, %v7293
  %7423 = vst.msk [vmem:[%s3 + $0x210] sm:$0xff] %vm7356, %v7294
  %7424 = vst.msk [vmem:[%s3 + $0x218] sm:$0xff] %vm7356, %v7295
  %7425 = vst.msk [vmem:[%s3 + $0x220] sm:$0xff] %vm7356, %v7296
  %7426 = vst.msk [vmem:[%s3 + $0x228] sm:$0xff] %vm7356, %v7297
  %7427 = vst.msk [vmem:[%s3 + $0x230] sm:$0xff] %vm7356, %v7298
  %7428 = vst.msk [vmem:[%s3 + $0x238] sm:$0xff] %vm7356, %v7299
  %7429 = vst.msk [vmem:[%s3 + $0x240] sm:$0xff] %vm7356, %v7300
  %7430 = vst.msk [vmem:[%s3 + $0x248] sm:$0xff] %vm7356, %v7301
  %7431 = vst.msk [vmem:[%s3 + $0x250] sm:$0xff] %vm7356, %v7302
  %7432 = vst.msk [vmem:[%s3 + $0x258] sm:$0xff] %vm7356, %v7303
  %7433 = vst.msk [vmem:[%s3 + $0x260] sm:$0xff] %vm7356, %v7304
  %7434 = vst.msk [vmem:[%s3 + $0x268] sm:$0xff] %vm7356, %v7305
  %7435 = vst.msk [vmem:[%s3 + $0x270] sm:$0xff] %vm7356, %v7306
  %7436 = vst.msk [vmem:[%s3 + $0x278] sm:$0xff] %vm7356, %v7307
  %7437 = vst.msk [vmem:[%s3 + $0x280] sm:$0xff] %vm7356, %v7308
  %7438 = vst.msk [vmem:[%s3 + $0x288] sm:$0xff] %vm7356, %v7309
  %7439 = vst.msk [vmem:[%s3 + $0x290] sm:$0xff] %vm7356, %v7310
  %7440 = vst.msk [vmem:[%s3 + $0x298] sm:$0xff] %vm7356, %v7311
  %7441 = vst.msk [vmem:[%s3 + $0x2a0] sm:$0xff] %vm7356, %v7312
  %7442 = vst.msk [vmem:[%s3 + $0x2a8] sm:$0xff] %vm7356, %v7313
  %7443 = vst.msk [vmem:[%s3 + $0x2b0] sm:$0xff] %vm7356, %v7314
  %7444 = vst.msk [vmem:[%s3 + $0x2b8] sm:$0xff] %vm7356, %v7315
  %7445 = vst.msk [vmem:[%s3 + $0x2c0] sm:$0xff] %vm7356, %v7316
  %7446 = vst.msk [vmem:[%s3 + $0x2c8] sm:$0xff] %vm7356, %v7317
  %7447 = vst.msk [vmem:[%s3 + $0x2d0] sm:$0xff] %vm7356, %v7318
  %7448 = vst.msk [vmem:[%s3 + $0x2d8] sm:$0xff] %vm7356, %v7319
  %7449 = vst.msk [vmem:[%s3 + $0x2e0] sm:$0xff] %vm7356, %v7320
  %7450 = vst.msk [vmem:[%s3 + $0x2e8] sm:$0xff] %vm7356, %v7321
  %7451 = vst.msk [vmem:[%s3 + $0x2f0] sm:$0xff] %vm7356, %v7322
  %7452 = vst.msk [vmem:[%s3 + $0x2f8] sm:$0xff] %vm7356, %v7323
  %7453 = vst.msk [vmem:[%s3 + $0x300] sm:$0xff] %vm7356, %v7324
  %7454 = vst.msk [vmem:[%s3 + $0x308] sm:$0xff] %vm7356, %v7325
  %7455 = vst.msk [vmem:[%s3 + $0x310] sm:$0xff] %vm7356, %v7326
  %7456 = vst.msk [vmem:[%s3 + $0x318] sm:$0xff] %vm7356, %v7327
  %7457 = vst.msk [vmem:[%s3 + $0x320] sm:$0xff] %vm7356, %v7328
  %7458 = vst.msk [vmem:[%s3 + $0x328] sm:$0xff] %vm7356, %v7329
  %7459 = vst.msk [vmem:[%s3 + $0x330] sm:$0xff] %vm7356, %v7330
  %7460 = vst.msk [vmem:[%s3 + $0x338] sm:$0xff] %vm7356, %v7331
  %7461 = vst.msk [vmem:[%s3 + $0x340] sm:$0xff] %vm7356, %v7332
  %7462 = vst.msk [vmem:[%s3 + $0x348] sm:$0xff] %vm7356, %v7333
  %7463 = vst.msk [vmem:[%s3 + $0x350] sm:$0xff] %vm7356, %v7334
  %7464 = vst.msk [vmem:[%s3 + $0x358] sm:$0xff] %vm7356, %v7335
  %7465 = vst.msk [vmem:[%s3 + $0x360] sm:$0xff] %vm7356, %v7336
  %7466 = vst.msk [vmem:[%s3 + $0x368] sm:$0xff] %vm7356, %v7337
  %7467 = vst.msk [vmem:[%s3 + $0x370] sm:$0xff] %vm7356, %v7338
  %7468 = vst.msk [vmem:[%s3 + $0x378] sm:$0xff] %vm7356, %v7339
  %7469 = vst.msk [vmem:[%s3 + $0x380] sm:$0xff] %vm7356, %v7340
  %7470 = vst.msk [vmem:[%s3 + $0x388] sm:$0xff] %vm7356, %v7341
  %7471 = vst.msk [vmem:[%s3 + $0x390] sm:$0xff] %vm7356, %v7342
  %7472 = vst.msk [vmem:[%s3 + $0x398] sm:$0xff] %vm7356, %v7343
  %7473 = vst.msk [vmem:[%s3 + $0x3a0] sm:$0xff] %vm7356, %v7344
  %7474 = vst.msk [vmem:[%s3 + $0x3a8] sm:$0xff] %vm7356, %v7345
  %7475 = vst.msk [vmem:[%s3 + $0x3b0] sm:$0xff] %vm7356, %v7346
  %7476 = vst.msk [vmem:[%s3 + $0x3b8] sm:$0xff] %vm7356, %v7347
  %7477 = vst.msk [vmem:[%s3 + $0x3c0] sm:$0xff] %vm7356, %v7348
  %7478 = vst.msk [vmem:[%s3 + $0x3c8] sm:$0xff] %vm7356, %v7349
  %7479 = vst.msk [vmem:[%s3 + $0x3d0] sm:$0xff] %vm7356, %v7350
  %7480 = vst.msk [vmem:[%s3 + $0x3d8] sm:$0xff] %vm7356, %v7351
  %7481 = vst.msk [vmem:[%s3 + $0x3e0] sm:$0xff] %vm7356, %v7352
  %7482 = vst.msk [vmem:[%s3 + $0x3e8] sm:$0xff] %vm7356, %v7353
  %7483 = vst.msk [vmem:[%s3 + $0x3f0] sm:$0xff] %vm7356, %v7354
  %7484 = vst.msk [vmem:[%s3 + $0x3f8] sm:$0xff] %vm7356, %v7355
  // Predicated region
  $region14: #{crnn_forward.10} parent=0 // pred_check
    _
  $region15: #{crnn_forward.10} parent=0 // pred_check_branch
    %7486 = sbr.rel (0) target = $region17
  $region16: #{crnn_forward.10} parent=0 // pred_region
    _
  $region17: #{crnn_forward.10} parent=0 // pred_fallthru
    _
  // Predicated region
  $region18: #{crnn_forward.10} parent=0 // pred_check
    _
  $region19: #{crnn_forward.10} parent=0 // pred_check_branch
    %7488 = sbr.rel (0) target = $region21
  $region20: #{crnn_forward.10} parent=0 // pred_region
    _
  $region21: #{crnn_forward.10} parent=0 // pred_fallthru
    _

// kernel: crnn_forward.19
$region0: #{crnn_forward.19}
  #allocation0 [shape = 'u32[]', space=smem, size = 0x4, offset = 0x4, fixed_abs, tag = 'smem constant byte address 0x4 - core index']
  #allocation1 [shape = 'u32[144,128]{1,0:T(1,128)}', space=vmem, size = 0x12000, scoped, tag = 'internal scratch']
  %s0 = inlined_call_operand.vmem [shape: f32[16,64], index: 0, kind: input, shape index: {}]
  %s1 = inlined_call_operand.vmem [shape: f32[64,128], index: 1, kind: input, shape index: {}]
  %s2 = inlined_call_operand.vmem [shape: f32[1,128], index: 2, kind: input, shape index: {}]
  %s3 = inlined_call_operand.hbm [shape: f32[16,128], index: 3, kind: output, shape index: {}]
  %s4 = sld [smem:[#allocation0]]
  $region22: #{crnn_forward.19} parent=0
    _
  %s6 = ssub.s32 1, %s4
  %s7 = scalar_select 0, %s6, %s4
  $region1: #{crnn_forward.19} parent=0
    #allocation2 [shape = 'u8[8192]{0}', space=vmem, size = 0x2000, scoped, tag = 'output window, operand 0, single buffered']
    #allocation3 [shape = 's32[1]{0}', space=sflag, size = 0x4, scoped, tag = 'scoped memory for crnn_forward.19']
    %8 = vsyncpa [#allocation3], 0
    // Predicated region
    $region2: #{crnn_forward.19} parent=1 // pred_check
      _
    $region3: #{crnn_forward.19} parent=1 // pred_check_branch
      %10 = sbr.rel (0) target = $region5
    $region4: #{crnn_forward.19} parent=1 // pred_region
      _
    $region5: #{crnn_forward.19} parent=1 // pred_fallthru
      _
    // Predicated region
    $region6: #{crnn_forward.19} parent=1 // pred_check
      _
    $region7: #{crnn_forward.19} parent=1 // pred_check_branch
      %12 = sbr.rel (0) target = $region9
    $region8: #{crnn_forward.19} parent=1 // pred_region
      _
    $region9: #{crnn_forward.19} parent=1 // pred_fallthru
      _
    // Predicated region
    $region10: #{crnn_forward.19} parent=1 // pred_check
      _
    $region11: #{crnn_forward.19} parent=1 // pred_check_branch
      %14 = sbr.rel (0) target = $region13
    $region12: #{crnn_forward.19} parent=1 // pred_region
      _
    $region13: #{crnn_forward.19} parent=1 // pred_fallthru
      _
    %v16 = vld [vmem:[%s0] sm:$0xff]
    %v17 = vld [vmem:[%s0 + $0x8] sm:$0xff]
    %v18 = vpack.c.bf16 %v17, %v16
    %v19 = vld [vmem:[%s1] sm:$0xff]
    %v20 = vld [vmem:[%s1 + $0x8] sm:$0xff]
    %v21 = vld [vmem:[%s1 + $0x10] sm:$0xff]
    %v22 = vld [vmem:[%s1 + $0x18] sm:$0xff]
    %v23 = vld [vmem:[%s1 + $0x20] sm:$0xff]
    %v24 = vld [vmem:[%s1 + $0x28] sm:$0xff]
    %v25 = vld [vmem:[%s1 + $0x30] sm:$0xff]
    %v26 = vld [vmem:[%s1 + $0x38] sm:$0xff]
    %v27 = vpack.c.bf16 %v20, %v19
    %v28 = vpack.c.bf16 %v22, %v21
    %v29 = vpack.c.bf16 %v24, %v23
    %v30 = vpack.c.bf16 %v26, %v25
    %v31 = vld [vmem:[%s2] sm:$0x1]
    %v33 = vlaneseq
    %v34 = vshrl.u32 %v33, 7
    %v35 = vsub.s32 0, %v34
    %v36 = vrot.slane %v31, %v35
    %vm38 = vcmask 523264
    %v40 = vsel %vm38, %v18, 0
    %42 = vmatprep.subr.bf16.mxu0 0
    %43 = vmatpush1.bf16.msra.mxu0 %v27
    %44 = vmatprep.subr.bf16.mxu0 0
    %45 = vmatpush1.bf16.msra.mxu0 %v28
    %46 = vmatprep.subr.bf16.mxu0 0
    %47 = vmatpush1.bf16.msra.mxu0 %v29
    %48 = vmatprep.subr.bf16.mxu0 0
    %49 = vmatpush1.bf16.msra.mxu0 %v30
    %50 = vmatprep.subr.bf16.mxu0 0
    %51 = vmatpush1.bf16.msra.mxu0 0
    %52 = vmatprep.subr.bf16.mxu0 0
    %53 = vmatpush1.bf16.msra.mxu0 0
    %54 = vmatprep.subr.bf16.mxu0 0
    %55 = vmatpush1.bf16.msra.mxu0 0
    %56 = vmatprep.subr.bf16.mxu0 0
    %57 = vmatpush1.bf16.msra.mxu0 0
    %58 = vmatprep.subr.bf16.mxu0 0
    %59 = vmatpush1.bf16.msra.mxu0 0
    %60 = vmatprep.subr.bf16.mxu0 0
    %61 = vmatpush1.bf16.msra.mxu0 0
    %62 = vmatprep.subr.bf16.mxu0 0
    %63 = vmatpush1.bf16.msra.mxu0 0
    %64 = vmatprep.subr.bf16.mxu0 0
    %65 = vmatpush1.bf16.msra.mxu0 0
    %66 = vmatprep.subr.bf16.mxu0 0
    %67 = vmatpush1.bf16.msra.mxu0 0
    %68 = vmatprep.subr.bf16.mxu0 0
    %69 = vmatpush1.bf16.msra.mxu0 0
    %70 = vmatprep.subr.bf16.mxu0 0
    %71 = vmatpush1.bf16.msra.mxu0 0
    %72 = vmatprep.subr.bf16.mxu0 0
    %73 = vmatpush1.bf16.msra.mxu0 0
    %74 = vmatprep.mubr.bf16.mxu0 0
    %75 = vmatmul.mubr.bf16.gmra.mrb[0].mxu0 %v40
    %v76 = vpop.f32.mrb[0].mxu0
    %v77 = vadd.f32 %v36, %v76
    %v78 = vpop.f32.mrb[0].mxu0
    %v79 = vpop.f32.mrb[0].mxu0
    %v80 = vadd.f32 %v36, %v79
    %v81 = vpop.f32.mrb[0].mxu0
    %82 = vdwg.mxu0
    %83 = vst [vmem:[#allocation2] sm:$0xff] %v77
    %84 = vst [vmem:[#allocation2 + $0x8] sm:$0xff] %v80
    // Predicated region
    $region14: #{crnn_forward.19} parent=1 // pred_check
      _
    $region15: #{crnn_forward.19} parent=1 // pred_check_branch
      %86 = sbr.rel (0) target = $region17
    $region16: #{crnn_forward.19} parent=1 // pred_region
      %s88 = ssub.s32 256, 256
      %89 = vsyncadd [#allocation3], %s88
      %s90 = sshll.u32 [#allocation2], 4
      %s91 = int_to_ptr.vmem [resolvable:$true] %s90
      %96 = dma.vmem_to_hbm [thread:$0]  %s91, 256, %s3, [#allocation3], 128, 128, 8
    $region17: #{crnn_forward.19} parent=1 // pred_fallthru
      _
    // Predicated region
    $region18: #{crnn_forward.19} parent=1 // pred_check
      _
    $region19: #{crnn_forward.19} parent=1 // pred_check_branch
      %98 = sbr.rel (0) target = $region21
    $region20: #{crnn_forward.19} parent=1 // pred_region
      %99 = dma.done [#allocation3], 256
    $region21: #{crnn_forward.19} parent=1 // pred_fallthru
      _
    %100 = vsyncpa [#allocation3], 1

// kernel: crnn_forward.16
$region0: #{crnn_forward.16}
  #allocation0 [shape = 'u32[]', space=smem, size = 0x4, offset = 0x4, fixed_abs, tag = 'smem constant byte address 0x4 - core index']
  #allocation1 [shape = 'u32[144,128]{1,0:T(1,128)}', space=vmem, size = 0x12000, scoped, tag = 'internal scratch']
  #allocation2 [shape = 'f32[2,32]{1,0:T(2,128)}', space=vmem, size = 0x400, scoped, tag = 'scratch operand']
  #allocation3 [shape = 'f32[2,32]{1,0:T(2,128)}', space=vmem, size = 0x400, scoped, tag = 'scratch operand']
  #allocation4 [shape = 'f32[2,32]{1,0:T(2,128)}', space=vmem, size = 0x400, scoped, tag = 'scratch operand']
  #allocation5 [shape = 'f32[2,32]{1,0:T(2,128)}', space=vmem, size = 0x400, scoped, tag = 'scratch operand']
  %s0 = inlined_call_operand.vmem [shape: f32[8,2,256], index: 0, kind: input, shape index: {}]
  %s1 = inlined_call_operand.vmem [shape: f32[32,128], index: 1, kind: input, shape index: {}]
  %s2 = inlined_call_operand.vmem [shape: f32[32,128], index: 2, kind: input, shape index: {}]
  %s3 = inlined_call_operand.vmem [shape: f32[8,2,32], index: 3, kind: output, shape index: {0}]
  %s4 = inlined_call_operand.vmem [shape: f32[8,2,32], index: 4, kind: output, shape index: {1}]
  %5 = xla_tuple %s3, %s4
  %s6 = sld [smem:[#allocation0]]
  $region30: #{crnn_forward.16} parent=0
    _
  %s8 = ssub.s32 1, %s6
  %s9 = scalar_select 0, %s8, %s6
  // Predicated region
  $region2: #{crnn_forward.16} parent=0 // pred_check
    _
  $region3: #{crnn_forward.16} parent=0 // pred_check_branch
    %11 = sbr.rel (0) target = $region5
  $region4: #{crnn_forward.16} parent=0 // pred_region
    _
  $region5: #{crnn_forward.16} parent=0 // pred_fallthru
    _
  // Predicated region
  $region6: #{crnn_forward.16} parent=0 // pred_check
    _
  $region7: #{crnn_forward.16} parent=0 // pred_check_branch
    %13 = sbr.rel (0) target = $region9
  $region8: #{crnn_forward.16} parent=0 // pred_region
    _
  $region9: #{crnn_forward.16} parent=0 // pred_fallthru
    _
  // Predicated region
  $region10: #{crnn_forward.16} parent=0 // pred_check
    _
  $region11: #{crnn_forward.16} parent=0 // pred_check_branch
    %15 = sbr.rel (0) target = $region13
  $region12: #{crnn_forward.16} parent=0 // pred_region
    _
  $region13: #{crnn_forward.16} parent=0 // pred_fallthru
    _
  %vm17 = vcmask 254976
  %18 = vst.msk [vmem:[#allocation2] sm:$0x3] %vm17, 0.0
  %19 = vst.msk [vmem:[#allocation3] sm:$0x3] %vm17, 0.0
  %20 = vst.msk [vmem:[#allocation4] sm:$0x3] %vm17, 0.0
  %21 = vst.msk [vmem:[#allocation5] sm:$0x3] %vm17, 0.0
  %v22 = vld [vmem:[%s1] sm:$0xff]
  %v23 = vld [vmem:[%s1 + $0x8] sm:$0xff]
  %v24 = vld [vmem:[%s1 + $0x10] sm:$0xff]
  %v25 = vld [vmem:[%s1 + $0x18] sm:$0xff]
  %v26 = vpack.c.bf16 %v23, %v22
  %v27 = vpack.c.bf16 %v25, %v24
  %v28 = vld [vmem:[%s2] sm:$0xff]
  %v29 = vld [vmem:[%s2 + $0x8] sm:$0xff]
  %v30 = vld [vmem:[%s2 + $0x10] sm:$0xff]
  %v31 = vld [vmem:[%s2 + $0x18] sm:$0xff]
  %v32 = vpack.c.bf16 %v29, %v28
  %v33 = vpack.c.bf16 %v31, %v30
  %v34 = vld [vmem:[%s0] sm:$0xf]
  %s35 = scalar_lea.vmem %s0, 28
  %v36 = vld [vmem:[%s35] sm:$0xf]
  %v37 = vld [vmem:[#allocation2] sm:$0x3]
  %v38 = vpack.c.bf16 %v37, %v37
  %vm39 = vcmask 261120
  %v41 = vsel %vm39, %v38, 0
  %43 = vmatprep.subr.bf16.mxu0 0
  %44 = vmatpush1.bf16.msra.mxu0 %v26
  %45 = vmatprep.subr.bf16.mxu0 0
  %46 = vmatpush1.bf16.msra.mxu0 %v27
  %47 = vmatprep.subr.bf16.mxu0 0
  %48 = vmatpush1.bf16.msra.mxu0 0
  %49 = vmatprep.subr.bf16.mxu0 0
  %50 = vmatpush1.bf16.msra.mxu0 0
  %51 = vmatprep.subr.bf16.mxu0 0
  %52 = vmatpush1.bf16.msra.mxu0 0
  %53 = vmatprep.subr.bf16.mxu0 0
  %54 = vmatpush1.bf16.msra.mxu0 0
  %55 = vmatprep.subr.bf16.mxu0 0
  %56 = vmatpush1.bf16.msra.mxu0 0
  %57 = vmatprep.subr.bf16.mxu0 0
  %58 = vmatpush1.bf16.msra.mxu0 0
  %59 = vmatprep.subr.bf16.mxu0 0
  %60 = vmatpush1.bf16.msra.mxu0 0
  %61 = vmatprep.subr.bf16.mxu0 0
  %62 = vmatpush1.bf16.msra.mxu0 0
  %63 = vmatprep.subr.bf16.mxu0 0
  %64 = vmatpush1.bf16.msra.mxu0 0
  %65 = vmatprep.subr.bf16.mxu0 0
  %66 = vmatpush1.bf16.msra.mxu0 0
  %67 = vmatprep.subr.bf16.mxu0 0
  %68 = vmatpush1.bf16.msra.mxu0 0
  %69 = vmatprep.subr.bf16.mxu0 0
  %70 = vmatpush1.bf16.msra.mxu0 0
  %71 = vmatprep.subr.bf16.mxu0 0
  %72 = vmatpush1.bf16.msra.mxu0 0
  %73 = vmatprep.subr.bf16.mxu0 0
  %74 = vmatpush1.bf16.msra.mxu0 0
  %75 = vmatprep.mubr.bf16.mxu0 0
  %76 = vmatmul.mubr.bf16.gmra.mrb[0].mxu0 %v41
  %v77 = vpop.f32.mrb[0].mxu0
  %v78 = vadd.f32 0.0, %v77
  %v79 = vpop.f32.mrb[0].mxu0
  %v80 = vpop.f32.mrb[0].mxu0
  %v81 = vpop.f32.mrb[0].mxu0
  %82 = vdwg.mxu0
  %v83 = vadd.f32 %v34, %v78
  %v84 = vld [vmem:[#allocation4] sm:$0x3]
  %v85 = vpack.c.bf16 %v84, %v84
  %v87 = vsel %vm39, %v85, 0
  %89 = vmatprep.subr.bf16.mxu0 0
  %90 = vmatpush1.bf16.msra.mxu0 %v32
  %91 = vmatprep.subr.bf16.mxu0 0
  %92 = vmatpush1.bf16.msra.mxu0 %v33
  %93 = vmatprep.subr.bf16.mxu0 0
  %94 = vmatpush1.bf16.msra.mxu0 0
  %95 = vmatprep.subr.bf16.mxu0 0
  %96 = vmatpush1.bf16.msra.mxu0 0
  %97 = vmatprep.subr.bf16.mxu0 0
  %98 = vmatpush1.bf16.msra.mxu0 0
  %99 = vmatprep.subr.bf16.mxu0 0
  %100 = vmatpush1.bf16.msra.mxu0 0
  %101 = vmatprep.subr.bf16.mxu0 0
  %102 = vmatpush1.bf16.msra.mxu0 0
  %103 = vmatprep.subr.bf16.mxu0 0
  %104 = vmatpush1.bf16.msra.mxu0 0
  %105 = vmatprep.subr.bf16.mxu0 0
  %106 = vmatpush1.bf16.msra.mxu0 0
  %107 = vmatprep.subr.bf16.mxu0 0
  %108 = vmatpush1.bf16.msra.mxu0 0
  %109 = vmatprep.subr.bf16.mxu0 0
  %110 = vmatpush1.bf16.msra.mxu0 0
  %111 = vmatprep.subr.bf16.mxu0 0
  %112 = vmatpush1.bf16.msra.mxu0 0
  %113 = vmatprep.subr.bf16.mxu0 0
  %114 = vmatpush1.bf16.msra.mxu0 0
  %115 = vmatprep.subr.bf16.mxu0 0
  %116 = vmatpush1.bf16.msra.mxu0 0
  %117 = vmatprep.subr.bf16.mxu0 0
  %118 = vmatpush1.bf16.msra.mxu0 0
  %119 = vmatprep.subr.bf16.mxu0 0
  %120 = vmatpush1.bf16.msra.mxu0 0
  %121 = vmatprep.mubr.bf16.mxu0 0
  %122 = vmatmul.mubr.bf16.gmra.mrb[0].mxu0 %v87
  %v123 = vpop.f32.mrb[0].mxu0
  %v124 = vadd.f32 0.0, %v123
  %v125 = vpop.f32.mrb[0].mxu0
  %v126 = vpop.f32.mrb[0].mxu0
  %v127 = vpop.f32.mrb[0].mxu0
  %128 = vdwg.mxu0
  %v130 = vrot.slane %v36, 2
  %v132 = vadd.f32 %v130, %v124
  %v133 = vld [vmem:[#allocation3] sm:$0x3]
  %v134 = vxor.u32 %v83, 2147483648
  %v135 = vmul.f32 %v134, 1.442695
  %v136 = vpow.pop %v135
  %v137 = vadd.f32 %v136, 1.0
  %v138 = vrcp.pop %v137
  %v139 = vmul.f32 1.0, %v138
  %v140 = vtanh.pop %v83
  %v143 = vunpack.c.l.s4 1983009808
  %v144 = vunpack.c.0.s8 %v143
  %v145 = vlaneseq
  %v146 = vshrl.u32 %v145, 7
  %v147 = vsub.s32 %v144, %v146
  %v148 = vrot.slane %v133, %v147
  %149 = vrot.lane.b32.xlu0 %v148, 32
  %v150 = vpop.permute.xlu0 %149
  %v152 = vmul.f32 %v139, %v150
  %154 = vrot.lane.b32.xlu0 %v140, 64
  %v155 = vpop.permute.xlu0 %154
  %v157 = vmul.f32 %v139, %v155
  %159 = vrot.lane.b32.xlu0 %v157, 32
  %v160 = vpop.permute.xlu0 %159
  %v162 = vadd.f32 %v152, %v160
  %v163 = vtanh.pop %v162
  %165 = vrot.lane.b32.xlu0 %v163, 64
  %v166 = vpop.permute.xlu0 %165
  %v168 = vmul.f32 %v139, %v166
  %v169 = vld [vmem:[#allocation5] sm:$0x3]
  %v170 = vxor.u32 %v132, 2147483648
  %v171 = vmul.f32 %v170, 1.442695
  %v172 = vpow.pop %v171
  %v173 = vadd.f32 %v172, 1.0
  %v174 = vrcp.pop %v173
  %v175 = vmul.f32 1.0, %v174
  %v176 = vtanh.pop %v132
  %v179 = vunpack.c.l.s4 1983009808
  %v180 = vunpack.c.0.s8 %v179
  %v181 = vlaneseq
  %v182 = vshrl.u32 %v181, 7
  %v183 = vsub.s32 %v180, %v182
  %v184 = vrot.slane %v169, %v183
  %185 = vrot.lane.b32.xlu0 %v184, 32
  %v186 = vpop.permute.xlu0 %185
  %v188 = vmul.f32 %v175, %v186
  %190 = vrot.lane.b32.xlu0 %v176, 64
  %v191 = vpop.permute.xlu0 %190
  %v193 = vmul.f32 %v175, %v191
  %195 = vrot.lane.b32.xlu0 %v193, 32
  %v196 = vpop.permute.xlu0 %195
  %v198 = vadd.f32 %v188, %v196
  %v199 = vtanh.pop %v198
  %201 = vrot.lane.b32.xlu0 %v199, 64
  %v202 = vpop.permute.xlu0 %201
  %v204 = vmul.f32 %v175, %v202
  %v207 = vunpack.c.l.s4 1983009808
  %v208 = vunpack.c.0.s8 %v207
  %v209 = vlaneseq
  %v210 = vshrl.u32 %v209, 7
  %v211 = vsub.s32 %v208, %v210
  %v212 = vrot.slane %v168, %v211
  %213 = vrot.lane.b32.xlu0 %v212, 32
  %v214 = vpop.permute.xlu0 %213
  %216 = vst.msk [vmem:[#allocation2] sm:$0x3] %vm17, %v214
  %v219 = vunpack.c.l.s4 1983009808
  %v220 = vunpack.c.0.s8 %v219
  %v221 = vlaneseq
  %v222 = vshrl.u32 %v221, 7
  %v223 = vsub.s32 %v220, %v222
  %v224 = vrot.slane %v162, %v223
  %225 = vrot.lane.b32.xlu0 %v224, 96
  %v226 = vpop.permute.xlu0 %225
  %228 = vst.msk [vmem:[#allocation3] sm:$0x3] %vm17, %v226
  %v231 = vunpack.c.l.s4 1983009808
  %v232 = vunpack.c.0.s8 %v231
  %v233 = vlaneseq
  %v234 = vshrl.u32 %v233, 7
  %v235 = vsub.s32 %v232, %v234
  %v236 = vrot.slane %v204, %v235
  %237 = vrot.lane.b32.xlu0 %v236, 32
  %v238 = vpop.permute.xlu0 %237
  %240 = vst.msk [vmem:[#allocation4] sm:$0x3] %vm17, %v238
  %v243 = vunpack.c.l.s4 1983009808
  %v244 = vunpack.c.0.s8 %v243
  %v245 = vlaneseq
  %v246 = vshrl.u32 %v245, 7
  %v247 = vsub.s32 %v244, %v246
  %v248 = vrot.slane %v198, %v247
  %249 = vrot.lane.b32.xlu0 %v248, 96
  %v250 = vpop.permute.xlu0 %249
  %252 = vst.msk [vmem:[#allocation5] sm:$0x3] %vm17, %v250
  %253 = vst.msk [vmem:[%s3] sm:$0x3] %vm17, %v214
  %s254 = scalar_lea.vmem %s4, 14
  %255 = vst.msk [vmem:[%s254] sm:$0x3] %vm17, %v238
  %s256 = scalar_lea.vmem %s0, 4
  %v257 = vld [vmem:[%s256] sm:$0xf]
  %s258 = scalar_lea.vmem %s0, 24
  %v259 = vld [vmem:[%s258] sm:$0xf]
  %v260 = vld [vmem:[#allocation2] sm:$0x3]
  %v261 = vpack.c.bf16 %v260, %v260
  %v263 = vsel %vm39, %v261, 0
  %265 = vmatprep.subr.bf16.mxu0 0
  %266 = vmatpush1.bf16.msra.mxu0 %v26
  %267 = vmatprep.subr.bf16.mxu0 0
  %268 = vmatpush1.bf16.msra.mxu0 %v27
  %269 = vmatprep.subr.bf16.mxu0 0
  %270 = vmatpush1.bf16.msra.mxu0 0
  %271 = vmatprep.subr.bf16.mxu0 0
  %272 = vmatpush1.bf16.msra.mxu0 0
  %273 = vmatprep.subr.bf16.mxu0 0
  %274 = vmatpush1.bf16.msra.mxu0 0
  %275 = vmatprep.subr.bf16.mxu0 0
  %276 = vmatpush1.bf16.msra.mxu0 0
  %277 = vmatprep.subr.bf16.mxu0 0
  %278 = vmatpush1.bf16.msra.mxu0 0
  %279 = vmatprep.subr.bf16.mxu0 0
  %280 = vmatpush1.bf16.msra.mxu0 0
  %281 = vmatprep.subr.bf16.mxu0 0
  %282 = vmatpush1.bf16.msra.mxu0 0
  %283 = vmatprep.subr.bf16.mxu0 0
  %284 = vmatpush1.bf16.msra.mxu0 0
  %285 = vmatprep.subr.bf16.mxu0 0
  %286 = vmatpush1.bf16.msra.mxu0 0
  %287 = vmatprep.subr.bf16.mxu0 0
  %288 = vmatpush1.bf16.msra.mxu0 0
  %289 = vmatprep.subr.bf16.mxu0 0
  %290 = vmatpush1.bf16.msra.mxu0 0
  %291 = vmatprep.subr.bf16.mxu0 0
  %292 = vmatpush1.bf16.msra.mxu0 0
  %293 = vmatprep.subr.bf16.mxu0 0
  %294 = vmatpush1.bf16.msra.mxu0 0
  %295 = vmatprep.subr.bf16.mxu0 0
  %296 = vmatpush1.bf16.msra.mxu0 0
  %297 = vmatprep.mubr.bf16.mxu0 0
  %298 = vmatmul.mubr.bf16.gmra.mrb[0].mxu0 %v263
  %v299 = vpop.f32.mrb[0].mxu0
  %v300 = vadd.f32 0.0, %v299
  %v301 = vpop.f32.mrb[0].mxu0
  %v302 = vpop.f32.mrb[0].mxu0
  %v303 = vpop.f32.mrb[0].mxu0
  %304 = vdwg.mxu0
  %v305 = vadd.f32 %v257, %v300
  %v306 = vld [vmem:[#allocation4] sm:$0x3]
  %v307 = vpack.c.bf16 %v306, %v306
  %v309 = vsel %vm39, %v307, 0
  %311 = vmatprep.subr.bf16.mxu0 0
  %312 = vmatpush1.bf16.msra.mxu0 %v32
  %313 = vmatprep.subr.bf16.mxu0 0
  %314 = vmatpush1.bf16.msra.mxu0 %v33
  %315 = vmatprep.subr.bf16.mxu0 0
  %316 = vmatpush1.bf16.msra.mxu0 0
  %317 = vmatprep.subr.bf16.mxu0 0
  %318 = vmatpush1.bf16.msra.mxu0 0
  %319 = vmatprep.subr.bf16.mxu0 0
  %320 = vmatpush1.bf16.msra.mxu0 0
  %321 = vmatprep.subr.bf16.mxu0 0
  %322 = vmatpush1.bf16.msra.mxu0 0
  %323 = vmatprep.subr.bf16.mxu0 0
  %324 = vmatpush1.bf16.msra.mxu0 0
  %325 = vmatprep.subr.bf16.mxu0 0
  %326 = vmatpush1.bf16.msra.mxu0 0
  %327 = vmatprep.subr.bf16.mxu0 0
  %328 = vmatpush1.bf16.msra.mxu0 0
  %329 = vmatprep.subr.bf16.mxu0 0
  %330 = vmatpush1.bf16.msra.mxu0 0
  %331 = vmatprep.subr.bf16.mxu0 0
  %332 = vmatpush1.bf16.msra.mxu0 0
  %333 = vmatprep.subr.bf16.mxu0 0
  %334 = vmatpush1.bf16.msra.mxu0 0
  %335 = vmatprep.subr.bf16.mxu0 0
  %336 = vmatpush1.bf16.msra.mxu0 0
  %337 = vmatprep.subr.bf16.mxu0 0
  %338 = vmatpush1.bf16.msra.mxu0 0
  %339 = vmatprep.subr.bf16.mxu0 0
  %340 = vmatpush1.bf16.msra.mxu0 0
  %341 = vmatprep.subr.bf16.mxu0 0
  %342 = vmatpush1.bf16.msra.mxu0 0
  %343 = vmatprep.mubr.bf16.mxu0 0
  %344 = vmatmul.mubr.bf16.gmra.mrb[0].mxu0 %v309
  %v345 = vpop.f32.mrb[0].mxu0
  %v346 = vadd.f32 0.0, %v345
  %v347 = vpop.f32.mrb[0].mxu0
  %v348 = vpop.f32.mrb[0].mxu0
  %v349 = vpop.f32.mrb[0].mxu0
  %350 = vdwg.mxu0
  %v352 = vrot.slane %v259, 2
  %v354 = vadd.f32 %v352, %v346
  %v355 = vld [vmem:[#allocation3] sm:$0x3]
  %v356 = vxor.u32 %v305, 2147483648
  %v357 = vmul.f32 %v356, 1.442695
  %v358 = vpow.pop %v357
  %v359 = vadd.f32 %v358, 1.0
  %v360 = vrcp.pop %v359
  %v361 = vmul.f32 1.0, %v360
  %v362 = vtanh.pop %v305
  %v365 = vunpack.c.l.s4 1983009808
  %v366 = vunpack.c.0.s8 %v365
  %v367 = vlaneseq
  %v368 = vshrl.u32 %v367, 7
  %v369 = vsub.s32 %v366, %v368
  %v370 = vrot.slane %v355, %v369
  %371 = vrot.lane.b32.xlu0 %v370, 32
  %v372 = vpop.permute.xlu0 %371
  %v374 = vmul.f32 %v361, %v372
  %376 = vrot.lane.b32.xlu0 %v362, 64
  %v377 = vpop.permute.xlu0 %376
  %v379 = vmul.f32 %v361, %v377
  %381 = vrot.lane.b32.xlu0 %v379, 32
  %v382 = vpop.permute.xlu0 %381
  %v384 = vadd.f32 %v374, %v382
  %v385 = vtanh.pop %v384
  %387 = vrot.lane.b32.xlu0 %v385, 64
  %v388 = vpop.permute.xlu0 %387
  %v390 = vmul.f32 %v361, %v388
  %v391 = vld [vmem:[#allocation5] sm:$0x3]
  %v392 = vxor.u32 %v354, 2147483648
  %v393 = vmul.f32 %v392, 1.442695
  %v394 = vpow.pop %v393
  %v395 = vadd.f32 %v394, 1.0
  %v396 = vrcp.pop %v395
  %v397 = vmul.f32 1.0, %v396
  %v398 = vtanh.pop %v354
  %v401 = vunpack.c.l.s4 1983009808
  %v402 = vunpack.c.0.s8 %v401
  %v403 = vlaneseq
  %v404 = vshrl.u32 %v403, 7
  %v405 = vsub.s32 %v402, %v404
  %v406 = vrot.slane %v391, %v405
  %407 = vrot.lane.b32.xlu0 %v406, 32
  %v408 = vpop.permute.xlu0 %407
  %v410 = vmul.f32 %v397, %v408
  %412 = vrot.lane.b32.xlu0 %v398, 64
  %v413 = vpop.permute.xlu0 %412
  %v415 = vmul.f32 %v397, %v413
  %417 = vrot.lane.b32.xlu0 %v415, 32
  %v418 = vpop.permute.xlu0 %417
  %v420 = vadd.f32 %v410, %v418
  %v421 = vtanh.pop %v420
  %423 = vrot.lane.b32.xlu0 %v421, 64
  %v424 = vpop.permute.xlu0 %423
  %v426 = vmul.f32 %v397, %v424
  %v429 = vunpack.c.l.s4 1983009808
  %v430 = vunpack.c.0.s8 %v429
  %v431 = vlaneseq
  %v432 = vshrl.u32 %v431, 7
  %v433 = vsub.s32 %v430, %v432
  %v434 = vrot.slane %v390, %v433
  %435 = vrot.lane.b32.xlu0 %v434, 32
  %v436 = vpop.permute.xlu0 %435
  %438 = vst.msk [vmem:[#allocation2] sm:$0x3] %vm17, %v436
  %v441 = vunpack.c.l.s4 1983009808
  %v442 = vunpack.c.0.s8 %v441
  %v443 = vlaneseq
  %v444 = vshrl.u32 %v443, 7
  %v445 = vsub.s32 %v442, %v444
  %v446 = vrot.slane %v384, %v445
  %447 = vrot.lane.b32.xlu0 %v446, 96
  %v448 = vpop.permute.xlu0 %447
  %450 = vst.msk [vmem:[#allocation3] sm:$0x3] %vm17, %v448
  %v453 = vunpack.c.l.s4 1983009808
  %v454 = vunpack.c.0.s8 %v453
  %v455 = vlaneseq
  %v456 = vshrl.u32 %v455, 7
  %v457 = vsub.s32 %v454, %v456
  %v458 = vrot.slane %v426, %v457
  %459 = vrot.lane.b32.xlu0 %v458, 32
  %v460 = vpop.permute.xlu0 %459
  %462 = vst.msk [vmem:[#allocation4] sm:$0x3] %vm17, %v460
  %v465 = vunpack.c.l.s4 1983009808
  %v466 = vunpack.c.0.s8 %v465
  %v467 = vlaneseq
  %v468 = vshrl.u32 %v467, 7
  %v469 = vsub.s32 %v466, %v468
  %v470 = vrot.slane %v420, %v469
  %471 = vrot.lane.b32.xlu0 %v470, 96
  %v472 = vpop.permute.xlu0 %471
  %474 = vst.msk [vmem:[#allocation5] sm:$0x3] %vm17, %v472
  %s475 = scalar_lea.vmem %s3, 2
  %476 = vst.msk [vmem:[%s475] sm:$0x3] %vm17, %v436
  %s477 = scalar_lea.vmem %s4, 12
  %478 = vst.msk [vmem:[%s477] sm:$0x3] %vm17, %v460
  %s479 = scalar_lea.vmem %s0, 8
  %v480 = vld [vmem:[%s479] sm:$0xf]
  %s481 = scalar_lea.vmem %s0, 20
  %v482 = vld [vmem:[%s481] sm:$0xf]
  %v483 = vld [vmem:[#allocation2] sm:$0x3]
  %v484 = vpack.c.bf16 %v483, %v483
  %v486 = vsel %vm39, %v484, 0
  %488 = vmatprep.subr.bf16.mxu0 0
  %489 = vmatpush1.bf16.msra.mxu0 %v26
  %490 = vmatprep.subr.bf16.mxu0 0
  %491 = vmatpush1.bf16.msra.mxu0 %v27
  %492 = vmatprep.subr.bf16.mxu0 0
  %493 = vmatpush1.bf16.msra.mxu0 0
  %494 = vmatprep.subr.bf16.mxu0 0
  %495 = vmatpush1.bf16.msra.mxu0 0
  %496 = vmatprep.subr.bf16.mxu0 0
  %497 = vmatpush1.bf16.msra.mxu0 0
  %498 = vmatprep.subr.bf16.mxu0 0
  %499 = vmatpush1.bf16.msra.mxu0 0
  %500 = vmatprep.subr.bf16.mxu0 0
  %501 = vmatpush1.bf16.msra.mxu0 0
  %502 = vmatprep.subr.bf16.mxu0 0
  %503 = vmatpush1.bf16.msra.mxu0 0
  %504 = vmatprep.subr.bf16.mxu0 0
  %505 = vmatpush1.bf16.msra.mxu0 0
  %506 = vmatprep.subr.bf16.mxu0 0
  %507 = vmatpush1.bf16.msra.mxu0 0
  %508 = vmatprep.subr.bf16.mxu0 0
  %509 = vmatpush1.bf16.msra.mxu0 0
  %510 = vmatprep.subr.bf16.mxu0 0
  %511 = vmatpush1.bf16.msra.mxu0 0
  %512 = vmatprep.subr.bf16.mxu0 0
  %513 = vmatpush1.bf16.msra.mxu0 0
  %514 = vmatprep.subr.bf16.mxu0 0
  %515 = vmatpush1.bf16.msra.mxu0 0
  %516 = vmatprep.subr.bf16.mxu0 0
  %517 = vmatpush1.bf16.msra.mxu0 0
  %518 = vmatprep.subr.bf16.mxu0 0
  %519 = vmatpush1.bf16.msra.mxu0 0
  %520 = vmatprep.mubr.bf16.mxu0 0
  %521 = vmatmul.mubr.bf16.gmra.mrb[0].mxu0 %v486
  %v522 = vpop.f32.mrb[0].mxu0
  %v523 = vadd.f32 0.0, %v522
  %v524 = vpop.f32.mrb[0].mxu0
  %v525 = vpop.f32.mrb[0].mxu0
  %v526 = vpop.f32.mrb[0].mxu0
  %527 = vdwg.mxu0
  %v528 = vadd.f32 %v480, %v523
  %v529 = vld [vmem:[#allocation4] sm:$0x3]
  %v530 = vpack.c.bf16 %v529, %v529
  %v532 = vsel %vm39, %v530, 0
  %534 = vmatprep.subr.bf16.mxu0 0
  %535 = vmatpush1.bf16.msra.mxu0 %v32
  %536 = vmatprep.subr.bf16.mxu0 0
  %537 = vmatpush1.bf16.msra.mxu0 %v33
  %538 = vmatprep.subr.bf16.mxu0 0
  %539 = vmatpush1.bf16.msra.mxu0 0
  %540 = vmatprep.subr.bf16.mxu0 0
  %541 = vmatpush1.bf16.msra.mxu0 0
  %542 = vmatprep.subr.bf16.mxu0 0
  %543 = vmatpush1.bf16.msra.mxu0 0
  %544 = vmatprep.subr.bf16.mxu0 0
  %545 = vmatpush1.bf16.msra.mxu0 0
  %546 = vmatprep.subr.bf16.mxu0 0
  %547 = vmatpush1.bf16.msra.mxu0 0
  %548 = vmatprep.subr.bf16.mxu0 0
  %549 = vmatpush1.bf16.msra.mxu0 0
  %550 = vmatprep.subr.bf16.mxu0 0
  %551 = vmatpush1.bf16.msra.mxu0 0
  %552 = vmatprep.subr.bf16.mxu0 0
  %553 = vmatpush1.bf16.msra.mxu0 0
  %554 = vmatprep.subr.bf16.mxu0 0
  %555 = vmatpush1.bf16.msra.mxu0 0
  %556 = vmatprep.subr.bf16.mxu0 0
  %557 = vmatpush1.bf16.msra.mxu0 0
  %558 = vmatprep.subr.bf16.mxu0 0
  %559 = vmatpush1.bf16.msra.mxu0 0
  %560 = vmatprep.subr.bf16.mxu0 0
  %561 = vmatpush1.bf16.msra.mxu0 0
  %562 = vmatprep.subr.bf16.mxu0 0
  %563 = vmatpush1.bf16.msra.mxu0 0
  %564 = vmatprep.subr.bf16.mxu0 0
  %565 = vmatpush1.bf16.msra.mxu0 0
  %566 = vmatprep.mubr.bf16.mxu0 0
  %567 = vmatmul.mubr.bf16.gmra.mrb[0].mxu0 %v532
  %v568 = vpop.f32.mrb[0].mxu0
  %v569 = vadd.f32 0.0, %v568
  %v570 = vpop.f32.mrb[0].mxu0
  %v571 = vpop.f32.mrb[0].mxu0
  %v572 = vpop.f32.mrb[0].mxu0
  %573 = vdwg.mxu0
  %v575 = vrot.slane %v482, 2
  %v577 = vadd.f32 %v575, %v569
  %v578 = vld [vmem:[#allocation3] sm:$0x3]
  %v579 = vxor.u32 %v528, 2147483648
  %v580 = vmul.f32 %v579, 1.442695
  %v581 = vpow.pop %v580
  %v582 = vadd.f32 %v581, 1.0
  %v583 = vrcp.pop %v582
  %v584 = vmul.f32 1.0, %v583
  %v585 = vtanh.pop %v528
  %v588 = vunpack.c.l.s4 1983009808
  %v589 = vunpack.c.0.s8 %v588
  %v590 = vlaneseq
  %v591 = vshrl.u32 %v590, 7
  %v592 = vsub.s32 %v589, %v591
  %v593 = vrot.slane %v578, %v592
  %594 = vrot.lane.b32.xlu0 %v593, 32
  %v595 = vpop.permute.xlu0 %594
  %v597 = vmul.f32 %v584, %v595
  %599 = vrot.lane.b32.xlu0 %v585, 64
  %v600 = vpop.permute.xlu0 %599
  %v602 = vmul.f32 %v584, %v600
  %604 = vrot.lane.b32.xlu0 %v602, 32
  %v605 = vpop.permute.xlu0 %604
  %v607 = vadd.f32 %v597, %v605
  %v608 = vtanh.pop %v607
  %610 = vrot.lane.b32.xlu0 %v608, 64
  %v611 = vpop.permute.xlu0 %610
  %v613 = vmul.f32 %v584, %v611
  %v614 = vld [vmem:[#allocation5] sm:$0x3]
  %v615 = vxor.u32 %v577, 2147483648
  %v616 = vmul.f32 %v615, 1.442695
  %v617 = vpow.pop %v616
  %v618 = vadd.f32 %v617, 1.0
  %v619 = vrcp.pop %v618
  %v620 = vmul.f32 1.0, %v619
  %v621 = vtanh.pop %v577
  %v624 = vunpack.c.l.s4 1983009808
  %v625 = vunpack.c.0.s8 %v624
  %v626 = vlaneseq
  %v627 = vshrl.u32 %v626, 7
  %v628 = vsub.s32 %v625, %v627
  %v629 = vrot.slane %v614, %v628
  %630 = vrot.lane.b32.xlu0 %v629, 32
  %v631 = vpop.permute.xlu0 %630
  %v633 = vmul.f32 %v620, %v631
  %635 = vrot.lane.b32.xlu0 %v621, 64
  %v636 = vpop.permute.xlu0 %635
  %v638 = vmul.f32 %v620, %v636
  %640 = vrot.lane.b32.xlu0 %v638, 32
  %v641 = vpop.permute.xlu0 %640
  %v643 = vadd.f32 %v633, %v641
  %v644 = vtanh.pop %v643
  %646 = vrot.lane.b32.xlu0 %v644, 64
  %v647 = vpop.permute.xlu0 %646
  %v649 = vmul.f32 %v620, %v647
  %v652 = vunpack.c.l.s4 1983009808
  %v653 = vunpack.c.0.s8 %v652
  %v654 = vlaneseq
  %v655 = vshrl.u32 %v654, 7
  %v656 = vsub.s32 %v653, %v655
  %v657 = vrot.slane %v613, %v656
  %658 = vrot.lane.b32.xlu0 %v657, 32
  %v659 = vpop.permute.xlu0 %658
  %661 = vst.msk [vmem:[#allocation2] sm:$0x3] %vm17, %v659
  %v664 = vunpack.c.l.s4 1983009808
  %v665 = vunpack.c.0.s8 %v664
  %v666 = vlaneseq
  %v667 = vshrl.u32 %v666, 7
  %v668 = vsub.s32 %v665, %v667
  %v669 = vrot.slane %v607, %v668
  %670 = vrot.lane.b32.xlu0 %v669, 96
  %v671 = vpop.permute.xlu0 %670
  %673 = vst.msk [vmem:[#allocation3] sm:$0x3] %vm17, %v671
  %v676 = vunpack.c.l.s4 1983009808
  %v677 = vunpack.c.0.s8 %v676
  %v678 = vlaneseq
  %v679 = vshrl.u32 %v678, 7
  %v680 = vsub.s32 %v677, %v679
  %v681 = vrot.slane %v649, %v680
  %682 = vrot.lane.b32.xlu0 %v681, 32
  %v683 = vpop.permute.xlu0 %682
  %685 = vst.msk [vmem:[#allocation4] sm:$0x3] %vm17, %v683
  %v688 = vunpack.c.l.s4 1983009808
  %v689 = vunpack.c.0.s8 %v688
  %v690 = vlaneseq
  %v691 = vshrl.u32 %v690, 7
  %v692 = vsub.s32 %v689, %v691
  %v693 = vrot.slane %v643, %v692
  %694 = vrot.lane.b32.xlu0 %v693, 96
  %v695 = vpop.permute.xlu0 %694
  %697 = vst.msk [vmem:[#allocation5] sm:$0x3] %vm17, %v695
  %s698 = scalar_lea.vmem %s3, 4
  %699 = vst.msk [vmem:[%s698] sm:$0x3] %vm17, %v659
  %s700 = scalar_lea.vmem %s4, 10
  %701 = vst.msk [vmem:[%s700] sm:$0x3] %vm17, %v683
  %s702 = scalar_lea.vmem %s0, 12
  %v703 = vld [vmem:[%s702] sm:$0xf]
  %s704 = scalar_lea.vmem %s0, 16
  %v705 = vld [vmem:[%s704] sm:$0xf]
  %v706 = vld [vmem:[#allocation2] sm:$0x3]
  %v707 = vpack.c.bf16 %v706, %v706
  %v709 = vsel %vm39, %v707, 0
  %711 = vmatprep.subr.bf16.mxu0 0
  %712 = vmatpush1.bf16.msra.mxu0 %v26
  %713 = vmatprep.subr.bf16.mxu0 0
  %714 = vmatpush1.bf16.msra.mxu0 %v27
  %715 = vmatprep.subr.bf16.mxu0 0
  %716 = vmatpush1.bf16.msra.mxu0 0
  %717 = vmatprep.subr.bf16.mxu0 0
  %718 = vmatpush1.bf16.msra.mxu0 0
  %719 = vmatprep.subr.bf16.mxu0 0
  %720 = vmatpush1.bf16.msra.mxu0 0
  %721 = vmatprep.subr.bf16.mxu0 0
  %722 = vmatpush1.bf16.msra.mxu0 0
  %723 = vmatprep.subr.bf16.mxu0 0
  %724 = vmatpush1.bf16.msra.mxu0 0
  %725 = vmatprep.subr.bf16.mxu0 0
  %726 = vmatpush1.bf16.msra.mxu0 0
  %727 = vmatprep.subr.bf16.mxu0 0
  %728 = vmatpush1.bf16.msra.mxu0 0
  %729 = vmatprep.subr.bf16.mxu0 0
  %730 = vmatpush1.bf16.msra.mxu0 0
  %731 = vmatprep.subr.bf16.mxu0 0
  %732 = vmatpush1.bf16.msra.mxu0 0
  %733 = vmatprep.subr.bf16.mxu0 0
  %734 = vmatpush1.bf16.msra.mxu0 0
  %735 = vmatprep.subr.bf16.mxu0 0
  %736 = vmatpush1.bf16.msra.mxu0 0
  %737 = vmatprep.subr.bf16.mxu0 0
  %738 = vmatpush1.bf16.msra.mxu0 0
  %739 = vmatprep.subr.bf16.mxu0 0
  %740 = vmatpush1.bf16.msra.mxu0 0
  %741 = vmatprep.subr.bf16.mxu0 0
  %742 = vmatpush1.bf16.msra.mxu0 0
  %743 = vmatprep.mubr.bf16.mxu0 0
  %744 = vmatmul.mubr.bf16.gmra.mrb[0].mxu0 %v709
  %v745 = vpop.f32.mrb[0].mxu0
  %v746 = vadd.f32 0.0, %v745
  %v747 = vpop.f32.mrb[0].mxu0
  %v748 = vpop.f32.mrb[0].mxu0
  %v749 = vpop.f32.mrb[0].mxu0
  %750 = vdwg.mxu0
  %v751 = vadd.f32 %v703, %v746
  %v752 = vld [vmem:[#allocation4] sm:$0x3]
  %v753 = vpack.c.bf16 %v752, %v752
  %v755 = vsel %vm39, %v753, 0
  %757 = vmatprep.subr.bf16.mxu0 0
  %758 = vmatpush1.bf16.msra.mxu0 %v32
  %759 = vmatprep.subr.bf16.mxu0 0
  %760 = vmatpush1.bf16.msra.mxu0 %v33
  %761 = vmatprep.subr.bf16.mxu0 0
  %762 = vmatpush1.bf16.msra.mxu0 0
  %763 = vmatprep.subr.bf16.mxu0 0
  %764 = vmatpush1.bf16.msra.mxu0 0
  %765 = vmatprep.subr.bf16.mxu0 0
  %766 = vmatpush1.bf16.msra.mxu0 0
  %767 = vmatprep.subr.bf16.mxu0 0
  %768 = vmatpush1.bf16.msra.mxu0 0
  %769 = vmatprep.subr.bf16.mxu0 0
  %770 = vmatpush1.bf16.msra.mxu0 0
  %771 = vmatprep.subr.bf16.mxu0 0
  %772 = vmatpush1.bf16.msra.mxu0 0
  %773 = vmatprep.subr.bf16.mxu0 0
  %774 = vmatpush1.bf16.msra.mxu0 0
  %775 = vmatprep.subr.bf16.mxu0 0
  %776 = vmatpush1.bf16.msra.mxu0 0
  %777 = vmatprep.subr.bf16.mxu0 0
  %778 = vmatpush1.bf16.msra.mxu0 0
  %779 = vmatprep.subr.bf16.mxu0 0
  %780 = vmatpush1.bf16.msra.mxu0 0
  %781 = vmatprep.subr.bf16.mxu0 0
  %782 = vmatpush1.bf16.msra.mxu0 0
  %783 = vmatprep.subr.bf16.mxu0 0
  %784 = vmatpush1.bf16.msra.mxu0 0
  %785 = vmatprep.subr.bf16.mxu0 0
  %786 = vmatpush1.bf16.msra.mxu0 0
  %787 = vmatprep.subr.bf16.mxu0 0
  %788 = vmatpush1.bf16.msra.mxu0 0
  %789 = vmatprep.mubr.bf16.mxu0 0
  %790 = vmatmul.mubr.bf16.gmra.mrb[0].mxu0 %v755
  %v791 = vpop.f32.mrb[0].mxu0
  %v792 = vadd.f32 0.0, %v791
  %v793 = vpop.f32.mrb[0].mxu0
  %v794 = vpop.f32.mrb[0].mxu0
  %v795 = vpop.f32.mrb[0].mxu0
  %796 = vdwg.mxu0
  %v798 = vrot.slane %v705, 2
  %v800 = vadd.f32 %v798, %v792
  %v801 = vld [vmem:[#allocation3] sm:$0x3]
  %v802 = vxor.u32 %v751, 2147483648
  %v803 = vmul.f32 %v802, 1.442695
  %v804 = vpow.pop %v803
  %v805 = vadd.f32 %v804, 1.0
  %v806 = vrcp.pop %v805
  %v807 = vmul.f32 1.0, %v806
  %v808 = vtanh.pop %v751
  %v811 = vunpack.c.l.s4 1983009808
  %v812 = vunpack.c.0.s8 %v811
  %v813 = vlaneseq
  %v814 = vshrl.u32 %v813, 7
  %v815 = vsub.s32 %v812, %v814
  %v816 = vrot.slane %v801, %v815
  %817 = vrot.lane.b32.xlu0 %v816, 32
  %v818 = vpop.permute.xlu0 %817
  %v820 = vmul.f32 %v807, %v818
  %822 = vrot.lane.b32.xlu0 %v808, 64
  %v823 = vpop.permute.xlu0 %822
  %v825 = vmul.f32 %v807, %v823
  %827 = vrot.lane.b32.xlu0 %v825, 32
  %v828 = vpop.permute.xlu0 %827
  %v830 = vadd.f32 %v820, %v828
  %v831 = vtanh.pop %v830
  %833 = vrot.lane.b32.xlu0 %v831, 64
  %v834 = vpop.permute.xlu0 %833
  %v836 = vmul.f32 %v807, %v834
  %v837 = vld [vmem:[#allocation5] sm:$0x3]
  %v838 = vxor.u32 %v800, 2147483648
  %v839 = vmul.f32 %v838, 1.442695
  %v840 = vpow.pop %v839
  %v841 = vadd.f32 %v840, 1.0
  %v842 = vrcp.pop %v841
  %v843 = vmul.f32 1.0, %v842
  %v844 = vtanh.pop %v800
  %v847 = vunpack.c.l.s4 1983009808
  %v848 = vunpack.c.0.s8 %v847
  %v849 = vlaneseq
  %v850 = vshrl.u32 %v849, 7
  %v851 = vsub.s32 %v848, %v850
  %v852 = vrot.slane %v837, %v851
  %853 = vrot.lane.b32.xlu0 %v852, 32
  %v854 = vpop.permute.xlu0 %853
  %v856 = vmul.f32 %v843, %v854
  %858 = vrot.lane.b32.xlu0 %v844, 64
  %v859 = vpop.permute.xlu0 %858
  %v861 = vmul.f32 %v843, %v859
  %863 = vrot.lane.b32.xlu0 %v861, 32
  %v864 = vpop.permute.xlu0 %863
  %v866 = vadd.f32 %v856, %v864
  %v867 = vtanh.pop %v866
  %869 = vrot.lane.b32.xlu0 %v867, 64
  %v870 = vpop.permute.xlu0 %869
  %v872 = vmul.f32 %v843, %v870
  %v875 = vunpack.c.l.s4 1983009808
  %v876 = vunpack.c.0.s8 %v875
  %v877 = vlaneseq
  %v878 = vshrl.u32 %v877, 7
  %v879 = vsub.s32 %v876, %v878
  %v880 = vrot.slane %v836, %v879
  %881 = vrot.lane.b32.xlu0 %v880, 32
  %v882 = vpop.permute.xlu0 %881
  %884 = vst.msk [vmem:[#allocation2] sm:$0x3] %vm17, %v882
  %v887 = vunpack.c.l.s4 1983009808
  %v888 = vunpack.c.0.s8 %v887
  %v889 = vlaneseq
  %v890 = vshrl.u32 %v889, 7
  %v891 = vsub.s32 %v888, %v890
  %v892 = vrot.slane %v830, %v891
  %893 = vrot.lane.b32.xlu0 %v892, 96
  %v894 = vpop.permute.xlu0 %893
  %896 = vst.msk [vmem:[#allocation3] sm:$0x3] %vm17, %v894
  %v899 = vunpack.c.l.s4 1983009808
  %v900 = vunpack.c.0.s8 %v899
  %v901 = vlaneseq
  %v902 = vshrl.u32 %v901, 7
  %v903 = vsub.s32 %v900, %v902
  %v904 = vrot.slane %v872, %v903
  %905 = vrot.lane.b32.xlu0 %v904, 32
  %v906 = vpop.permute.xlu0 %905
  %908 = vst.msk [vmem:[#allocation4] sm:$0x3] %vm17, %v906
  %v911 = vunpack.c.l.s4 1983009808
  %v912 = vunpack.c.0.s8 %v911
  %v913 = vlaneseq
  %v914 = vshrl.u32 %v913, 7
  %v915 = vsub.s32 %v912, %v914
  %v916 = vrot.slane %v866, %v915
  %917 = vrot.lane.b32.xlu0 %v916, 96
  %v918 = vpop.permute.xlu0 %917
  %920 = vst.msk [vmem:[#allocation5] sm:$0x3] %vm17, %v918
  %s921 = scalar_lea.vmem %s3, 6
  %922 = vst.msk [vmem:[%s921] sm:$0x3] %vm17, %v882
  %s923 = scalar_lea.vmem %s4, 8
  %924 = vst.msk [vmem:[%s923] sm:$0x3] %vm17, %v906
  %v925 = vld [vmem:[%s704] sm:$0xf]
  %v926 = vld [vmem:[%s702] sm:$0xf]
  %v927 = vld [vmem:[#allocation2] sm:$0x3]
  %v928 = vpack.c.bf16 %v927, %v927
  %v930 = vsel %vm39, %v928, 0
  %932 = vmatprep.subr.bf16.mxu0 0
  %933 = vmatpush1.bf16.msra.mxu0 %v26
  %934 = vmatprep.subr.bf16.mxu0 0
  %935 = vmatpush1.bf16.msra.mxu0 %v27
  %936 = vmatprep.subr.bf16.mxu0 0
  %937 = vmatpush1.bf16.msra.mxu0 0
  %938 = vmatprep.subr.bf16.mxu0 0
  %939 = vmatpush1.bf16.msra.mxu0 0
  %940 = vmatprep.subr.bf16.mxu0 0
  %941 = vmatpush1.bf16.msra.mxu0 0
  %942 = vmatprep.subr.bf16.mxu0 0
  %943 = vmatpush1.bf16.msra.mxu0 0
  %944 = vmatprep.subr.bf16.mxu0 0
  %945 = vmatpush1.bf16.msra.mxu0 0
  %946 = vmatprep.subr.bf16.mxu0 0
  %947 = vmatpush1.bf16.msra.mxu0 0
  %948 = vmatprep.subr.bf16.mxu0 0
  %949 = vmatpush1.bf16.msra.mxu0 0
  %950 = vmatprep.subr.bf16.mxu0 0
  %951 = vmatpush1.bf16.msra.mxu0 0
  %952 = vmatprep.subr.bf16.mxu0 0
  %953 = vmatpush1.bf16.msra.mxu0 0
  %954 = vmatprep.subr.bf16.mxu0 0
  %955 = vmatpush1.bf16.msra.mxu0 0
  %956 = vmatprep.subr.bf16.mxu0 0
  %957 = vmatpush1.bf16.msra.mxu0 0
  %958 = vmatprep.subr.bf16.mxu0 0
  %959 = vmatpush1.bf16.msra.mxu0 0
  %960 = vmatprep.subr.bf16.mxu0 0
  %961 = vmatpush1.bf16.msra.mxu0 0
  %962 = vmatprep.subr.bf16.mxu0 0
  %963 = vmatpush1.bf16.msra.mxu0 0
  %964 = vmatprep.mubr.bf16.mxu0 0
  %965 = vmatmul.mubr.bf16.gmra.mrb[0].mxu0 %v930
  %v966 = vpop.f32.mrb[0].mxu0
  %v967 = vadd.f32 0.0, %v966
  %v968 = vpop.f32.mrb[0].mxu0
  %v969 = vpop.f32.mrb[0].mxu0
  %v970 = vpop.f32.mrb[0].mxu0
  %971 = vdwg.mxu0
  %v972 = vadd.f32 %v925, %v967
  %v973 = vld [vmem:[#allocation4] sm:$0x3]
  %v974 = vpack.c.bf16 %v973, %v973
  %v976 = vsel %vm39, %v974, 0
  %978 = vmatprep.subr.bf16.mxu0 0
  %979 = vmatpush1.bf16.msra.mxu0 %v32
  %980 = vmatprep.subr.bf16.mxu0 0
  %981 = vmatpush1.bf16.msra.mxu0 %v33
  %982 = vmatprep.subr.bf16.mxu0 0
  %983 = vmatpush1.bf16.msra.mxu0 0
  %984 = vmatprep.subr.bf16.mxu0 0
  %985 = vmatpush1.bf16.msra.mxu0 0
  %986 = vmatprep.subr.bf16.mxu0 0
  %987 = vmatpush1.bf16.msra.mxu0 0
  %988 = vmatprep.subr.bf16.mxu0 0
  %989 = vmatpush1.bf16.msra.mxu0 0
  %990 = vmatprep.subr.bf16.mxu0 0
  %991 = vmatpush1.bf16.msra.mxu0 0
  %992 = vmatprep.subr.bf16.mxu0 0
  %993 = vmatpush1.bf16.msra.mxu0 0
  %994 = vmatprep.subr.bf16.mxu0 0
  %995 = vmatpush1.bf16.msra.mxu0 0
  %996 = vmatprep.subr.bf16.mxu0 0
  %997 = vmatpush1.bf16.msra.mxu0 0
  %998 = vmatprep.subr.bf16.mxu0 0
  %999 = vmatpush1.bf16.msra.mxu0 0
  %1000 = vmatprep.subr.bf16.mxu0 0
  %1001 = vmatpush1.bf16.msra.mxu0 0
  %1002 = vmatprep.subr.bf16.mxu0 0
  %1003 = vmatpush1.bf16.msra.mxu0 0
  %1004 = vmatprep.subr.bf16.mxu0 0
  %1005 = vmatpush1.bf16.msra.mxu0 0
  %1006 = vmatprep.subr.bf16.mxu0 0
  %1007 = vmatpush1.bf16.msra.mxu0 0
  %1008 = vmatprep.subr.bf16.mxu0 0
  %1009 = vmatpush1.bf16.msra.mxu0 0
  %1010 = vmatprep.mubr.bf16.mxu0 0
  %1011 = vmatmul.mubr.bf16.gmra.mrb[0].mxu0 %v976
  %v1012 = vpop.f32.mrb[0].mxu0
  %v1013 = vadd.f32 0.0, %v1012
  %v1014 = vpop.f32.mrb[0].mxu0
  %v1015 = vpop.f32.mrb[0].mxu0
  %v1016 = vpop.f32.mrb[0].mxu0
  %1017 = vdwg.mxu0
  %v1019 = vrot.slane %v926, 2
  %v1021 = vadd.f32 %v1019, %v1013
  %v1022 = vld [vmem:[#allocation3] sm:$0x3]
  %v1023 = vxor.u32 %v972, 2147483648
  %v1024 = vmul.f32 %v1023, 1.442695
  %v1025 = vpow.pop %v1024
  %v1026 = vadd.f32 %v1025, 1.0
  %v1027 = vrcp.pop %v1026
  %v1028 = vmul.f32 1.0, %v1027
  %v1029 = vtanh.pop %v972
  %v1032 = vunpack.c.l.s4 1983009808
  %v1033 = vunpack.c.0.s8 %v1032
  %v1034 = vlaneseq
  %v1035 = vshrl.u32 %v1034, 7
  %v1036 = vsub.s32 %v1033, %v1035
  %v1037 = vrot.slane %v1022, %v1036
  %1038 = vrot.lane.b32.xlu0 %v1037, 32
  %v1039 = vpop.permute.xlu0 %1038
  %v1041 = vmul.f32 %v1028, %v1039
  %1043 = vrot.lane.b32.xlu0 %v1029, 64
  %v1044 = vpop.permute.xlu0 %1043
  %v1046 = vmul.f32 %v1028, %v1044
  %1048 = vrot.lane.b32.xlu0 %v1046, 32
  %v1049 = vpop.permute.xlu0 %1048
  %v1051 = vadd.f32 %v1041, %v1049
  %v1052 = vtanh.pop %v1051
  %1054 = vrot.lane.b32.xlu0 %v1052, 64
  %v1055 = vpop.permute.xlu0 %1054
  %v1057 = vmul.f32 %v1028, %v1055
  %v1058 = vld [vmem:[#allocation5] sm:$0x3]
  %v1059 = vxor.u32 %v1021, 2147483648
  %v1060 = vmul.f32 %v1059, 1.442695
  %v1061 = vpow.pop %v1060
  %v1062 = vadd.f32 %v1061, 1.0
  %v1063 = vrcp.pop %v1062
  %v1064 = vmul.f32 1.0, %v1063
  %v1065 = vtanh.pop %v1021
  %v1068 = vunpack.c.l.s4 1983009808
  %v1069 = vunpack.c.0.s8 %v1068
  %v1070 = vlaneseq
  %v1071 = vshrl.u32 %v1070, 7
  %v1072 = vsub.s32 %v1069, %v1071
  %v1073 = vrot.slane %v1058, %v1072
  %1074 = vrot.lane.b32.xlu0 %v1073, 32
  %v1075 = vpop.permute.xlu0 %1074
  %v1077 = vmul.f32 %v1064, %v1075
  %1079 = vrot.lane.b32.xlu0 %v1065, 64
  %v1080 = vpop.permute.xlu0 %1079
  %v1082 = vmul.f32 %v1064, %v1080
  %1084 = vrot.lane.b32.xlu0 %v1082, 32
  %v1085 = vpop.permute.xlu0 %1084
  %v1087 = vadd.f32 %v1077, %v1085
  %v1088 = vtanh.pop %v1087
  %1090 = vrot.lane.b32.xlu0 %v1088, 64
  %v1091 = vpop.permute.xlu0 %1090
  %v1093 = vmul.f32 %v1064, %v1091
  %v1096 = vunpack.c.l.s4 1983009808
  %v1097 = vunpack.c.0.s8 %v1096
  %v1098 = vlaneseq
  %v1099 = vshrl.u32 %v1098, 7
  %v1100 = vsub.s32 %v1097, %v1099
  %v1101 = vrot.slane %v1057, %v1100
  %1102 = vrot.lane.b32.xlu0 %v1101, 32
  %v1103 = vpop.permute.xlu0 %1102
  %1105 = vst.msk [vmem:[#allocation2] sm:$0x3] %vm17, %v1103
  %v1108 = vunpack.c.l.s4 1983009808
  %v1109 = vunpack.c.0.s8 %v1108
  %v1110 = vlaneseq
  %v1111 = vshrl.u32 %v1110, 7
  %v1112 = vsub.s32 %v1109, %v1111
  %v1113 = vrot.slane %v1051, %v1112
  %1114 = vrot.lane.b32.xlu0 %v1113, 96
  %v1115 = vpop.permute.xlu0 %1114
  %1117 = vst.msk [vmem:[#allocation3] sm:$0x3] %vm17, %v1115
  %v1120 = vunpack.c.l.s4 1983009808
  %v1121 = vunpack.c.0.s8 %v1120
  %v1122 = vlaneseq
  %v1123 = vshrl.u32 %v1122, 7
  %v1124 = vsub.s32 %v1121, %v1123
  %v1125 = vrot.slane %v1093, %v1124
  %1126 = vrot.lane.b32.xlu0 %v1125, 32
  %v1127 = vpop.permute.xlu0 %1126
  %1129 = vst.msk [vmem:[#allocation4] sm:$0x3] %vm17, %v1127
  %v1132 = vunpack.c.l.s4 1983009808
  %v1133 = vunpack.c.0.s8 %v1132
  %v1134 = vlaneseq
  %v1135 = vshrl.u32 %v1134, 7
  %v1136 = vsub.s32 %v1133, %v1135
  %v1137 = vrot.slane %v1087, %v1136
  %1138 = vrot.lane.b32.xlu0 %v1137, 96
  %v1139 = vpop.permute.xlu0 %1138
  %1141 = vst.msk [vmem:[#allocation5] sm:$0x3] %vm17, %v1139
  %s1142 = scalar_lea.vmem %s3, 8
  %1143 = vst.msk [vmem:[%s1142] sm:$0x3] %vm17, %v1103
  %s1144 = scalar_lea.vmem %s4, 6
  %1145 = vst.msk [vmem:[%s1144] sm:$0x3] %vm17, %v1127
  %v1146 = vld [vmem:[%s481] sm:$0xf]
  %v1147 = vld [vmem:[%s479] sm:$0xf]
  %v1148 = vld [vmem:[#allocation2] sm:$0x3]
  %v1149 = vpack.c.bf16 %v1148, %v1148
  %v1151 = vsel %vm39, %v1149, 0
  %1153 = vmatprep.subr.bf16.mxu0 0
  %1154 = vmatpush1.bf16.msra.mxu0 %v26
  %1155 = vmatprep.subr.bf16.mxu0 0
  %1156 = vmatpush1.bf16.msra.mxu0 %v27
  %1157 = vmatprep.subr.bf16.mxu0 0
  %1158 = vmatpush1.bf16.msra.mxu0 0
  %1159 = vmatprep.subr.bf16.mxu0 0
  %1160 = vmatpush1.bf16.msra.mxu0 0
  %1161 = vmatprep.subr.bf16.mxu0 0
  %1162 = vmatpush1.bf16.msra.mxu0 0
  %1163 = vmatprep.subr.bf16.mxu0 0
  %1164 = vmatpush1.bf16.msra.mxu0 0
  %1165 = vmatprep.subr.bf16.mxu0 0
  %1166 = vmatpush1.bf16.msra.mxu0 0
  %1167 = vmatprep.subr.bf16.mxu0 0
  %1168 = vmatpush1.bf16.msra.mxu0 0
  %1169 = vmatprep.subr.bf16.mxu0 0
  %1170 = vmatpush1.bf16.msra.mxu0 0
  %1171 = vmatprep.subr.bf16.mxu0 0
  %1172 = vmatpush1.bf16.msra.mxu0 0
  %1173 = vmatprep.subr.bf16.mxu0 0
  %1174 = vmatpush1.bf16.msra.mxu0 0
  %1175 = vmatprep.subr.bf16.mxu0 0
  %1176 = vmatpush1.bf16.msra.mxu0 0
  %1177 = vmatprep.subr.bf16.mxu0 0
  %1178 = vmatpush1.bf16.msra.mxu0 0
  %1179 = vmatprep.subr.bf16.mxu0 0
  %1180 = vmatpush1.bf16.msra.mxu0 0
  %1181 = vmatprep.subr.bf16.mxu0 0
  %1182 = vmatpush1.bf16.msra.mxu0 0
  %1183 = vmatprep.subr.bf16.mxu0 0
  %1184 = vmatpush1.bf16.msra.mxu0 0
  %1185 = vmatprep.mubr.bf16.mxu0 0
  %1186 = vmatmul.mubr.bf16.gmra.mrb[0].mxu0 %v1151
  %v1187 = vpop.f32.mrb[0].mxu0
  %v1188 = vadd.f32 0.0, %v1187
  %v1189 = vpop.f32.mrb[0].mxu0
  %v1190 = vpop.f32.mrb[0].mxu0
  %v1191 = vpop.f32.mrb[0].mxu0
  %1192 = vdwg.mxu0
  %v1193 = vadd.f32 %v1146, %v1188
  %v1194 = vld [vmem:[#allocation4] sm:$0x3]
  %v1195 = vpack.c.bf16 %v1194, %v1194
  %v1197 = vsel %vm39, %v1195, 0
  %1199 = vmatprep.subr.bf16.mxu0 0
  %1200 = vmatpush1.bf16.msra.mxu0 %v32
  %1201 = vmatprep.subr.bf16.mxu0 0
  %1202 = vmatpush1.bf16.msra.mxu0 %v33
  %1203 = vmatprep.subr.bf16.mxu0 0
  %1204 = vmatpush1.bf16.msra.mxu0 0
  %1205 = vmatprep.subr.bf16.mxu0 0
  %1206 = vmatpush1.bf16.msra.mxu0 0
  %1207 = vmatprep.subr.bf16.mxu0 0
  %1208 = vmatpush1.bf16.msra.mxu0 0
  %1209 = vmatprep.subr.bf16.mxu0 0
  %1210 = vmatpush1.bf16.msra.mxu0 0
  %1211 = vmatprep.subr.bf16.mxu0 0
  %1212 = vmatpush1.bf16.msra.mxu0 0
  %1213 = vmatprep.subr.bf16.mxu0 0
  %1214 = vmatpush1.bf16.msra.mxu0 0
  %1215 = vmatprep.subr.bf16.mxu0 0
  %1216 = vmatpush1.bf16.msra.mxu0 0
  %1217 = vmatprep.subr.bf16.mxu0 0
  %1218 = vmatpush1.bf16.msra.mxu0 0
  %1219 = vmatprep.subr.bf16.mxu0 0
  %1220 = vmatpush1.bf16.msra.mxu0 0
  %1221 = vmatprep.subr.bf16.mxu0 0
  %1222 = vmatpush1.bf16.msra.mxu0 0
  %1223 = vmatprep.subr.bf16.mxu0 0
  %1224 = vmatpush1.bf16.msra.mxu0 0
  %1225 = vmatprep.subr.bf16.mxu0 0
  %1226 = vmatpush1.bf16.msra.mxu0 0
  %1227 = vmatprep.subr.bf16.mxu0 0
  %1228 = vmatpush1.bf16.msra.mxu0 0
  %1229 = vmatprep.subr.bf16.mxu0 0
  %1230 = vmatpush1.bf16.msra.mxu0 0
  %1231 = vmatprep.mubr.bf16.mxu0 0
  %1232 = vmatmul.mubr.bf16.gmra.mrb[0].mxu0 %v1197
  %v1233 = vpop.f32.mrb[0].mxu0
  %v1234 = vadd.f32 0.0, %v1233
  %v1235 = vpop.f32.mrb[0].mxu0
  %v1236 = vpop.f32.mrb[0].mxu0
  %v1237 = vpop.f32.mrb[0].mxu0
  %1238 = vdwg.mxu0
  %v1240 = vrot.slane %v1147, 2
  %v1242 = vadd.f32 %v1240, %v1234
  %v1243 = vld [vmem:[#allocation3] sm:$0x3]
  %v1244 = vxor.u32 %v1193, 2147483648
  %v1245 = vmul.f32 %v1244, 1.442695
  %v1246 = vpow.pop %v1245
  %v1247 = vadd.f32 %v1246, 1.0
  %v1248 = vrcp.pop %v1247
  %v1249 = vmul.f32 1.0, %v1248
  %v1250 = vtanh.pop %v1193
  %v1253 = vunpack.c.l.s4 1983009808
  %v1254 = vunpack.c.0.s8 %v1253
  %v1255 = vlaneseq
  %v1256 = vshrl.u32 %v1255, 7
  %v1257 = vsub.s32 %v1254, %v1256
  %v1258 = vrot.slane %v1243, %v1257
  %1259 = vrot.lane.b32.xlu0 %v1258, 32
  %v1260 = vpop.permute.xlu0 %1259
  %v1262 = vmul.f32 %v1249, %v1260
  %1264 = vrot.lane.b32.xlu0 %v1250, 64
  %v1265 = vpop.permute.xlu0 %1264
  %v1267 = vmul.f32 %v1249, %v1265
  %1269 = vrot.lane.b32.xlu0 %v1267, 32
  %v1270 = vpop.permute.xlu0 %1269
  %v1272 = vadd.f32 %v1262, %v1270
  %v1273 = vtanh.pop %v1272
  %1275 = vrot.lane.b32.xlu0 %v1273, 64
  %v1276 = vpop.permute.xlu0 %1275
  %v1278 = vmul.f32 %v1249, %v1276
  %v1279 = vld [vmem:[#allocation5] sm:$0x3]
  %v1280 = vxor.u32 %v1242, 2147483648
  %v1281 = vmul.f32 %v1280, 1.442695
  %v1282 = vpow.pop %v1281
  %v1283 = vadd.f32 %v1282, 1.0
  %v1284 = vrcp.pop %v1283
  %v1285 = vmul.f32 1.0, %v1284
  %v1286 = vtanh.pop %v1242
  %v1289 = vunpack.c.l.s4 1983009808
  %v1290 = vunpack.c.0.s8 %v1289
  %v1291 = vlaneseq
  %v1292 = vshrl.u32 %v1291, 7
  %v1293 = vsub.s32 %v1290, %v1292
  %v1294 = vrot.slane %v1279, %v1293
  %1295 = vrot.lane.b32.xlu0 %v1294, 32
  %v1296 = vpop.permute.xlu0 %1295
  %v1298 = vmul.f32 %v1285, %v1296
  %1300 = vrot.lane.b32.xlu0 %v1286, 64
  %v1301 = vpop.permute.xlu0 %1300
  %v1303 = vmul.f32 %v1285, %v1301
  %1305 = vrot.lane.b32.xlu0 %v1303, 32
  %v1306 = vpop.permute.xlu0 %1305
  %v1308 = vadd.f32 %v1298, %v1306
  %v1309 = vtanh.pop %v1308
  %1311 = vrot.lane.b32.xlu0 %v1309, 64
  %v1312 = vpop.permute.xlu0 %1311
  %v1314 = vmul.f32 %v1285, %v1312
  %v1317 = vunpack.c.l.s4 1983009808
  %v1318 = vunpack.c.0.s8 %v1317
  %v1319 = vlaneseq
  %v1320 = vshrl.u32 %v1319, 7
  %v1321 = vsub.s32 %v1318, %v1320
  %v1322 = vrot.slane %v1278, %v1321
  %1323 = vrot.lane.b32.xlu0 %v1322, 32
  %v1324 = vpop.permute.xlu0 %1323
  %1326 = vst.msk [vmem:[#allocation2] sm:$0x3] %vm17, %v1324
  %v1329 = vunpack.c.l.s4 1983009808
  %v1330 = vunpack.c.0.s8 %v1329
  %v1331 = vlaneseq
  %v1332 = vshrl.u32 %v1331, 7
  %v1333 = vsub.s32 %v1330, %v1332
  %v1334 = vrot.slane %v1272, %v1333
  %1335 = vrot.lane.b32.xlu0 %v1334, 96
  %v1336 = vpop.permute.xlu0 %1335
  %1338 = vst.msk [vmem:[#allocation3] sm:$0x3] %vm17, %v1336
  %v1341 = vunpack.c.l.s4 1983009808
  %v1342 = vunpack.c.0.s8 %v1341
  %v1343 = vlaneseq
  %v1344 = vshrl.u32 %v1343, 7
  %v1345 = vsub.s32 %v1342, %v1344
  %v1346 = vrot.slane %v1314, %v1345
  %1347 = vrot.lane.b32.xlu0 %v1346, 32
  %v1348 = vpop.permute.xlu0 %1347
  %1350 = vst.msk [vmem:[#allocation4] sm:$0x3] %vm17, %v1348
  %v1353 = vunpack.c.l.s4 1983009808
  %v1354 = vunpack.c.0.s8 %v1353
  %v1355 = vlaneseq
  %v1356 = vshrl.u32 %v1355, 7
  %v1357 = vsub.s32 %v1354, %v1356
  %v1358 = vrot.slane %v1308, %v1357
  %1359 = vrot.lane.b32.xlu0 %v1358, 96
  %v1360 = vpop.permute.xlu0 %1359
  %1362 = vst.msk [vmem:[#allocation5] sm:$0x3] %vm17, %v1360
  %s1363 = scalar_lea.vmem %s3, 10
  %1364 = vst.msk [vmem:[%s1363] sm:$0x3] %vm17, %v1324
  %s1365 = scalar_lea.vmem %s4, 4
  %1366 = vst.msk [vmem:[%s1365] sm:$0x3] %vm17, %v1348
  %v1367 = vld [vmem:[%s258] sm:$0xf]
  %v1368 = vld [vmem:[%s256] sm:$0xf]
  %v1369 = vld [vmem:[#allocation2] sm:$0x3]
  %v1370 = vpack.c.bf16 %v1369, %v1369
  %v1372 = vsel %vm39, %v1370, 0
  %1374 = vmatprep.subr.bf16.mxu0 0
  %1375 = vmatpush1.bf16.msra.mxu0 %v26
  %1376 = vmatprep.subr.bf16.mxu0 0
  %1377 = vmatpush1.bf16.msra.mxu0 %v27
  %1378 = vmatprep.subr.bf16.mxu0 0
  %1379 = vmatpush1.bf16.msra.mxu0 0
  %1380 = vmatprep.subr.bf16.mxu0 0
  %1381 = vmatpush1.bf16.msra.mxu0 0
  %1382 = vmatprep.subr.bf16.mxu0 0
  %1383 = vmatpush1.bf16.msra.mxu0 0
  %1384 = vmatprep.subr.bf16.mxu0 0
  %1385 = vmatpush1.bf16.msra.mxu0 0
  %1386 = vmatprep.subr.bf16.mxu0 0
  %1387 = vmatpush1.bf16.msra.mxu0 0
  %1388 = vmatprep.subr.bf16.mxu0 0
  %1389 = vmatpush1.bf16.msra.mxu0 0
  %1390 = vmatprep.subr.bf16.mxu0 0
  %1391 = vmatpush1.bf16.msra.mxu0 0
  %1392 = vmatprep.subr.bf16.mxu0 0
  %1393 = vmatpush1.bf16.msra.mxu0 0
  %1394 = vmatprep.subr.bf16.mxu0 0
  %1395 = vmatpush1.bf16.msra.mxu0 0
  %1396 = vmatprep.subr.bf16.mxu0 0
  %1397 = vmatpush1.bf16.msra.mxu0 0
  %1398 = vmatprep.subr.bf16.mxu0 0
  %1399 = vmatpush1.bf16.msra.mxu0 0
  %1400 = vmatprep.subr.bf16.mxu0 0
  %1401 = vmatpush1.bf16.msra.mxu0 0
  %1402 = vmatprep.subr.bf16.mxu0 0
  %1403 = vmatpush1.bf16.msra.mxu0 0
  %1404 = vmatprep.subr.bf16.mxu0 0
  %1405 = vmatpush1.bf16.msra.mxu0 0
  %1406 = vmatprep.mubr.bf16.mxu0 0
  %1407 = vmatmul.mubr.bf16.gmra.mrb[0].mxu0 %v1372
  %v1408 = vpop.f32.mrb[0].mxu0
  %v1409 = vadd.f32 0.0, %v1408
  %v1410 = vpop.f32.mrb[0].mxu0
  %v1411 = vpop.f32.mrb[0].mxu0
  %v1412 = vpop.f32.mrb[0].mxu0
  %1413 = vdwg.mxu0
  %v1414 = vadd.f32 %v1367, %v1409
  %v1415 = vld [vmem:[#allocation4] sm:$0x3]
  %v1416 = vpack.c.bf16 %v1415, %v1415
  %v1418 = vsel %vm39, %v1416, 0
  %1420 = vmatprep.subr.bf16.mxu0 0
  %1421 = vmatpush1.bf16.msra.mxu0 %v32
  %1422 = vmatprep.subr.bf16.mxu0 0
  %1423 = vmatpush1.bf16.msra.mxu0 %v33
  %1424 = vmatprep.subr.bf16.mxu0 0
  %1425 = vmatpush1.bf16.msra.mxu0 0
  %1426 = vmatprep.subr.bf16.mxu0 0
  %1427 = vmatpush1.bf16.msra.mxu0 0
  %1428 = vmatprep.subr.bf16.mxu0 0
  %1429 = vmatpush1.bf16.msra.mxu0 0
  %1430 = vmatprep.subr.bf16.mxu0 0
  %1431 = vmatpush1.bf16.msra.mxu0 0
  %1432 = vmatprep.subr.bf16.mxu0 0
  %1433 = vmatpush1.bf16.msra.mxu0 0
  %1434 = vmatprep.subr.bf16.mxu0 0
  %1435 = vmatpush1.bf16.msra.mxu0 0
  %1436 = vmatprep.subr.bf16.mxu0 0
  %1437 = vmatpush1.bf16.msra.mxu0 0
  %1438 = vmatprep.subr.bf16.mxu0 0
  %1439 = vmatpush1.bf16.msra.mxu0 0
  %1440 = vmatprep.subr.bf16.mxu0 0
  %1441 = vmatpush1.bf16.msra.mxu0 0
  %1442 = vmatprep.subr.bf16.mxu0 0
  %1443 = vmatpush1.bf16.msra.mxu0 0
  %1444 = vmatprep.subr.bf16.mxu0 0
  %1445 = vmatpush1.bf16.msra.mxu0 0
  %1446 = vmatprep.subr.bf16.mxu0 0
  %1447 = vmatpush1.bf16.msra.mxu0 0
  %1448 = vmatprep.subr.bf16.mxu0 0
  %1449 = vmatpush1.bf16.msra.mxu0 0
  %1450 = vmatprep.subr.bf16.mxu0 0
  %1451 = vmatpush1.bf16.msra.mxu0 0
  %1452 = vmatprep.mubr.bf16.mxu0 0
  %1453 = vmatmul.mubr.bf16.gmra.mrb[0].mxu0 %v1418
  %v1454 = vpop.f32.mrb[0].mxu0
  %v1455 = vadd.f32 0.0, %v1454
  %v1456 = vpop.f32.mrb[0].mxu0
  %v1457 = vpop.f32.mrb[0].mxu0
  %v1458 = vpop.f32.mrb[0].mxu0
  %1459 = vdwg.mxu0
  %v1461 = vrot.slane %v1368, 2
  %v1463 = vadd.f32 %v1461, %v1455
  %v1464 = vld [vmem:[#allocation3] sm:$0x3]
  %v1465 = vxor.u32 %v1414, 2147483648
  %v1466 = vmul.f32 %v1465, 1.442695
  %v1467 = vpow.pop %v1466
  %v1468 = vadd.f32 %v1467, 1.0
  %v1469 = vrcp.pop %v1468
  %v1470 = vmul.f32 1.0, %v1469
  %v1471 = vtanh.pop %v1414
  %v1474 = vunpack.c.l.s4 1983009808
  %v1475 = vunpack.c.0.s8 %v1474
  %v1476 = vlaneseq
  %v1477 = vshrl.u32 %v1476, 7
  %v1478 = vsub.s32 %v1475, %v1477
  %v1479 = vrot.slane %v1464, %v1478
  %1480 = vrot.lane.b32.xlu0 %v1479, 32
  %v1481 = vpop.permute.xlu0 %1480
  %v1483 = vmul.f32 %v1470, %v1481
  %1485 = vrot.lane.b32.xlu0 %v1471, 64
  %v1486 = vpop.permute.xlu0 %1485
  %v1488 = vmul.f32 %v1470, %v1486
  %1490 = vrot.lane.b32.xlu0 %v1488, 32
  %v1491 = vpop.permute.xlu0 %1490
  %v1493 = vadd.f32 %v1483, %v1491
  %v1494 = vtanh.pop %v1493
  %1496 = vrot.lane.b32.xlu0 %v1494, 64
  %v1497 = vpop.permute.xlu0 %1496
  %v1499 = vmul.f32 %v1470, %v1497
  %v1500 = vld [vmem:[#allocation5] sm:$0x3]
  %v1501 = vxor.u32 %v1463, 2147483648
  %v1502 = vmul.f32 %v1501, 1.442695
  %v1503 = vpow.pop %v1502
  %v1504 = vadd.f32 %v1503, 1.0
  %v1505 = vrcp.pop %v1504
  %v1506 = vmul.f32 1.0, %v1505
  %v1507 = vtanh.pop %v1463
  %v1510 = vunpack.c.l.s4 1983009808
  %v1511 = vunpack.c.0.s8 %v1510
  %v1512 = vlaneseq
  %v1513 = vshrl.u32 %v1512, 7
  %v1514 = vsub.s32 %v1511, %v1513
  %v1515 = vrot.slane %v1500, %v1514
  %1516 = vrot.lane.b32.xlu0 %v1515, 32
  %v1517 = vpop.permute.xlu0 %1516
  %v1519 = vmul.f32 %v1506, %v1517
  %1521 = vrot.lane.b32.xlu0 %v1507, 64
  %v1522 = vpop.permute.xlu0 %1521
  %v1524 = vmul.f32 %v1506, %v1522
  %1526 = vrot.lane.b32.xlu0 %v1524, 32
  %v1527 = vpop.permute.xlu0 %1526
  %v1529 = vadd.f32 %v1519, %v1527
  %v1530 = vtanh.pop %v1529
  %1532 = vrot.lane.b32.xlu0 %v1530, 64
  %v1533 = vpop.permute.xlu0 %1532
  %v1535 = vmul.f32 %v1506, %v1533
  %v1538 = vunpack.c.l.s4 1983009808
  %v1539 = vunpack.c.0.s8 %v1538
  %v1540 = vlaneseq
  %v1541 = vshrl.u32 %v1540, 7
  %v1542 = vsub.s32 %v1539, %v1541
  %v1543 = vrot.slane %v1499, %v1542
  %1544 = vrot.lane.b32.xlu0 %v1543, 32
  %v1545 = vpop.permute.xlu0 %1544
  %1547 = vst.msk [vmem:[#allocation2] sm:$0x3] %vm17, %v1545
  %v1550 = vunpack.c.l.s4 1983009808
  %v1551 = vunpack.c.0.s8 %v1550
  %v1552 = vlaneseq
  %v1553 = vshrl.u32 %v1552, 7
  %v1554 = vsub.s32 %v1551, %v1553
  %v1555 = vrot.slane %v1493, %v1554
  %1556 = vrot.lane.b32.xlu0 %v1555, 96
  %v1557 = vpop.permute.xlu0 %1556
  %1559 = vst.msk [vmem:[#allocation3] sm:$0x3] %vm17, %v1557
  %v1562 = vunpack.c.l.s4 1983009808
  %v1563 = vunpack.c.0.s8 %v1562
  %v1564 = vlaneseq
  %v1565 = vshrl.u32 %v1564, 7
  %v1566 = vsub.s32 %v1563, %v1565
  %v1567 = vrot.slane %v1535, %v1566
  %1568 = vrot.lane.b32.xlu0 %v1567, 32
  %v1569 = vpop.permute.xlu0 %1568
  %1571 = vst.msk [vmem:[#allocation4] sm:$0x3] %vm17, %v1569
  %v1574 = vunpack.c.l.s4 1983009808
  %v1575 = vunpack.c.0.s8 %v1574
  %v1576 = vlaneseq
  %v1577 = vshrl.u32 %v1576, 7
  %v1578 = vsub.s32 %v1575, %v1577
  %v1579 = vrot.slane %v1529, %v1578
  %1580 = vrot.lane.b32.xlu0 %v1579, 96
  %v1581 = vpop.permute.xlu0 %1580
  %1583 = vst.msk [vmem:[#allocation5] sm:$0x3] %vm17, %v1581
  %s1584 = scalar_lea.vmem %s3, 12
  %1585 = vst.msk [vmem:[%s1584] sm:$0x3] %vm17, %v1545
  %s1586 = scalar_lea.vmem %s4, 2
  %1587 = vst.msk [vmem:[%s1586] sm:$0x3] %vm17, %v1569
  %v1588 = vld [vmem:[%s35] sm:$0xf]
  %v1589 = vld [vmem:[%s0] sm:$0xf]
  %v1590 = vld [vmem:[#allocation2] sm:$0x3]
  %v1591 = vpack.c.bf16 %v1590, %v1590
  %v1593 = vsel %vm39, %v1591, 0
  %1595 = vmatprep.subr.bf16.mxu0 0
  %1596 = vmatpush1.bf16.msra.mxu0 %v26
  %1597 = vmatprep.subr.bf16.mxu0 0
  %1598 = vmatpush1.bf16.msra.mxu0 %v27
  %1599 = vmatprep.subr.bf16.mxu0 0
  %1600 = vmatpush1.bf16.msra.mxu0 0
  %1601 = vmatprep.subr.bf16.mxu0 0
  %1602 = vmatpush1.bf16.msra.mxu0 0
  %1603 = vmatprep.subr.bf16.mxu0 0
  %1604 = vmatpush1.bf16.msra.mxu0 0
  %1605 = vmatprep.subr.bf16.mxu0 0
  %1606 = vmatpush1.bf16.msra.mxu0 0
  %1607 = vmatprep.subr.bf16.mxu0 0
  %1608 = vmatpush1.bf16.msra.mxu0 0
  %1609 = vmatprep.subr.bf16.mxu0 0
  %1610 = vmatpush1.bf16.msra.mxu0 0
  %1611 = vmatprep.subr.bf16.mxu0 0
  %1612 = vmatpush1.bf16.msra.mxu0 0
  %1613 = vmatprep.subr.bf16.mxu0 0
  %1614 = vmatpush1.bf16.msra.mxu0 0
  %1615 = vmatprep.subr.bf16.mxu0 0
  %1616 = vmatpush1.bf16.msra.mxu0 0
  %1617 = vmatprep.subr.bf16.mxu0 0
  %1618 = vmatpush1.bf16.msra.mxu0 0
  %1619 = vmatprep.subr.bf16.mxu0 0
  %1620 = vmatpush1.bf16.msra.mxu0 0
  %1621 = vmatprep.subr.bf16.mxu0 0
  %1622 = vmatpush1.bf16.msra.mxu0 0
  %1623 = vmatprep.subr.bf16.mxu0 0
  %1624 = vmatpush1.bf16.msra.mxu0 0
  %1625 = vmatprep.subr.bf16.mxu0 0
  %1626 = vmatpush1.bf16.msra.mxu0 0
  %1627 = vmatprep.mubr.bf16.mxu0 0
  %1628 = vmatmul.mubr.bf16.gmra.mrb[0].mxu0 %v1593
  %v1629 = vpop.f32.mrb[0].mxu0
  %v1630 = vadd.f32 0.0, %v1629
  %v1631 = vpop.f32.mrb[0].mxu0
  %v1632 = vpop.f32.mrb[0].mxu0
  %v1633 = vpop.f32.mrb[0].mxu0
  %1634 = vdwg.mxu0
  %v1635 = vadd.f32 %v1588, %v1630
  %v1636 = vld [vmem:[#allocation4] sm:$0x3]
  %v1637 = vpack.c.bf16 %v1636, %v1636
  %v1639 = vsel %vm39, %v1637, 0
  %1641 = vmatprep.subr.bf16.mxu0 0
  %1642 = vmatpush1.bf16.msra.mxu0 %v32
  %1643 = vmatprep.subr.bf16.mxu0 0
  %1644 = vmatpush1.bf16.msra.mxu0 %v33
  %1645 = vmatprep.subr.bf16.mxu0 0
  %1646 = vmatpush1.bf16.msra.mxu0 0
  %1647 = vmatprep.subr.bf16.mxu0 0
  %1648 = vmatpush1.bf16.msra.mxu0 0
  %1649 = vmatprep.subr.bf16.mxu0 0
  %1650 = vmatpush1.bf16.msra.mxu0 0
  %1651 = vmatprep.subr.bf16.mxu0 0
  %1652 = vmatpush1.bf16.msra.mxu0 0
  %1653 = vmatprep.subr.bf16.mxu0 0
  %1654 = vmatpush1.bf16.msra.mxu0 0
  %1655 = vmatprep.subr.bf16.mxu0 0
  %1656 = vmatpush1.bf16.msra.mxu0 0
  %1657 = vmatprep.subr.bf16.mxu0 0
  %1658 = vmatpush1.bf16.msra.mxu0 0
  %1659 = vmatprep.subr.bf16.mxu0 0
  %1660 = vmatpush1.bf16.msra.mxu0 0
  %1661 = vmatprep.subr.bf16.mxu0 0
  %1662 = vmatpush1.bf16.msra.mxu0 0
  %1663 = vmatprep.subr.bf16.mxu0 0
  %1664 = vmatpush1.bf16.msra.mxu0 0
  %1665 = vmatprep.subr.bf16.mxu0 0
  %1666 = vmatpush1.bf16.msra.mxu0 0
  %1667 = vmatprep.subr.bf16.mxu0 0
  %1668 = vmatpush1.bf16.msra.mxu0 0
  %1669 = vmatprep.subr.bf16.mxu0 0
  %1670 = vmatpush1.bf16.msra.mxu0 0
  %1671 = vmatprep.subr.bf16.mxu0 0
  %1672 = vmatpush1.bf16.msra.mxu0 0
  %1673 = vmatprep.mubr.bf16.mxu0 0
  %1674 = vmatmul.mubr.bf16.gmra.mrb[0].mxu0 %v1639
  %v1675 = vpop.f32.mrb[0].mxu0
  %v1676 = vadd.f32 0.0, %v1675
  %v1677 = vpop.f32.mrb[0].mxu0
  %v1678 = vpop.f32.mrb[0].mxu0
  %v1679 = vpop.f32.mrb[0].mxu0
  %1680 = vdwg.mxu0
  %v1682 = vrot.slane %v1589, 2
  %v1684 = vadd.f32 %v1682, %v1676
  %v1685 = vld [vmem:[#allocation3] sm:$0x3]
  %v1686 = vxor.u32 %v1635, 2147483648
  %v1687 = vmul.f32 %v1686, 1.442695
  %v1688 = vpow.pop %v1687
  %v1689 = vadd.f32 %v1688, 1.0
  %v1690 = vrcp.pop %v1689
  %v1691 = vmul.f32 1.0, %v1690
  %v1692 = vtanh.pop %v1635
  %v1695 = vunpack.c.l.s4 1983009808
  %v1696 = vunpack.c.0.s8 %v1695
  %v1697 = vlaneseq
  %v1698 = vshrl.u32 %v1697, 7
  %v1699 = vsub.s32 %v1696, %v1698
  %v1700 = vrot.slane %v1685, %v1699
  %1701 = vrot.lane.b32.xlu0 %v1700, 32
  %v1702 = vpop.permute.xlu0 %1701
  %v1704 = vmul.f32 %v1691, %v1702
  %1706 = vrot.lane.b32.xlu0 %v1692, 64
  %v1707 = vpop.permute.xlu0 %1706
  %v1709 = vmul.f32 %v1691, %v1707
  %1711 = vrot.lane.b32.xlu0 %v1709, 32
  %v1712 = vpop.permute.xlu0 %1711
  %v1714 = vadd.f32 %v1704, %v1712
  %v1715 = vtanh.pop %v1714
  %1717 = vrot.lane.b32.xlu0 %v1715, 64
  %v1718 = vpop.permute.xlu0 %1717
  %v1720 = vmul.f32 %v1691, %v1718
  %v1721 = vld [vmem:[#allocation5] sm:$0x3]
  %v1722 = vxor.u32 %v1684, 2147483648
  %v1723 = vmul.f32 %v1722, 1.442695
  %v1724 = vpow.pop %v1723
  %v1725 = vadd.f32 %v1724, 1.0
  %v1726 = vrcp.pop %v1725
  %v1727 = vmul.f32 1.0, %v1726
  %v1728 = vtanh.pop %v1684
  %v1731 = vunpack.c.l.s4 1983009808
  %v1732 = vunpack.c.0.s8 %v1731
  %v1733 = vlaneseq
  %v1734 = vshrl.u32 %v1733, 7
  %v1735 = vsub.s32 %v1732, %v1734
  %v1736 = vrot.slane %v1721, %v1735
  %1737 = vrot.lane.b32.xlu0 %v1736, 32
  %v1738 = vpop.permute.xlu0 %1737
  %v1740 = vmul.f32 %v1727, %v1738
  %1742 = vrot.lane.b32.xlu0 %v1728, 64
  %v1743 = vpop.permute.xlu0 %1742
  %v1745 = vmul.f32 %v1727, %v1743
  %1747 = vrot.lane.b32.xlu0 %v1745, 32
  %v1748 = vpop.permute.xlu0 %1747
  %v1750 = vadd.f32 %v1740, %v1748
  %v1751 = vtanh.pop %v1750
  %1753 = vrot.lane.b32.xlu0 %v1751, 64
  %v1754 = vpop.permute.xlu0 %1753
  %v1756 = vmul.f32 %v1727, %v1754
  %v1759 = vunpack.c.l.s4 1983009808
  %v1760 = vunpack.c.0.s8 %v1759
  %v1761 = vlaneseq
  %v1762 = vshrl.u32 %v1761, 7
  %v1763 = vsub.s32 %v1760, %v1762
  %v1764 = vrot.slane %v1720, %v1763
  %1765 = vrot.lane.b32.xlu0 %v1764, 32
  %v1766 = vpop.permute.xlu0 %1765
  %1768 = vst.msk [vmem:[#allocation2] sm:$0x3] %vm17, %v1766
  %v1771 = vunpack.c.l.s4 1983009808
  %v1772 = vunpack.c.0.s8 %v1771
  %v1773 = vlaneseq
  %v1774 = vshrl.u32 %v1773, 7
  %v1775 = vsub.s32 %v1772, %v1774
  %v1776 = vrot.slane %v1714, %v1775
  %1777 = vrot.lane.b32.xlu0 %v1776, 96
  %v1778 = vpop.permute.xlu0 %1777
  %1780 = vst.msk [vmem:[#allocation3] sm:$0x3] %vm17, %v1778
  %v1783 = vunpack.c.l.s4 1983009808
  %v1784 = vunpack.c.0.s8 %v1783
  %v1785 = vlaneseq
  %v1786 = vshrl.u32 %v1785, 7
  %v1787 = vsub.s32 %v1784, %v1786
  %v1788 = vrot.slane %v1756, %v1787
  %1789 = vrot.lane.b32.xlu0 %v1788, 32
  %v1790 = vpop.permute.xlu0 %1789
  %1792 = vst.msk [vmem:[#allocation4] sm:$0x3] %vm17, %v1790
  %v1795 = vunpack.c.l.s4 1983009808
  %v1796 = vunpack.c.0.s8 %v1795
  %v1797 = vlaneseq
  %v1798 = vshrl.u32 %v1797, 7
  %v1799 = vsub.s32 %v1796, %v1798
  %v1800 = vrot.slane %v1750, %v1799
  %1801 = vrot.lane.b32.xlu0 %v1800, 96
  %v1802 = vpop.permute.xlu0 %1801
  %1804 = vst.msk [vmem:[#allocation5] sm:$0x3] %vm17, %v1802
  %s1805 = scalar_lea.vmem %s3, 14
  %1806 = vst.msk [vmem:[%s1805] sm:$0x3] %vm17, %v1766
  %1807 = vst.msk [vmem:[%s4] sm:$0x3] %vm17, %v1790
  // Predicated region
  $region14: #{crnn_forward.16} parent=0 // pred_check
    _
  $region15: #{crnn_forward.16} parent=0 // pred_check_branch
    %1809 = sbr.rel (0) target = $region17
  $region16: #{crnn_forward.16} parent=0 // pred_region
    _
  $region17: #{crnn_forward.16} parent=0 // pred_fallthru
    _
  // Predicated region
  $region18: #{crnn_forward.16} parent=0 // pred_check
    _
  $region19: #{crnn_forward.16} parent=0 // pred_check_branch
    %1811 = sbr.rel (0) target = $region21
  $region20: #{crnn_forward.16} parent=0 // pred_region
    _
  $region21: #{crnn_forward.16} parent=0 // pred_fallthru
    _
  // Predicated region
  $region22: #{crnn_forward.16} parent=0 // pred_check
    _
  $region23: #{crnn_forward.16} parent=0 // pred_check_branch
    %1813 = sbr.rel (0) target = $region25
  $region24: #{crnn_forward.16} parent=0 // pred_region
    _
  $region25: #{crnn_forward.16} parent=0 // pred_fallthru
    _
  // Predicated region
  $region26: #{crnn_forward.16} parent=0 // pred_check
    _
  $region27: #{crnn_forward.16} parent=0 // pred_check_branch
    %1815 = sbr.rel (0) target = $region29
  $region28: #{crnn_forward.16} parent=0 // pred_region
    _
  $region29: #{crnn_forward.16} parent=0 // pred_fallthru
    _

</llo_original>
